<compile_context>
chip_gen: v5e
topology: v5e:2x2
jax: 0.10.0
libtpu: 0.0.40
codegen_flags: <defaults>
</compile_context>

<pallas_src>
import functools
import math

import jax
import jax.numpy as jnp
from jax import lax
from jax.experimental import pallas as pl
from jax.experimental.pallas import tpu as pltpu

F32 = jnp.float32
BF16 = jnp.bfloat16
ATTN_NEG = -1e9          # additive mask for causal / padding attention bias
VOCAB_NEG = -1e30        # mask for padded vocab columns in the fused logsumexp


# ----------------------------- small helpers ----------------------------------

def _round_up(x, m):
    return (x + m - 1) // m * m


def _layer_norm(x, g, b, eps=1e-5):
    x = x.astype(F32)
    mu = jnp.mean(x, axis=-1, keepdims=True)
    var = jnp.mean((x - mu) ** 2, axis=-1, keepdims=True)
    return (x - mu) * lax.rsqrt(var + eps) * g.astype(F32) + b.astype(F32)


def _gelu_new(x):
    # GPT-2 "gelu_new" (tanh approximation) -- tanh goes to the EUP.
    return 0.5 * x * (1.0 + jnp.tanh(0.7978845608028654 * (x + 0.044715 * x * x * x)))


def _vmem_budget(bytes_needed):
    # Adapt the scoped VMEM limit to what the kernel actually needs
    # (v7x only has 64 MiB per TensorCore; v5e/v6e have 128 MiB).
    return int(min(100 * 2 ** 20, max(32 * 2 ** 20, 2 * int(bytes_needed))))


# -------- probe: single-buffering of constant-index weight blocks -------------

_BUFFERED_ONE = None


def _probe_kernel(x_ref, o_ref):
    o_ref[...] = x_ref[...] + 1.0


def _single_buffer_supported():
    """Check once whether pipeline_mode=pl.Buffered(1) is usable on this runtime."""
    global _BUFFERED_ONE
    if _BUFFERED_ONE is None:
        try:
            f = pl.pallas_call(
                _probe_kernel,
                out_shape=jax.ShapeDtypeStruct((8, 128), F32),
                grid=(2,),
                in_specs=[pl.BlockSpec((8, 128), lambda i: (0, 0),
                                       pipeline_mode=pl.Buffered(1))],
                out_specs=pl.BlockSpec((8, 128), lambda i: (0, 0)),
            )
            out = jax.block_until_ready(f(jnp.zeros((8, 128), F32)))
            _BUFFERED_ONE = bool(jnp.allclose(out, 1.0))
        except Exception:
            _BUFFERED_ONE = False
    return _BUFFERED_ONE


def _const_spec(shape):
    """Spec for a weight whose block index never changes across the grid.

    Single-buffered where supported (halves its VMEM footprint; decisive on
    v7x's 64 MiB VMEM), otherwise the default double-buffered spec."""
    nd = len(shape)
    index_map = lambda *_: (0,) * nd
    if _single_buffer_supported():
        return pl.BlockSpec(shape, index_map, pipeline_mode=pl.Buffered(1))
    return pl.BlockSpec(shape, index_map)


# ----------------------------- transformer block ------------------------------

def transformer_block_kernel(num_heads, q_tile,
                             x_ref, mask_bias_ref,
                             ln1_g, ln1_b, w_q, b_q, w_kv, b_kv,
                             w_proj, b_proj, ln2_g, ln2_b,
                             w_fc, b_fc, w_out, b_out,
                             o_ref, k_scr, v_scr):
    H = num_heads
    Tq = q_tile
    S = x_ref.shape[1]
    D = x_ref.shape[2]
    Dh = D // H
    n_kv = k_scr.shape[0]
    scale = 1.0 / math.sqrt(Dh)
    qi = pl.program_id(1)

    # ---- K/V for the whole batch row: computed once (q-tile 0), stored per head
    # ---- TRANSPOSED as (kv_tile, H, Dh, Tq) bf16 -> lane-dense reads, dense stores.
    @pl.when(qi == 0)
    def _():
        h_full = _layer_norm(x_ref[0], ln1_g[...], ln1_b[...])
        kv = jnp.dot(h_full.astype(BF16), w_kv[...],
                     preferred_element_type=F32) + b_kv[...]          # (S, 2D) f32
        kvT = kv.T                                                    # (2D, S); one XLU transpose
        for t in range(n_kv):                                         # static, dense stores
            k_scr[t] = kvT[:D, t * Tq:(t + 1) * Tq].reshape(H, Dh, Tq).astype(BF16)
            v_scr[t] = kvT[D:, t * Tq:(t + 1) * Tq].reshape(H, Dh, Tq).astype(BF16)

    # ---- Q / residual for this query tile, sliced from the resident block
    q_start = pl.multiple_of(qi * Tq, Tq)
    x_q = x_ref[0, pl.ds(q_start, Tq), :].astype(F32)                 # (Tq, D)
    h_q = _layer_norm(x_q, ln1_g[...], ln1_b[...])
    q_all = jnp.dot(h_q.astype(BF16), w_q[...],
                    preferred_element_type=F32) + b_q[...]            # (Tq, D) f32
    q_bf = (q_all * scale).astype(BF16)                               # fold 1/sqrt(Dh) into Q
    q_heads = jnp.stack([q_bf[:, h * Dh:(h + 1) * Dh] for h in range(H)],
                        axis=0)                                       # (H, Tq, Dh)

    row_ids = lax.broadcasted_iota(jnp.int32, (Tq, Tq), 0)
    col_ids = lax.broadcasted_iota(jnp.int32, (Tq, Tq), 1)

    # ---- flash-style online softmax over only the causally needed KV tiles
    def kv_step(kt, carry):
        m, l, acc = carry
        k_t = k_scr[kt]                                               # (H, Dh, Tq) bf16
        v_t = v_scr[kt]                                               # (H, Dh, Tq) bf16
        s = jnp.einsum('hqd,hdk->hqk', q_heads, k_t,
                       preferred_element_type=F32)                    # (H, Tq, Tq)
        k_start = kt * Tq
        causal = jnp.where(row_ids + (q_start - k_start) >= col_ids, 0.0, ATTN_NEG)
        s = s + (causal + mask_bias_ref[0, kt])[None]                 # + padding bias (1, Tq)
        m_new = jnp.maximum(m, jnp.max(s, axis=-1, keepdims=True))
        alpha = jnp.exp(m - m_new)
        p = jnp.exp(s - m_new)
        l_new = alpha * l + jnp.sum(p, axis=-1, keepdims=True)
        ctx = jnp.einsum('hqk,hdk->hqd', p.astype(BF16), v_t,
                         preferred_element_type=F32)                  # (H, Tq, Dh)
        return m_new, l_new, alpha * acc + ctx

    m0 = jnp.full((H, Tq, 1), -1e30, F32)
    l0 = jnp.zeros((H, Tq, 1), F32)
    acc0 = jnp.zeros((H, Tq, Dh), F32)
    _, l, acc = lax.fori_loop(0, qi + 1, kv_step, (m0, l0, acc0))

    # normalize AFTER the PV matmul: multiplies (H,Tq,Dh) instead of (H,Tq,S)
    acc = acc * pl.reciprocal(l, approx=True)
    ctx = jnp.concatenate([acc[h] for h in range(H)], axis=-1).astype(BF16)  # (Tq, D)

    # head-merged output projection: ONE full-D contraction on the MXU
    attn = jnp.dot(ctx, w_proj[...], preferred_element_type=F32) + b_proj[...]
    x1 = x_q + attn

    # ---- MLP
    h2 = _layer_norm(x1, ln2_g[...], ln2_b[...])
    ff = jnp.dot(h2.astype(BF16), w_fc[...], preferred_element_type=F32) + b_fc[...]
    ff = _gelu_new(ff)
    ff = jnp.dot(ff.astype(BF16), w_out[...], preferred_element_type=F32) + b_out[...]
    o_ref[0] = (x1 + ff).astype(o_ref.dtype)


def run_transformer_block(x, mask_bias, layer, num_heads, q_tile=128):
    B, S, D = x.shape
    H = num_heads
    Dh = D // H
    Tq = min(q_tile, S)
    assert S % Tq == 0, "sequence length must be a multiple of the query tile"
    n_q = S // Tq

    (ln1_g, ln1_b, w_q, b_q, w_kv, b_kv, w_proj, b_proj,
     ln2_g, ln2_b, w_fc, b_fc, w_out, b_out) = layer
    params = [ln1_g, ln1_b, w_q, b_q, w_kv, b_kv, w_proj, b_proj,
              ln2_g, ln2_b, w_fc, b_fc, w_out, b_out]

    in_specs = [
        pl.BlockSpec((1, S, D), lambda b, q: (b, 0, 0)),        # x: full row (K/V + Q slice)
        pl.BlockSpec((1, n_q, 1, Tq), lambda b, q: (b, 0, 0, 0)),  # additive padding bias
    ] + [_const_spec(p.shape) for p in params]

    w_bytes = sum(int(p.size) * p.dtype.itemsize for p in params)
    act_bytes = 2 * (S * D * 2) + 2 * (Tq * D * 2) + n_q * Tq * 4
    scr_bytes = 2 * S * D * 2
    cost = pl.CostEstimate(
        flops=int(B * (24 * S * D * D + 2 * S * S * D)),
        transcendentals=int(B * (H * S * S // 2 + 4 * S * D)),
        bytes_accessed=int(w_bytes + 2 * B * S * D * 2 + B * S * 4),
    )

    # NOTE: only the batch axis is megacore-parallel; on v7x use an even batch.
    return pl.pallas_call(
        functools.partial(transformer_block_kernel, num_heads, Tq),
        out_shape=jax.ShapeDtypeStruct((B, S, D), x.dtype),
        grid=(B, n_q),
        in_specs=in_specs,
        out_specs=pl.BlockSpec((1, Tq, D), lambda b, q: (b, q, 0)),
        scratch_shapes=[
            pltpu.VMEM((n_q, H, Dh, Tq), BF16),   # K^T per head, lane-dense
            pltpu.VMEM((n_q, H, Dh, Tq), BF16),   # V^T per head, lane-dense
        ],
        compiler_params=pltpu.CompilerParams(
            dimension_semantics=("parallel", "arbitrary"),
            vmem_limit_bytes=_vmem_budget(w_bytes + act_bytes + scr_bytes),
        ),
        cost_estimate=cost,
    )(x, mask_bias, *params)


# ------------------- LM head (tied, vocab-tiled, fused loss stats) -------------

def lm_head_kernel(v_total, v_tile,
                   x_ref, tgt_ref, lnf_g, lnf_b, wte_ref,
                   logits_ref, lse_ref, tl_ref,
                   h_scr, m_scr, l_scr, t_scr):
    vi = pl.program_id(1)

    @pl.when(vi == 0)
    def _():
        h_scr[...] = _layer_norm(x_ref[0], lnf_g[...], lnf_b[...]).astype(BF16)
        m_scr[...] = jnp.full(m_scr.shape, -1e30, F32)
        l_scr[...] = jnp.zeros(l_scr.shape, F32)
        t_scr[...] = jnp.zeros(t_scr.shape, F32)

    # tied embedding: logits tile = LN(x) @ wte_tile^T  (contract hidden dims)
    logits = lax.dot_general(h_scr[...], wte_ref[...], (((1,), (1,)), ((), ())),
                             preferred_element_type=F32)              # (S, Tv) f32
    col = vi * v_tile + lax.broadcasted_iota(jnp.int32, logits.shape, 1)
    masked = jnp.where(col < v_total, logits, VOCAB_NEG)
    logits_ref[0] = masked.astype(logits_ref.dtype)                   # bf16 writeback

    # online logsumexp across vocab tiles (padded vocab columns masked out)
    m_new = jnp.maximum(m_scr[...], jnp.max(masked, axis=-1, keepdims=True))
    alpha = jnp.exp(m_scr[...] - m_new)
    l_scr[...] = alpha * l_scr[...] + jnp.sum(jnp.exp(masked - m_new),
                                              axis=-1, keepdims=True)
    m_scr[...] = m_new

    # gather the (pre-shifted, clamped) target logit for the fused LM loss
    hit = col == tgt_ref[0]                                           # (S,Tv) vs (S,1)
    t_scr[...] += jnp.sum(jnp.where(hit, logits, 0.0), axis=-1, keepdims=True)

    @pl.when(vi == pl.num_programs(1) - 1)
    def _():
        lse_ref[0] = m_scr[...] + jnp.log(l_scr[...])
        tl_ref[0] = t_scr[...]


def run_lm_head(x, lnf_g, lnf_b, wte, targets):
    B, S, D = x.shape
    V = wte.shape[0]
    tv = min(2048, _round_up(V, 256))         # lane-dense, >=256 fills the MXU N-width
    v_pad = _round_up(V, tv)
    if v_pad != V:
        wte = jnp.pad(wte, ((0, v_pad - V), (0, 0)))
    n_v = v_pad // tv

    need = 4 * (tv * D * 2 + S * tv * 2) + 4 * S * D * 2
    cost = pl.CostEstimate(
        flops=int(2 * B * S * D * v_pad),
        transcendentals=int(B * S * v_pad),
        bytes_accessed=int(v_pad * D * 2 + B * S * D * 2 + B * S * v_pad * 2),
    )

    logits, lse, tl = pl.pallas_call(
        functools.partial(lm_head_kernel, V, tv),
        out_shape=(jax.ShapeDtypeStruct((B, S, v_pad), BF16),
                   jax.ShapeDtypeStruct((B, S, 1), F32),
                   jax.ShapeDtypeStruct((B, S, 1), F32)),
        grid=(B, n_v),
        in_specs=[
            pl.BlockSpec((1, S, D), lambda b, v: (b, 0, 0)),
            pl.BlockSpec((1, S, 1), lambda b, v: (b, 0, 0)),
            _const_spec(lnf_g.shape),
            _const_spec(lnf_b.shape),
            pl.BlockSpec((tv, D), lambda b, v: (v, 0)),
        ],
        out_specs=(pl.BlockSpec((1, S, tv), lambda b, v: (b, 0, v)),
                   pl.BlockSpec((1, S, 1), lambda b, v: (b, 0, 0)),
                   pl.BlockSpec((1, S, 1), lambda b, v: (b, 0, 0))),
        scratch_shapes=[
            pltpu.VMEM((S, D), BF16),   # LN(x), computed once per batch row
            pltpu.VMEM((S, 1), F32),    # running max
            pltpu.VMEM((S, 1), F32),    # running sum-exp
            pltpu.VMEM((S, 1), F32),    # gathered target logit
        ],
        compiler_params=pltpu.CompilerParams(
            dimension_semantics=("parallel", "arbitrary"),
            vmem_limit_bytes=_vmem_budget(need),
        ),
        cost_estimate=cost,
    )(x, targets, lnf_g, lnf_b, wte)
    return logits[:, :, :V], lse[..., 0], tl[..., 0]


# ----------------------------- parameters -------------------------------------

def init_params(key, vocab, max_pos, d, n_layers):
    std = 0.02
    keys = jax.random.split(key, 2 + 6 * n_layers)

    def w(k, shape):
        return (std * jax.random.normal(k, shape, F32)).astype(BF16)

    params = {
        "wte": w(keys[0], (vocab, d)),
        "wpe": w(keys[1], (max_pos, d)),
        "lnf_g": jnp.ones((1, d), F32),
        "lnf_b": jnp.zeros((1, d), F32),
        "layers": [],
    }
    for l in range(n_layers):
        k = keys[2 + 6 * l: 2 + 6 * (l + 1)]
        # GPT-2's c_attn is one (D, 3D) Conv1D; keep the query part and the
        # key/value part as separate bf16 weights so the kernel can cache K/V.
        w_qkv = std * jax.random.normal(k[0], (d, 3 * d), F32)
        layer = (
            jnp.ones((1, d), F32),            # ln1_g
            jnp.zeros((1, d), F32),           # ln1_b
            w_qkv[:, :d].astype(BF16),        # w_q
            jnp.zeros((1, d), F32),           # b_q
            w_qkv[:, d:].astype(BF16),        # w_kv
            jnp.zeros((1, 2 * d), F32),       # b_kv
            w(k[1], (d, d)),                  # w_proj
            jnp.zeros((1, d), F32),           # b_proj
            jnp.ones((1, d), F32),            # ln2_g
            jnp.zeros((1, d), F32),           # ln2_b
            w(k[2], (d, 4 * d)),              # w_fc
            jnp.zeros((1, 4 * d), F32),       # b_fc
            w(k[3], (4 * d, d)),              # w_out
            jnp.zeros((1, d), F32),           # b_out
        )
        params["layers"].append(layer)
    return params


# ----------------------------- full forward -----------------------------------

def text_decoder_forward(params, input_ids, attention_mask=None, labels=None,
                         num_heads=4, q_tile=128):
    B, S = input_ids.shape
    if attention_mask is None:
        attention_mask = jnp.ones((B, S), F32)
    Tq = min(q_tile, S)
    assert S % Tq == 0
    n_q = S // Tq
    # additive padding bias, pre-tiled to (B, n_kv_tiles, 1, Tq) so the kernel picks
    # a key tile with one major-dim dynamic index (no dynamic lane slicing)
    mask_bias = jnp.where(attention_mask.astype(F32) > 0.5, 0.0, ATTN_NEG)
    mask_bias = mask_bias.astype(F32).reshape(B, n_q, 1, Tq)

    # embedding gather (JAX glue)
    h = (jnp.take(params["wte"], input_ids, axis=0)
         + params["wpe"][:S][None, :, :]).astype(BF16)

    for layer in params["layers"]:
        h = run_transformer_block(h, mask_bias, layer, num_heads, q_tile=Tq)

    # shift-by-one targets for the fused LM loss (ignore_index = -100)
    if labels is None:
        valid = None
        targets = jnp.zeros((B, S, 1), jnp.int32)
    else:
        shifted = jnp.concatenate(
            [labels[:, 1:], jnp.full((B, 1), -100, labels.dtype)], axis=1)
        valid = shifted != -100
        targets = jnp.where(valid, shifted, 0).astype(jnp.int32).reshape(B, S, 1)

    logits, lse, tgt_logit = run_lm_head(
        h, params["lnf_g"], params["lnf_b"], params["wte"], targets)

    if labels is None:
        return logits

    validf = valid.astype(F32)
    nll = (lse - tgt_logit) * validf
    loss = jnp.sum(nll) / jnp.maximum(jnp.sum(validf), 1.0)
    return loss, logits


# ----------------------------- pure-JAX reference ------------------------------

def _reference_forward(params, input_ids, attention_mask, num_heads):
    B, S = input_ids.shape
    D = params["wte"].shape[1]
    H = num_heads
    Dh = D // H
    x = (jnp.take(params["wte"], input_ids, axis=0)
         + params["wpe"][:S][None]).astype(BF16)
    keep = jnp.tril(jnp.ones((S, S), bool))[None] & (attention_mask > 0.5)[:, None, :]
    bias = jnp.where(keep, 0.0, ATTN_NEG)[:, None]        # (B,1,S,S)

    for (ln1_g, ln1_b, w_q, b_q, w_kv, b_kv, w_proj, b_proj,
         ln2_g, ln2_b, w_fc, b_fc, w_out, b_out) in params["layers"]:
        xf = x.astype(F32)
        h1 = _layer_norm(xf, ln1_g, ln1_b)
        q = ((jnp.einsum('bsd,de->bse', h1.astype(BF16), w_q,
                         preferred_element_type=F32) + b_q) / math.sqrt(Dh)).astype(BF16)
        kv = jnp.einsum('bsd,de->bse', h1.astype(BF16), w_kv,
                        preferred_element_type=F32) + b_kv
        k = kv[..., :D].astype(BF16)
        v = kv[..., D:].astype(BF16)
        qh = q.reshape(B, S, H, Dh).transpose(0, 2, 1, 3)
        kh = k.reshape(B, S, H, Dh).transpose(0, 2, 1, 3)
        vh = v.reshape(B, S, H, Dh).transpose(0, 2, 1, 3)
        s = jnp.einsum('bhqd,bhkd->bhqk', qh, kh, preferred_element_type=F32) + bias
        p = jax.nn.softmax(s, axis=-1)
        ctx = jnp.einsum('bhqk,bhkd->bhqd', p.astype(BF16), vh,
                         preferred_element_type=F32)
        ctx = ctx.transpose(0, 2, 1, 3).reshape(B, S, D).astype(BF16)
        attn = jnp.einsum('bsd,de->bse', ctx, w_proj,
                          preferred_element_type=F32) + b_proj
        x1 = xf + attn
        h2 = _layer_norm(x1, ln2_g, ln2_b)
        ff = jnp.einsum('bsd,de->bse', h2.astype(BF16), w_fc,
                        preferred_element_type=F32) + b_fc
        ff = _gelu_new(ff)
        ff = jnp.einsum('bsd,de->bse', ff.astype(BF16), w_out,
                        preferred_element_type=F32) + b_out
        x = (x1 + ff).astype(BF16)

    hf = _layer_norm(x.astype(F32), params["lnf_g"], params["lnf_b"]).astype(BF16)
    return jnp.einsum('bsd,vd->bsv', hf, params["wte"], preferred_element_type=F32)


# ----------------------------- demo -------------------------------------------

if __name__ == "__main__":
    # TODO(synk): GPT2Tokenizer (host-side string processing) and loading the
    # pretrained HF checkpoint have no Pallas equivalent; weights are synthetic.
    B, S, D, H, L, V, MAXPOS = 2, 256, 128, 4, 2, 500, 512

    key = jax.random.PRNGKey(0)
    k_params, k_ids = jax.random.split(key)
    params = init_params(k_params, V, MAXPOS, D, L)

    input_ids = jax.random.randint(k_ids, (B, S), 0, V, dtype=jnp.int32)
    attention_mask = jnp.ones((B, S), F32).at[1, -32:].set(0.0)
    labels = jnp.where(attention_mask > 0.5, input_ids, -100)

    loss, logits = text_decoder_forward(params, input_ids, attention_mask, labels,
                                        num_heads=H)
    jax.block_until_ready((loss, logits))
    assert logits.shape == (B, S, V)
    assert loss.shape == () and bool(jnp.isfinite(loss))

    # 1) logits must match a pure-JAX reference of the same decoder
    ref_logits = _reference_forward(params, input_ids, attention_mask, H)
    max_err = float(jnp.max(jnp.abs(logits.astype(F32) - ref_logits)))
    assert max_err < 3e-2, max_err

    # 2) the fused in-kernel loss must agree with a recompute from the logits
    shift_logits = logits[:, :-1, :].astype(F32)
    shift_labels = labels[:, 1:]
    logp = jax.nn.log_softmax(shift_logits, axis=-1)
    nll = -jnp.take_along_axis(logp, jnp.maximum(shift_labels, 0)[..., None], -1)[..., 0]
    validf = (shift_labels != -100).astype(F32)
    loss_ref = jnp.sum(nll * validf) / jnp.maximum(jnp.sum(validf), 1.0)
    assert abs(float(loss) - float(loss_ref)) < 1e-2, (float(loss), float(loss_ref))

    # labels=None path returns logits only
    logits_only = text_decoder_forward(params, input_ids, attention_mask, None,
                                       num_heads=H)
    jax.block_until_ready(logits_only)
    assert logits_only.shape == (B, S, V)

    print("KERNEL_OK")
</pallas_src>

<mosaic_0001>
module attributes {stable_mosaic.version = 11 : i64} {
  func.func @_probe_kernel(%arg0: i32, %arg1: memref<8x128xf32, #tpu.memory_space<vmem>>, %arg2: memref<8x128xf32, #tpu.memory_space<vmem>>) attributes {dimension_semantics = [#tpu.dimension_semantics<arbitrary>], iteration_bounds = array<i64: 2>, scalar_prefetch = 0 : i64, scratch_operands = 0 : i64, tpu.core_type = #tpu.core_type<tc>, window_params = [{pipeline_mode = #tpu.pipeline_mode<synchronous>, transform_indices = @transform_0, window_bounds = array<i64: 8, 128>}, {pipeline_mode = #tpu.pipeline_mode<synchronous>, transform_indices = @transform_1, window_bounds = array<i64: 8, 128>}]} {
    %c0 = arith.constant 0 : index
    %c0_0 = arith.constant 0 : index
    %0 = vector.load %arg1[%c0, %c0_0] : memref<8x128xf32, #tpu.memory_space<vmem>>, vector<8x128xf32>
    %cst = arith.constant 1.000000e+00 : f32
    %1 = vector.broadcast %cst : f32 to vector<8x128xf32>
    %2 = arith.addf %0, %1 : vector<8x128xf32>
    %c0_1 = arith.constant 0 : index
    %c0_2 = arith.constant 0 : index
    %3 = vector.load %arg2[%c0_1, %c0_2] : memref<8x128xf32, #tpu.memory_space<vmem>>, vector<8x128xf32>
    tpu.vector_store %arg2[%c0_1, %c0_2], %2 {strides = array<i32>} : memref<8x128xf32, #tpu.memory_space<vmem>>, vector<8x128xf32>,
    return
  }
  func.func @transform_0(%arg0: i32) -> (i32, i32) {
    %c0_i32 = arith.constant 0 : i32
    %c0_i32_0 = arith.constant 0 : i32
    %c0_i32_1 = arith.constant 0 : i32
    return %c0_i32, %c0_i32_0 : i32, i32
  }
  func.func @transform_1(%arg0: i32) -> (i32, i32) {
    %c0_i32 = arith.constant 0 : i32
    %c0_i32_0 = arith.constant 0 : i32
    %c0_i32_1 = arith.constant 0 : i32
    return %c0_i32, %c0_i32_0 : i32, i32
  }
}

module attributes {stable_mosaic.version = 11 : i64} {
  func.func @transformer_block_kernel(%arg0: i32, %arg1: i32, %arg2: memref<1x256x128xbf16, #tpu.memory_space<vmem>>, %arg3: memref<1x2x1x128xf32, #tpu.memory_space<vmem>>, %arg4: memref<1x128xf32, #tpu.memory_space<vmem>>, %arg5: memref<1x128xf32, #tpu.memory_space<vmem>>, %arg6: memref<128x128xbf16, #tpu.memory_space<vmem>>, %arg7: memref<1x128xf32, #tpu.memory_space<vmem>>, %arg8: memref<128x256xbf16, #tpu.memory_space<vmem>>, %arg9: memref<1x256xf32, #tpu.memory_space<vmem>>, %arg10: memref<128x128xbf16, #tpu.memory_space<vmem>>, %arg11: memref<1x128xf32, #tpu.memory_space<vmem>>, %arg12: memref<1x128xf32, #tpu.memory_space<vmem>>, %arg13: memref<1x128xf32, #tpu.memory_space<vmem>>, %arg14: memref<128x512xbf16, #tpu.memory_space<vmem>>, %arg15: memref<1x512xf32, #tpu.memory_space<vmem>>, %arg16: memref<512x128xbf16, #tpu.memory_space<vmem>>, %arg17: memref<1x128xf32, #tpu.memory_space<vmem>>, %arg18: memref<1x128x128xbf16, #tpu.memory_space<vmem>>, %arg19: memref<2x4x32x128xbf16, #tpu.memory_space<vmem>>, %arg20: memref<2x4x32x128xbf16, #tpu.memory_space<vmem>>) attributes {dimension_semantics = [#tpu.dimension_semantics<parallel>, #tpu.dimension_semantics<arbitrary>], iteration_bounds = array<i64: 2, 2>, scalar_prefetch = 0 : i64, scratch_operands = 2 : i64, tpu.core_type = #tpu.core_type<tc>, window_params = [{transform_indices = @transform_0, window_bounds = array<i64: 1, 256, 128>}, {transform_indices = @transform_1, window_bounds = array<i64: 1, 2, 1, 128>}, {pipeline_mode = #tpu.pipeline_mode<synchronous>, transform_indices = @transform_2, window_bounds = array<i64: 1, 128>}, {pipeline_mode = #tpu.pipeline_mode<synchronous>, transform_indices = @transform_3, window_bounds = array<i64: 1, 128>}, {pipeline_mode = #tpu.pipeline_mode<synchronous>, transform_indices = @transform_4, window_bounds = array<i64: 128, 128>}, {pipeline_mode = #tpu.pipeline_mode<synchronous>, transform_indices = @transform_5, window_bounds = array<i64: 1, 128>}, {pipeline_mode = #tpu.pipeline_mode<synchronous>, transform_indices = @transform_6, window_bounds = array<i64: 128, 256>}, {pipeline_mode = #tpu.pipeline_mode<synchronous>, transform_indices = @transform_7, window_bounds = array<i64: 1, 256>}, {pipeline_mode = #tpu.pipeline_mode<synchronous>, transform_indices = @transform_8, window_bounds = array<i64: 128, 128>}, {pipeline_mode = #tpu.pipeline_mode<synchronous>, transform_indices = @transform_9, window_bounds = array<i64: 1, 128>}, {pipeline_mode = #tpu.pipeline_mode<synchronous>, transform_indices = @transform_10, window_bounds = array<i64: 1, 128>}, {pipeline_mode = #tpu.pipeline_mode<synchronous>, transform_indices = @transform_11, window_bounds = array<i64: 1, 128>}, {pipeline_mode = #tpu.pipeline_mode<synchronous>, transform_indices = @transform_12, window_bounds = array<i64: 128, 512>}, {pipeline_mode = #tpu.pipeline_mode<synchronous>, transform_indices = @transform_13, window_bounds = array<i64: 1, 512>}, {pipeline_mode = #tpu.pipeline_mode<synchronous>, transform_indices = @transform_14, window_bounds = array<i64: 512, 128>}, {pipeline_mode = #tpu.pipeline_mode<synchronous>, transform_indices = @transform_15, window_bounds = array<i64: 1, 128>}, {transform_indices = @transform_16, window_bounds = array<i64: 1, 128, 128>}]} {
    %c0_i32 = arith.constant 0 : i32
    %0 = arith.cmpi eq, %arg1, %c0_i32 : i32
    %1 = arith.extui %0 : i1 to i32
    %c0_i32_0 = arith.constant 0 : i32
    %2 = arith.cmpi ne, %1, %c0_i32_0 : i32
    scf.if %2 {
      %c0_52 = arith.constant 0 : index
      %c0_53 = arith.constant 0 : index
      %c0_54 = arith.constant 0 : index
      %133 = vector.load %arg2[%c0_52, %c0_53, %c0_54] : memref<1x256x128xbf16, #tpu.memory_space<vmem>>, vector<1x256x128xbf16>
      %134 = vector.shape_cast %133 : vector<1x256x128xbf16> to vector<256x128xbf16>
      %c0_55 = arith.constant 0 : index
      %c0_56 = arith.constant 0 : index
      %135 = vector.load %arg4[%c0_55, %c0_56] : memref<1x128xf32, #tpu.memory_space<vmem>>, vector<1x128xf32>
      %c0_57 = arith.constant 0 : index
      %c0_58 = arith.constant 0 : index
      %136 = vector.load %arg5[%c0_57, %c0_58] : memref<1x128xf32, #tpu.memory_space<vmem>>, vector<1x128xf32>
      %137 = arith.extf %134 : vector<256x128xbf16> to vector<256x128xf32>
      %cst_59 = arith.constant dense<0.000000e+00> : vector<256xf32>
      %138 = vector.multi_reduction <add>, %137, %cst_59 [1] : vector<256x128xf32> to vector<256xf32>
      %139 = vector.shape_cast %138 : vector<256xf32> to vector<256x1xf32>
      %cst_60 = arith.constant 1.280000e+02 : f32
      %140 = vector.broadcast %cst_60 : f32 to vector<256x1xf32>
      %141 = arith.divf %139, %140 : vector<256x1xf32>
      %142 = vector.broadcast %141 : vector<256x1xf32> to vector<256x128xf32>
      %143 = arith.subf %137, %142 : vector<256x128xf32>
      %144 = arith.mulf %143, %143 : vector<256x128xf32>
      %cst_61 = arith.constant dense<0.000000e+00> : vector<256xf32>
      %145 = vector.multi_reduction <add>, %144, %cst_61 [1] : vector<256x128xf32> to vector<256xf32>
      %146 = vector.shape_cast %145 : vector<256xf32> to vector<256x1xf32>
      %cst_62 = arith.constant 1.280000e+02 : f32
      %147 = vector.broadcast %cst_62 : f32 to vector<256x1xf32>
      %148 = arith.divf %146, %147 : vector<256x1xf32>
      %149 = vector.broadcast %141 : vector<256x1xf32> to vector<256x128xf32>
      %150 = arith.subf %137, %149 : vector<256x128xf32>
      %cst_63 = arith.constant 9.99999974E-6 : f32
      %151 = vector.broadcast %cst_63 : f32 to vector<256x1xf32>
      %152 = arith.addf %148, %151 : vector<256x1xf32>
      %153 = math.rsqrt %152 : vector<256x1xf32>
      %154 = vector.broadcast %153 : vector<256x1xf32> to vector<256x128xf32>
      %155 = arith.mulf %150, %154 : vector<256x128xf32>
      %156 = vector.broadcast %135 : vector<1x128xf32> to vector<256x128xf32>
      %157 = arith.mulf %155, %156 : vector<256x128xf32>
      %158 = vector.broadcast %136 : vector<1x128xf32> to vector<256x128xf32>
      %159 = arith.addf %157, %158 : vector<256x128xf32>
      %160 = arith.truncf %159 : vector<256x128xf32> to vector<256x128xbf16>
      %c0_64 = arith.constant 0 : index
      %c0_65 = arith.constant 0 : index
      %161 = vector.load %arg8[%c0_64, %c0_65] : memref<128x256xbf16, #tpu.memory_space<vmem>>, vector<128x256xbf16>
      %cst_66 = arith.constant dense<0.000000e+00> : vector<256x256xf32>
      %162 = tpu.matmul %160, %161, %cst_66 {dimension_numbers = #tpu.dot_dimension_numbers<[1], [0], [0], [1], [0, 0, 1, 1], [], []>} : vector<256x128xbf16>, vector<128x256xbf16>, vector<256x256xf32> -> vector<256x256xf32>
      %c0_67 = arith.constant 0 : index
      %c0_68 = arith.constant 0 : index
      %163 = vector.load %arg9[%c0_67, %c0_68] : memref<1x256xf32, #tpu.memory_space<vmem>>, vector<1x256xf32>
      %164 = vector.broadcast %163 : vector<1x256xf32> to vector<256x256xf32>
      %165 = arith.addf %162, %164 : vector<256x256xf32>
      %166 = tpu.transpose %165, [1, 0] : vector<256x256xf32> -> vector<256x256xf32>
      %167 = vector.extract_strided_slice %166 {offsets = [0, 0], sizes = [128, 128], strides = [1, 1]} : vector<256x256xf32> to vector<128x128xf32>
      %168 = vector.shape_cast %167 : vector<128x128xf32> to vector<4x32x128xf32>
      %169 = arith.truncf %168 : vector<4x32x128xf32> to vector<4x32x128xbf16>
      %c0_69 = arith.constant 0 : index
      %c0_70 = arith.constant 0 : index
      %c0_71 = arith.constant 0 : index
      %c0_72 = arith.constant 0 : index
      %170 = vector.load %arg19[%c0_69, %c0_70, %c0_71, %c0_72] : memref<2x4x32x128xbf16, #tpu.memory_space<vmem>>, vector<1x4x32x128xbf16>
      %171 = vector.shape_cast %170 : vector<1x4x32x128xbf16> to vector<4x32x128xbf16>
      %172 = vector.shape_cast %169 : vector<4x32x128xbf16> to vector<1x4x32x128xbf16>
      tpu.vector_store %arg19[%c0_69, %c0_70, %c0_71, %c0_72], %172 {strides = array<i32>} : memref<2x4x32x128xbf16, #tpu.memory_space<vmem>>, vector<1x4x32x128xbf16>,
      %173 = vector.extract_strided_slice %166 {offsets = [128, 0], sizes = [128, 128], strides = [1, 1]} : vector<256x256xf32> to vector<128x128xf32>
      %174 = vector.shape_cast %173 : vector<128x128xf32> to vector<4x32x128xf32>
      %175 = arith.truncf %174 : vector<4x32x128xf32> to vector<4x32x128xbf16>
      %c0_73 = arith.constant 0 : index
      %c0_74 = arith.constant 0 : index
      %c0_75 = arith.constant 0 : index
      %c0_76 = arith.constant 0 : index
      %176 = vector.load %arg20[%c0_73, %c0_74, %c0_75, %c0_76] : memref<2x4x32x128xbf16, #tpu.memory_space<vmem>>, vector<1x4x32x128xbf16>
      %177 = vector.shape_cast %176 : vector<1x4x32x128xbf16> to vector<4x32x128xbf16>
      %178 = vector.shape_cast %175 : vector<4x32x128xbf16> to vector<1x4x32x128xbf16>
      tpu.vector_store %arg20[%c0_73, %c0_74, %c0_75, %c0_76], %178 {strides = array<i32>} : memref<2x4x32x128xbf16, #tpu.memory_space<vmem>>, vector<1x4x32x128xbf16>,
      %179 = vector.extract_strided_slice %166 {offsets = [0, 128], sizes = [128, 128], strides = [1, 1]} : vector<256x256xf32> to vector<128x128xf32>
      %180 = vector.shape_cast %179 : vector<128x128xf32> to vector<4x32x128xf32>
      %181 = arith.truncf %180 : vector<4x32x128xf32> to vector<4x32x128xbf16>
      %c1 = arith.constant 1 : index
      %c0_77 = arith.constant 0 : index
      %c0_78 = arith.constant 0 : index
      %c0_79 = arith.constant 0 : index
      %182 = vector.load %arg19[%c1, %c0_77, %c0_78, %c0_79] : memref<2x4x32x128xbf16, #tpu.memory_space<vmem>>, vector<1x4x32x128xbf16>
      %183 = vector.shape_cast %182 : vector<1x4x32x128xbf16> to vector<4x32x128xbf16>
      %184 = vector.shape_cast %181 : vector<4x32x128xbf16> to vector<1x4x32x128xbf16>
      tpu.vector_store %arg19[%c1, %c0_77, %c0_78, %c0_79], %184 {strides = array<i32>} : memref<2x4x32x128xbf16, #tpu.memory_space<vmem>>, vector<1x4x32x128xbf16>,
      %185 = vector.extract_strided_slice %166 {offsets = [128, 128], sizes = [128, 128], strides = [1, 1]} : vector<256x256xf32> to vector<128x128xf32>
      %186 = vector.shape_cast %185 : vector<128x128xf32> to vector<4x32x128xf32>
      %187 = arith.truncf %186 : vector<4x32x128xf32> to vector<4x32x128xbf16>
      %c1_80 = arith.constant 1 : index
      %c0_81 = arith.constant 0 : index
      %c0_82 = arith.constant 0 : index
      %c0_83 = arith.constant 0 : index
      %188 = vector.load %arg20[%c1_80, %c0_81, %c0_82, %c0_83] : memref<2x4x32x128xbf16, #tpu.memory_space<vmem>>, vector<1x4x32x128xbf16>
      %189 = vector.shape_cast %188 : vector<1x4x32x128xbf16> to vector<4x32x128xbf16>
      %190 = vector.shape_cast %187 : vector<4x32x128xbf16> to vector<1x4x32x128xbf16>
      tpu.vector_store %arg20[%c1_80, %c0_81, %c0_82, %c0_83], %190 {strides = array<i32>} : memref<2x4x32x128xbf16, #tpu.memory_space<vmem>>, vector<1x4x32x128xbf16>,
    } else {
    }
    %c128_i32 = arith.constant 128 : i32
    %3 = arith.muli %arg1, %c128_i32 : i32
    %4 = tpu.assume_multiple %3, 128 : i32
    %c0 = arith.constant 0 : index
    %5 = arith.index_cast %4 : i32 to index
    %c0_1 = arith.constant 0 : index
    %6 = vector.load %arg2[%c0, %5, %c0_1] : memref<1x256x128xbf16, #tpu.memory_space<vmem>>, vector<1x128x128xbf16>
    %7 = vector.shape_cast %6 : vector<1x128x128xbf16> to vector<128x128xbf16>
    %8 = arith.extf %7 : vector<128x128xbf16> to vector<128x128xf32>
    %c0_2 = arith.constant 0 : index
    %c0_3 = arith.constant 0 : index
    %9 = vector.load %arg4[%c0_2, %c0_3] : memref<1x128xf32, #tpu.memory_space<vmem>>, vector<1x128xf32>
    %c0_4 = arith.constant 0 : index
    %c0_5 = arith.constant 0 : index
    %10 = vector.load %arg5[%c0_4, %c0_5] : memref<1x128xf32, #tpu.memory_space<vmem>>, vector<1x128xf32>
    %cst = arith.constant dense<0.000000e+00> : vector<128xf32>
    %11 = vector.multi_reduction <add>, %8, %cst [1] : vector<128x128xf32> to vector<128xf32>
    %12 = vector.shape_cast %11 : vector<128xf32> to vector<128x1xf32>
    %cst_6 = arith.constant 1.280000e+02 : f32
    %13 = vector.broadcast %cst_6 : f32 to vector<128x1xf32>
    %14 = arith.divf %12, %13 : vector<128x1xf32>
    %15 = vector.broadcast %14 : vector<128x1xf32> to vector<128x128xf32>
    %16 = arith.subf %8, %15 : vector<128x128xf32>
    %17 = arith.mulf %16, %16 : vector<128x128xf32>
    %cst_7 = arith.constant dense<0.000000e+00> : vector<128xf32>
    %18 = vector.multi_reduction <add>, %17, %cst_7 [1] : vector<128x128xf32> to vector<128xf32>
    %19 = vector.shape_cast %18 : vector<128xf32> to vector<128x1xf32>
    %cst_8 = arith.constant 1.280000e+02 : f32
    %20 = vector.broadcast %cst_8 : f32 to vector<128x1xf32>
    %21 = arith.divf %19, %20 : vector<128x1xf32>
    %22 = vector.broadcast %14 : vector<128x1xf32> to vector<128x128xf32>
    %23 = arith.subf %8, %22 : vector<128x128xf32>
    %cst_9 = arith.constant 9.99999974E-6 : f32
    %24 = vector.broadcast %cst_9 : f32 to vector<128x1xf32>
    %25 = arith.addf %21, %24 : vector<128x1xf32>
    %26 = math.rsqrt %25 : vector<128x1xf32>
    %27 = vector.broadcast %26 : vector<128x1xf32> to vector<128x128xf32>
    %28 = arith.mulf %23, %27 : vector<128x128xf32>
    %29 = vector.broadcast %9 : vector<1x128xf32> to vector<128x128xf32>
    %30 = arith.mulf %28, %29 : vector<128x128xf32>
    %31 = vector.broadcast %10 : vector<1x128xf32> to vector<128x128xf32>
    %32 = arith.addf %30, %31 : vector<128x128xf32>
    %33 = arith.truncf %32 : vector<128x128xf32> to vector<128x128xbf16>
    %c0_10 = arith.constant 0 : index
    %c0_11 = arith.constant 0 : index
    %34 = vector.load %arg6[%c0_10, %c0_11] : memref<128x128xbf16, #tpu.memory_space<vmem>>, vector<128x128xbf16>
    %cst_12 = arith.constant dense<0.000000e+00> : vector<128x128xf32>
    %35 = tpu.matmul %33, %34, %cst_12 {dimension_numbers = #tpu.dot_dimension_numbers<[1], [0], [0], [1], [0, 0, 1, 1], [], []>} : vector<128x128xbf16>, vector<128x128xbf16>, vector<128x128xf32> -> vector<128x128xf32>
    %c0_13 = arith.constant 0 : index
    %c0_14 = arith.constant 0 : index
    %36 = vector.load %arg7[%c0_13, %c0_14] : memref<1x128xf32, #tpu.memory_space<vmem>>, vector<1x128xf32>
    %37 = vector.broadcast %36 : vector<1x128xf32> to vector<128x128xf32>
    %38 = arith.addf %35, %37 : vector<128x128xf32>
    %cst_15 = arith.constant 0.176776692 : f32
    %39 = vector.broadcast %cst_15 : f32 to vector<128x128xf32>
    %40 = arith.mulf %38, %39 : vector<128x128xf32>
    %41 = arith.truncf %40 : vector<128x128xf32> to vector<128x128xbf16>
    %42 = vector.extract_strided_slice %41 {offsets = [0, 0], sizes = [128, 32], strides = [1, 1]} : vector<128x128xbf16> to vector<128x32xbf16>
    %43 = vector.extract_strided_slice %41 {offsets = [0, 32], sizes = [128, 32], strides = [1, 1]} : vector<128x128xbf16> to vector<128x32xbf16>
    %44 = vector.extract_strided_slice %41 {offsets = [0, 64], sizes = [128, 32], strides = [1, 1]} : vector<128x128xbf16> to vector<128x32xbf16>
    %45 = vector.extract_strided_slice %41 {offsets = [0, 96], sizes = [128, 32], strides = [1, 1]} : vector<128x128xbf16> to vector<128x32xbf16>
    %46 = vector.shape_cast %42 : vector<128x32xbf16> to vector<1x128x32xbf16>
    %47 = vector.shape_cast %43 : vector<128x32xbf16> to vector<1x128x32xbf16>
    %48 = vector.shape_cast %44 : vector<128x32xbf16> to vector<1x128x32xbf16>
    %49 = vector.shape_cast %45 : vector<128x32xbf16> to vector<1x128x32xbf16>
    %50 = tpu.concatenate %46, %47, %48, %49 in 0 : vector<1x128x32xbf16>, vector<1x128x32xbf16>, vector<1x128x32xbf16>, vector<1x128x32xbf16> -> vector<4x128x32xbf16>
    %51 = tpu.iota {dimensions = array<i32: 0>} : vector<128x128xi32>
    %52 = tpu.iota {dimensions = array<i32: 1>} : vector<128x128xi32>
    %cst_16 = arith.constant -1.000000e+30 : f32
    %53 = vector.broadcast %cst_16 : f32 to vector<4x128x1xf32>
    %cst_17 = arith.constant 0.000000e+00 : f32
    %54 = vector.broadcast %cst_17 : f32 to vector<4x128x1xf32>
    %cst_18 = arith.constant 0.000000e+00 : f32
    %55 = vector.broadcast %cst_18 : f32 to vector<4x128x32xf32>
    %c1_i32 = arith.constant 1 : i32
    %56 = arith.addi %arg1, %c1_i32 : i32
    %c0_i32_19 = arith.constant 0 : i32
    %57 = arith.subi %56, %c0_i32_19 : i32
    %58 = arith.addi %c0_i32_19, %57 : i32
    %c1_i32_20 = arith.constant 1 : i32
    %59:3 = scf.for %arg21 = %c0_i32_19 to %58 step %c1_i32_20 iter_args(%arg22 = %53, %arg23 = %54, %arg24 = %55) -> (vector<4x128x1xf32>, vector<4x128x1xf32>, vector<4x128x32xf32>)  : i32 {
      %133 = arith.index_cast %arg21 : i32 to index
      %c0_52 = arith.constant 0 : index
      %c0_53 = arith.constant 0 : index
      %c0_54 = arith.constant 0 : index
      %134 = vector.load %arg19[%133, %c0_52, %c0_53, %c0_54] : memref<2x4x32x128xbf16, #tpu.memory_space<vmem>>, vector<1x4x32x128xbf16>
      %135 = vector.shape_cast %134 : vector<1x4x32x128xbf16> to vector<4x32x128xbf16>
      %136 = arith.index_cast %arg21 : i32 to index
      %c0_55 = arith.constant 0 : index
      %c0_56 = arith.constant 0 : index
      %c0_57 = arith.constant 0 : index
      %137 = vector.load %arg20[%136, %c0_55, %c0_56, %c0_57] : memref<2x4x32x128xbf16, #tpu.memory_space<vmem>>, vector<1x4x32x128xbf16>
      %138 = vector.shape_cast %137 : vector<1x4x32x128xbf16> to vector<4x32x128xbf16>
      "tpu.trace_start"() <{level = 10 : i32, message = "hqd,hdk->hqk"}> : () -> ()
      %cst_58 = arith.constant dense<0.000000e+00> : vector<4x128x128xf32>
      %139 = tpu.matmul %50, %135, %cst_58 {dimension_numbers = #tpu.dot_dimension_numbers<[2], [1], [1], [2], [0, 0, 0, 1, 1, 2], [0], [0]>} : vector<4x128x32xbf16>, vector<4x32x128xbf16>, vector<4x128x128xf32> -> vector<4x128x128xf32>
      "tpu.trace_stop"() : () -> ()
      %c128_i32_59 = arith.constant 128 : i32
      %140 = arith.muli %arg21, %c128_i32_59 : i32
      %141 = arith.subi %4, %140 : i32
      %142 = vector.broadcast %141 : i32 to vector<128x128xi32>
      %143 = arith.addi %51, %142 : vector<128x128xi32>
      %144 = arith.cmpi sge, %143, %52 : vector<128x128xi32>
      %cst_60 = arith.constant 0.000000e+00 : f32
      %cst_61 = arith.constant -1.000000e+09 : f32
      %145 = vector.broadcast %cst_60 : f32 to vector<128x128xf32>
      %146 = vector.broadcast %cst_61 : f32 to vector<128x128xf32>
      %147 = arith.select %144, %145, %146 : vector<128x128xi1>, vector<128x128xf32>
      %c0_62 = arith.constant 0 : index
      %148 = arith.index_cast %arg21 : i32 to index
      %c0_63 = arith.constant 0 : index
      %c0_64 = arith.constant 0 : index
      %149 = vector.load %arg3[%c0_62, %148, %c0_63, %c0_64] : memref<1x2x1x128xf32, #tpu.memory_space<vmem>>, vector<1x1x1x128xf32>
      %150 = vector.shape_cast %149 : vector<1x1x1x128xf32> to vector<1x128xf32>
      %151 = vector.broadcast %150 : vector<1x128xf32> to vector<128x128xf32>
      %152 = arith.addf %147, %151 : vector<128x128xf32>
      %153 = vector.shape_cast %152 : vector<128x128xf32> to vector<1x128x128xf32>
      %154 = vector.broadcast %153 : vector<1x128x128xf32> to vector<4x128x128xf32>
      %155 = arith.addf %139, %154 : vector<4x128x128xf32>
      %cst_65 = arith.constant dense<0xFF800000> : vector<4x128xf32>
      %156 = vector.multi_reduction <maximumf>, %155, %cst_65 [2] : vector<4x128x128xf32> to vector<4x128xf32>
      %157 = vector.shape_cast %156 : vector<4x128xf32> to vector<4x128x1xf32>
      %158 = arith.maximumf %arg22, %157 : vector<4x128x1xf32>
      %159 = arith.subf %arg22, %158 : vector<4x128x1xf32>
      %160 = math.exp %159 : vector<4x128x1xf32>
      %161 = vector.broadcast %158 : vector<4x128x1xf32> to vector<4x128x128xf32>
      %162 = arith.subf %155, %161 : vector<4x128x128xf32>
      %163 = math.exp %162 : vector<4x128x128xf32>
      %164 = arith.mulf %160, %arg23 : vector<4x128x1xf32>
      %cst_66 = arith.constant dense<0.000000e+00> : vector<4x128xf32>
      %165 = vector.multi_reduction <add>, %163, %cst_66 [2] : vector<4x128x128xf32> to vector<4x128xf32>
      %166 = vector.shape_cast %165 : vector<4x128xf32> to vector<4x128x1xf32>
      %167 = arith.addf %164, %166 : vector<4x128x1xf32>
      %168 = arith.truncf %163 : vector<4x128x128xf32> to vector<4x128x128xbf16>
      "tpu.trace_start"() <{level = 10 : i32, message = "hqk,hdk->hqd"}> : () -> ()
      %cst_67 = arith.constant dense<0.000000e+00> : vector<4x128x32xf32>
      %169 = tpu.matmul %168, %138, %cst_67 {dimension_numbers = #tpu.dot_dimension_numbers<[2], [2], [1], [1], [0, 0, 0, 1, 1, 1], [0], [0]>} : vector<4x128x128xbf16>, vector<4x32x128xbf16>, vector<4x128x32xf32> -> vector<4x128x32xf32>
      "tpu.trace_stop"() : () -> ()
      %170 = vector.broadcast %160 : vector<4x128x1xf32> to vector<4x128x32xf32>
      %171 = arith.mulf %170, %arg24 : vector<4x128x32xf32>
      %172 = arith.addf %171, %169 : vector<4x128x32xf32>
      scf.yield %158, %167, %172 : vector<4x128x1xf32>, vector<4x128x1xf32>, vector<4x128x32xf32>
    }
    %60 = tpu.reciprocal %59#1 {approx = true} : vector<4x128x1xf32> -> vector<4x128x1xf32>
    %61 = vector.broadcast %60 : vector<4x128x1xf32> to vector<4x128x32xf32>
    %62 = arith.mulf %59#2, %61 : vector<4x128x32xf32>
    %63 = vector.extract_strided_slice %62 {offsets = [0, 0, 0], sizes = [1, 128, 32], strides = [1, 1, 1]} : vector<4x128x32xf32> to vector<1x128x32xf32>
    %64 = vector.shape_cast %63 : vector<1x128x32xf32> to vector<128x32xf32>
    %65 = vector.extract_strided_slice %62 {offsets = [1, 0, 0], sizes = [1, 128, 32], strides = [1, 1, 1]} : vector<4x128x32xf32> to vector<1x128x32xf32>
    %66 = vector.shape_cast %65 : vector<1x128x32xf32> to vector<128x32xf32>
    %67 = vector.extract_strided_slice %62 {offsets = [2, 0, 0], sizes = [1, 128, 32], strides = [1, 1, 1]} : vector<4x128x32xf32> to vector<1x128x32xf32>
    %68 = vector.shape_cast %67 : vector<1x128x32xf32> to vector<128x32xf32>
    %69 = vector.extract_strided_slice %62 {offsets = [3, 0, 0], sizes = [1, 128, 32], strides = [1, 1, 1]} : vector<4x128x32xf32> to vector<1x128x32xf32>
    %70 = vector.shape_cast %69 : vector<1x128x32xf32> to vector<128x32xf32>
    %71 = tpu.concatenate %64, %66, %68, %70 in 1 : vector<128x32xf32>, vector<128x32xf32>, vector<128x32xf32>, vector<128x32xf32> -> vector<128x128xf32>
    %72 = arith.truncf %71 : vector<128x128xf32> to vector<128x128xbf16>
    %c0_21 = arith.constant 0 : index
    %c0_22 = arith.constant 0 : index
    %73 = vector.load %arg10[%c0_21, %c0_22] : memref<128x128xbf16, #tpu.memory_space<vmem>>, vector<128x128xbf16>
    %cst_23 = arith.constant dense<0.000000e+00> : vector<128x128xf32>
    %74 = tpu.matmul %72, %73, %cst_23 {dimension_numbers = #tpu.dot_dimension_numbers<[1], [0], [0], [1], [0, 0, 1, 1], [], []>} : vector<128x128xbf16>, vector<128x128xbf16>, vector<128x128xf32> -> vector<128x128xf32>
    %c0_24 = arith.constant 0 : index
    %c0_25 = arith.constant 0 : index
    %75 = vector.load %arg11[%c0_24, %c0_25] : memref<1x128xf32, #tpu.memory_space<vmem>>, vector<1x128xf32>
    %76 = vector.broadcast %75 : vector<1x128xf32> to vector<128x128xf32>
    %77 = arith.addf %74, %76 : vector<128x128xf32>
    %78 = arith.addf %8, %77 : vector<128x128xf32>
    %c0_26 = arith.constant 0 : index
    %c0_27 = arith.constant 0 : index
    %79 = vector.load %arg12[%c0_26, %c0_27] : memref<1x128xf32, #tpu.memory_space<vmem>>, vector<1x128xf32>
    %c0_28 = arith.constant 0 : index
    %c0_29 = arith.constant 0 : index
    %80 = vector.load %arg13[%c0_28, %c0_29] : memref<1x128xf32, #tpu.memory_space<vmem>>, vector<1x128xf32>
    %cst_30 = arith.constant dense<0.000000e+00> : vector<128xf32>
    %81 = vector.multi_reduction <add>, %78, %cst_30 [1] : vector<128x128xf32> to vector<128xf32>
    %82 = vector.shape_cast %81 : vector<128xf32> to vector<128x1xf32>
    %cst_31 = arith.constant 1.280000e+02 : f32
    %83 = vector.broadcast %cst_31 : f32 to vector<128x1xf32>
    %84 = arith.divf %82, %83 : vector<128x1xf32>
    %85 = vector.broadcast %84 : vector<128x1xf32> to vector<128x128xf32>
    %86 = arith.subf %78, %85 : vector<128x128xf32>
    %87 = arith.mulf %86, %86 : vector<128x128xf32>
    %cst_32 = arith.constant dense<0.000000e+00> : vector<128xf32>
    %88 = vector.multi_reduction <add>, %87, %cst_32 [1] : vector<128x128xf32> to vector<128xf32>
    %89 = vector.shape_cast %88 : vector<128xf32> to vector<128x1xf32>
    %cst_33 = arith.constant 1.280000e+02 : f32
    %90 = vector.broadcast %cst_33 : f32 to vector<128x1xf32>
    %91 = arith.divf %89, %90 : vector<128x1xf32>
    %92 = vector.broadcast %84 : vector<128x1xf32> to vector<128x128xf32>
    %93 = arith.subf %78, %92 : vector<128x128xf32>
    %cst_34 = arith.constant 9.99999974E-6 : f32
    %94 = vector.broadcast %cst_34 : f32 to vector<128x1xf32>
    %95 = arith.addf %91, %94 : vector<128x1xf32>
    %96 = math.rsqrt %95 : vector<128x1xf32>
    %97 = vector.broadcast %96 : vector<128x1xf32> to vector<128x128xf32>
    %98 = arith.mulf %93, %97 : vector<128x128xf32>
    %99 = vector.broadcast %79 : vector<1x128xf32> to vector<128x128xf32>
    %100 = arith.mulf %98, %99 : vector<128x128xf32>
    %101 = vector.broadcast %80 : vector<1x128xf32> to vector<128x128xf32>
    %102 = arith.addf %100, %101 : vector<128x128xf32>
    %103 = arith.truncf %102 : vector<128x128xf32> to vector<128x128xbf16>
    %c0_35 = arith.constant 0 : index
    %c0_36 = arith.constant 0 : index
    %104 = vector.load %arg14[%c0_35, %c0_36] : memref<128x512xbf16, #tpu.memory_space<vmem>>, vector<128x512xbf16>
    %cst_37 = arith.constant dense<0.000000e+00> : vector<128x512xf32>
    %105 = tpu.matmul %103, %104, %cst_37 {dimension_numbers = #tpu.dot_dimension_numbers<[1], [0], [0], [1], [0, 0, 1, 1], [], []>} : vector<128x128xbf16>, vector<128x512xbf16>, vector<128x512xf32> -> vector<128x512xf32>
    %c0_38 = arith.constant 0 : index
    %c0_39 = arith.constant 0 : index
    %106 = vector.load %arg15[%c0_38, %c0_39] : memref<1x512xf32, #tpu.memory_space<vmem>>, vector<1x512xf32>
    %107 = vector.broadcast %106 : vector<1x512xf32> to vector<128x512xf32>
    %108 = arith.addf %105, %107 : vector<128x512xf32>
    %cst_40 = arith.constant 5.000000e-01 : f32
    %109 = vector.broadcast %cst_40 : f32 to vector<128x512xf32>
    %110 = arith.mulf %109, %108 : vector<128x512xf32>
    %cst_41 = arith.constant 4.471500e-02 : f32
    %111 = vector.broadcast %cst_41 : f32 to vector<128x512xf32>
    %112 = arith.mulf %111, %108 : vector<128x512xf32>
    %113 = arith.mulf %112, %108 : vector<128x512xf32>
    %114 = arith.mulf %113, %108 : vector<128x512xf32>
    %115 = arith.addf %108, %114 : vector<128x512xf32>
    %cst_42 = arith.constant 0.797884583 : f32
    %116 = vector.broadcast %cst_42 : f32 to vector<128x512xf32>
    %117 = arith.mulf %116, %115 : vector<128x512xf32>
    %118 = math.tanh %117 : vector<128x512xf32>
    %cst_43 = arith.constant 1.000000e+00 : f32
    %119 = vector.broadcast %cst_43 : f32 to vector<128x512xf32>
    %120 = arith.addf %119, %118 : vector<128x512xf32>
    %121 = arith.mulf %110, %120 : vector<128x512xf32>
    %122 = arith.truncf %121 : vector<128x512xf32> to vector<128x512xbf16>
    %c0_44 = arith.constant 0 : index
    %c0_45 = arith.constant 0 : index
    %123 = vector.load %arg16[%c0_44, %c0_45] : memref<512x128xbf16, #tpu.memory_space<vmem>>, vector<512x128xbf16>
    %cst_46 = arith.constant dense<0.000000e+00> : vector<128x128xf32>
    %124 = tpu.matmul %122, %123, %cst_46 {dimension_numbers = #tpu.dot_dimension_numbers<[1], [0], [0], [1], [0, 0, 1, 1], [], []>} : vector<128x512xbf16>, vector<512x128xbf16>, vector<128x128xf32> -> vector<128x128xf32>
    %c0_47 = arith.constant 0 : index
    %c0_48 = arith.constant 0 : index
    %125 = vector.load %arg17[%c0_47, %c0_48] : memref<1x128xf32, #tpu.memory_space<vmem>>, vector<1x128xf32>
    %126 = vector.broadcast %125 : vector<1x128xf32> to vector<128x128xf32>
    %127 = arith.addf %124, %126 : vector<128x128xf32>
    %128 = arith.addf %78, %127 : vector<128x128xf32>
    %129 = arith.truncf %128 : vector<128x128xf32> to vector<128x128xbf16>
    %c0_49 = arith.constant 0 : index
    %c0_50 = arith.constant 0 : index
    %c0_51 = arith.constant 0 : index
    %130 = vector.load %arg18[%c0_49, %c0_50, %c0_51] : memref<1x128x128xbf16, #tpu.memory_space<vmem>>, vector<1x128x128xbf16>
    %131 = vector.shape_cast %130 : vector<1x128x128xbf16> to vector<128x128xbf16>
    %132 = vector.shape_cast %129 : vector<128x128xbf16> to vector<1x128x128xbf16>
    tpu.vector_store %arg18[%c0_49, %c0_50, %c0_51], %132 {strides = array<i32>} : memref<1x128x128xbf16, #tpu.memory_space<vmem>>, vector<1x128x128xbf16>,
    return
  }
  func.func @transform_0(%arg0: i32, %arg1: i32) -> (i32, i32, i32) {
    %c0_i32 = arith.constant 0 : i32
    %c0_i32_0 = arith.constant 0 : i32
    %c0_i32_1 = arith.constant 0 : i32
    return %arg0, %c0_i32, %c0_i32_0 : i32, i32, i32
  }
  func.func @transform_1(%arg0: i32, %arg1: i32) -> (i32, i32, i32, i32) {
    %c0_i32 = arith.constant 0 : i32
    %c0_i32_0 = arith.constant 0 : i32
    %c0_i32_1 = arith.constant 0 : i32
    %c0_i32_2 = arith.constant 0 : i32
    return %arg0, %c0_i32, %c0_i32_0, %c0_i32_1 : i32, i32, i32, i32
  }
  func.func @transform_2(%arg0: i32, %arg1: i32) -> (i32, i32) {
    %c0_i32 = arith.constant 0 : i32
    %c0_i32_0 = arith.constant 0 : i32
    %c0_i32_1 = arith.constant 0 : i32
    return %c0_i32, %c0_i32_0 : i32, i32
  }
  func.func @transform_3(%arg0: i32, %arg1: i32) -> (i32, i32) {
    %c0_i32 = arith.constant 0 : i32
    %c0_i32_0 = arith.constant 0 : i32
    %c0_i32_1 = arith.constant 0 : i32
    return %c0_i32, %c0_i32_0 : i32, i32
  }
  func.func @transform_4(%arg0: i32, %arg1: i32) -> (i32, i32) {
    %c0_i32 = arith.constant 0 : i32
    %c0_i32_0 = arith.constant 0 : i32
    %c0_i32_1 = arith.constant 0 : i32
    return %c0_i32, %c0_i32_0 : i32, i32
  }
  func.func @transform_5(%arg0: i32, %arg1: i32) -> (i32, i32) {
    %c0_i32 = arith.constant 0 : i32
    %c0_i32_0 = arith.constant 0 : i32
    %c0_i32_1 = arith.constant 0 : i32
    return %c0_i32, %c0_i32_0 : i32, i32
  }
  func.func @transform_6(%arg0: i32, %arg1: i32) -> (i32, i32) {
    %c0_i32 = arith.constant 0 : i32
    %c0_i32_0 = arith.constant 0 : i32
    %c0_i32_1 = arith.constant 0 : i32
    return %c0_i32, %c0_i32_0 : i32, i32
  }
  func.func @transform_7(%arg0: i32, %arg1: i32) -> (i32, i32) {
    %c0_i32 = arith.constant 0 : i32
    %c0_i32_0 = arith.constant 0 : i32
    %c0_i32_1 = arith.constant 0 : i32
    return %c0_i32, %c0_i32_0 : i32, i32
  }
  func.func @transform_8(%arg0: i32, %arg1: i32) -> (i32, i32) {
    %c0_i32 = arith.constant 0 : i32
    %c0_i32_0 = arith.constant 0 : i32
    %c0_i32_1 = arith.constant 0 : i32
    return %c0_i32, %c0_i32_0 : i32, i32
  }
  func.func @transform_9(%arg0: i32, %arg1: i32) -> (i32, i32) {
    %c0_i32 = arith.constant 0 : i32
    %c0_i32_0 = arith.constant 0 : i32
    %c0_i32_1 = arith.constant 0 : i32
    return %c0_i32, %c0_i32_0 : i32, i32
  }
  func.func @transform_10(%arg0: i32, %arg1: i32) -> (i32, i32) {
    %c0_i32 = arith.constant 0 : i32
    %c0_i32_0 = arith.constant 0 : i32
    %c0_i32_1 = arith.constant 0 : i32
    return %c0_i32, %c0_i32_0 : i32, i32
  }
  func.func @transform_11(%arg0: i32, %arg1: i32) -> (i32, i32) {
    %c0_i32 = arith.constant 0 : i32
    %c0_i32_0 = arith.constant 0 : i32
    %c0_i32_1 = arith.constant 0 : i32
    return %c0_i32, %c0_i32_0 : i32, i32
  }
  func.func @transform_12(%arg0: i32, %arg1: i32) -> (i32, i32) {
    %c0_i32 = arith.constant 0 : i32
    %c0_i32_0 = arith.constant 0 : i32
    %c0_i32_1 = arith.constant 0 : i32
    return %c0_i32, %c0_i32_0 : i32, i32
  }
  func.func @transform_13(%arg0: i32, %arg1: i32) -> (i32, i32) {
    %c0_i32 = arith.constant 0 : i32
    %c0_i32_0 = arith.constant 0 : i32
    %c0_i32_1 = arith.constant 0 : i32
    return %c0_i32, %c0_i32_0 : i32, i32
  }
  func.func @transform_14(%arg0: i32, %arg1: i32) -> (i32, i32) {
    %c0_i32 = arith.constant 0 : i32
    %c0_i32_0 = arith.constant 0 : i32
    %c0_i32_1 = arith.constant 0 : i32
    return %c0_i32, %c0_i32_0 : i32, i32
  }
  func.func @transform_15(%arg0: i32, %arg1: i32) -> (i32, i32) {
    %c0_i32 = arith.constant 0 : i32
    %c0_i32_0 = arith.constant 0 : i32
    %c0_i32_1 = arith.constant 0 : i32
    return %c0_i32, %c0_i32_0 : i32, i32
  }
  func.func @transform_16(%arg0: i32, %arg1: i32) -> (i32, i32, i32) {
    %c0_i32 = arith.constant 0 : i32
    %c0_i32_0 = arith.constant 0 : i32
    return %arg0, %arg1, %c0_i32 : i32, i32, i32
  }
}

</mosaic_0001>

<llo_original>
// kernel: tpu_custom_call.1
$region0: #{tpu_custom_call.1}
  #allocation0 [shape = 'u32[]', space=smem, size = 0x4, offset = 0x4, fixed_abs, tag = 'smem constant byte address 0x4 - core index']
  #allocation1 [shape = 'u32[72,128]{1,0:T(1,128)}', space=vmem, size = 0x9000, scoped, tag = 'internal scratch']
  %s0 = inlined_call_operand.hbm [shape: f32[8,128], index: 0, kind: input, shape index: {}]
  %s1 = inlined_call_operand.hbm [shape: f32[8,128], index: 1, kind: output, shape index: {}]
  %s2 = sld [smem:[#allocation0]]
  $region41: #{tpu_custom_call.1} parent=0
    _
  %s4 = ssub.s32 1, %s2
  %s5 = scalar_select 0, %s4, %s2
  $region1: #{tpu_custom_call.1} parent=0
    #allocation2 [shape = 'u8[4096]{0}', space=vmem, size = 0x1000, scoped, tag = 'input window, operand 0, single buffered']
    #allocation3 [shape = 's32[2]{0}', space=sflag, size = 0x8, scoped, tag = 'scoped memory for tpu_custom_call.1']
    #allocation4 [shape = 's32[2]{0}', space=sflag, size = 0x8, scoped, tag = 'scoped memory for tpu_custom_call.1']
    #allocation5 [shape = 'u8[4096]{0}', space=vmem, size = 0x1000, scoped, tag = 'output window, operand 0, single buffered']
    %6 = vsyncpa [#allocation3], 0
    %7 = vsyncpa [#allocation4], 0
    loop: start=0, step=1, limit=4
    $region2: #{tpu_custom_call.1} parent=1 // loop_pre_header
      _
    $region3: #{tpu_custom_call.1} parent=1 // loop_header
      %s9 = sphi 0, %s13
      %p10 = scmp.ge.s32.totalorder %s9, 4
      %s17 = sphi 0, %s17
      %s19 = sphi 0, %s17
      %s20 = sphi 0, %s19
      %s34 = sphi 0, %s20
      %s38 = sphi 0, %s38
      %s40 = sphi 0, %s38
      %s41 = sphi 0, %s40
      %s55 = sphi 0, %s41
    $region4: #{tpu_custom_call.1} parent=1 // loop_header_branch
      %12 = sbr.rel (%p10) target = $region8
    $region5: #{tpu_custom_call.1} parent=1 // loop_body
      %s14 = ssub.s32 %s9, 1
      %s15 = ssub.s32 %s9, 2
      %s16 = sadd.s32 %s9, 1
      %s18 = sadd.s32 %s17, 1
      %p21 = scmp.eq.s32.totalorder %s9, 1
      %p22 = scmp.ne.s32.totalorder %s17, %s19
      %p23 = scmp.eq.s32.totalorder %s9, 0
      %p24 = por %p22, %p23
      %p25 = scmp.ne.s32.totalorder %s17, %s19
      %p26 = scmp.eq.s32.totalorder %s14, 1
      %p27 = por %p25, %p26
      %p28 = scmp.ne.s32.totalorder %s19, %s20
      %p29 = scmp.eq.s32.totalorder %s14, 0
      %p30 = por %p28, %p29
      %p31 = scmp.ne.s32.totalorder %s19, %s20
      %p32 = scmp.eq.s32.totalorder %s15, 1
      %p33 = por %p31, %p32
      %p35 = scmp.ne.s32.totalorder %s20, %s34
      %p36 = scmp.eq.s32.totalorder %s15, 0
      %p37 = por %p35, %p36
      %s39 = sadd.s32 %s38, 1
      %p42 = scmp.eq.s32.totalorder %s9, 1
      %p43 = scmp.ne.s32.totalorder %s38, %s40
      %p44 = scmp.eq.s32.totalorder %s9, 0
      %p45 = por %p43, %p44
      %p46 = scmp.ne.s32.totalorder %s38, %s40
      %p47 = scmp.eq.s32.totalorder %s14, 1
      %p48 = por %p46, %p47
      %p49 = scmp.ne.s32.totalorder %s40, %s41
      %p50 = scmp.eq.s32.totalorder %s14, 0
      %p51 = por %p49, %p50
      %p52 = scmp.ne.s32.totalorder %s40, %s41
      %p53 = scmp.eq.s32.totalorder %s15, 1
      %p54 = por %p52, %p53
      %p56 = scmp.ne.s32.totalorder %s41, %s55
      %p57 = scmp.eq.s32.totalorder %s15, 0
      %p58 = por %p56, %p57
      %p59 = scmp.le.s32.totalorder 1, %s9
      %p60 = scmp.lt.s32.totalorder %s9, 3
      %p61 = pnand %p59, %p60
      %p62 = pneg %p61
      // Predicated region
      $region9: #{tpu_custom_call.1} parent=5 // pred_check
        _
      $region10: #{tpu_custom_call.1} parent=5 // pred_check_branch
        %64 = sbr.rel (%p61) target = $region12
      $region11: #{tpu_custom_call.1} parent=5 // pred_region
        %s65 = ssub.s32 %s9, 1
        // Predicated region
        $region13: #{tpu_custom_call.1} parent=11 // pred_check
          %p66 = pneg %p30
        $region14: #{tpu_custom_call.1} parent=11 // pred_check_branch
          %68 = sbr.rel (%p66) target = $region16
        $region15: #{tpu_custom_call.1} parent=11 // pred_region
          %70 = vsyncadd [#allocation3], 0
          %s72 = sshll.u32 %s0, 4
          %s73 = int_to_ptr.hbm [resolvable:$true] %s72
          %s74 = sshll.u32 [#allocation2], 4
          %s75 = int_to_ptr.vmem [resolvable:$true] %s74
          %77 = dma.hbm_to_vmem [thread:$0]  %s73, 128, %s75, [#allocation3]
        $region16: #{tpu_custom_call.1} parent=11 // pred_fallthru
          _
      $region12: #{tpu_custom_call.1} parent=5 // pred_fallthru
        _
      %p78 = scmp.lt.s32.totalorder %s9, 2
      // Predicated region
      $region17: #{tpu_custom_call.1} parent=5 // pred_check
        %p79 = pneg %p78
      $region18: #{tpu_custom_call.1} parent=5 // pred_check_branch
        %81 = sbr.rel (%p79) target = $region20
      $region19: #{tpu_custom_call.1} parent=5 // pred_region
        _
      $region20: #{tpu_custom_call.1} parent=5 // pred_fallthru
        _
      %p82 = scmp.le.s32.totalorder 1, %s9
      %p83 = scmp.lt.s32.totalorder %s9, 3
      %p84 = pnand %p82, %p83
      %p85 = pneg %p84
      // Predicated region
      $region21: #{tpu_custom_call.1} parent=5 // pred_check
        _
      $region22: #{tpu_custom_call.1} parent=5 // pred_check_branch
        %87 = sbr.rel (%p84) target = $region24
      $region23: #{tpu_custom_call.1} parent=5 // pred_region
        %s88 = ssub.s32 %s9, 1
        // Predicated region
        $region25: #{tpu_custom_call.1} parent=23 // pred_check
          %p89 = pneg %p30
        $region26: #{tpu_custom_call.1} parent=23 // pred_check_branch
          %91 = sbr.rel (%p89) target = $region28
        $region27: #{tpu_custom_call.1} parent=23 // pred_region
          %93 = dma.done [#allocation3], 128
        $region28: #{tpu_custom_call.1} parent=23 // pred_fallthru
          _
        %p94 = pneg %p30
        %p95 = pneg %p27
        %p96 = pneg %p51
        %p97 = pneg %p48
        %v98 = vld [vmem:[#allocation2] sm:$0xff]
        %v99 = vadd.f32 %v98, 1.0
        %100 = vst [vmem:[#allocation5] sm:$0xff] %v99
        // Predicated region
        $region29: #{tpu_custom_call.1} parent=23 // pred_check
          %p101 = pneg %p48
        $region30: #{tpu_custom_call.1} parent=23 // pred_check_branch
          %103 = sbr.rel (%p101) target = $region32
        $region31: #{tpu_custom_call.1} parent=23 // pred_region
          %105 = vsyncadd [#allocation4], 0
          %s107 = sshll.u32 [#allocation5], 4
          %s108 = int_to_ptr.vmem [resolvable:$true] %s107
          %s109 = sshll.u32 %s1, 4
          %s110 = int_to_ptr.hbm [resolvable:$true] %s109
          %112 = dma.vmem_to_hbm [thread:$0]  %s108, 128, %s110, [#allocation4]
        $region32: #{tpu_custom_call.1} parent=23 // pred_fallthru
          _
        // Predicated region
        $region33: #{tpu_custom_call.1} parent=23 // pred_check
          %p113 = pneg %p48
        $region34: #{tpu_custom_call.1} parent=23 // pred_check_branch
          %115 = sbr.rel (%p113) target = $region36
        $region35: #{tpu_custom_call.1} parent=23 // pred_region
          %117 = dma.done [#allocation4], 128
        $region36: #{tpu_custom_call.1} parent=23 // pred_fallthru
          _
      $region24: #{tpu_custom_call.1} parent=5 // pred_fallthru
        _
      %p118 = scmp.le.s32.totalorder 2, %s9
      // Predicated region
      $region37: #{tpu_custom_call.1} parent=5 // pred_check
        %p119 = pneg %p118
      $region38: #{tpu_custom_call.1} parent=5 // pred_check_branch
        %121 = sbr.rel (%p119) target = $region40
      $region39: #{tpu_custom_call.1} parent=5 // pred_region
        %s122 = ssub.s32 %s9, 2
      $region40: #{tpu_custom_call.1} parent=5 // pred_fallthru
        _
    $region6: #{tpu_custom_call.1} parent=1 // loop_footer
      %s13 = sadd.s32 1, %s9
    $region7: #{tpu_custom_call.1} parent=1 // loop_footer_branch
      %8 = sbr.rel target = $region3
    $region8: #{tpu_custom_call.1} parent=1 // loop_exit
      _
    %123 = vsyncpa [#allocation3], 1
    %s124 = scalar_lea.sflag [#allocation3], 1
    %125 = vsyncpa %s124, 1
    %126 = vsyncpa [#allocation4], 1
    %s127 = scalar_lea.sflag [#allocation4], 1
    %128 = vsyncpa %s127, 1

// kernel: tpu_custom_call.1
$region0: #{tpu_custom_call.1}
  #allocation0 [shape = 'u32[]', space=smem, size = 0x4, offset = 0x4, fixed_abs, tag = 'smem constant byte address 0x4 - core index']
  #allocation1 [shape = 'u32[72,128]{1,0:T(1,128)}', space=vmem, size = 0x9000, scoped, tag = 'internal scratch']
  #allocation2 [shape = 'bf16[2,4,32,128]{3,2,1,0:T(8,128)(2,1)}', space=vmem, size = 0x10000, scoped, tag = 'scratch operand']
  #allocation3 [shape = 'bf16[2,4,32,128]{3,2,1,0:T(8,128)(2,1)}', space=vmem, size = 0x10000, scoped, tag = 'scratch operand']
  %s0 = inlined_call_operand.hbm [shape: bf16[2,256,128], index: 0, kind: input, shape index: {}]
  %s1 = inlined_call_operand.hbm [shape: f32[2,2,1,128], index: 1, kind: input, shape index: {}]
  %s2 = inlined_call_operand.vmem [shape: f32[1,128], index: 2, kind: input, shape index: {}]
  %s3 = inlined_call_operand.hbm [shape: f32[1,128], index: 3, kind: input, shape index: {}]
  %s4 = inlined_call_operand.hbm [shape: bf16[128,128], index: 4, kind: input, shape index: {}]
  %s5 = inlined_call_operand.hbm [shape: f32[1,128], index: 5, kind: input, shape index: {}]
  %s6 = inlined_call_operand.hbm [shape: bf16[128,256], index: 6, kind: input, shape index: {}]
  %s7 = inlined_call_operand.vmem [shape: f32[1,256], index: 7, kind: input, shape index: {}]
  %s8 = inlined_call_operand.hbm [shape: bf16[128,128], index: 8, kind: input, shape index: {}]
  %s9 = inlined_call_operand.vmem [shape: f32[1,128], index: 9, kind: input, shape index: {}]
  %s10 = inlined_call_operand.vmem [shape: f32[1,128], index: 10, kind: input, shape index: {}]
  %s11 = inlined_call_operand.vmem [shape: f32[1,128], index: 11, kind: input, shape index: {}]
  %s12 = inlined_call_operand.hbm [shape: bf16[128,512], index: 12, kind: input, shape index: {}]
  %s13 = inlined_call_operand.vmem [shape: f32[1,512], index: 13, kind: input, shape index: {}]
  %s14 = inlined_call_operand.hbm [shape: bf16[512,128], index: 14, kind: input, shape index: {}]
  %s15 = inlined_call_operand.vmem [shape: f32[1,128], index: 15, kind: input, shape index: {}]
  %s16 = inlined_call_operand.hbm [shape: bf16[2,256,128], index: 16, kind: output, shape index: {}]
  %s17 = sld [smem:[#allocation0]]
  $region144: #{tpu_custom_call.1} parent=0
    _
  %s19 = ssub.s32 1, %s17
  %s20 = scalar_select 0, %s19, %s17
  $region1: #{tpu_custom_call.1} parent=0
    #allocation4 [shape = 'u8[131072]{0}', space=vmem, size = 0x20000, scoped, tag = 'input window, operand 0']
    #allocation5 [shape = 's32[2]{0}', space=sflag, size = 0x8, scoped, tag = 'scoped memory for tpu_custom_call.1']
    #allocation6 [shape = 's32[2]{0}', space=sflag, size = 0x8, scoped, tag = 'scoped memory for tpu_custom_call.1']
    #allocation7 [shape = 'u8[2048]{0}', space=vmem, size = 0x800, scoped, tag = 'input window, operand 1']
    #allocation8 [shape = 's32[2]{0}', space=sflag, size = 0x8, scoped, tag = 'scoped memory for tpu_custom_call.1']
    #allocation9 [shape = 'u8[512]{0}', space=vmem, size = 0x400, scoped, tag = 'input window, operand 3, single buffered']
    #allocation10 [shape = 'u8[32768]{0}', space=vmem, size = 0x8000, scoped, tag = 'input window, operand 4, single buffered']
    #allocation11 [shape = 's32[1]{0}', space=sflag, size = 0x4, scoped, tag = 'scoped memory for tpu_custom_call.1']
    #allocation12 [shape = 'u8[512]{0}', space=vmem, size = 0x400, scoped, tag = 'input window, operand 5, single buffered']
    #allocation13 [shape = 'u8[65536]{0}', space=vmem, size = 0x10000, scoped, tag = 'input window, operand 6, single buffered']
    #allocation14 [shape = 's32[1]{0}', space=sflag, size = 0x4, scoped, tag = 'scoped memory for tpu_custom_call.1']
    #allocation15 [shape = 'u8[32768]{0}', space=vmem, size = 0x8000, scoped, tag = 'input window, operand 8, single buffered']
    #allocation16 [shape = 'u8[131072]{0}', space=vmem, size = 0x20000, scoped, tag = 'input window, operand 12, single buffered']
    #allocation17 [shape = 's32[1]{0}', space=sflag, size = 0x4, scoped, tag = 'scoped memory for tpu_custom_call.1']
    #allocation18 [shape = 'u8[131072]{0}', space=vmem, size = 0x20000, scoped, tag = 'input window, operand 14, single buffered']
    #allocation19 [shape = 'u8[65536]{0}', space=vmem, size = 0x10000, scoped, tag = 'output window, operand 0']
    %21 = vsyncpa [#allocation5], 0
    %s22 = scalar_lea.sflag [#allocation5], 1
    %23 = vsyncpa %s22, 0
    %24 = vsyncpa [#allocation8], 0
    %s25 = scalar_lea.sflag [#allocation8], 1
    %26 = vsyncpa %s25, 0
    %27 = vsyncpa [#allocation11], 0
    %28 = vsyncpa [#allocation14], 0
    %29 = vsyncpa [#allocation17], 0
    %30 = vsyncpa [#allocation6], 0
    %s31 = scalar_lea.sflag [#allocation6], 1
    %32 = vsyncpa %s31, 0
    loop: start=0, step=1, limit=6
    $region2: #{tpu_custom_call.1} parent=1 // loop_pre_header
      _
    $region3: #{tpu_custom_call.1} parent=1 // loop_header
      %s34 = sphi 0, %s38
      %p35 = scmp.ge.s32.totalorder %s34, 6
      %s41 = sphi 0, %s53
      %s42 = sphi 0, %s49
      %s43 = sphi 0, %s41
      %s44 = sphi 0, %s42
      %s45 = sphi 0, %s43
      %s46 = sphi 0, %s44
      %s56 = sphi 0, %s58
      %s59 = sphi 0, %s56
      %s60 = sphi 0, %s59
      %s76 = sphi 0, %s60
      %s82 = sphi 0, %s84
      %s85 = sphi 0, %s82
      %s86 = sphi 0, %s85
      %s102 = sphi 0, %s86
      %s106 = sphi 0, %s106
      %s108 = sphi 0, %s106
      %s109 = sphi 0, %s108
      %s123 = sphi 0, %s109
      %s127 = sphi 0, %s127
      %s129 = sphi 0, %s127
      %s130 = sphi 0, %s129
      %s144 = sphi 0, %s130
      %s148 = sphi 0, %s148
      %s150 = sphi 0, %s148
      %s151 = sphi 0, %s150
      %s165 = sphi 0, %s151
      %s169 = sphi 0, %s169
      %s171 = sphi 0, %s169
      %s172 = sphi 0, %s171
      %s186 = sphi 0, %s172
      %s190 = sphi 0, %s190
      %s192 = sphi 0, %s190
      %s193 = sphi 0, %s192
      %s207 = sphi 0, %s193
      %s211 = sphi 0, %s211
      %s213 = sphi 0, %s211
      %s214 = sphi 0, %s213
      %s228 = sphi 0, %s214
      %s232 = sphi 0, %s232
      %s234 = sphi 0, %s232
      %s235 = sphi 0, %s234
      %s249 = sphi 0, %s235
      %s253 = sphi 0, %s253
      %s255 = sphi 0, %s253
      %s256 = sphi 0, %s255
      %s270 = sphi 0, %s256
      %s274 = sphi 0, %s274
      %s276 = sphi 0, %s274
      %s277 = sphi 0, %s276
      %s291 = sphi 0, %s277
      %s295 = sphi 0, %s295
      %s297 = sphi 0, %s295
      %s298 = sphi 0, %s297
      %s312 = sphi 0, %s298
      %s316 = sphi 0, %s316
      %s318 = sphi 0, %s316
      %s319 = sphi 0, %s318
      %s333 = sphi 0, %s319
      %s337 = sphi 0, %s337
      %s339 = sphi 0, %s337
      %s340 = sphi 0, %s339
      %s354 = sphi 0, %s340
      %s358 = sphi 0, %s358
      %s360 = sphi 0, %s358
      %s361 = sphi 0, %s360
      %s375 = sphi 0, %s361
      %s379 = sphi 0, %s379
      %s381 = sphi 0, %s379
      %s382 = sphi 0, %s381
      %s396 = sphi 0, %s382
      %s404 = sphi 0, %s406
      %s407 = sphi 0, %s404
      %s408 = sphi 0, %s407
      %s424 = sphi 0, %s408
    $region4: #{tpu_custom_call.1} parent=1 // loop_header_branch
      %37 = sbr.rel (%p35) target = $region8
    $region5: #{tpu_custom_call.1} parent=1 // loop_body
      %s39 = ssub.s32 %s34, 1
      %s40 = ssub.s32 %s34, 2
      %s47 = sadd.s32 1, %s42
      %p48 = scmp.ge.s32.totalorder %s47, 2
      %s49 = scalar_select %p48, 0, %s47
      %s50 = sadd.s32 1, %s41
      %s51 = scalar_select %p48, %s50, %s41
      %p52 = scmp.ge.s32.totalorder %s51, 2
      %s53 = scalar_select %p52, 0, %s51
      %s54 = ssub.s32 %s41, %s53
      %p55 = scmp.eq.s32.totalorder %s54, 0
      %s57 = sadd.s32 %s56, 1
      %s58 = scalar_select %p55, %s56, %s57
      %p61 = pneg %p55
      %p62 = scmp.eq.s32.totalorder %s34, 3
      %p63 = por %p61, %p62
      %p64 = scmp.ne.s32.totalorder %s56, %s59
      %p65 = scmp.eq.s32.totalorder %s34, 0
      %p66 = por %p64, %p65
      %p67 = scmp.ne.s32.totalorder %s56, %s59
      %p68 = scmp.eq.s32.totalorder %s39, 3
      %p69 = por %p67, %p68
      %p70 = scmp.ne.s32.totalorder %s59, %s60
      %p71 = scmp.eq.s32.totalorder %s39, 0
      %p72 = por %p70, %p71
      %p73 = scmp.ne.s32.totalorder %s59, %s60
      %p74 = scmp.eq.s32.totalorder %s40, 3
      %p75 = por %p73, %p74
      %p77 = scmp.ne.s32.totalorder %s60, %s76
      %p78 = scmp.eq.s32.totalorder %s40, 0
      %p79 = por %p77, %p78
      %s80 = ssub.s32 %s41, %s53
      %p81 = scmp.eq.s32.totalorder %s80, 0
      %s83 = sadd.s32 %s82, 1
      %s84 = scalar_select %p81, %s82, %s83
      %p87 = pneg %p81
      %p88 = scmp.eq.s32.totalorder %s34, 3
      %p89 = por %p87, %p88
      %p90 = scmp.ne.s32.totalorder %s82, %s85
      %p91 = scmp.eq.s32.totalorder %s34, 0
      %p92 = por %p90, %p91
      %p93 = scmp.ne.s32.totalorder %s82, %s85
      %p94 = scmp.eq.s32.totalorder %s39, 3
      %p95 = por %p93, %p94
      %p96 = scmp.ne.s32.totalorder %s85, %s86
      %p97 = scmp.eq.s32.totalorder %s39, 0
      %p98 = por %p96, %p97
      %p99 = scmp.ne.s32.totalorder %s85, %s86
      %p100 = scmp.eq.s32.totalorder %s40, 3
      %p101 = por %p99, %p100
      %p103 = scmp.ne.s32.totalorder %s86, %s102
      %p104 = scmp.eq.s32.totalorder %s40, 0
      %p105 = por %p103, %p104
      %s107 = sadd.s32 %s106, 1
      %p110 = scmp.eq.s32.totalorder %s34, 3
      %p111 = scmp.ne.s32.totalorder %s106, %s108
      %p112 = scmp.eq.s32.totalorder %s34, 0
      %p113 = por %p111, %p112
      %p114 = scmp.ne.s32.totalorder %s106, %s108
      %p115 = scmp.eq.s32.totalorder %s39, 3
      %p116 = por %p114, %p115
      %p117 = scmp.ne.s32.totalorder %s108, %s109
      %p118 = scmp.eq.s32.totalorder %s39, 0
      %p119 = por %p117, %p118
      %p120 = scmp.ne.s32.totalorder %s108, %s109
      %p121 = scmp.eq.s32.totalorder %s40, 3
      %p122 = por %p120, %p121
      %p124 = scmp.ne.s32.totalorder %s109, %s123
      %p125 = scmp.eq.s32.totalorder %s40, 0
      %p126 = por %p124, %p125
      %s128 = sadd.s32 %s127, 1
      %p131 = scmp.eq.s32.totalorder %s34, 3
      %p132 = scmp.ne.s32.totalorder %s127, %s129
      %p133 = scmp.eq.s32.totalorder %s34, 0
      %p134 = por %p132, %p133
      %p135 = scmp.ne.s32.totalorder %s127, %s129
      %p136 = scmp.eq.s32.totalorder %s39, 3
      %p137 = por %p135, %p136
      %p138 = scmp.ne.s32.totalorder %s129, %s130
      %p139 = scmp.eq.s32.totalorder %s39, 0
      %p140 = por %p138, %p139
      %p141 = scmp.ne.s32.totalorder %s129, %s130
      %p142 = scmp.eq.s32.totalorder %s40, 3
      %p143 = por %p141, %p142
      %p145 = scmp.ne.s32.totalorder %s130, %s144
      %p146 = scmp.eq.s32.totalorder %s40, 0
      %p147 = por %p145, %p146
      %s149 = sadd.s32 %s148, 1
      %p152 = scmp.eq.s32.totalorder %s34, 3
      %p153 = scmp.ne.s32.totalorder %s148, %s150
      %p154 = scmp.eq.s32.totalorder %s34, 0
      %p155 = por %p153, %p154
      %p156 = scmp.ne.s32.totalorder %s148, %s150
      %p157 = scmp.eq.s32.totalorder %s39, 3
      %p158 = por %p156, %p157
      %p159 = scmp.ne.s32.totalorder %s150, %s151
      %p160 = scmp.eq.s32.totalorder %s39, 0
      %p161 = por %p159, %p160
      %p162 = scmp.ne.s32.totalorder %s150, %s151
      %p163 = scmp.eq.s32.totalorder %s40, 3
      %p164 = por %p162, %p163
      %p166 = scmp.ne.s32.totalorder %s151, %s165
      %p167 = scmp.eq.s32.totalorder %s40, 0
      %p168 = por %p166, %p167
      %s170 = sadd.s32 %s169, 1
      %p173 = scmp.eq.s32.totalorder %s34, 3
      %p174 = scmp.ne.s32.totalorder %s169, %s171
      %p175 = scmp.eq.s32.totalorder %s34, 0
      %p176 = por %p174, %p175
      %p177 = scmp.ne.s32.totalorder %s169, %s171
      %p178 = scmp.eq.s32.totalorder %s39, 3
      %p179 = por %p177, %p178
      %p180 = scmp.ne.s32.totalorder %s171, %s172
      %p181 = scmp.eq.s32.totalorder %s39, 0
      %p182 = por %p180, %p181
      %p183 = scmp.ne.s32.totalorder %s171, %s172
      %p184 = scmp.eq.s32.totalorder %s40, 3
      %p185 = por %p183, %p184
      %p187 = scmp.ne.s32.totalorder %s172, %s186
      %p188 = scmp.eq.s32.totalorder %s40, 0
      %p189 = por %p187, %p188
      %s191 = sadd.s32 %s190, 1
      %p194 = scmp.eq.s32.totalorder %s34, 3
      %p195 = scmp.ne.s32.totalorder %s190, %s192
      %p196 = scmp.eq.s32.totalorder %s34, 0
      %p197 = por %p195, %p196
      %p198 = scmp.ne.s32.totalorder %s190, %s192
      %p199 = scmp.eq.s32.totalorder %s39, 3
      %p200 = por %p198, %p199
      %p201 = scmp.ne.s32.totalorder %s192, %s193
      %p202 = scmp.eq.s32.totalorder %s39, 0
      %p203 = por %p201, %p202
      %p204 = scmp.ne.s32.totalorder %s192, %s193
      %p205 = scmp.eq.s32.totalorder %s40, 3
      %p206 = por %p204, %p205
      %p208 = scmp.ne.s32.totalorder %s193, %s207
      %p209 = scmp.eq.s32.totalorder %s40, 0
      %p210 = por %p208, %p209
      %s212 = sadd.s32 %s211, 1
      %p215 = scmp.eq.s32.totalorder %s34, 3
      %p216 = scmp.ne.s32.totalorder %s211, %s213
      %p217 = scmp.eq.s32.totalorder %s34, 0
      %p218 = por %p216, %p217
      %p219 = scmp.ne.s32.totalorder %s211, %s213
      %p220 = scmp.eq.s32.totalorder %s39, 3
      %p221 = por %p219, %p220
      %p222 = scmp.ne.s32.totalorder %s213, %s214
      %p223 = scmp.eq.s32.totalorder %s39, 0
      %p224 = por %p222, %p223
      %p225 = scmp.ne.s32.totalorder %s213, %s214
      %p226 = scmp.eq.s32.totalorder %s40, 3
      %p227 = por %p225, %p226
      %p229 = scmp.ne.s32.totalorder %s214, %s228
      %p230 = scmp.eq.s32.totalorder %s40, 0
      %p231 = por %p229, %p230
      %s233 = sadd.s32 %s232, 1
      %p236 = scmp.eq.s32.totalorder %s34, 3
      %p237 = scmp.ne.s32.totalorder %s232, %s234
      %p238 = scmp.eq.s32.totalorder %s34, 0
      %p239 = por %p237, %p238
      %p240 = scmp.ne.s32.totalorder %s232, %s234
      %p241 = scmp.eq.s32.totalorder %s39, 3
      %p242 = por %p240, %p241
      %p243 = scmp.ne.s32.totalorder %s234, %s235
      %p244 = scmp.eq.s32.totalorder %s39, 0
      %p245 = por %p243, %p244
      %p246 = scmp.ne.s32.totalorder %s234, %s235
      %p247 = scmp.eq.s32.totalorder %s40, 3
      %p248 = por %p246, %p247
      %p250 = scmp.ne.s32.totalorder %s235, %s249
      %p251 = scmp.eq.s32.totalorder %s40, 0
      %p252 = por %p250, %p251
      %s254 = sadd.s32 %s253, 1
      %p257 = scmp.eq.s32.totalorder %s34, 3
      %p258 = scmp.ne.s32.totalorder %s253, %s255
      %p259 = scmp.eq.s32.totalorder %s34, 0
      %p260 = por %p258, %p259
      %p261 = scmp.ne.s32.totalorder %s253, %s255
      %p262 = scmp.eq.s32.totalorder %s39, 3
      %p263 = por %p261, %p262
      %p264 = scmp.ne.s32.totalorder %s255, %s256
      %p265 = scmp.eq.s32.totalorder %s39, 0
      %p266 = por %p264, %p265
      %p267 = scmp.ne.s32.totalorder %s255, %s256
      %p268 = scmp.eq.s32.totalorder %s40, 3
      %p269 = por %p267, %p268
      %p271 = scmp.ne.s32.totalorder %s256, %s270
      %p272 = scmp.eq.s32.totalorder %s40, 0
      %p273 = por %p271, %p272
      %s275 = sadd.s32 %s274, 1
      %p278 = scmp.eq.s32.totalorder %s34, 3
      %p279 = scmp.ne.s32.totalorder %s274, %s276
      %p280 = scmp.eq.s32.totalorder %s34, 0
      %p281 = por %p279, %p280
      %p282 = scmp.ne.s32.totalorder %s274, %s276
      %p283 = scmp.eq.s32.totalorder %s39, 3
      %p284 = por %p282, %p283
      %p285 = scmp.ne.s32.totalorder %s276, %s277
      %p286 = scmp.eq.s32.totalorder %s39, 0
      %p287 = por %p285, %p286
      %p288 = scmp.ne.s32.totalorder %s276, %s277
      %p289 = scmp.eq.s32.totalorder %s40, 3
      %p290 = por %p288, %p289
      %p292 = scmp.ne.s32.totalorder %s277, %s291
      %p293 = scmp.eq.s32.totalorder %s40, 0
      %p294 = por %p292, %p293
      %s296 = sadd.s32 %s295, 1
      %p299 = scmp.eq.s32.totalorder %s34, 3
      %p300 = scmp.ne.s32.totalorder %s295, %s297
      %p301 = scmp.eq.s32.totalorder %s34, 0
      %p302 = por %p300, %p301
      %p303 = scmp.ne.s32.totalorder %s295, %s297
      %p304 = scmp.eq.s32.totalorder %s39, 3
      %p305 = por %p303, %p304
      %p306 = scmp.ne.s32.totalorder %s297, %s298
      %p307 = scmp.eq.s32.totalorder %s39, 0
      %p308 = por %p306, %p307
      %p309 = scmp.ne.s32.totalorder %s297, %s298
      %p310 = scmp.eq.s32.totalorder %s40, 3
      %p311 = por %p309, %p310
      %p313 = scmp.ne.s32.totalorder %s298, %s312
      %p314 = scmp.eq.s32.totalorder %s40, 0
      %p315 = por %p313, %p314
      %s317 = sadd.s32 %s316, 1
      %p320 = scmp.eq.s32.totalorder %s34, 3
      %p321 = scmp.ne.s32.totalorder %s316, %s318
      %p322 = scmp.eq.s32.totalorder %s34, 0
      %p323 = por %p321, %p322
      %p324 = scmp.ne.s32.totalorder %s316, %s318
      %p325 = scmp.eq.s32.totalorder %s39, 3
      %p326 = por %p324, %p325
      %p327 = scmp.ne.s32.totalorder %s318, %s319
      %p328 = scmp.eq.s32.totalorder %s39, 0
      %p329 = por %p327, %p328
      %p330 = scmp.ne.s32.totalorder %s318, %s319
      %p331 = scmp.eq.s32.totalorder %s40, 3
      %p332 = por %p330, %p331
      %p334 = scmp.ne.s32.totalorder %s319, %s333
      %p335 = scmp.eq.s32.totalorder %s40, 0
      %p336 = por %p334, %p335
      %s338 = sadd.s32 %s337, 1
      %p341 = scmp.eq.s32.totalorder %s34, 3
      %p342 = scmp.ne.s32.totalorder %s337, %s339
      %p343 = scmp.eq.s32.totalorder %s34, 0
      %p344 = por %p342, %p343
      %p345 = scmp.ne.s32.totalorder %s337, %s339
      %p346 = scmp.eq.s32.totalorder %s39, 3
      %p347 = por %p345, %p346
      %p348 = scmp.ne.s32.totalorder %s339, %s340
      %p349 = scmp.eq.s32.totalorder %s39, 0
      %p350 = por %p348, %p349
      %p351 = scmp.ne.s32.totalorder %s339, %s340
      %p352 = scmp.eq.s32.totalorder %s40, 3
      %p353 = por %p351, %p352
      %p355 = scmp.ne.s32.totalorder %s340, %s354
      %p356 = scmp.eq.s32.totalorder %s40, 0
      %p357 = por %p355, %p356
      %s359 = sadd.s32 %s358, 1
      %p362 = scmp.eq.s32.totalorder %s34, 3
      %p363 = scmp.ne.s32.totalorder %s358, %s360
      %p364 = scmp.eq.s32.totalorder %s34, 0
      %p365 = por %p363, %p364
      %p366 = scmp.ne.s32.totalorder %s358, %s360
      %p367 = scmp.eq.s32.totalorder %s39, 3
      %p368 = por %p366, %p367
      %p369 = scmp.ne.s32.totalorder %s360, %s361
      %p370 = scmp.eq.s32.totalorder %s39, 0
      %p371 = por %p369, %p370
      %p372 = scmp.ne.s32.totalorder %s360, %s361
      %p373 = scmp.eq.s32.totalorder %s40, 3
      %p374 = por %p372, %p373
      %p376 = scmp.ne.s32.totalorder %s361, %s375
      %p377 = scmp.eq.s32.totalorder %s40, 0
      %p378 = por %p376, %p377
      %s380 = sadd.s32 %s379, 1
      %p383 = scmp.eq.s32.totalorder %s34, 3
      %p384 = scmp.ne.s32.totalorder %s379, %s381
      %p385 = scmp.eq.s32.totalorder %s34, 0
      %p386 = por %p384, %p385
      %p387 = scmp.ne.s32.totalorder %s379, %s381
      %p388 = scmp.eq.s32.totalorder %s39, 3
      %p389 = por %p387, %p388
      %p390 = scmp.ne.s32.totalorder %s381, %s382
      %p391 = scmp.eq.s32.totalorder %s39, 0
      %p392 = por %p390, %p391
      %p393 = scmp.ne.s32.totalorder %s381, %s382
      %p394 = scmp.eq.s32.totalorder %s40, 3
      %p395 = por %p393, %p394
      %p397 = scmp.ne.s32.totalorder %s382, %s396
      %p398 = scmp.eq.s32.totalorder %s40, 0
      %p399 = por %p397, %p398
      %s400 = ssub.s32 %s41, %s53
      %s401 = ssub.s32 %s42, %s49
      %s402 = sor.u32 %s400, %s401
      %p403 = scmp.eq.s32.totalorder %s402, 0
      %s405 = sadd.s32 %s404, 1
      %s406 = scalar_select %p403, %s404, %s405
      %p409 = pneg %p403
      %p410 = scmp.eq.s32.totalorder %s34, 3
      %p411 = por %p409, %p410
      %p412 = scmp.ne.s32.totalorder %s404, %s407
      %p413 = scmp.eq.s32.totalorder %s34, 0
      %p414 = por %p412, %p413
      %p415 = scmp.ne.s32.totalorder %s404, %s407
      %p416 = scmp.eq.s32.totalorder %s39, 3
      %p417 = por %p415, %p416
      %p418 = scmp.ne.s32.totalorder %s407, %s408
      %p419 = scmp.eq.s32.totalorder %s39, 0
      %p420 = por %p418, %p419
      %p421 = scmp.ne.s32.totalorder %s407, %s408
      %p422 = scmp.eq.s32.totalorder %s40, 3
      %p423 = por %p421, %p422
      %p425 = scmp.ne.s32.totalorder %s408, %s424
      %p426 = scmp.eq.s32.totalorder %s40, 0
      %p427 = por %p425, %p426
      %p428 = scmp.le.s32.totalorder 1, %s34
      %p429 = scmp.lt.s32.totalorder %s34, 5
      %p430 = pnand %p428, %p429
      %p431 = pneg %p430
      // Predicated region
      $region9: #{tpu_custom_call.1} parent=5 // pred_check
        _
      $region10: #{tpu_custom_call.1} parent=5 // pred_check_branch
        %433 = sbr.rel (%p430) target = $region12
      $region11: #{tpu_custom_call.1} parent=5 // pred_region
        %s434 = ssub.s32 %s34, 1
        // Predicated region
        $region13: #{tpu_custom_call.1} parent=11 // pred_check
          %p435 = pneg %p119
        $region14: #{tpu_custom_call.1} parent=11 // pred_check_branch
          %437 = sbr.rel (%p435) target = $region16
        $region15: #{tpu_custom_call.1} parent=11 // pred_region
          _
        $region16: #{tpu_custom_call.1} parent=11 // pred_fallthru
          _
        // Predicated region
        $region17: #{tpu_custom_call.1} parent=11 // pred_check
          %p438 = pneg %p140
        $region18: #{tpu_custom_call.1} parent=11 // pred_check_branch
          %440 = sbr.rel (%p438) target = $region20
        $region19: #{tpu_custom_call.1} parent=11 // pred_region
          %442 = vsyncadd [#allocation8], 0
          %s444 = sshll.u32 %s3, 4
          %s445 = int_to_ptr.hbm [resolvable:$true] %s444
          %s446 = sshll.u32 [#allocation9], 4
          %s447 = int_to_ptr.vmem [resolvable:$true] %s446
          %449 = dma.hbm_to_vmem [thread:$0]  %s445, 16, %s447, [#allocation8]
        $region20: #{tpu_custom_call.1} parent=11 // pred_fallthru
          _
        // Predicated region
        $region21: #{tpu_custom_call.1} parent=11 // pred_check
          %p450 = pneg %p161
        $region22: #{tpu_custom_call.1} parent=11 // pred_check_branch
          %452 = sbr.rel (%p450) target = $region24
        $region23: #{tpu_custom_call.1} parent=11 // pred_region
          %454 = vsyncadd [#allocation11], 0
          %s455 = sshll.u32 %s4, 4
          %s456 = int_to_ptr.hbm [resolvable:$true] %s455
          %s457 = sshll.u32 [#allocation10], 4
          %s458 = int_to_ptr.vmem [resolvable:$true] %s457
          %463 = dma.hbm_to_vmem [thread:$0]  %s456, 1024, %s458, [#allocation11], 64, 64, 4
        $region24: #{tpu_custom_call.1} parent=11 // pred_fallthru
          _
        // Predicated region
        $region25: #{tpu_custom_call.1} parent=11 // pred_check
          %p464 = pneg %p182
        $region26: #{tpu_custom_call.1} parent=11 // pred_check_branch
          %466 = sbr.rel (%p464) target = $region28
        $region27: #{tpu_custom_call.1} parent=11 // pred_region
          %468 = vsyncadd [#allocation11], 0
          %s470 = sshll.u32 %s5, 4
          %s471 = int_to_ptr.hbm [resolvable:$true] %s470
          %s472 = sshll.u32 [#allocation12], 4
          %s473 = int_to_ptr.vmem [resolvable:$true] %s472
          %475 = dma.hbm_to_vmem [thread:$0]  %s471, 16, %s473, [#allocation11]
        $region28: #{tpu_custom_call.1} parent=11 // pred_fallthru
          _
        // Predicated region
        $region29: #{tpu_custom_call.1} parent=11 // pred_check
          %p476 = pneg %p203
        $region30: #{tpu_custom_call.1} parent=11 // pred_check_branch
          %478 = sbr.rel (%p476) target = $region32
        $region31: #{tpu_custom_call.1} parent=11 // pred_region
          %480 = vsyncadd [#allocation14], 0
          %s481 = sshll.u32 %s6, 4
          %s482 = int_to_ptr.hbm [resolvable:$true] %s481
          %s483 = sshll.u32 [#allocation13], 4
          %s484 = int_to_ptr.vmem [resolvable:$true] %s483
          %489 = dma.hbm_to_vmem [thread:$0]  %s482, 2048, %s484, [#allocation14], 128, 128, 8
        $region32: #{tpu_custom_call.1} parent=11 // pred_fallthru
          _
        // Predicated region
        $region33: #{tpu_custom_call.1} parent=11 // pred_check
          %p490 = pneg %p224
        $region34: #{tpu_custom_call.1} parent=11 // pred_check_branch
          %492 = sbr.rel (%p490) target = $region36
        $region35: #{tpu_custom_call.1} parent=11 // pred_region
          _
        $region36: #{tpu_custom_call.1} parent=11 // pred_fallthru
          _
        // Predicated region
        $region37: #{tpu_custom_call.1} parent=11 // pred_check
          %p493 = pneg %p245
        $region38: #{tpu_custom_call.1} parent=11 // pred_check_branch
          %495 = sbr.rel (%p493) target = $region40
        $region39: #{tpu_custom_call.1} parent=11 // pred_region
          %497 = vsyncadd [#allocation14], 0
          %s498 = sshll.u32 %s8, 4
          %s499 = int_to_ptr.hbm [resolvable:$true] %s498
          %s500 = sshll.u32 [#allocation15], 4
          %s501 = int_to_ptr.vmem [resolvable:$true] %s500
          %506 = dma.hbm_to_vmem [thread:$0]  %s499, 1024, %s501, [#allocation14], 64, 64, 4
        $region40: #{tpu_custom_call.1} parent=11 // pred_fallthru
          _
        // Predicated region
        $region41: #{tpu_custom_call.1} parent=11 // pred_check
          %p507 = pneg %p266
        $region42: #{tpu_custom_call.1} parent=11 // pred_check_branch
          %509 = sbr.rel (%p507) target = $region44
        $region43: #{tpu_custom_call.1} parent=11 // pred_region
          _
        $region44: #{tpu_custom_call.1} parent=11 // pred_fallthru
          _
        // Predicated region
        $region45: #{tpu_custom_call.1} parent=11 // pred_check
          %p510 = pneg %p287
        $region46: #{tpu_custom_call.1} parent=11 // pred_check_branch
          %512 = sbr.rel (%p510) target = $region48
        $region47: #{tpu_custom_call.1} parent=11 // pred_region
          _
        $region48: #{tpu_custom_call.1} parent=11 // pred_fallthru
          _
        // Predicated region
        $region49: #{tpu_custom_call.1} parent=11 // pred_check
          %p513 = pneg %p308
        $region50: #{tpu_custom_call.1} parent=11 // pred_check_branch
          %515 = sbr.rel (%p513) target = $region52
        $region51: #{tpu_custom_call.1} parent=11 // pred_region
          _
        $region52: #{tpu_custom_call.1} parent=11 // pred_fallthru
          _
        // Predicated region
        $region53: #{tpu_custom_call.1} parent=11 // pred_check
          %p516 = pneg %p329
        $region54: #{tpu_custom_call.1} parent=11 // pred_check_branch
          %518 = sbr.rel (%p516) target = $region56
        $region55: #{tpu_custom_call.1} parent=11 // pred_region
          %520 = vsyncadd [#allocation17], 0
          %s521 = sshll.u32 %s12, 4
          %s522 = int_to_ptr.hbm [resolvable:$true] %s521
          %s523 = sshll.u32 [#allocation16], 4
          %s524 = int_to_ptr.vmem [resolvable:$true] %s523
          %529 = dma.hbm_to_vmem [thread:$0]  %s522, 4096, %s524, [#allocation17], 256, 256, 16
        $region56: #{tpu_custom_call.1} parent=11 // pred_fallthru
          _
        // Predicated region
        $region57: #{tpu_custom_call.1} parent=11 // pred_check
          %p530 = pneg %p350
        $region58: #{tpu_custom_call.1} parent=11 // pred_check_branch
          %532 = sbr.rel (%p530) target = $region60
        $region59: #{tpu_custom_call.1} parent=11 // pred_region
          _
        $region60: #{tpu_custom_call.1} parent=11 // pred_fallthru
          _
        // Predicated region
        $region61: #{tpu_custom_call.1} parent=11 // pred_check
          %p533 = pneg %p371
        $region62: #{tpu_custom_call.1} parent=11 // pred_check_branch
          %535 = sbr.rel (%p533) target = $region64
        $region63: #{tpu_custom_call.1} parent=11 // pred_region
          %537 = vsyncadd [#allocation17], 0
          %s538 = sshll.u32 %s14, 4
          %s539 = int_to_ptr.hbm [resolvable:$true] %s538
          %s540 = sshll.u32 [#allocation18], 4
          %s541 = int_to_ptr.vmem [resolvable:$true] %s540
          %546 = dma.hbm_to_vmem [thread:$0]  %s539, 4096, %s541, [#allocation17], 64, 64, 4
        $region64: #{tpu_custom_call.1} parent=11 // pred_fallthru
          _
        // Predicated region
        $region65: #{tpu_custom_call.1} parent=11 // pred_check
          %p547 = pneg %p392
        $region66: #{tpu_custom_call.1} parent=11 // pred_check_branch
          %549 = sbr.rel (%p547) target = $region68
        $region67: #{tpu_custom_call.1} parent=11 // pred_region
          _
        $region68: #{tpu_custom_call.1} parent=11 // pred_fallthru
          _
      $region12: #{tpu_custom_call.1} parent=5 // pred_fallthru
        _
      %p550 = scmp.lt.s32.totalorder %s34, 4
      // Predicated region
      $region69: #{tpu_custom_call.1} parent=5 // pred_check
        %p551 = pneg %p550
      $region70: #{tpu_custom_call.1} parent=5 // pred_check_branch
        %553 = sbr.rel (%p551) target = $region72
      $region71: #{tpu_custom_call.1} parent=5 // pred_region
        // Predicated region
        $region73: #{tpu_custom_call.1} parent=71 // pred_check
          %p554 = pneg %p66
        $region74: #{tpu_custom_call.1} parent=71 // pred_check_branch
          %556 = sbr.rel (%p554) target = $region76
        $region75: #{tpu_custom_call.1} parent=71 // pred_region
          %s557 = sand.u32 %s56, 1
          %s558 = scalar_lea.sflag [#allocation5], %s557
          %s559 = sand.u32 %s56, 1
          %s560 = smul.addr %s559, 128
          %s561 = scalar_lea.vmem [#allocation4], %s560
          %563 = vsyncadd %s558, 0
          %s564 = smul.addr %s41, 32
          %s565 = smul.addr %s564, 4
          %s566 = scalar_lea.hbm %s0, %s565
          %s567 = sshll.u32 %s566, 4
          %s568 = int_to_ptr.hbm [resolvable:$true] %s567
          %s569 = sshll.u32 %s561, 4
          %s570 = int_to_ptr.vmem [resolvable:$true] %s569
          %575 = dma.hbm_to_vmem [thread:$0]  %s568, 2048, %s570, %s558, 64, 64, 4
        $region76: #{tpu_custom_call.1} parent=71 // pred_fallthru
          _
        // Predicated region
        $region77: #{tpu_custom_call.1} parent=71 // pred_check
          %p576 = pneg %p92
        $region78: #{tpu_custom_call.1} parent=71 // pred_check_branch
          %578 = sbr.rel (%p576) target = $region80
        $region79: #{tpu_custom_call.1} parent=71 // pred_region
          %s579 = sand.u32 %s34, 1
          %s580 = scalar_lea.sflag [#allocation8], %s579
          %s581 = sand.u32 %s82, 1
          %s582 = smul.addr %s581, 2
          %s583 = scalar_lea.vmem [#allocation7], %s582
          %585 = vsyncadd %s580, 0
          %s586 = smul.addr %s41, 2
          %s587 = scalar_lea.hbm %s1, %s586
          %s588 = sshll.u32 %s587, 4
          %s589 = int_to_ptr.hbm [resolvable:$true] %s588
          %s590 = sshll.u32 %s583, 4
          %s591 = int_to_ptr.vmem [resolvable:$true] %s590
          %596 = dma.hbm_to_vmem [thread:$0]  %s589, 32, %s591, %s580, 16, 16, 1
        $region80: #{tpu_custom_call.1} parent=71 // pred_fallthru
          _
      $region72: #{tpu_custom_call.1} parent=5 // pred_fallthru
        _
      %p597 = scmp.le.s32.totalorder 1, %s34
      %p598 = scmp.lt.s32.totalorder %s34, 5
      %p599 = pnand %p597, %p598
      %p600 = pneg %p599
      // Predicated region
      $region81: #{tpu_custom_call.1} parent=5 // pred_check
        _
      $region82: #{tpu_custom_call.1} parent=5 // pred_check_branch
        %602 = sbr.rel (%p599) target = $region84
      $region83: #{tpu_custom_call.1} parent=5 // pred_region
        %s603 = ssub.s32 %s34, 1
        %s604 = sand.u32 %s59, 1
        %s605 = scalar_lea.sflag [#allocation5], %s604
        %s606 = sand.u32 %s59, 1
        %s607 = smul.addr %s606, 128
        %s608 = scalar_lea.vmem [#allocation4], %s607
        // Predicated region
        $region85: #{tpu_custom_call.1} parent=83 // pred_check
          %p609 = pneg %p72
        $region86: #{tpu_custom_call.1} parent=83 // pred_check_branch
          %611 = sbr.rel (%p609) target = $region88
        $region87: #{tpu_custom_call.1} parent=83 // pred_region
          %613 = dma.done %s605, 2048
        $region88: #{tpu_custom_call.1} parent=83 // pred_fallthru
          _
        %s614 = sand.u32 %s39, 1
        %s615 = scalar_lea.sflag [#allocation8], %s614
        %s616 = sand.u32 %s85, 1
        %s617 = smul.addr %s616, 2
        %s618 = scalar_lea.vmem [#allocation7], %s617
        // Predicated region
        $region89: #{tpu_custom_call.1} parent=83 // pred_check
          %p619 = pneg %p98
        $region90: #{tpu_custom_call.1} parent=83 // pred_check_branch
          %621 = sbr.rel (%p619) target = $region92
        $region91: #{tpu_custom_call.1} parent=83 // pred_region
          %623 = dma.done %s615, 32
        $region92: #{tpu_custom_call.1} parent=83 // pred_fallthru
          _
        // Predicated region
        $region93: #{tpu_custom_call.1} parent=83 // pred_check
          %p624 = pneg %p140
        $region94: #{tpu_custom_call.1} parent=83 // pred_check_branch
          %626 = sbr.rel (%p624) target = $region96
        $region95: #{tpu_custom_call.1} parent=83 // pred_region
          %628 = dma.done [#allocation8], 16
        $region96: #{tpu_custom_call.1} parent=83 // pred_fallthru
          _
        // Predicated region
        $region97: #{tpu_custom_call.1} parent=83 // pred_check
          %p629 = pneg %p161
        $region98: #{tpu_custom_call.1} parent=83 // pred_check_branch
          %631 = sbr.rel (%p629) target = $region100
        $region99: #{tpu_custom_call.1} parent=83 // pred_region
          %633 = dma.done [#allocation11], 1024
        $region100: #{tpu_custom_call.1} parent=83 // pred_fallthru
          _
        // Predicated region
        $region101: #{tpu_custom_call.1} parent=83 // pred_check
          %p634 = pneg %p182
        $region102: #{tpu_custom_call.1} parent=83 // pred_check_branch
          %636 = sbr.rel (%p634) target = $region104
        $region103: #{tpu_custom_call.1} parent=83 // pred_region
          %638 = dma.done [#allocation11], 16
        $region104: #{tpu_custom_call.1} parent=83 // pred_fallthru
          _
        // Predicated region
        $region105: #{tpu_custom_call.1} parent=83 // pred_check
          %p639 = pneg %p203
        $region106: #{tpu_custom_call.1} parent=83 // pred_check_branch
          %641 = sbr.rel (%p639) target = $region108
        $region107: #{tpu_custom_call.1} parent=83 // pred_region
          %643 = dma.done [#allocation14], 2048
        $region108: #{tpu_custom_call.1} parent=83 // pred_fallthru
          _
        // Predicated region
        $region109: #{tpu_custom_call.1} parent=83 // pred_check
          %p644 = pneg %p245
        $region110: #{tpu_custom_call.1} parent=83 // pred_check_branch
          %646 = sbr.rel (%p644) target = $region112
        $region111: #{tpu_custom_call.1} parent=83 // pred_region
          %648 = dma.done [#allocation14], 1024
        $region112: #{tpu_custom_call.1} parent=83 // pred_fallthru
          _
        // Predicated region
        $region113: #{tpu_custom_call.1} parent=83 // pred_check
          %p649 = pneg %p329
        $region114: #{tpu_custom_call.1} parent=83 // pred_check_branch
          %651 = sbr.rel (%p649) target = $region116
        $region115: #{tpu_custom_call.1} parent=83 // pred_region
          %653 = dma.done [#allocation17], 4096
        $region116: #{tpu_custom_call.1} parent=83 // pred_fallthru
          _
        // Predicated region
        $region117: #{tpu_custom_call.1} parent=83 // pred_check
          %p654 = pneg %p371
        $region118: #{tpu_custom_call.1} parent=83 // pred_check_branch
          %656 = sbr.rel (%p654) target = $region120
        $region119: #{tpu_custom_call.1} parent=83 // pred_region
          %658 = dma.done [#allocation17], 4096
        $region120: #{tpu_custom_call.1} parent=83 // pred_fallthru
          _
        %s659 = sand.u32 %s59, 1
        %s660 = scalar_lea.sflag [#allocation5], %s659
        %s661 = sand.u32 %s59, 1
        %s662 = smul.addr %s661, 128
        %s663 = scalar_lea.vmem [#allocation4], %s662
        %p664 = pneg %p72
        %p665 = pneg %p69
        %s666 = sand.u32 %s39, 1
        %s667 = scalar_lea.sflag [#allocation8], %s666
        %s668 = sand.u32 %s85, 1
        %s669 = smul.addr %s668, 2
        %s670 = scalar_lea.vmem [#allocation7], %s669
        %p671 = pneg %p98
        %p672 = pneg %p95
        %p673 = pneg %p119
        %p674 = pneg %p116
        %p675 = pneg %p140
        %p676 = pneg %p137
        %p677 = pneg %p161
        %p678 = pneg %p158
        %p679 = pneg %p182
        %p680 = pneg %p179
        %p681 = pneg %p203
        %p682 = pneg %p200
        %p683 = pneg %p224
        %p684 = pneg %p221
        %p685 = pneg %p245
        %p686 = pneg %p242
        %p687 = pneg %p266
        %p688 = pneg %p263
        %p689 = pneg %p287
        %p690 = pneg %p284
        %p691 = pneg %p308
        %p692 = pneg %p305
        %p693 = pneg %p329
        %p694 = pneg %p326
        %p695 = pneg %p350
        %p696 = pneg %p347
        %p697 = pneg %p371
        %p698 = pneg %p368
        %p699 = pneg %p392
        %p700 = pneg %p389
        %p701 = pneg %p420
        %p702 = pneg %p417
        %s703 = sand.u32 %s407, 1
        %s704 = scalar_lea.sflag [#allocation6], %s703
        %s705 = sand.u32 %s407, 1
        %s706 = smul.addr %s705, 64
        %s707 = scalar_lea.vmem [#allocation19], %s706
        %s708 = smul.u32 16, %s44
        %p710 = scmp.eq.s32.totalorder %s44, 0
        // Predicated region
        $region121: #{tpu_custom_call.1} parent=83 // pred_check
          %p711 = pneg %p710
        $region122: #{tpu_custom_call.1} parent=83 // pred_check_branch
          %713 = sbr.rel (%p711) target = $region124
        $region123: #{tpu_custom_call.1} parent=83 // pred_region
          %v714 = vld [vmem:[%s608] sm:$0xf]
          %v715 = vld [vmem:[%s608 + $0x4] sm:$0xf]
          %v716 = vld [vmem:[%s608 + $0x8] sm:$0xf]
          %v717 = vld [vmem:[%s608 + $0xc] sm:$0xf]
          %v718 = vld [vmem:[%s608 + $0x10] sm:$0xf]
          %v719 = vld [vmem:[%s608 + $0x14] sm:$0xf]
          %v720 = vld [vmem:[%s608 + $0x18] sm:$0xf]
          %v721 = vld [vmem:[%s608 + $0x1c] sm:$0xf]
          %v722 = vld [vmem:[%s608 + $0x20] sm:$0xf]
          %v723 = vld [vmem:[%s608 + $0x24] sm:$0xf]
          %v724 = vld [vmem:[%s608 + $0x28] sm:$0xf]
          %v725 = vld [vmem:[%s608 + $0x2c] sm:$0xf]
          %v726 = vld [vmem:[%s608 + $0x30] sm:$0xf]
          %v727 = vld [vmem:[%s608 + $0x34] sm:$0xf]
          %v728 = vld [vmem:[%s608 + $0x38] sm:$0xf]
          %v729 = vld [vmem:[%s608 + $0x3c] sm:$0xf]
          %v730 = vld [vmem:[%s608 + $0x40] sm:$0xf]
          %v731 = vld [vmem:[%s608 + $0x44] sm:$0xf]
          %v732 = vld [vmem:[%s608 + $0x48] sm:$0xf]
          %v733 = vld [vmem:[%s608 + $0x4c] sm:$0xf]
          %v734 = vld [vmem:[%s608 + $0x50] sm:$0xf]
          %v735 = vld [vmem:[%s608 + $0x54] sm:$0xf]
          %v736 = vld [vmem:[%s608 + $0x58] sm:$0xf]
          %v737 = vld [vmem:[%s608 + $0x5c] sm:$0xf]
          %v738 = vld [vmem:[%s608 + $0x60] sm:$0xf]
          %v739 = vld [vmem:[%s608 + $0x64] sm:$0xf]
          %v740 = vld [vmem:[%s608 + $0x68] sm:$0xf]
          %v741 = vld [vmem:[%s608 + $0x6c] sm:$0xf]
          %v742 = vld [vmem:[%s608 + $0x70] sm:$0xf]
          %v743 = vld [vmem:[%s608 + $0x74] sm:$0xf]
          %v744 = vld [vmem:[%s608 + $0x78] sm:$0xf]
          %v745 = vld [vmem:[%s608 + $0x7c] sm:$0xf]
          %v746 = vld [vmem:[%s2] sm:$0x1]
          %v747 = vld [vmem:[#allocation9] sm:$0x1]
          %v748 = vunpack.c.l.bf16 %v714
          %v749 = vunpack.c.l.bf16 %v715
          %v750 = vunpack.c.l.bf16 %v716
          %v751 = vunpack.c.l.bf16 %v717
          %v752 = vunpack.c.l.bf16 %v718
          %v753 = vunpack.c.l.bf16 %v719
          %v754 = vunpack.c.l.bf16 %v720
          %v755 = vunpack.c.l.bf16 %v721
          %v756 = vunpack.c.l.bf16 %v722
          %v757 = vunpack.c.l.bf16 %v723
          %v758 = vunpack.c.l.bf16 %v724
          %v759 = vunpack.c.l.bf16 %v725
          %v760 = vunpack.c.l.bf16 %v726
          %v761 = vunpack.c.l.bf16 %v727
          %v762 = vunpack.c.l.bf16 %v728
          %v763 = vunpack.c.l.bf16 %v729
          %v764 = vunpack.c.l.bf16 %v730
          %v765 = vunpack.c.l.bf16 %v731
          %v766 = vunpack.c.l.bf16 %v732
          %v767 = vunpack.c.l.bf16 %v733
          %v768 = vunpack.c.l.bf16 %v734
          %v769 = vunpack.c.l.bf16 %v735
          %v770 = vunpack.c.l.bf16 %v736
          %v771 = vunpack.c.l.bf16 %v737
          %v772 = vunpack.c.l.bf16 %v738
          %v773 = vunpack.c.l.bf16 %v739
          %v774 = vunpack.c.l.bf16 %v740
          %v775 = vunpack.c.l.bf16 %v741
          %v776 = vunpack.c.l.bf16 %v742
          %v777 = vunpack.c.l.bf16 %v743
          %v778 = vunpack.c.l.bf16 %v744
          %v779 = vunpack.c.l.bf16 %v745
          %780 = vadd.xlane.f32.xlu0 %v748
          %v781 = vpop.xlane.xlu0 %780
          %782 = vadd.xlane.f32.xlu0 %v749
          %v783 = vpop.xlane.xlu0 %782
          %784 = vadd.xlane.f32.xlu0 %v750
          %v785 = vpop.xlane.xlu0 %784
          %786 = vadd.xlane.f32.xlu0 %v751
          %v787 = vpop.xlane.xlu0 %786
          %788 = vadd.xlane.f32.xlu0 %v752
          %v789 = vpop.xlane.xlu0 %788
          %790 = vadd.xlane.f32.xlu0 %v753
          %v791 = vpop.xlane.xlu0 %790
          %792 = vadd.xlane.f32.xlu0 %v754
          %v793 = vpop.xlane.xlu0 %792
          %794 = vadd.xlane.f32.xlu0 %v755
          %v795 = vpop.xlane.xlu0 %794
          %796 = vadd.xlane.f32.xlu0 %v756
          %v797 = vpop.xlane.xlu0 %796
          %798 = vadd.xlane.f32.xlu0 %v757
          %v799 = vpop.xlane.xlu0 %798
          %800 = vadd.xlane.f32.xlu0 %v758
          %v801 = vpop.xlane.xlu0 %800
          %802 = vadd.xlane.f32.xlu0 %v759
          %v803 = vpop.xlane.xlu0 %802
          %804 = vadd.xlane.f32.xlu0 %v760
          %v805 = vpop.xlane.xlu0 %804
          %806 = vadd.xlane.f32.xlu0 %v761
          %v807 = vpop.xlane.xlu0 %806
          %808 = vadd.xlane.f32.xlu0 %v762
          %v809 = vpop.xlane.xlu0 %808
          %810 = vadd.xlane.f32.xlu0 %v763
          %v811 = vpop.xlane.xlu0 %810
          %812 = vadd.xlane.f32.xlu0 %v764
          %v813 = vpop.xlane.xlu0 %812
          %814 = vadd.xlane.f32.xlu0 %v765
          %v815 = vpop.xlane.xlu0 %814
          %816 = vadd.xlane.f32.xlu0 %v766
          %v817 = vpop.xlane.xlu0 %816
          %818 = vadd.xlane.f32.xlu0 %v767
          %v819 = vpop.xlane.xlu0 %818
          %820 = vadd.xlane.f32.xlu0 %v768
          %v821 = vpop.xlane.xlu0 %820
          %822 = vadd.xlane.f32.xlu0 %v769
          %v823 = vpop.xlane.xlu0 %822
          %824 = vadd.xlane.f32.xlu0 %v770
          %v825 = vpop.xlane.xlu0 %824
          %826 = vadd.xlane.f32.xlu0 %v771
          %v827 = vpop.xlane.xlu0 %826
          %828 = vadd.xlane.f32.xlu0 %v772
          %v829 = vpop.xlane.xlu0 %828
          %830 = vadd.xlane.f32.xlu0 %v773
          %v831 = vpop.xlane.xlu0 %830
          %832 = vadd.xlane.f32.xlu0 %v774
          %v833 = vpop.xlane.xlu0 %832
          %834 = vadd.xlane.f32.xlu0 %v775
          %v835 = vpop.xlane.xlu0 %834
          %836 = vadd.xlane.f32.xlu0 %v776
          %v837 = vpop.xlane.xlu0 %836
          %838 = vadd.xlane.f32.xlu0 %v777
          %v839 = vpop.xlane.xlu0 %838
          %840 = vadd.xlane.f32.xlu0 %v778
          %v841 = vpop.xlane.xlu0 %840
          %842 = vadd.xlane.f32.xlu0 %v779
          %v843 = vpop.xlane.xlu0 %842
          %v844 = vrcp.pop 128.0
          %v845 = vmul.f32 128.0, %v844
          %v846 = vsub.f32 1.0, %v845
          %v847 = vmul.f32 %v844, %v846
          %v848 = vadd.f32 %v844, %v847
          %vm849 = vweird.f32 %v844
          %v850 = vsel %vm849, %v844, %v848
          %v851 = vmul.f32 %v781, %v850
          %v852 = vmul.f32 %v783, %v850
          %v853 = vmul.f32 %v785, %v850
          %v854 = vmul.f32 %v787, %v850
          %v855 = vmul.f32 %v789, %v850
          %v856 = vmul.f32 %v791, %v850
          %v857 = vmul.f32 %v793, %v850
          %v858 = vmul.f32 %v795, %v850
          %v859 = vmul.f32 %v797, %v850
          %v860 = vmul.f32 %v799, %v850
          %v861 = vmul.f32 %v801, %v850
          %v862 = vmul.f32 %v803, %v850
          %v863 = vmul.f32 %v805, %v850
          %v864 = vmul.f32 %v807, %v850
          %v865 = vmul.f32 %v809, %v850
          %v866 = vmul.f32 %v811, %v850
          %v867 = vmul.f32 %v813, %v850
          %v868 = vmul.f32 %v815, %v850
          %v869 = vmul.f32 %v817, %v850
          %v870 = vmul.f32 %v819, %v850
          %v871 = vmul.f32 %v821, %v850
          %v872 = vmul.f32 %v823, %v850
          %v873 = vmul.f32 %v825, %v850
          %v874 = vmul.f32 %v827, %v850
          %v875 = vmul.f32 %v829, %v850
          %v876 = vmul.f32 %v831, %v850
          %v877 = vmul.f32 %v833, %v850
          %v878 = vmul.f32 %v835, %v850
          %v879 = vmul.f32 %v837, %v850
          %v880 = vmul.f32 %v839, %v850
          %v881 = vmul.f32 %v841, %v850
          %v882 = vmul.f32 %v843, %v850
          %v883 = vsub.f32 %v748, %v851
          %v884 = vsub.f32 %v749, %v852
          %v885 = vsub.f32 %v750, %v853
          %v886 = vsub.f32 %v751, %v854
          %v887 = vsub.f32 %v752, %v855
          %v888 = vsub.f32 %v753, %v856
          %v889 = vsub.f32 %v754, %v857
          %v890 = vsub.f32 %v755, %v858
          %v891 = vsub.f32 %v756, %v859
          %v892 = vsub.f32 %v757, %v860
          %v893 = vsub.f32 %v758, %v861
          %v894 = vsub.f32 %v759, %v862
          %v895 = vsub.f32 %v760, %v863
          %v896 = vsub.f32 %v761, %v864
          %v897 = vsub.f32 %v762, %v865
          %v898 = vsub.f32 %v763, %v866
          %v899 = vsub.f32 %v764, %v867
          %v900 = vsub.f32 %v765, %v868
          %v901 = vsub.f32 %v766, %v869
          %v902 = vsub.f32 %v767, %v870
          %v903 = vsub.f32 %v768, %v871
          %v904 = vsub.f32 %v769, %v872
          %v905 = vsub.f32 %v770, %v873
          %v906 = vsub.f32 %v771, %v874
          %v907 = vsub.f32 %v772, %v875
          %v908 = vsub.f32 %v773, %v876
          %v909 = vsub.f32 %v774, %v877
          %v910 = vsub.f32 %v775, %v878
          %v911 = vsub.f32 %v776, %v879
          %v912 = vsub.f32 %v777, %v880
          %v913 = vsub.f32 %v778, %v881
          %v914 = vsub.f32 %v779, %v882
          %v915 = vmul.f32 %v883, %v883
          %v916 = vmul.f32 %v884, %v884
          %v917 = vmul.f32 %v885, %v885
          %v918 = vmul.f32 %v886, %v886
          %v919 = vmul.f32 %v887, %v887
          %v920 = vmul.f32 %v888, %v888
          %v921 = vmul.f32 %v889, %v889
          %v922 = vmul.f32 %v890, %v890
          %v923 = vmul.f32 %v891, %v891
          %v924 = vmul.f32 %v892, %v892
          %v925 = vmul.f32 %v893, %v893
          %v926 = vmul.f32 %v894, %v894
          %v927 = vmul.f32 %v895, %v895
          %v928 = vmul.f32 %v896, %v896
          %v929 = vmul.f32 %v897, %v897
          %v930 = vmul.f32 %v898, %v898
          %v931 = vmul.f32 %v899, %v899
          %v932 = vmul.f32 %v900, %v900
          %v933 = vmul.f32 %v901, %v901
          %v934 = vmul.f32 %v902, %v902
          %v935 = vmul.f32 %v903, %v903
          %v936 = vmul.f32 %v904, %v904
          %v937 = vmul.f32 %v905, %v905
          %v938 = vmul.f32 %v906, %v906
          %v939 = vmul.f32 %v907, %v907
          %v940 = vmul.f32 %v908, %v908
          %v941 = vmul.f32 %v909, %v909
          %v942 = vmul.f32 %v910, %v910
          %v943 = vmul.f32 %v911, %v911
          %v944 = vmul.f32 %v912, %v912
          %v945 = vmul.f32 %v913, %v913
          %v946 = vmul.f32 %v914, %v914
          %947 = vadd.xlane.f32.xlu0 %v915
          %v948 = vpop.xlane.xlu0 %947
          %949 = vadd.xlane.f32.xlu0 %v916
          %v950 = vpop.xlane.xlu0 %949
          %951 = vadd.xlane.f32.xlu0 %v917
          %v952 = vpop.xlane.xlu0 %951
          %953 = vadd.xlane.f32.xlu0 %v918
          %v954 = vpop.xlane.xlu0 %953
          %955 = vadd.xlane.f32.xlu0 %v919
          %v956 = vpop.xlane.xlu0 %955
          %957 = vadd.xlane.f32.xlu0 %v920
          %v958 = vpop.xlane.xlu0 %957
          %959 = vadd.xlane.f32.xlu0 %v921
          %v960 = vpop.xlane.xlu0 %959
          %961 = vadd.xlane.f32.xlu0 %v922
          %v962 = vpop.xlane.xlu0 %961
          %963 = vadd.xlane.f32.xlu0 %v923
          %v964 = vpop.xlane.xlu0 %963
          %965 = vadd.xlane.f32.xlu0 %v924
          %v966 = vpop.xlane.xlu0 %965
          %967 = vadd.xlane.f32.xlu0 %v925
          %v968 = vpop.xlane.xlu0 %967
          %969 = vadd.xlane.f32.xlu0 %v926
          %v970 = vpop.xlane.xlu0 %969
          %971 = vadd.xlane.f32.xlu0 %v927
          %v972 = vpop.xlane.xlu0 %971
          %973 = vadd.xlane.f32.xlu0 %v928
          %v974 = vpop.xlane.xlu0 %973
          %975 = vadd.xlane.f32.xlu0 %v929
          %v976 = vpop.xlane.xlu0 %975
          %977 = vadd.xlane.f32.xlu0 %v930
          %v978 = vpop.xlane.xlu0 %977
          %979 = vadd.xlane.f32.xlu0 %v931
          %v980 = vpop.xlane.xlu0 %979
          %981 = vadd.xlane.f32.xlu0 %v932
          %v982 = vpop.xlane.xlu0 %981
          %983 = vadd.xlane.f32.xlu0 %v933
          %v984 = vpop.xlane.xlu0 %983
          %985 = vadd.xlane.f32.xlu0 %v934
          %v986 = vpop.xlane.xlu0 %985
          %987 = vadd.xlane.f32.xlu0 %v935
          %v988 = vpop.xlane.xlu0 %987
          %989 = vadd.xlane.f32.xlu0 %v936
          %v990 = vpop.xlane.xlu0 %989
          %991 = vadd.xlane.f32.xlu0 %v937
          %v992 = vpop.xlane.xlu0 %991
          %993 = vadd.xlane.f32.xlu0 %v938
          %v994 = vpop.xlane.xlu0 %993
          %995 = vadd.xlane.f32.xlu0 %v939
          %v996 = vpop.xlane.xlu0 %995
          %997 = vadd.xlane.f32.xlu0 %v940
          %v998 = vpop.xlane.xlu0 %997
          %999 = vadd.xlane.f32.xlu0 %v941
          %v1000 = vpop.xlane.xlu0 %999
          %1001 = vadd.xlane.f32.xlu0 %v942
          %v1002 = vpop.xlane.xlu0 %1001
          %1003 = vadd.xlane.f32.xlu0 %v943
          %v1004 = vpop.xlane.xlu0 %1003
          %1005 = vadd.xlane.f32.xlu0 %v944
          %v1006 = vpop.xlane.xlu0 %1005
          %1007 = vadd.xlane.f32.xlu0 %v945
          %v1008 = vpop.xlane.xlu0 %1007
          %1009 = vadd.xlane.f32.xlu0 %v946
          %v1010 = vpop.xlane.xlu0 %1009
          %v1011 = vmul.f32 %v948, %v850
          %v1012 = vmul.f32 %v950, %v850
          %v1013 = vmul.f32 %v952, %v850
          %v1014 = vmul.f32 %v954, %v850
          %v1015 = vmul.f32 %v956, %v850
          %v1016 = vmul.f32 %v958, %v850
          %v1017 = vmul.f32 %v960, %v850
          %v1018 = vmul.f32 %v962, %v850
          %v1019 = vmul.f32 %v964, %v850
          %v1020 = vmul.f32 %v966, %v850
          %v1021 = vmul.f32 %v968, %v850
          %v1022 = vmul.f32 %v970, %v850
          %v1023 = vmul.f32 %v972, %v850
          %v1024 = vmul.f32 %v974, %v850
          %v1025 = vmul.f32 %v976, %v850
          %v1026 = vmul.f32 %v978, %v850
          %v1027 = vmul.f32 %v980, %v850
          %v1028 = vmul.f32 %v982, %v850
          %v1029 = vmul.f32 %v984, %v850
          %v1030 = vmul.f32 %v986, %v850
          %v1031 = vmul.f32 %v988, %v850
          %v1032 = vmul.f32 %v990, %v850
          %v1033 = vmul.f32 %v992, %v850
          %v1034 = vmul.f32 %v994, %v850
          %v1035 = vmul.f32 %v996, %v850
          %v1036 = vmul.f32 %v998, %v850
          %v1037 = vmul.f32 %v1000, %v850
          %v1038 = vmul.f32 %v1002, %v850
          %v1039 = vmul.f32 %v1004, %v850
          %v1040 = vmul.f32 %v1006, %v850
          %v1041 = vmul.f32 %v1008, %v850
          %v1042 = vmul.f32 %v1010, %v850
          %v1043 = vadd.f32 %v1011, 1e-05
          %v1044 = vadd.f32 %v1012, 1e-05
          %v1045 = vadd.f32 %v1013, 1e-05
          %v1046 = vadd.f32 %v1014, 1e-05
          %v1047 = vadd.f32 %v1015, 1e-05
          %v1048 = vadd.f32 %v1016, 1e-05
          %v1049 = vadd.f32 %v1017, 1e-05
          %v1050 = vadd.f32 %v1018, 1e-05
          %v1051 = vadd.f32 %v1019, 1e-05
          %v1052 = vadd.f32 %v1020, 1e-05
          %v1053 = vadd.f32 %v1021, 1e-05
          %v1054 = vadd.f32 %v1022, 1e-05
          %v1055 = vadd.f32 %v1023, 1e-05
          %v1056 = vadd.f32 %v1024, 1e-05
          %v1057 = vadd.f32 %v1025, 1e-05
          %v1058 = vadd.f32 %v1026, 1e-05
          %v1059 = vadd.f32 %v1027, 1e-05
          %v1060 = vadd.f32 %v1028, 1e-05
          %v1061 = vadd.f32 %v1029, 1e-05
          %v1062 = vadd.f32 %v1030, 1e-05
          %v1063 = vadd.f32 %v1031, 1e-05
          %v1064 = vadd.f32 %v1032, 1e-05
          %v1065 = vadd.f32 %v1033, 1e-05
          %v1066 = vadd.f32 %v1034, 1e-05
          %v1067 = vadd.f32 %v1035, 1e-05
          %v1068 = vadd.f32 %v1036, 1e-05
          %v1069 = vadd.f32 %v1037, 1e-05
          %v1070 = vadd.f32 %v1038, 1e-05
          %v1071 = vadd.f32 %v1039, 1e-05
          %v1072 = vadd.f32 %v1040, 1e-05
          %v1073 = vadd.f32 %v1041, 1e-05
          %v1074 = vadd.f32 %v1042, 1e-05
          %v1075 = vrsqrt.pop %v1043
          %v1076 = vmul.f32 %v1075, %v1043
          %v1077 = vmul.f32 %v1076, %v1075
          %v1078 = vmul.f32 0.5, %v1077
          %v1079 = vsub.f32 1.5, %v1078
          %v1080 = vmul.f32 %v1075, %v1079
          %vm1081 = vweird.f32 %v1043
          %vm1082 = vweird.f32 %v1075
          %vm1083 = vmor %vm1081, %vm1082
          %v1084 = vsel %vm1083, %v1075, %v1080
          %v1085 = vrsqrt.pop %v1044
          %v1086 = vmul.f32 %v1085, %v1044
          %v1087 = vmul.f32 %v1086, %v1085
          %v1088 = vmul.f32 0.5, %v1087
          %v1089 = vsub.f32 1.5, %v1088
          %v1090 = vmul.f32 %v1085, %v1089
          %vm1091 = vweird.f32 %v1044
          %vm1092 = vweird.f32 %v1085
          %vm1093 = vmor %vm1091, %vm1092
          %v1094 = vsel %vm1093, %v1085, %v1090
          %v1095 = vrsqrt.pop %v1045
          %v1096 = vmul.f32 %v1095, %v1045
          %v1097 = vmul.f32 %v1096, %v1095
          %v1098 = vmul.f32 0.5, %v1097
          %v1099 = vsub.f32 1.5, %v1098
          %v1100 = vmul.f32 %v1095, %v1099
          %vm1101 = vweird.f32 %v1045
          %vm1102 = vweird.f32 %v1095
          %vm1103 = vmor %vm1101, %vm1102
          %v1104 = vsel %vm1103, %v1095, %v1100
          %v1105 = vrsqrt.pop %v1046
          %v1106 = vmul.f32 %v1105, %v1046
          %v1107 = vmul.f32 %v1106, %v1105
          %v1108 = vmul.f32 0.5, %v1107
          %v1109 = vsub.f32 1.5, %v1108
          %v1110 = vmul.f32 %v1105, %v1109
          %vm1111 = vweird.f32 %v1046
          %vm1112 = vweird.f32 %v1105
          %vm1113 = vmor %vm1111, %vm1112
          %v1114 = vsel %vm1113, %v1105, %v1110
          %v1115 = vrsqrt.pop %v1047
          %v1116 = vmul.f32 %v1115, %v1047
          %v1117 = vmul.f32 %v1116, %v1115
          %v1118 = vmul.f32 0.5, %v1117
          %v1119 = vsub.f32 1.5, %v1118
          %v1120 = vmul.f32 %v1115, %v1119
          %vm1121 = vweird.f32 %v1047
          %vm1122 = vweird.f32 %v1115
          %vm1123 = vmor %vm1121, %vm1122
          %v1124 = vsel %vm1123, %v1115, %v1120
          %v1125 = vrsqrt.pop %v1048
          %v1126 = vmul.f32 %v1125, %v1048
          %v1127 = vmul.f32 %v1126, %v1125
          %v1128 = vmul.f32 0.5, %v1127
          %v1129 = vsub.f32 1.5, %v1128
          %v1130 = vmul.f32 %v1125, %v1129
          %vm1131 = vweird.f32 %v1048
          %vm1132 = vweird.f32 %v1125
          %vm1133 = vmor %vm1131, %vm1132
          %v1134 = vsel %vm1133, %v1125, %v1130
          %v1135 = vrsqrt.pop %v1049
          %v1136 = vmul.f32 %v1135, %v1049
          %v1137 = vmul.f32 %v1136, %v1135
          %v1138 = vmul.f32 0.5, %v1137
          %v1139 = vsub.f32 1.5, %v1138
          %v1140 = vmul.f32 %v1135, %v1139
          %vm1141 = vweird.f32 %v1049
          %vm1142 = vweird.f32 %v1135
          %vm1143 = vmor %vm1141, %vm1142
          %v1144 = vsel %vm1143, %v1135, %v1140
          %v1145 = vrsqrt.pop %v1050
          %v1146 = vmul.f32 %v1145, %v1050
          %v1147 = vmul.f32 %v1146, %v1145
          %v1148 = vmul.f32 0.5, %v1147
          %v1149 = vsub.f32 1.5, %v1148
          %v1150 = vmul.f32 %v1145, %v1149
          %vm1151 = vweird.f32 %v1050
          %vm1152 = vweird.f32 %v1145
          %vm1153 = vmor %vm1151, %vm1152
          %v1154 = vsel %vm1153, %v1145, %v1150
          %v1155 = vrsqrt.pop %v1051
          %v1156 = vmul.f32 %v1155, %v1051
          %v1157 = vmul.f32 %v1156, %v1155
          %v1158 = vmul.f32 0.5, %v1157
          %v1159 = vsub.f32 1.5, %v1158
          %v1160 = vmul.f32 %v1155, %v1159
          %vm1161 = vweird.f32 %v1051
          %vm1162 = vweird.f32 %v1155
          %vm1163 = vmor %vm1161, %vm1162
          %v1164 = vsel %vm1163, %v1155, %v1160
          %v1165 = vrsqrt.pop %v1052
          %v1166 = vmul.f32 %v1165, %v1052
          %v1167 = vmul.f32 %v1166, %v1165
          %v1168 = vmul.f32 0.5, %v1167
          %v1169 = vsub.f32 1.5, %v1168
          %v1170 = vmul.f32 %v1165, %v1169
          %vm1171 = vweird.f32 %v1052
          %vm1172 = vweird.f32 %v1165
          %vm1173 = vmor %vm1171, %vm1172
          %v1174 = vsel %vm1173, %v1165, %v1170
          %v1175 = vrsqrt.pop %v1053
          %v1176 = vmul.f32 %v1175, %v1053
          %v1177 = vmul.f32 %v1176, %v1175
          %v1178 = vmul.f32 0.5, %v1177
          %v1179 = vsub.f32 1.5, %v1178
          %v1180 = vmul.f32 %v1175, %v1179
          %vm1181 = vweird.f32 %v1053
          %vm1182 = vweird.f32 %v1175
          %vm1183 = vmor %vm1181, %vm1182
          %v1184 = vsel %vm1183, %v1175, %v1180
          %v1185 = vrsqrt.pop %v1054
          %v1186 = vmul.f32 %v1185, %v1054
          %v1187 = vmul.f32 %v1186, %v1185
          %v1188 = vmul.f32 0.5, %v1187
          %v1189 = vsub.f32 1.5, %v1188
          %v1190 = vmul.f32 %v1185, %v1189
          %vm1191 = vweird.f32 %v1054
          %vm1192 = vweird.f32 %v1185
          %vm1193 = vmor %vm1191, %vm1192
          %v1194 = vsel %vm1193, %v1185, %v1190
          %v1195 = vrsqrt.pop %v1055
          %v1196 = vmul.f32 %v1195, %v1055
          %v1197 = vmul.f32 %v1196, %v1195
          %v1198 = vmul.f32 0.5, %v1197
          %v1199 = vsub.f32 1.5, %v1198
          %v1200 = vmul.f32 %v1195, %v1199
          %vm1201 = vweird.f32 %v1055
          %vm1202 = vweird.f32 %v1195
          %vm1203 = vmor %vm1201, %vm1202
          %v1204 = vsel %vm1203, %v1195, %v1200
          %v1205 = vrsqrt.pop %v1056
          %v1206 = vmul.f32 %v1205, %v1056
          %v1207 = vmul.f32 %v1206, %v1205
          %v1208 = vmul.f32 0.5, %v1207
          %v1209 = vsub.f32 1.5, %v1208
          %v1210 = vmul.f32 %v1205, %v1209
          %vm1211 = vweird.f32 %v1056
          %vm1212 = vweird.f32 %v1205
          %vm1213 = vmor %vm1211, %vm1212
          %v1214 = vsel %vm1213, %v1205, %v1210
          %v1215 = vrsqrt.pop %v1057
          %v1216 = vmul.f32 %v1215, %v1057
          %v1217 = vmul.f32 %v1216, %v1215
          %v1218 = vmul.f32 0.5, %v1217
          %v1219 = vsub.f32 1.5, %v1218
          %v1220 = vmul.f32 %v1215, %v1219
          %vm1221 = vweird.f32 %v1057
          %vm1222 = vweird.f32 %v1215
          %vm1223 = vmor %vm1221, %vm1222
          %v1224 = vsel %vm1223, %v1215, %v1220
          %v1225 = vrsqrt.pop %v1058
          %v1226 = vmul.f32 %v1225, %v1058
          %v1227 = vmul.f32 %v1226, %v1225
          %v1228 = vmul.f32 0.5, %v1227
          %v1229 = vsub.f32 1.5, %v1228
          %v1230 = vmul.f32 %v1225, %v1229
          %vm1231 = vweird.f32 %v1058
          %vm1232 = vweird.f32 %v1225
          %vm1233 = vmor %vm1231, %vm1232
          %v1234 = vsel %vm1233, %v1225, %v1230
          %v1235 = vrsqrt.pop %v1059
          %v1236 = vmul.f32 %v1235, %v1059
          %v1237 = vmul.f32 %v1236, %v1235
          %v1238 = vmul.f32 0.5, %v1237
          %v1239 = vsub.f32 1.5, %v1238
          %v1240 = vmul.f32 %v1235, %v1239
          %vm1241 = vweird.f32 %v1059
          %vm1242 = vweird.f32 %v1235
          %vm1243 = vmor %vm1241, %vm1242
          %v1244 = vsel %vm1243, %v1235, %v1240
          %v1245 = vrsqrt.pop %v1060
          %v1246 = vmul.f32 %v1245, %v1060
          %v1247 = vmul.f32 %v1246, %v1245
          %v1248 = vmul.f32 0.5, %v1247
          %v1249 = vsub.f32 1.5, %v1248
          %v1250 = vmul.f32 %v1245, %v1249
          %vm1251 = vweird.f32 %v1060
          %vm1252 = vweird.f32 %v1245
          %vm1253 = vmor %vm1251, %vm1252
          %v1254 = vsel %vm1253, %v1245, %v1250
          %v1255 = vrsqrt.pop %v1061
          %v1256 = vmul.f32 %v1255, %v1061
          %v1257 = vmul.f32 %v1256, %v1255
          %v1258 = vmul.f32 0.5, %v1257
          %v1259 = vsub.f32 1.5, %v1258
          %v1260 = vmul.f32 %v1255, %v1259
          %vm1261 = vweird.f32 %v1061
          %vm1262 = vweird.f32 %v1255
          %vm1263 = vmor %vm1261, %vm1262
          %v1264 = vsel %vm1263, %v1255, %v1260
          %v1265 = vrsqrt.pop %v1062
          %v1266 = vmul.f32 %v1265, %v1062
          %v1267 = vmul.f32 %v1266, %v1265
          %v1268 = vmul.f32 0.5, %v1267
          %v1269 = vsub.f32 1.5, %v1268
          %v1270 = vmul.f32 %v1265, %v1269
          %vm1271 = vweird.f32 %v1062
          %vm1272 = vweird.f32 %v1265
          %vm1273 = vmor %vm1271, %vm1272
          %v1274 = vsel %vm1273, %v1265, %v1270
          %v1275 = vrsqrt.pop %v1063
          %v1276 = vmul.f32 %v1275, %v1063
          %v1277 = vmul.f32 %v1276, %v1275
          %v1278 = vmul.f32 0.5, %v1277
          %v1279 = vsub.f32 1.5, %v1278
          %v1280 = vmul.f32 %v1275, %v1279
          %vm1281 = vweird.f32 %v1063
          %vm1282 = vweird.f32 %v1275
          %vm1283 = vmor %vm1281, %vm1282
          %v1284 = vsel %vm1283, %v1275, %v1280
          %v1285 = vrsqrt.pop %v1064
          %v1286 = vmul.f32 %v1285, %v1064
          %v1287 = vmul.f32 %v1286, %v1285
          %v1288 = vmul.f32 0.5, %v1287
          %v1289 = vsub.f32 1.5, %v1288
          %v1290 = vmul.f32 %v1285, %v1289
          %vm1291 = vweird.f32 %v1064
          %vm1292 = vweird.f32 %v1285
          %vm1293 = vmor %vm1291, %vm1292
          %v1294 = vsel %vm1293, %v1285, %v1290
          %v1295 = vrsqrt.pop %v1065
          %v1296 = vmul.f32 %v1295, %v1065
          %v1297 = vmul.f32 %v1296, %v1295
          %v1298 = vmul.f32 0.5, %v1297
          %v1299 = vsub.f32 1.5, %v1298
          %v1300 = vmul.f32 %v1295, %v1299
          %vm1301 = vweird.f32 %v1065
          %vm1302 = vweird.f32 %v1295
          %vm1303 = vmor %vm1301, %vm1302
          %v1304 = vsel %vm1303, %v1295, %v1300
          %v1305 = vrsqrt.pop %v1066
          %v1306 = vmul.f32 %v1305, %v1066
          %v1307 = vmul.f32 %v1306, %v1305
          %v1308 = vmul.f32 0.5, %v1307
          %v1309 = vsub.f32 1.5, %v1308
          %v1310 = vmul.f32 %v1305, %v1309
          %vm1311 = vweird.f32 %v1066
          %vm1312 = vweird.f32 %v1305
          %vm1313 = vmor %vm1311, %vm1312
          %v1314 = vsel %vm1313, %v1305, %v1310
          %v1315 = vrsqrt.pop %v1067
          %v1316 = vmul.f32 %v1315, %v1067
          %v1317 = vmul.f32 %v1316, %v1315
          %v1318 = vmul.f32 0.5, %v1317
          %v1319 = vsub.f32 1.5, %v1318
          %v1320 = vmul.f32 %v1315, %v1319
          %vm1321 = vweird.f32 %v1067
          %vm1322 = vweird.f32 %v1315
          %vm1323 = vmor %vm1321, %vm1322
          %v1324 = vsel %vm1323, %v1315, %v1320
          %v1325 = vrsqrt.pop %v1068
          %v1326 = vmul.f32 %v1325, %v1068
          %v1327 = vmul.f32 %v1326, %v1325
          %v1328 = vmul.f32 0.5, %v1327
          %v1329 = vsub.f32 1.5, %v1328
          %v1330 = vmul.f32 %v1325, %v1329
          %vm1331 = vweird.f32 %v1068
          %vm1332 = vweird.f32 %v1325
          %vm1333 = vmor %vm1331, %vm1332
          %v1334 = vsel %vm1333, %v1325, %v1330
          %v1335 = vrsqrt.pop %v1069
          %v1336 = vmul.f32 %v1335, %v1069
          %v1337 = vmul.f32 %v1336, %v1335
          %v1338 = vmul.f32 0.5, %v1337
          %v1339 = vsub.f32 1.5, %v1338
          %v1340 = vmul.f32 %v1335, %v1339
          %vm1341 = vweird.f32 %v1069
          %vm1342 = vweird.f32 %v1335
          %vm1343 = vmor %vm1341, %vm1342
          %v1344 = vsel %vm1343, %v1335, %v1340
          %v1345 = vrsqrt.pop %v1070
          %v1346 = vmul.f32 %v1345, %v1070
          %v1347 = vmul.f32 %v1346, %v1345
          %v1348 = vmul.f32 0.5, %v1347
          %v1349 = vsub.f32 1.5, %v1348
          %v1350 = vmul.f32 %v1345, %v1349
          %vm1351 = vweird.f32 %v1070
          %vm1352 = vweird.f32 %v1345
          %vm1353 = vmor %vm1351, %vm1352
          %v1354 = vsel %vm1353, %v1345, %v1350
          %v1355 = vrsqrt.pop %v1071
          %v1356 = vmul.f32 %v1355, %v1071
          %v1357 = vmul.f32 %v1356, %v1355
          %v1358 = vmul.f32 0.5, %v1357
          %v1359 = vsub.f32 1.5, %v1358
          %v1360 = vmul.f32 %v1355, %v1359
          %vm1361 = vweird.f32 %v1071
          %vm1362 = vweird.f32 %v1355
          %vm1363 = vmor %vm1361, %vm1362
          %v1364 = vsel %vm1363, %v1355, %v1360
          %v1365 = vrsqrt.pop %v1072
          %v1366 = vmul.f32 %v1365, %v1072
          %v1367 = vmul.f32 %v1366, %v1365
          %v1368 = vmul.f32 0.5, %v1367
          %v1369 = vsub.f32 1.5, %v1368
          %v1370 = vmul.f32 %v1365, %v1369
          %vm1371 = vweird.f32 %v1072
          %vm1372 = vweird.f32 %v1365
          %vm1373 = vmor %vm1371, %vm1372
          %v1374 = vsel %vm1373, %v1365, %v1370
          %v1375 = vrsqrt.pop %v1073
          %v1376 = vmul.f32 %v1375, %v1073
          %v1377 = vmul.f32 %v1376, %v1375
          %v1378 = vmul.f32 0.5, %v1377
          %v1379 = vsub.f32 1.5, %v1378
          %v1380 = vmul.f32 %v1375, %v1379
          %vm1381 = vweird.f32 %v1073
          %vm1382 = vweird.f32 %v1375
          %vm1383 = vmor %vm1381, %vm1382
          %v1384 = vsel %vm1383, %v1375, %v1380
          %v1385 = vrsqrt.pop %v1074
          %v1386 = vmul.f32 %v1385, %v1074
          %v1387 = vmul.f32 %v1386, %v1385
          %v1388 = vmul.f32 0.5, %v1387
          %v1389 = vsub.f32 1.5, %v1388
          %v1390 = vmul.f32 %v1385, %v1389
          %vm1391 = vweird.f32 %v1074
          %vm1392 = vweird.f32 %v1385
          %vm1393 = vmor %vm1391, %vm1392
          %v1394 = vsel %vm1393, %v1385, %v1390
          %v1395 = vmul.f32 %v883, %v1084
          %v1396 = vmul.f32 %v884, %v1094
          %v1397 = vmul.f32 %v885, %v1104
          %v1398 = vmul.f32 %v886, %v1114
          %v1399 = vmul.f32 %v887, %v1124
          %v1400 = vmul.f32 %v888, %v1134
          %v1401 = vmul.f32 %v889, %v1144
          %v1402 = vmul.f32 %v890, %v1154
          %v1403 = vmul.f32 %v891, %v1164
          %v1404 = vmul.f32 %v892, %v1174
          %v1405 = vmul.f32 %v893, %v1184
          %v1406 = vmul.f32 %v894, %v1194
          %v1407 = vmul.f32 %v895, %v1204
          %v1408 = vmul.f32 %v896, %v1214
          %v1409 = vmul.f32 %v897, %v1224
          %v1410 = vmul.f32 %v898, %v1234
          %v1411 = vmul.f32 %v899, %v1244
          %v1412 = vmul.f32 %v900, %v1254
          %v1413 = vmul.f32 %v901, %v1264
          %v1414 = vmul.f32 %v902, %v1274
          %v1415 = vmul.f32 %v903, %v1284
          %v1416 = vmul.f32 %v904, %v1294
          %v1417 = vmul.f32 %v905, %v1304
          %v1418 = vmul.f32 %v906, %v1314
          %v1419 = vmul.f32 %v907, %v1324
          %v1420 = vmul.f32 %v908, %v1334
          %v1421 = vmul.f32 %v909, %v1344
          %v1422 = vmul.f32 %v910, %v1354
          %v1423 = vmul.f32 %v911, %v1364
          %v1424 = vmul.f32 %v912, %v1374
          %v1425 = vmul.f32 %v913, %v1384
          %v1426 = vmul.f32 %v914, %v1394
          %v1428 = vperm.slane %v746, 0
          %v1430 = vmul.f32 %v1395, %v1428
          %v1431 = vmul.f32 %v1396, %v1428
          %v1432 = vmul.f32 %v1397, %v1428
          %v1433 = vmul.f32 %v1398, %v1428
          %v1434 = vmul.f32 %v1399, %v1428
          %v1435 = vmul.f32 %v1400, %v1428
          %v1436 = vmul.f32 %v1401, %v1428
          %v1437 = vmul.f32 %v1402, %v1428
          %v1438 = vmul.f32 %v1403, %v1428
          %v1439 = vmul.f32 %v1404, %v1428
          %v1440 = vmul.f32 %v1405, %v1428
          %v1441 = vmul.f32 %v1406, %v1428
          %v1442 = vmul.f32 %v1407, %v1428
          %v1443 = vmul.f32 %v1408, %v1428
          %v1444 = vmul.f32 %v1409, %v1428
          %v1445 = vmul.f32 %v1410, %v1428
          %v1446 = vmul.f32 %v1411, %v1428
          %v1447 = vmul.f32 %v1412, %v1428
          %v1448 = vmul.f32 %v1413, %v1428
          %v1449 = vmul.f32 %v1414, %v1428
          %v1450 = vmul.f32 %v1415, %v1428
          %v1451 = vmul.f32 %v1416, %v1428
          %v1452 = vmul.f32 %v1417, %v1428
          %v1453 = vmul.f32 %v1418, %v1428
          %v1454 = vmul.f32 %v1419, %v1428
          %v1455 = vmul.f32 %v1420, %v1428
          %v1456 = vmul.f32 %v1421, %v1428
          %v1457 = vmul.f32 %v1422, %v1428
          %v1458 = vmul.f32 %v1423, %v1428
          %v1459 = vmul.f32 %v1424, %v1428
          %v1460 = vmul.f32 %v1425, %v1428
          %v1461 = vmul.f32 %v1426, %v1428
          %v1463 = vperm.slane %v747, 0
          %v1465 = vadd.f32 %v1430, %v1463
          %v1466 = vadd.f32 %v1431, %v1463
          %v1467 = vadd.f32 %v1432, %v1463
          %v1468 = vadd.f32 %v1433, %v1463
          %v1469 = vadd.f32 %v1434, %v1463
          %v1470 = vadd.f32 %v1435, %v1463
          %v1471 = vadd.f32 %v1436, %v1463
          %v1472 = vadd.f32 %v1437, %v1463
          %v1473 = vadd.f32 %v1438, %v1463
          %v1474 = vadd.f32 %v1439, %v1463
          %v1475 = vadd.f32 %v1440, %v1463
          %v1476 = vadd.f32 %v1441, %v1463
          %v1477 = vadd.f32 %v1442, %v1463
          %v1478 = vadd.f32 %v1443, %v1463
          %v1479 = vadd.f32 %v1444, %v1463
          %v1480 = vadd.f32 %v1445, %v1463
          %v1481 = vadd.f32 %v1446, %v1463
          %v1482 = vadd.f32 %v1447, %v1463
          %v1483 = vadd.f32 %v1448, %v1463
          %v1484 = vadd.f32 %v1449, %v1463
          %v1485 = vadd.f32 %v1450, %v1463
          %v1486 = vadd.f32 %v1451, %v1463
          %v1487 = vadd.f32 %v1452, %v1463
          %v1488 = vadd.f32 %v1453, %v1463
          %v1489 = vadd.f32 %v1454, %v1463
          %v1490 = vadd.f32 %v1455, %v1463
          %v1491 = vadd.f32 %v1456, %v1463
          %v1492 = vadd.f32 %v1457, %v1463
          %v1493 = vadd.f32 %v1458, %v1463
          %v1494 = vadd.f32 %v1459, %v1463
          %v1495 = vadd.f32 %v1460, %v1463
          %v1496 = vadd.f32 %v1461, %v1463
          %v1497 = vpack.c.bf16 %v1466, %v1465
          %v1498 = vpack.c.bf16 %v1468, %v1467
          %v1499 = vpack.c.bf16 %v1470, %v1469
          %v1500 = vpack.c.bf16 %v1472, %v1471
          %v1501 = vpack.c.bf16 %v1474, %v1473
          %v1502 = vpack.c.bf16 %v1476, %v1475
          %v1503 = vpack.c.bf16 %v1478, %v1477
          %v1504 = vpack.c.bf16 %v1480, %v1479
          %v1505 = vpack.c.bf16 %v1482, %v1481
          %v1506 = vpack.c.bf16 %v1484, %v1483
          %v1507 = vpack.c.bf16 %v1486, %v1485
          %v1508 = vpack.c.bf16 %v1488, %v1487
          %v1509 = vpack.c.bf16 %v1490, %v1489
          %v1510 = vpack.c.bf16 %v1492, %v1491
          %v1511 = vpack.c.bf16 %v1494, %v1493
          %v1512 = vpack.c.bf16 %v1496, %v1495
          %v1513 = vld [vmem:[#allocation13] sm:$0xff]
          %v1514 = vld [vmem:[#allocation13 + $0x8] sm:$0xff]
          %v1515 = vld [vmem:[#allocation13 + $0x10] sm:$0xff]
          %v1516 = vld [vmem:[#allocation13 + $0x18] sm:$0xff]
          %v1517 = vld [vmem:[#allocation13 + $0x20] sm:$0xff]
          %v1518 = vld [vmem:[#allocation13 + $0x28] sm:$0xff]
          %v1519 = vld [vmem:[#allocation13 + $0x30] sm:$0xff]
          %v1520 = vld [vmem:[#allocation13 + $0x38] sm:$0xff]
          %v1521 = vld [vmem:[#allocation13 + $0x40] sm:$0xff]
          %v1522 = vld [vmem:[#allocation13 + $0x48] sm:$0xff]
          %v1523 = vld [vmem:[#allocation13 + $0x50] sm:$0xff]
          %v1524 = vld [vmem:[#allocation13 + $0x58] sm:$0xff]
          %v1525 = vld [vmem:[#allocation13 + $0x60] sm:$0xff]
          %v1526 = vld [vmem:[#allocation13 + $0x68] sm:$0xff]
          %v1527 = vld [vmem:[#allocation13 + $0x70] sm:$0xff]
          %v1528 = vld [vmem:[#allocation13 + $0x78] sm:$0xff]
          %v1529 = vld [vmem:[%s7] sm:$0x3]
          %v1531 = vperm.slane %v1529, 0
          %v1532 = vperm.slane %v1529, 1
          %v1551 = vunpack.c.l.b16 %v1513
          %v1552 = vunpack.c.h.b16 %v1513
          %v1553 = vunpack.c.l.b16 %v1514
          %v1554 = vunpack.c.h.b16 %v1514
          %v1555 = vunpack.c.l.b16 %v1515
          %v1556 = vunpack.c.h.b16 %v1515
          %v1557 = vunpack.c.l.b16 %v1516
          %v1558 = vunpack.c.h.b16 %v1516
          %v1559 = vunpack.c.l.b16 %v1517
          %v1560 = vunpack.c.h.b16 %v1517
          %v1561 = vunpack.c.l.b16 %v1518
          %v1562 = vunpack.c.h.b16 %v1518
          %v1563 = vunpack.c.l.b16 %v1519
          %v1564 = vunpack.c.h.b16 %v1519
          %v1565 = vunpack.c.l.b16 %v1520
          %v1566 = vunpack.c.h.b16 %v1520
          %v1567 = vunpack.c.l.b16 %v1521
          %v1568 = vunpack.c.h.b16 %v1521
          %v1569 = vunpack.c.l.b16 %v1522
          %v1570 = vunpack.c.h.b16 %v1522
          %v1571 = vunpack.c.l.b16 %v1523
          %v1572 = vunpack.c.h.b16 %v1523
          %v1573 = vunpack.c.l.b16 %v1524
          %v1574 = vunpack.c.h.b16 %v1524
          %v1575 = vunpack.c.l.b16 %v1525
          %v1576 = vunpack.c.h.b16 %v1525
          %v1577 = vunpack.c.l.b16 %v1526
          %v1578 = vunpack.c.h.b16 %v1526
          %v1579 = vunpack.c.l.b16 %v1527
          %v1580 = vunpack.c.h.b16 %v1527
          %v1581 = vunpack.c.l.b16 %v1528
          %v1582 = vunpack.c.h.b16 %v1528
          %v1583 = vpack.c.b16 %v1553, %v1551
          %v1584 = vpack.c.b16 %v1554, %v1552
          %v1585 = vpack.c.b16 %v1557, %v1555
          %v1586 = vpack.c.b16 %v1558, %v1556
          %v1587 = vpack.c.b16 %v1561, %v1559
          %v1588 = vpack.c.b16 %v1562, %v1560
          %v1589 = vpack.c.b16 %v1565, %v1563
          %v1590 = vpack.c.b16 %v1566, %v1564
          %v1591 = vpack.c.b16 %v1569, %v1567
          %v1592 = vpack.c.b16 %v1570, %v1568
          %v1593 = vpack.c.b16 %v1573, %v1571
          %v1594 = vpack.c.b16 %v1574, %v1572
          %v1595 = vpack.c.b16 %v1577, %v1575
          %v1596 = vpack.c.b16 %v1578, %v1576
          %v1597 = vpack.c.b16 %v1581, %v1579
          %v1598 = vpack.c.b16 %v1582, %v1580
          %1615 = vmatpush.bf16.msra.mxu0 %v1597
          %1616 = vmatpush.bf16.msra.mxu0 %v1595
          %1617 = vmatpush.bf16.msra.mxu0 %v1593
          %1618 = vmatpush.bf16.msra.mxu0 %v1591
          %1619 = vmatpush.bf16.msra.mxu0 %v1589
          %1620 = vmatpush.bf16.msra.mxu0 %v1587
          %1621 = vmatpush.bf16.msra.mxu0 %v1585
          %1622 = vmatpush.bf16.msra.mxu0 %v1583
          %1623 = vmatmul.bf16.gmra.mxu0 %v1497
          %v1624 = vpop.f32.mrf.mxu0
          %v1625 = vadd.f32 %v1531, %v1624
          %v1626 = vpop.f32.mrf.mxu0
          %v1627 = vadd.f32 %v1531, %v1626
          %1628 = vmatmul.bf16.gmra.mxu0 %v1498
          %v1629 = vpop.f32.mrf.mxu0
          %v1630 = vadd.f32 %v1531, %v1629
          %v1631 = vpop.f32.mrf.mxu0
          %v1632 = vadd.f32 %v1531, %v1631
          %1633 = vmatmul.bf16.gmra.mxu0 %v1499
          %v1634 = vpop.f32.mrf.mxu0
          %v1635 = vadd.f32 %v1531, %v1634
          %v1636 = vpop.f32.mrf.mxu0
          %v1637 = vadd.f32 %v1531, %v1636
          %1638 = vmatmul.bf16.gmra.mxu0 %v1500
          %v1639 = vpop.f32.mrf.mxu0
          %v1640 = vadd.f32 %v1531, %v1639
          %v1641 = vpop.f32.mrf.mxu0
          %v1642 = vadd.f32 %v1531, %v1641
          %1643 = vmatmul.bf16.gmra.mxu0 %v1501
          %v1644 = vpop.f32.mrf.mxu0
          %v1645 = vadd.f32 %v1531, %v1644
          %v1646 = vpop.f32.mrf.mxu0
          %v1647 = vadd.f32 %v1531, %v1646
          %1648 = vmatmul.bf16.gmra.mxu0 %v1502
          %v1649 = vpop.f32.mrf.mxu0
          %v1650 = vadd.f32 %v1531, %v1649
          %v1651 = vpop.f32.mrf.mxu0
          %v1652 = vadd.f32 %v1531, %v1651
          %1653 = vmatmul.bf16.gmra.mxu0 %v1503
          %v1654 = vpop.f32.mrf.mxu0
          %v1655 = vadd.f32 %v1531, %v1654
          %v1656 = vpop.f32.mrf.mxu0
          %v1657 = vadd.f32 %v1531, %v1656
          %1658 = vmatmul.bf16.gmra.mxu0 %v1504
          %v1659 = vpop.f32.mrf.mxu0
          %v1660 = vadd.f32 %v1531, %v1659
          %v1661 = vpop.f32.mrf.mxu0
          %v1662 = vadd.f32 %v1531, %v1661
          %1663 = vmatmul.bf16.gmra.mxu0 %v1505
          %v1664 = vpop.f32.mrf.mxu0
          %v1665 = vadd.f32 %v1531, %v1664
          %v1666 = vpop.f32.mrf.mxu0
          %v1667 = vadd.f32 %v1531, %v1666
          %1668 = vmatmul.bf16.gmra.mxu0 %v1506
          %v1669 = vpop.f32.mrf.mxu0
          %v1670 = vadd.f32 %v1531, %v1669
          %v1671 = vpop.f32.mrf.mxu0
          %v1672 = vadd.f32 %v1531, %v1671
          %1673 = vmatmul.bf16.gmra.mxu0 %v1507
          %v1674 = vpop.f32.mrf.mxu0
          %v1675 = vadd.f32 %v1531, %v1674
          %v1676 = vpop.f32.mrf.mxu0
          %v1677 = vadd.f32 %v1531, %v1676
          %1678 = vmatmul.bf16.gmra.mxu0 %v1508
          %v1679 = vpop.f32.mrf.mxu0
          %v1680 = vadd.f32 %v1531, %v1679
          %v1681 = vpop.f32.mrf.mxu0
          %v1682 = vadd.f32 %v1531, %v1681
          %1683 = vmatmul.bf16.gmra.mxu0 %v1509
          %v1684 = vpop.f32.mrf.mxu0
          %v1685 = vadd.f32 %v1531, %v1684
          %v1686 = vpop.f32.mrf.mxu0
          %v1687 = vadd.f32 %v1531, %v1686
          %1688 = vmatmul.bf16.gmra.mxu0 %v1510
          %v1689 = vpop.f32.mrf.mxu0
          %v1690 = vadd.f32 %v1531, %v1689
          %v1691 = vpop.f32.mrf.mxu0
          %v1692 = vadd.f32 %v1531, %v1691
          %1693 = vmatmul.bf16.gmra.mxu0 %v1511
          %v1694 = vpop.f32.mrf.mxu0
          %v1695 = vadd.f32 %v1531, %v1694
          %v1696 = vpop.f32.mrf.mxu0
          %v1697 = vadd.f32 %v1531, %v1696
          %1698 = vmatmul.bf16.gmra.mxu0 %v1512
          %v1699 = vpop.f32.mrf.mxu0
          %v1700 = vadd.f32 %v1531, %v1699
          %v1701 = vpop.f32.mrf.mxu0
          %v1702 = vadd.f32 %v1531, %v1701
          %1703 = vdwg.mxu0
          %1704 = vmatpush.bf16.msra.mxu0 %v1598
          %1705 = vmatpush.bf16.msra.mxu0 %v1596
          %1706 = vmatpush.bf16.msra.mxu0 %v1594
          %1707 = vmatpush.bf16.msra.mxu0 %v1592
          %1708 = vmatpush.bf16.msra.mxu0 %v1590
          %1709 = vmatpush.bf16.msra.mxu0 %v1588
          %1710 = vmatpush.bf16.msra.mxu0 %v1586
          %1711 = vmatpush.bf16.msra.mxu0 %v1584
          %1712 = vmatmul.bf16.gmra.mxu0 %v1497
          %v1713 = vpop.f32.mrf.mxu0
          %v1714 = vadd.f32 %v1532, %v1713
          %v1715 = vpop.f32.mrf.mxu0
          %v1716 = vadd.f32 %v1532, %v1715
          %1717 = vmatmul.bf16.gmra.mxu0 %v1498
          %v1718 = vpop.f32.mrf.mxu0
          %v1719 = vadd.f32 %v1532, %v1718
          %v1720 = vpop.f32.mrf.mxu0
          %v1721 = vadd.f32 %v1532, %v1720
          %1722 = vmatmul.bf16.gmra.mxu0 %v1499
          %v1723 = vpop.f32.mrf.mxu0
          %v1724 = vadd.f32 %v1532, %v1723
          %v1725 = vpop.f32.mrf.mxu0
          %v1726 = vadd.f32 %v1532, %v1725
          %1727 = vmatmul.bf16.gmra.mxu0 %v1500
          %v1728 = vpop.f32.mrf.mxu0
          %v1729 = vadd.f32 %v1532, %v1728
          %v1730 = vpop.f32.mrf.mxu0
          %v1731 = vadd.f32 %v1532, %v1730
          %1732 = vmatmul.bf16.gmra.mxu0 %v1501
          %v1733 = vpop.f32.mrf.mxu0
          %v1734 = vadd.f32 %v1532, %v1733
          %v1735 = vpop.f32.mrf.mxu0
          %v1736 = vadd.f32 %v1532, %v1735
          %1737 = vmatmul.bf16.gmra.mxu0 %v1502
          %v1738 = vpop.f32.mrf.mxu0
          %v1739 = vadd.f32 %v1532, %v1738
          %v1740 = vpop.f32.mrf.mxu0
          %v1741 = vadd.f32 %v1532, %v1740
          %1742 = vmatmul.bf16.gmra.mxu0 %v1503
          %v1743 = vpop.f32.mrf.mxu0
          %v1744 = vadd.f32 %v1532, %v1743
          %v1745 = vpop.f32.mrf.mxu0
          %v1746 = vadd.f32 %v1532, %v1745
          %1747 = vmatmul.bf16.gmra.mxu0 %v1504
          %v1748 = vpop.f32.mrf.mxu0
          %v1749 = vadd.f32 %v1532, %v1748
          %v1750 = vpop.f32.mrf.mxu0
          %v1751 = vadd.f32 %v1532, %v1750
          %1752 = vmatmul.bf16.gmra.mxu0 %v1505
          %v1753 = vpop.f32.mrf.mxu0
          %v1754 = vadd.f32 %v1532, %v1753
          %v1755 = vpop.f32.mrf.mxu0
          %v1756 = vadd.f32 %v1532, %v1755
          %1757 = vmatmul.bf16.gmra.mxu0 %v1506
          %v1758 = vpop.f32.mrf.mxu0
          %v1759 = vadd.f32 %v1532, %v1758
          %v1760 = vpop.f32.mrf.mxu0
          %v1761 = vadd.f32 %v1532, %v1760
          %1762 = vmatmul.bf16.gmra.mxu0 %v1507
          %v1763 = vpop.f32.mrf.mxu0
          %v1764 = vadd.f32 %v1532, %v1763
          %v1765 = vpop.f32.mrf.mxu0
          %v1766 = vadd.f32 %v1532, %v1765
          %1767 = vmatmul.bf16.gmra.mxu0 %v1508
          %v1768 = vpop.f32.mrf.mxu0
          %v1769 = vadd.f32 %v1532, %v1768
          %v1770 = vpop.f32.mrf.mxu0
          %v1771 = vadd.f32 %v1532, %v1770
          %1772 = vmatmul.bf16.gmra.mxu0 %v1509
          %v1773 = vpop.f32.mrf.mxu0
          %v1774 = vadd.f32 %v1532, %v1773
          %v1775 = vpop.f32.mrf.mxu0
          %v1776 = vadd.f32 %v1532, %v1775
          %1777 = vmatmul.bf16.gmra.mxu0 %v1510
          %v1778 = vpop.f32.mrf.mxu0
          %v1779 = vadd.f32 %v1532, %v1778
          %v1780 = vpop.f32.mrf.mxu0
          %v1781 = vadd.f32 %v1532, %v1780
          %1782 = vmatmul.bf16.gmra.mxu0 %v1511
          %v1783 = vpop.f32.mrf.mxu0
          %v1784 = vadd.f32 %v1532, %v1783
          %v1785 = vpop.f32.mrf.mxu0
          %v1786 = vadd.f32 %v1532, %v1785
          %1787 = vmatmul.bf16.gmra.mxu0 %v1512
          %v1788 = vpop.f32.mrf.mxu0
          %v1789 = vadd.f32 %v1532, %v1788
          %v1790 = vpop.f32.mrf.mxu0
          %v1791 = vadd.f32 %v1532, %v1790
          %1792 = vdwg.mxu0
          %1793 = vxpose.xlu0.b32.start [1/16] %v1625, 128
          %1794 = vxpose.xlu0.b32.cont [2/16] %v1627, 128
          %1795 = vxpose.xlu0.b32.cont [3/16] %v1630, 128
          %1796 = vxpose.xlu0.b32.cont [4/16] %v1632, 128
          %1797 = vxpose.xlu0.b32.cont [5/16] %v1635, 128
          %1798 = vxpose.xlu0.b32.cont [6/16] %v1637, 128
          %1799 = vxpose.xlu0.b32.cont [7/16] %v1640, 128
          %1800 = vxpose.xlu0.b32.cont [8/16] %v1642, 128
          %1801 = vxpose.xlu0.b32.cont [9/16] %v1645, 128
          %1802 = vxpose.xlu0.b32.cont [10/16] %v1647, 128
          %1803 = vxpose.xlu0.b32.cont [11/16] %v1650, 128
          %1804 = vxpose.xlu0.b32.cont [12/16] %v1652, 128
          %1805 = vxpose.xlu0.b32.cont [13/16] %v1655, 128
          %1806 = vxpose.xlu0.b32.cont [14/16] %v1657, 128
          %1807 = vxpose.xlu0.b32.cont [15/16] %v1660, 128
          %1808 = vxpose.xlu0.b32.end [16/16] %v1662, 128
          %v1809 = vpop.trf.xlu0
          %v1810 = vpop.trf.xlu0
          %v1811 = vpop.trf.xlu0
          %v1812 = vpop.trf.xlu0
          %v1813 = vpop.trf.xlu0
          %v1814 = vpop.trf.xlu0
          %v1815 = vpop.trf.xlu0
          %v1816 = vpop.trf.xlu0
          %v1817 = vpop.trf.xlu0
          %v1818 = vpop.trf.xlu0
          %v1819 = vpop.trf.xlu0
          %v1820 = vpop.trf.xlu0
          %v1821 = vpop.trf.xlu0
          %v1822 = vpop.trf.xlu0
          %v1823 = vpop.trf.xlu0
          %v1824 = vpop.trf.xlu0
          %1825 = vxpose.xlu0.b32.start [1/16] %v1714, 128
          %1826 = vxpose.xlu0.b32.cont [2/16] %v1716, 128
          %1827 = vxpose.xlu0.b32.cont [3/16] %v1719, 128
          %1828 = vxpose.xlu0.b32.cont [4/16] %v1721, 128
          %1829 = vxpose.xlu0.b32.cont [5/16] %v1724, 128
          %1830 = vxpose.xlu0.b32.cont [6/16] %v1726, 128
          %1831 = vxpose.xlu0.b32.cont [7/16] %v1729, 128
          %1832 = vxpose.xlu0.b32.cont [8/16] %v1731, 128
          %1833 = vxpose.xlu0.b32.cont [9/16] %v1734, 128
          %1834 = vxpose.xlu0.b32.cont [10/16] %v1736, 128
          %1835 = vxpose.xlu0.b32.cont [11/16] %v1739, 128
          %1836 = vxpose.xlu0.b32.cont [12/16] %v1741, 128
          %1837 = vxpose.xlu0.b32.cont [13/16] %v1744, 128
          %1838 = vxpose.xlu0.b32.cont [14/16] %v1746, 128
          %1839 = vxpose.xlu0.b32.cont [15/16] %v1749, 128
          %1840 = vxpose.xlu0.b32.end [16/16] %v1751, 128
          %v1841 = vpop.trf.xlu0
          %v1842 = vpop.trf.xlu0
          %v1843 = vpop.trf.xlu0
          %v1844 = vpop.trf.xlu0
          %v1845 = vpop.trf.xlu0
          %v1846 = vpop.trf.xlu0
          %v1847 = vpop.trf.xlu0
          %v1848 = vpop.trf.xlu0
          %v1849 = vpop.trf.xlu0
          %v1850 = vpop.trf.xlu0
          %v1851 = vpop.trf.xlu0
          %v1852 = vpop.trf.xlu0
          %v1853 = vpop.trf.xlu0
          %v1854 = vpop.trf.xlu0
          %v1855 = vpop.trf.xlu0
          %v1856 = vpop.trf.xlu0
          %1857 = vxpose.xlu0.b32.start [1/16] %v1665, 128
          %1858 = vxpose.xlu0.b32.cont [2/16] %v1667, 128
          %1859 = vxpose.xlu0.b32.cont [3/16] %v1670, 128
          %1860 = vxpose.xlu0.b32.cont [4/16] %v1672, 128
          %1861 = vxpose.xlu0.b32.cont [5/16] %v1675, 128
          %1862 = vxpose.xlu0.b32.cont [6/16] %v1677, 128
          %1863 = vxpose.xlu0.b32.cont [7/16] %v1680, 128
          %1864 = vxpose.xlu0.b32.cont [8/16] %v1682, 128
          %1865 = vxpose.xlu0.b32.cont [9/16] %v1685, 128
          %1866 = vxpose.xlu0.b32.cont [10/16] %v1687, 128
          %1867 = vxpose.xlu0.b32.cont [11/16] %v1690, 128
          %1868 = vxpose.xlu0.b32.cont [12/16] %v1692, 128
          %1869 = vxpose.xlu0.b32.cont [13/16] %v1695, 128
          %1870 = vxpose.xlu0.b32.cont [14/16] %v1697, 128
          %1871 = vxpose.xlu0.b32.cont [15/16] %v1700, 128
          %1872 = vxpose.xlu0.b32.end [16/16] %v1702, 128
          %v1873 = vpop.trf.xlu0
          %v1874 = vpop.trf.xlu0
          %v1875 = vpop.trf.xlu0
          %v1876 = vpop.trf.xlu0
          %v1877 = vpop.trf.xlu0
          %v1878 = vpop.trf.xlu0
          %v1879 = vpop.trf.xlu0
          %v1880 = vpop.trf.xlu0
          %v1881 = vpop.trf.xlu0
          %v1882 = vpop.trf.xlu0
          %v1883 = vpop.trf.xlu0
          %v1884 = vpop.trf.xlu0
          %v1885 = vpop.trf.xlu0
          %v1886 = vpop.trf.xlu0
          %v1887 = vpop.trf.xlu0
          %v1888 = vpop.trf.xlu0
          %1889 = vxpose.xlu0.b32.start [1/16] %v1754, 128
          %1890 = vxpose.xlu0.b32.cont [2/16] %v1756, 128
          %1891 = vxpose.xlu0.b32.cont [3/16] %v1759, 128
          %1892 = vxpose.xlu0.b32.cont [4/16] %v1761, 128
          %1893 = vxpose.xlu0.b32.cont [5/16] %v1764, 128
          %1894 = vxpose.xlu0.b32.cont [6/16] %v1766, 128
          %1895 = vxpose.xlu0.b32.cont [7/16] %v1769, 128
          %1896 = vxpose.xlu0.b32.cont [8/16] %v1771, 128
          %1897 = vxpose.xlu0.b32.cont [9/16] %v1774, 128
          %1898 = vxpose.xlu0.b32.cont [10/16] %v1776, 128
          %1899 = vxpose.xlu0.b32.cont [11/16] %v1779, 128
          %1900 = vxpose.xlu0.b32.cont [12/16] %v1781, 128
          %1901 = vxpose.xlu0.b32.cont [13/16] %v1784, 128
          %1902 = vxpose.xlu0.b32.cont [14/16] %v1786, 128
          %1903 = vxpose.xlu0.b32.cont [15/16] %v1789, 128
          %1904 = vxpose.xlu0.b32.end [16/16] %v1791, 128
          %v1905 = vpop.trf.xlu0
          %v1906 = vpop.trf.xlu0
          %v1907 = vpop.trf.xlu0
          %v1908 = vpop.trf.xlu0
          %v1909 = vpop.trf.xlu0
          %v1910 = vpop.trf.xlu0
          %v1911 = vpop.trf.xlu0
          %v1912 = vpop.trf.xlu0
          %v1913 = vpop.trf.xlu0
          %v1914 = vpop.trf.xlu0
          %v1915 = vpop.trf.xlu0
          %v1916 = vpop.trf.xlu0
          %v1917 = vpop.trf.xlu0
          %v1918 = vpop.trf.xlu0
          %v1919 = vpop.trf.xlu0
          %v1920 = vpop.trf.xlu0
          %v1921 = vpack.c.bf16 %v1809, %v1809
          %v1922 = vpack.c.bf16 %v1810, %v1810
          %v1923 = vpack.c.bf16 %v1811, %v1811
          %v1924 = vpack.c.bf16 %v1812, %v1812
          %v1925 = vpack.c.bf16 %v1813, %v1813
          %v1926 = vpack.c.bf16 %v1814, %v1814
          %v1927 = vpack.c.bf16 %v1815, %v1815
          %v1928 = vpack.c.bf16 %v1816, %v1816
          %v1929 = vpack.c.bf16 %v1817, %v1817
          %v1930 = vpack.c.bf16 %v1818, %v1818
          %v1931 = vpack.c.bf16 %v1819, %v1819
          %v1932 = vpack.c.bf16 %v1820, %v1820
          %v1933 = vpack.c.bf16 %v1821, %v1821
          %v1934 = vpack.c.bf16 %v1822, %v1822
          %v1935 = vpack.c.bf16 %v1823, %v1823
          %v1936 = vpack.c.bf16 %v1824, %v1824
          %1937 = vst [vmem:[#allocation2] sm:$0xf] %v1921
          %1938 = vst [vmem:[#allocation2 + $0x4] sm:$0xf] %v1922
          %1939 = vst [vmem:[#allocation2 + $0x8] sm:$0xf] %v1923
          %1940 = vst [vmem:[#allocation2 + $0xc] sm:$0xf] %v1924
          %1941 = vst [vmem:[#allocation2 + $0x10] sm:$0xf] %v1925
          %1942 = vst [vmem:[#allocation2 + $0x14] sm:$0xf] %v1926
          %1943 = vst [vmem:[#allocation2 + $0x18] sm:$0xf] %v1927
          %1944 = vst [vmem:[#allocation2 + $0x1c] sm:$0xf] %v1928
          %1945 = vst [vmem:[#allocation2 + $0x20] sm:$0xf] %v1929
          %1946 = vst [vmem:[#allocation2 + $0x24] sm:$0xf] %v1930
          %1947 = vst [vmem:[#allocation2 + $0x28] sm:$0xf] %v1931
          %1948 = vst [vmem:[#allocation2 + $0x2c] sm:$0xf] %v1932
          %1949 = vst [vmem:[#allocation2 + $0x30] sm:$0xf] %v1933
          %1950 = vst [vmem:[#allocation2 + $0x34] sm:$0xf] %v1934
          %1951 = vst [vmem:[#allocation2 + $0x38] sm:$0xf] %v1935
          %1952 = vst [vmem:[#allocation2 + $0x3c] sm:$0xf] %v1936
          %v1953 = vpack.c.bf16 %v1841, %v1841
          %v1954 = vpack.c.bf16 %v1842, %v1842
          %v1955 = vpack.c.bf16 %v1843, %v1843
          %v1956 = vpack.c.bf16 %v1844, %v1844
          %v1957 = vpack.c.bf16 %v1845, %v1845
          %v1958 = vpack.c.bf16 %v1846, %v1846
          %v1959 = vpack.c.bf16 %v1847, %v1847
          %v1960 = vpack.c.bf16 %v1848, %v1848
          %v1961 = vpack.c.bf16 %v1849, %v1849
          %v1962 = vpack.c.bf16 %v1850, %v1850
          %v1963 = vpack.c.bf16 %v1851, %v1851
          %v1964 = vpack.c.bf16 %v1852, %v1852
          %v1965 = vpack.c.bf16 %v1853, %v1853
          %v1966 = vpack.c.bf16 %v1854, %v1854
          %v1967 = vpack.c.bf16 %v1855, %v1855
          %v1968 = vpack.c.bf16 %v1856, %v1856
          %1969 = vst [vmem:[#allocation3] sm:$0xf] %v1953
          %1970 = vst [vmem:[#allocation3 + $0x4] sm:$0xf] %v1954
          %1971 = vst [vmem:[#allocation3 + $0x8] sm:$0xf] %v1955
          %1972 = vst [vmem:[#allocation3 + $0xc] sm:$0xf] %v1956
          %1973 = vst [vmem:[#allocation3 + $0x10] sm:$0xf] %v1957
          %1974 = vst [vmem:[#allocation3 + $0x14] sm:$0xf] %v1958
          %1975 = vst [vmem:[#allocation3 + $0x18] sm:$0xf] %v1959
          %1976 = vst [vmem:[#allocation3 + $0x1c] sm:$0xf] %v1960
          %1977 = vst [vmem:[#allocation3 + $0x20] sm:$0xf] %v1961
          %1978 = vst [vmem:[#allocation3 + $0x24] sm:$0xf] %v1962
          %1979 = vst [vmem:[#allocation3 + $0x28] sm:$0xf] %v1963
          %1980 = vst [vmem:[#allocation3 + $0x2c] sm:$0xf] %v1964
          %1981 = vst [vmem:[#allocation3 + $0x30] sm:$0xf] %v1965
          %1982 = vst [vmem:[#allocation3 + $0x34] sm:$0xf] %v1966
          %1983 = vst [vmem:[#allocation3 + $0x38] sm:$0xf] %v1967
          %1984 = vst [vmem:[#allocation3 + $0x3c] sm:$0xf] %v1968
          %v1985 = vpack.c.bf16 %v1873, %v1873
          %v1986 = vpack.c.bf16 %v1874, %v1874
          %v1987 = vpack.c.bf16 %v1875, %v1875
          %v1988 = vpack.c.bf16 %v1876, %v1876
          %v1989 = vpack.c.bf16 %v1877, %v1877
          %v1990 = vpack.c.bf16 %v1878, %v1878
          %v1991 = vpack.c.bf16 %v1879, %v1879
          %v1992 = vpack.c.bf16 %v1880, %v1880
          %v1993 = vpack.c.bf16 %v1881, %v1881
          %v1994 = vpack.c.bf16 %v1882, %v1882
          %v1995 = vpack.c.bf16 %v1883, %v1883
          %v1996 = vpack.c.bf16 %v1884, %v1884
          %v1997 = vpack.c.bf16 %v1885, %v1885
          %v1998 = vpack.c.bf16 %v1886, %v1886
          %v1999 = vpack.c.bf16 %v1887, %v1887
          %v2000 = vpack.c.bf16 %v1888, %v1888
          %s2001 = scalar_lea.vmem [#allocation2], 64
          %2002 = vst [vmem:[%s2001] sm:$0xf] %v1985
          %2003 = vst [vmem:[%s2001 + $0x4] sm:$0xf] %v1986
          %2004 = vst [vmem:[%s2001 + $0x8] sm:$0xf] %v1987
          %2005 = vst [vmem:[%s2001 + $0xc] sm:$0xf] %v1988
          %2006 = vst [vmem:[%s2001 + $0x10] sm:$0xf] %v1989
          %2007 = vst [vmem:[%s2001 + $0x14] sm:$0xf] %v1990
          %2008 = vst [vmem:[%s2001 + $0x18] sm:$0xf] %v1991
          %2009 = vst [vmem:[%s2001 + $0x1c] sm:$0xf] %v1992
          %2010 = vst [vmem:[%s2001 + $0x20] sm:$0xf] %v1993
          %2011 = vst [vmem:[%s2001 + $0x24] sm:$0xf] %v1994
          %2012 = vst [vmem:[%s2001 + $0x28] sm:$0xf] %v1995
          %2013 = vst [vmem:[%s2001 + $0x2c] sm:$0xf] %v1996
          %2014 = vst [vmem:[%s2001 + $0x30] sm:$0xf] %v1997
          %2015 = vst [vmem:[%s2001 + $0x34] sm:$0xf] %v1998
          %2016 = vst [vmem:[%s2001 + $0x38] sm:$0xf] %v1999
          %2017 = vst [vmem:[%s2001 + $0x3c] sm:$0xf] %v2000
          %v2018 = vpack.c.bf16 %v1905, %v1905
          %v2019 = vpack.c.bf16 %v1906, %v1906
          %v2020 = vpack.c.bf16 %v1907, %v1907
          %v2021 = vpack.c.bf16 %v1908, %v1908
          %v2022 = vpack.c.bf16 %v1909, %v1909
          %v2023 = vpack.c.bf16 %v1910, %v1910
          %v2024 = vpack.c.bf16 %v1911, %v1911
          %v2025 = vpack.c.bf16 %v1912, %v1912
          %v2026 = vpack.c.bf16 %v1913, %v1913
          %v2027 = vpack.c.bf16 %v1914, %v1914
          %v2028 = vpack.c.bf16 %v1915, %v1915
          %v2029 = vpack.c.bf16 %v1916, %v1916
          %v2030 = vpack.c.bf16 %v1917, %v1917
          %v2031 = vpack.c.bf16 %v1918, %v1918
          %v2032 = vpack.c.bf16 %v1919, %v1919
          %v2033 = vpack.c.bf16 %v1920, %v1920
          %s2034 = scalar_lea.vmem [#allocation3], 64
          %2035 = vst [vmem:[%s2034] sm:$0xf] %v2018
          %2036 = vst [vmem:[%s2034 + $0x4] sm:$0xf] %v2019
          %2037 = vst [vmem:[%s2034 + $0x8] sm:$0xf] %v2020
          %2038 = vst [vmem:[%s2034 + $0xc] sm:$0xf] %v2021
          %2039 = vst [vmem:[%s2034 + $0x10] sm:$0xf] %v2022
          %2040 = vst [vmem:[%s2034 + $0x14] sm:$0xf] %v2023
          %2041 = vst [vmem:[%s2034 + $0x18] sm:$0xf] %v2024
          %2042 = vst [vmem:[%s2034 + $0x1c] sm:$0xf] %v2025
          %2043 = vst [vmem:[%s2034 + $0x20] sm:$0xf] %v2026
          %2044 = vst [vmem:[%s2034 + $0x24] sm:$0xf] %v2027
          %2045 = vst [vmem:[%s2034 + $0x28] sm:$0xf] %v2028
          %2046 = vst [vmem:[%s2034 + $0x2c] sm:$0xf] %v2029
          %2047 = vst [vmem:[%s2034 + $0x30] sm:$0xf] %v2030
          %2048 = vst [vmem:[%s2034 + $0x34] sm:$0xf] %v2031
          %2049 = vst [vmem:[%s2034 + $0x38] sm:$0xf] %v2032
          %2050 = vst [vmem:[%s2034 + $0x3c] sm:$0xf] %v2033
        $region124: #{tpu_custom_call.1} parent=83 // pred_fallthru
          _
        %s2051 = smul.u32 %s44, 128
        %s2052 = sshra.s32 %s2051, 3
        %s2053 = sand.u32 %s2051, 7
        %s2054 = smul.addr %s2052, 4
        %s2055 = scalar_lea.vmem %s608, %s2054 [#allocation4]
        %v2056 = vld [vmem:[%s2055] sm:$0xf]
        %v2057 = vld [vmem:[%s2055 + $0x4] sm:$0xf]
        %v2058 = vld [vmem:[%s2055 + $0x8] sm:$0xf]
        %v2059 = vld [vmem:[%s2055 + $0xc] sm:$0xf]
        %v2060 = vld [vmem:[%s2055 + $0x10] sm:$0xf]
        %v2061 = vld [vmem:[%s2055 + $0x14] sm:$0xf]
        %v2062 = vld [vmem:[%s2055 + $0x18] sm:$0xf]
        %v2063 = vld [vmem:[%s2055 + $0x1c] sm:$0xf]
        %v2064 = vld [vmem:[%s2055 + $0x20] sm:$0xf]
        %v2065 = vld [vmem:[%s2055 + $0x24] sm:$0xf]
        %v2066 = vld [vmem:[%s2055 + $0x28] sm:$0xf]
        %v2067 = vld [vmem:[%s2055 + $0x2c] sm:$0xf]
        %v2068 = vld [vmem:[%s2055 + $0x30] sm:$0xf]
        %v2069 = vld [vmem:[%s2055 + $0x34] sm:$0xf]
        %v2070 = vld [vmem:[%s2055 + $0x38] sm:$0xf]
        %v2071 = vld [vmem:[%s2055 + $0x3c] sm:$0xf]
        %v2072 = vunpack.c.l.bf16 %v2056
        %v2073 = vunpack.c.l.bf16 %v2057
        %v2074 = vunpack.c.l.bf16 %v2058
        %v2075 = vunpack.c.l.bf16 %v2059
        %v2076 = vunpack.c.l.bf16 %v2060
        %v2077 = vunpack.c.l.bf16 %v2061
        %v2078 = vunpack.c.l.bf16 %v2062
        %v2079 = vunpack.c.l.bf16 %v2063
        %v2080 = vunpack.c.l.bf16 %v2064
        %v2081 = vunpack.c.l.bf16 %v2065
        %v2082 = vunpack.c.l.bf16 %v2066
        %v2083 = vunpack.c.l.bf16 %v2067
        %v2084 = vunpack.c.l.bf16 %v2068
        %v2085 = vunpack.c.l.bf16 %v2069
        %v2086 = vunpack.c.l.bf16 %v2070
        %v2087 = vunpack.c.l.bf16 %v2071
        %v2088 = vld [vmem:[%s2] sm:$0x1]
        %v2089 = vld [vmem:[#allocation9] sm:$0x1]
        %2090 = vadd.xlane.f32.xlu0 %v2072
        %v2091 = vpop.xlane.xlu0 %2090
        %2092 = vadd.xlane.f32.xlu0 %v2073
        %v2093 = vpop.xlane.xlu0 %2092
        %2094 = vadd.xlane.f32.xlu0 %v2074
        %v2095 = vpop.xlane.xlu0 %2094
        %2096 = vadd.xlane.f32.xlu0 %v2075
        %v2097 = vpop.xlane.xlu0 %2096
        %2098 = vadd.xlane.f32.xlu0 %v2076
        %v2099 = vpop.xlane.xlu0 %2098
        %2100 = vadd.xlane.f32.xlu0 %v2077
        %v2101 = vpop.xlane.xlu0 %2100
        %2102 = vadd.xlane.f32.xlu0 %v2078
        %v2103 = vpop.xlane.xlu0 %2102
        %2104 = vadd.xlane.f32.xlu0 %v2079
        %v2105 = vpop.xlane.xlu0 %2104
        %2106 = vadd.xlane.f32.xlu0 %v2080
        %v2107 = vpop.xlane.xlu0 %2106
        %2108 = vadd.xlane.f32.xlu0 %v2081
        %v2109 = vpop.xlane.xlu0 %2108
        %2110 = vadd.xlane.f32.xlu0 %v2082
        %v2111 = vpop.xlane.xlu0 %2110
        %2112 = vadd.xlane.f32.xlu0 %v2083
        %v2113 = vpop.xlane.xlu0 %2112
        %2114 = vadd.xlane.f32.xlu0 %v2084
        %v2115 = vpop.xlane.xlu0 %2114
        %2116 = vadd.xlane.f32.xlu0 %v2085
        %v2117 = vpop.xlane.xlu0 %2116
        %2118 = vadd.xlane.f32.xlu0 %v2086
        %v2119 = vpop.xlane.xlu0 %2118
        %2120 = vadd.xlane.f32.xlu0 %v2087
        %v2121 = vpop.xlane.xlu0 %2120
        %v2122 = vrcp.pop 128.0
        %v2123 = vmul.f32 128.0, %v2122
        %v2124 = vsub.f32 1.0, %v2123
        %v2125 = vmul.f32 %v2122, %v2124
        %v2126 = vadd.f32 %v2122, %v2125
        %vm2127 = vweird.f32 %v2122
        %v2128 = vsel %vm2127, %v2122, %v2126
        %v2129 = vmul.f32 %v2091, %v2128
        %v2130 = vmul.f32 %v2093, %v2128
        %v2131 = vmul.f32 %v2095, %v2128
        %v2132 = vmul.f32 %v2097, %v2128
        %v2133 = vmul.f32 %v2099, %v2128
        %v2134 = vmul.f32 %v2101, %v2128
        %v2135 = vmul.f32 %v2103, %v2128
        %v2136 = vmul.f32 %v2105, %v2128
        %v2137 = vmul.f32 %v2107, %v2128
        %v2138 = vmul.f32 %v2109, %v2128
        %v2139 = vmul.f32 %v2111, %v2128
        %v2140 = vmul.f32 %v2113, %v2128
        %v2141 = vmul.f32 %v2115, %v2128
        %v2142 = vmul.f32 %v2117, %v2128
        %v2143 = vmul.f32 %v2119, %v2128
        %v2144 = vmul.f32 %v2121, %v2128
        %v2145 = vsub.f32 %v2072, %v2129
        %v2146 = vsub.f32 %v2073, %v2130
        %v2147 = vsub.f32 %v2074, %v2131
        %v2148 = vsub.f32 %v2075, %v2132
        %v2149 = vsub.f32 %v2076, %v2133
        %v2150 = vsub.f32 %v2077, %v2134
        %v2151 = vsub.f32 %v2078, %v2135
        %v2152 = vsub.f32 %v2079, %v2136
        %v2153 = vsub.f32 %v2080, %v2137
        %v2154 = vsub.f32 %v2081, %v2138
        %v2155 = vsub.f32 %v2082, %v2139
        %v2156 = vsub.f32 %v2083, %v2140
        %v2157 = vsub.f32 %v2084, %v2141
        %v2158 = vsub.f32 %v2085, %v2142
        %v2159 = vsub.f32 %v2086, %v2143
        %v2160 = vsub.f32 %v2087, %v2144
        %v2161 = vmul.f32 %v2145, %v2145
        %v2162 = vmul.f32 %v2146, %v2146
        %v2163 = vmul.f32 %v2147, %v2147
        %v2164 = vmul.f32 %v2148, %v2148
        %v2165 = vmul.f32 %v2149, %v2149
        %v2166 = vmul.f32 %v2150, %v2150
        %v2167 = vmul.f32 %v2151, %v2151
        %v2168 = vmul.f32 %v2152, %v2152
        %v2169 = vmul.f32 %v2153, %v2153
        %v2170 = vmul.f32 %v2154, %v2154
        %v2171 = vmul.f32 %v2155, %v2155
        %v2172 = vmul.f32 %v2156, %v2156
        %v2173 = vmul.f32 %v2157, %v2157
        %v2174 = vmul.f32 %v2158, %v2158
        %v2175 = vmul.f32 %v2159, %v2159
        %v2176 = vmul.f32 %v2160, %v2160
        %2177 = vadd.xlane.f32.xlu0 %v2161
        %v2178 = vpop.xlane.xlu0 %2177
        %2179 = vadd.xlane.f32.xlu0 %v2162
        %v2180 = vpop.xlane.xlu0 %2179
        %2181 = vadd.xlane.f32.xlu0 %v2163
        %v2182 = vpop.xlane.xlu0 %2181
        %2183 = vadd.xlane.f32.xlu0 %v2164
        %v2184 = vpop.xlane.xlu0 %2183
        %2185 = vadd.xlane.f32.xlu0 %v2165
        %v2186 = vpop.xlane.xlu0 %2185
        %2187 = vadd.xlane.f32.xlu0 %v2166
        %v2188 = vpop.xlane.xlu0 %2187
        %2189 = vadd.xlane.f32.xlu0 %v2167
        %v2190 = vpop.xlane.xlu0 %2189
        %2191 = vadd.xlane.f32.xlu0 %v2168
        %v2192 = vpop.xlane.xlu0 %2191
        %2193 = vadd.xlane.f32.xlu0 %v2169
        %v2194 = vpop.xlane.xlu0 %2193
        %2195 = vadd.xlane.f32.xlu0 %v2170
        %v2196 = vpop.xlane.xlu0 %2195
        %2197 = vadd.xlane.f32.xlu0 %v2171
        %v2198 = vpop.xlane.xlu0 %2197
        %2199 = vadd.xlane.f32.xlu0 %v2172
        %v2200 = vpop.xlane.xlu0 %2199
        %2201 = vadd.xlane.f32.xlu0 %v2173
        %v2202 = vpop.xlane.xlu0 %2201
        %2203 = vadd.xlane.f32.xlu0 %v2174
        %v2204 = vpop.xlane.xlu0 %2203
        %2205 = vadd.xlane.f32.xlu0 %v2175
        %v2206 = vpop.xlane.xlu0 %2205
        %2207 = vadd.xlane.f32.xlu0 %v2176
        %v2208 = vpop.xlane.xlu0 %2207
        %v2209 = vmul.f32 %v2178, %v2128
        %v2210 = vmul.f32 %v2180, %v2128
        %v2211 = vmul.f32 %v2182, %v2128
        %v2212 = vmul.f32 %v2184, %v2128
        %v2213 = vmul.f32 %v2186, %v2128
        %v2214 = vmul.f32 %v2188, %v2128
        %v2215 = vmul.f32 %v2190, %v2128
        %v2216 = vmul.f32 %v2192, %v2128
        %v2217 = vmul.f32 %v2194, %v2128
        %v2218 = vmul.f32 %v2196, %v2128
        %v2219 = vmul.f32 %v2198, %v2128
        %v2220 = vmul.f32 %v2200, %v2128
        %v2221 = vmul.f32 %v2202, %v2128
        %v2222 = vmul.f32 %v2204, %v2128
        %v2223 = vmul.f32 %v2206, %v2128
        %v2224 = vmul.f32 %v2208, %v2128
        %v2225 = vadd.f32 %v2209, 1e-05
        %v2226 = vadd.f32 %v2210, 1e-05
        %v2227 = vadd.f32 %v2211, 1e-05
        %v2228 = vadd.f32 %v2212, 1e-05
        %v2229 = vadd.f32 %v2213, 1e-05
        %v2230 = vadd.f32 %v2214, 1e-05
        %v2231 = vadd.f32 %v2215, 1e-05
        %v2232 = vadd.f32 %v2216, 1e-05
        %v2233 = vadd.f32 %v2217, 1e-05
        %v2234 = vadd.f32 %v2218, 1e-05
        %v2235 = vadd.f32 %v2219, 1e-05
        %v2236 = vadd.f32 %v2220, 1e-05
        %v2237 = vadd.f32 %v2221, 1e-05
        %v2238 = vadd.f32 %v2222, 1e-05
        %v2239 = vadd.f32 %v2223, 1e-05
        %v2240 = vadd.f32 %v2224, 1e-05
        %v2241 = vrsqrt.pop %v2225
        %v2242 = vmul.f32 %v2241, %v2225
        %v2243 = vmul.f32 %v2242, %v2241
        %v2244 = vmul.f32 0.5, %v2243
        %v2245 = vsub.f32 1.5, %v2244
        %v2246 = vmul.f32 %v2241, %v2245
        %vm2247 = vweird.f32 %v2225
        %vm2248 = vweird.f32 %v2241
        %vm2249 = vmor %vm2247, %vm2248
        %v2250 = vsel %vm2249, %v2241, %v2246
        %v2251 = vrsqrt.pop %v2226
        %v2252 = vmul.f32 %v2251, %v2226
        %v2253 = vmul.f32 %v2252, %v2251
        %v2254 = vmul.f32 0.5, %v2253
        %v2255 = vsub.f32 1.5, %v2254
        %v2256 = vmul.f32 %v2251, %v2255
        %vm2257 = vweird.f32 %v2226
        %vm2258 = vweird.f32 %v2251
        %vm2259 = vmor %vm2257, %vm2258
        %v2260 = vsel %vm2259, %v2251, %v2256
        %v2261 = vrsqrt.pop %v2227
        %v2262 = vmul.f32 %v2261, %v2227
        %v2263 = vmul.f32 %v2262, %v2261
        %v2264 = vmul.f32 0.5, %v2263
        %v2265 = vsub.f32 1.5, %v2264
        %v2266 = vmul.f32 %v2261, %v2265
        %vm2267 = vweird.f32 %v2227
        %vm2268 = vweird.f32 %v2261
        %vm2269 = vmor %vm2267, %vm2268
        %v2270 = vsel %vm2269, %v2261, %v2266
        %v2271 = vrsqrt.pop %v2228
        %v2272 = vmul.f32 %v2271, %v2228
        %v2273 = vmul.f32 %v2272, %v2271
        %v2274 = vmul.f32 0.5, %v2273
        %v2275 = vsub.f32 1.5, %v2274
        %v2276 = vmul.f32 %v2271, %v2275
        %vm2277 = vweird.f32 %v2228
        %vm2278 = vweird.f32 %v2271
        %vm2279 = vmor %vm2277, %vm2278
        %v2280 = vsel %vm2279, %v2271, %v2276
        %v2281 = vrsqrt.pop %v2229
        %v2282 = vmul.f32 %v2281, %v2229
        %v2283 = vmul.f32 %v2282, %v2281
        %v2284 = vmul.f32 0.5, %v2283
        %v2285 = vsub.f32 1.5, %v2284
        %v2286 = vmul.f32 %v2281, %v2285
        %vm2287 = vweird.f32 %v2229
        %vm2288 = vweird.f32 %v2281
        %vm2289 = vmor %vm2287, %vm2288
        %v2290 = vsel %vm2289, %v2281, %v2286
        %v2291 = vrsqrt.pop %v2230
        %v2292 = vmul.f32 %v2291, %v2230
        %v2293 = vmul.f32 %v2292, %v2291
        %v2294 = vmul.f32 0.5, %v2293
        %v2295 = vsub.f32 1.5, %v2294
        %v2296 = vmul.f32 %v2291, %v2295
        %vm2297 = vweird.f32 %v2230
        %vm2298 = vweird.f32 %v2291
        %vm2299 = vmor %vm2297, %vm2298
        %v2300 = vsel %vm2299, %v2291, %v2296
        %v2301 = vrsqrt.pop %v2231
        %v2302 = vmul.f32 %v2301, %v2231
        %v2303 = vmul.f32 %v2302, %v2301
        %v2304 = vmul.f32 0.5, %v2303
        %v2305 = vsub.f32 1.5, %v2304
        %v2306 = vmul.f32 %v2301, %v2305
        %vm2307 = vweird.f32 %v2231
        %vm2308 = vweird.f32 %v2301
        %vm2309 = vmor %vm2307, %vm2308
        %v2310 = vsel %vm2309, %v2301, %v2306
        %v2311 = vrsqrt.pop %v2232
        %v2312 = vmul.f32 %v2311, %v2232
        %v2313 = vmul.f32 %v2312, %v2311
        %v2314 = vmul.f32 0.5, %v2313
        %v2315 = vsub.f32 1.5, %v2314
        %v2316 = vmul.f32 %v2311, %v2315
        %vm2317 = vweird.f32 %v2232
        %vm2318 = vweird.f32 %v2311
        %vm2319 = vmor %vm2317, %vm2318
        %v2320 = vsel %vm2319, %v2311, %v2316
        %v2321 = vrsqrt.pop %v2233
        %v2322 = vmul.f32 %v2321, %v2233
        %v2323 = vmul.f32 %v2322, %v2321
        %v2324 = vmul.f32 0.5, %v2323
        %v2325 = vsub.f32 1.5, %v2324
        %v2326 = vmul.f32 %v2321, %v2325
        %vm2327 = vweird.f32 %v2233
        %vm2328 = vweird.f32 %v2321
        %vm2329 = vmor %vm2327, %vm2328
        %v2330 = vsel %vm2329, %v2321, %v2326
        %v2331 = vrsqrt.pop %v2234
        %v2332 = vmul.f32 %v2331, %v2234
        %v2333 = vmul.f32 %v2332, %v2331
        %v2334 = vmul.f32 0.5, %v2333
        %v2335 = vsub.f32 1.5, %v2334
        %v2336 = vmul.f32 %v2331, %v2335
        %vm2337 = vweird.f32 %v2234
        %vm2338 = vweird.f32 %v2331
        %vm2339 = vmor %vm2337, %vm2338
        %v2340 = vsel %vm2339, %v2331, %v2336
        %v2341 = vrsqrt.pop %v2235
        %v2342 = vmul.f32 %v2341, %v2235
        %v2343 = vmul.f32 %v2342, %v2341
        %v2344 = vmul.f32 0.5, %v2343
        %v2345 = vsub.f32 1.5, %v2344
        %v2346 = vmul.f32 %v2341, %v2345
        %vm2347 = vweird.f32 %v2235
        %vm2348 = vweird.f32 %v2341
        %vm2349 = vmor %vm2347, %vm2348
        %v2350 = vsel %vm2349, %v2341, %v2346
        %v2351 = vrsqrt.pop %v2236
        %v2352 = vmul.f32 %v2351, %v2236
        %v2353 = vmul.f32 %v2352, %v2351
        %v2354 = vmul.f32 0.5, %v2353
        %v2355 = vsub.f32 1.5, %v2354
        %v2356 = vmul.f32 %v2351, %v2355
        %vm2357 = vweird.f32 %v2236
        %vm2358 = vweird.f32 %v2351
        %vm2359 = vmor %vm2357, %vm2358
        %v2360 = vsel %vm2359, %v2351, %v2356
        %v2361 = vrsqrt.pop %v2237
        %v2362 = vmul.f32 %v2361, %v2237
        %v2363 = vmul.f32 %v2362, %v2361
        %v2364 = vmul.f32 0.5, %v2363
        %v2365 = vsub.f32 1.5, %v2364
        %v2366 = vmul.f32 %v2361, %v2365
        %vm2367 = vweird.f32 %v2237
        %vm2368 = vweird.f32 %v2361
        %vm2369 = vmor %vm2367, %vm2368
        %v2370 = vsel %vm2369, %v2361, %v2366
        %v2371 = vrsqrt.pop %v2238
        %v2372 = vmul.f32 %v2371, %v2238
        %v2373 = vmul.f32 %v2372, %v2371
        %v2374 = vmul.f32 0.5, %v2373
        %v2375 = vsub.f32 1.5, %v2374
        %v2376 = vmul.f32 %v2371, %v2375
        %vm2377 = vweird.f32 %v2238
        %vm2378 = vweird.f32 %v2371
        %vm2379 = vmor %vm2377, %vm2378
        %v2380 = vsel %vm2379, %v2371, %v2376
        %v2381 = vrsqrt.pop %v2239
        %v2382 = vmul.f32 %v2381, %v2239
        %v2383 = vmul.f32 %v2382, %v2381
        %v2384 = vmul.f32 0.5, %v2383
        %v2385 = vsub.f32 1.5, %v2384
        %v2386 = vmul.f32 %v2381, %v2385
        %vm2387 = vweird.f32 %v2239
        %vm2388 = vweird.f32 %v2381
        %vm2389 = vmor %vm2387, %vm2388
        %v2390 = vsel %vm2389, %v2381, %v2386
        %v2391 = vrsqrt.pop %v2240
        %v2392 = vmul.f32 %v2391, %v2240
        %v2393 = vmul.f32 %v2392, %v2391
        %v2394 = vmul.f32 0.5, %v2393
        %v2395 = vsub.f32 1.5, %v2394
        %v2396 = vmul.f32 %v2391, %v2395
        %vm2397 = vweird.f32 %v2240
        %vm2398 = vweird.f32 %v2391
        %vm2399 = vmor %vm2397, %vm2398
        %v2400 = vsel %vm2399, %v2391, %v2396
        %v2401 = vmul.f32 %v2145, %v2250
        %v2402 = vmul.f32 %v2146, %v2260
        %v2403 = vmul.f32 %v2147, %v2270
        %v2404 = vmul.f32 %v2148, %v2280
        %v2405 = vmul.f32 %v2149, %v2290
        %v2406 = vmul.f32 %v2150, %v2300
        %v2407 = vmul.f32 %v2151, %v2310
        %v2408 = vmul.f32 %v2152, %v2320
        %v2409 = vmul.f32 %v2153, %v2330
        %v2410 = vmul.f32 %v2154, %v2340
        %v2411 = vmul.f32 %v2155, %v2350
        %v2412 = vmul.f32 %v2156, %v2360
        %v2413 = vmul.f32 %v2157, %v2370
        %v2414 = vmul.f32 %v2158, %v2380
        %v2415 = vmul.f32 %v2159, %v2390
        %v2416 = vmul.f32 %v2160, %v2400
        %v2418 = vperm.slane %v2088, 0
        %v2420 = vmul.f32 %v2401, %v2418
        %v2421 = vmul.f32 %v2402, %v2418
        %v2422 = vmul.f32 %v2403, %v2418
        %v2423 = vmul.f32 %v2404, %v2418
        %v2424 = vmul.f32 %v2405, %v2418
        %v2425 = vmul.f32 %v2406, %v2418
        %v2426 = vmul.f32 %v2407, %v2418
        %v2427 = vmul.f32 %v2408, %v2418
        %v2428 = vmul.f32 %v2409, %v2418
        %v2429 = vmul.f32 %v2410, %v2418
        %v2430 = vmul.f32 %v2411, %v2418
        %v2431 = vmul.f32 %v2412, %v2418
        %v2432 = vmul.f32 %v2413, %v2418
        %v2433 = vmul.f32 %v2414, %v2418
        %v2434 = vmul.f32 %v2415, %v2418
        %v2435 = vmul.f32 %v2416, %v2418
        %v2437 = vperm.slane %v2089, 0
        %v2439 = vadd.f32 %v2420, %v2437
        %v2440 = vadd.f32 %v2421, %v2437
        %v2441 = vadd.f32 %v2422, %v2437
        %v2442 = vadd.f32 %v2423, %v2437
        %v2443 = vadd.f32 %v2424, %v2437
        %v2444 = vadd.f32 %v2425, %v2437
        %v2445 = vadd.f32 %v2426, %v2437
        %v2446 = vadd.f32 %v2427, %v2437
        %v2447 = vadd.f32 %v2428, %v2437
        %v2448 = vadd.f32 %v2429, %v2437
        %v2449 = vadd.f32 %v2430, %v2437
        %v2450 = vadd.f32 %v2431, %v2437
        %v2451 = vadd.f32 %v2432, %v2437
        %v2452 = vadd.f32 %v2433, %v2437
        %v2453 = vadd.f32 %v2434, %v2437
        %v2454 = vadd.f32 %v2435, %v2437
        %v2455 = vpack.c.bf16 %v2440, %v2439
        %v2456 = vpack.c.bf16 %v2442, %v2441
        %v2457 = vpack.c.bf16 %v2444, %v2443
        %v2458 = vpack.c.bf16 %v2446, %v2445
        %v2459 = vpack.c.bf16 %v2448, %v2447
        %v2460 = vpack.c.bf16 %v2450, %v2449
        %v2461 = vpack.c.bf16 %v2452, %v2451
        %v2462 = vpack.c.bf16 %v2454, %v2453
        %v2463 = vld [vmem:[#allocation10] sm:$0xf]
        %v2464 = vld [vmem:[#allocation10 + $0x4] sm:$0xf]
        %v2465 = vld [vmem:[#allocation10 + $0x8] sm:$0xf]
        %v2466 = vld [vmem:[#allocation10 + $0xc] sm:$0xf]
        %v2467 = vld [vmem:[#allocation10 + $0x10] sm:$0xf]
        %v2468 = vld [vmem:[#allocation10 + $0x14] sm:$0xf]
        %v2469 = vld [vmem:[#allocation10 + $0x18] sm:$0xf]
        %v2470 = vld [vmem:[#allocation10 + $0x1c] sm:$0xf]
        %v2471 = vld [vmem:[#allocation10 + $0x20] sm:$0xf]
        %v2472 = vld [vmem:[#allocation10 + $0x24] sm:$0xf]
        %v2473 = vld [vmem:[#allocation10 + $0x28] sm:$0xf]
        %v2474 = vld [vmem:[#allocation10 + $0x2c] sm:$0xf]
        %v2475 = vld [vmem:[#allocation10 + $0x30] sm:$0xf]
        %v2476 = vld [vmem:[#allocation10 + $0x34] sm:$0xf]
        %v2477 = vld [vmem:[#allocation10 + $0x38] sm:$0xf]
        %v2478 = vld [vmem:[#allocation10 + $0x3c] sm:$0xf]
        %v2479 = vld [vmem:[#allocation12] sm:$0x1]
        %v2481 = vperm.slane %v2479, 0
        %v2499 = vunpack.c.l.b16 %v2463
        %v2500 = vunpack.c.l.b16 %v2464
        %v2501 = vunpack.c.l.b16 %v2465
        %v2502 = vunpack.c.l.b16 %v2466
        %v2503 = vunpack.c.l.b16 %v2467
        %v2504 = vunpack.c.l.b16 %v2468
        %v2505 = vunpack.c.l.b16 %v2469
        %v2506 = vunpack.c.l.b16 %v2470
        %v2507 = vunpack.c.l.b16 %v2471
        %v2508 = vunpack.c.l.b16 %v2472
        %v2509 = vunpack.c.l.b16 %v2473
        %v2510 = vunpack.c.l.b16 %v2474
        %v2511 = vunpack.c.l.b16 %v2475
        %v2512 = vunpack.c.l.b16 %v2476
        %v2513 = vunpack.c.l.b16 %v2477
        %v2514 = vunpack.c.l.b16 %v2478
        %v2515 = vpack.c.b16 %v2500, %v2499
        %v2516 = vpack.c.b16 %v2502, %v2501
        %v2517 = vpack.c.b16 %v2504, %v2503
        %v2518 = vpack.c.b16 %v2506, %v2505
        %v2519 = vpack.c.b16 %v2508, %v2507
        %v2520 = vpack.c.b16 %v2510, %v2509
        %v2521 = vpack.c.b16 %v2512, %v2511
        %v2522 = vpack.c.b16 %v2514, %v2513
        %2531 = vmatpush.bf16.msra.mxu0 %v2522
        %2532 = vmatpush.bf16.msra.mxu0 %v2521
        %2533 = vmatpush.bf16.msra.mxu0 %v2520
        %2534 = vmatpush.bf16.msra.mxu0 %v2519
        %2535 = vmatpush.bf16.msra.mxu0 %v2518
        %2536 = vmatpush.bf16.msra.mxu0 %v2517
        %2537 = vmatpush.bf16.msra.mxu0 %v2516
        %2538 = vmatpush.bf16.msra.mxu0 %v2515
        %2539 = vmatmul.bf16.gmra.mxu0 %v2455
        %v2540 = vpop.f32.mrf.mxu0
        %v2541 = vadd.f32 %v2481, %v2540
        %v2542 = vpop.f32.mrf.mxu0
        %v2543 = vadd.f32 %v2481, %v2542
        %2544 = vmatmul.bf16.gmra.mxu0 %v2456
        %v2545 = vpop.f32.mrf.mxu0
        %v2546 = vadd.f32 %v2481, %v2545
        %v2547 = vpop.f32.mrf.mxu0
        %v2548 = vadd.f32 %v2481, %v2547
        %2549 = vmatmul.bf16.gmra.mxu0 %v2457
        %v2550 = vpop.f32.mrf.mxu0
        %v2551 = vadd.f32 %v2481, %v2550
        %v2552 = vpop.f32.mrf.mxu0
        %v2553 = vadd.f32 %v2481, %v2552
        %2554 = vmatmul.bf16.gmra.mxu0 %v2458
        %v2555 = vpop.f32.mrf.mxu0
        %v2556 = vadd.f32 %v2481, %v2555
        %v2557 = vpop.f32.mrf.mxu0
        %v2558 = vadd.f32 %v2481, %v2557
        %2559 = vmatmul.bf16.gmra.mxu0 %v2459
        %v2560 = vpop.f32.mrf.mxu0
        %v2561 = vadd.f32 %v2481, %v2560
        %v2562 = vpop.f32.mrf.mxu0
        %v2563 = vadd.f32 %v2481, %v2562
        %2564 = vmatmul.bf16.gmra.mxu0 %v2460
        %v2565 = vpop.f32.mrf.mxu0
        %v2566 = vadd.f32 %v2481, %v2565
        %v2567 = vpop.f32.mrf.mxu0
        %v2568 = vadd.f32 %v2481, %v2567
        %2569 = vmatmul.bf16.gmra.mxu0 %v2461
        %v2570 = vpop.f32.mrf.mxu0
        %v2571 = vadd.f32 %v2481, %v2570
        %v2572 = vpop.f32.mrf.mxu0
        %v2573 = vadd.f32 %v2481, %v2572
        %2574 = vmatmul.bf16.gmra.mxu0 %v2462
        %v2575 = vpop.f32.mrf.mxu0
        %v2576 = vadd.f32 %v2481, %v2575
        %v2577 = vpop.f32.mrf.mxu0
        %v2578 = vadd.f32 %v2481, %v2577
        %2579 = vdwg.mxu0
        %v2580 = vmul.f32 %v2541, 0.17677669
        %v2581 = vmul.f32 %v2543, 0.17677669
        %v2582 = vmul.f32 %v2546, 0.17677669
        %v2583 = vmul.f32 %v2548, 0.17677669
        %v2584 = vmul.f32 %v2551, 0.17677669
        %v2585 = vmul.f32 %v2553, 0.17677669
        %v2586 = vmul.f32 %v2556, 0.17677669
        %v2587 = vmul.f32 %v2558, 0.17677669
        %v2588 = vmul.f32 %v2561, 0.17677669
        %v2589 = vmul.f32 %v2563, 0.17677669
        %v2590 = vmul.f32 %v2566, 0.17677669
        %v2591 = vmul.f32 %v2568, 0.17677669
        %v2592 = vmul.f32 %v2571, 0.17677669
        %v2593 = vmul.f32 %v2573, 0.17677669
        %v2594 = vmul.f32 %v2576, 0.17677669
        %v2595 = vmul.f32 %v2578, 0.17677669
        %v2596 = vpack.c.bf16 %v2580, %v2580
        %v2597 = vpack.c.bf16 %v2581, %v2581
        %v2598 = vpack.c.bf16 %v2582, %v2582
        %v2599 = vpack.c.bf16 %v2583, %v2583
        %v2600 = vpack.c.bf16 %v2584, %v2584
        %v2601 = vpack.c.bf16 %v2585, %v2585
        %v2602 = vpack.c.bf16 %v2586, %v2586
        %v2603 = vpack.c.bf16 %v2587, %v2587
        %v2604 = vpack.c.bf16 %v2588, %v2588
        %v2605 = vpack.c.bf16 %v2589, %v2589
        %v2606 = vpack.c.bf16 %v2590, %v2590
        %v2607 = vpack.c.bf16 %v2591, %v2591
        %v2608 = vpack.c.bf16 %v2592, %v2592
        %v2609 = vpack.c.bf16 %v2593, %v2593
        %v2610 = vpack.c.bf16 %v2594, %v2594
        %v2611 = vpack.c.bf16 %v2595, %v2595
        %2628 = vrot.lane.b32.xlu0 %v2596, 96
        %v2629 = vpop.permute.xlu0 %2628
        %2630 = vrot.lane.b32.xlu0 %v2597, 96
        %v2631 = vpop.permute.xlu0 %2630
        %2632 = vrot.lane.b32.xlu0 %v2598, 96
        %v2633 = vpop.permute.xlu0 %2632
        %2634 = vrot.lane.b32.xlu0 %v2599, 96
        %v2635 = vpop.permute.xlu0 %2634
        %2636 = vrot.lane.b32.xlu0 %v2600, 96
        %v2637 = vpop.permute.xlu0 %2636
        %2638 = vrot.lane.b32.xlu0 %v2601, 96
        %v2639 = vpop.permute.xlu0 %2638
        %2640 = vrot.lane.b32.xlu0 %v2602, 96
        %v2641 = vpop.permute.xlu0 %2640
        %2642 = vrot.lane.b32.xlu0 %v2603, 96
        %v2643 = vpop.permute.xlu0 %2642
        %2644 = vrot.lane.b32.xlu0 %v2604, 96
        %v2645 = vpop.permute.xlu0 %2644
        %2646 = vrot.lane.b32.xlu0 %v2605, 96
        %v2647 = vpop.permute.xlu0 %2646
        %2648 = vrot.lane.b32.xlu0 %v2606, 96
        %v2649 = vpop.permute.xlu0 %2648
        %2650 = vrot.lane.b32.xlu0 %v2607, 96
        %v2651 = vpop.permute.xlu0 %2650
        %2652 = vrot.lane.b32.xlu0 %v2608, 96
        %v2653 = vpop.permute.xlu0 %2652
        %2654 = vrot.lane.b32.xlu0 %v2609, 96
        %v2655 = vpop.permute.xlu0 %2654
        %2656 = vrot.lane.b32.xlu0 %v2610, 96
        %v2657 = vpop.permute.xlu0 %2656
        %2658 = vrot.lane.b32.xlu0 %v2611, 96
        %v2659 = vpop.permute.xlu0 %2658
        %2660 = vrot.lane.b32.xlu0 %v2596, 64
        %v2661 = vpop.permute.xlu0 %2660
        %2662 = vrot.lane.b32.xlu0 %v2597, 64
        %v2663 = vpop.permute.xlu0 %2662
        %2664 = vrot.lane.b32.xlu0 %v2598, 64
        %v2665 = vpop.permute.xlu0 %2664
        %2666 = vrot.lane.b32.xlu0 %v2599, 64
        %v2667 = vpop.permute.xlu0 %2666
        %2668 = vrot.lane.b32.xlu0 %v2600, 64
        %v2669 = vpop.permute.xlu0 %2668
        %2670 = vrot.lane.b32.xlu0 %v2601, 64
        %v2671 = vpop.permute.xlu0 %2670
        %2672 = vrot.lane.b32.xlu0 %v2602, 64
        %v2673 = vpop.permute.xlu0 %2672
        %2674 = vrot.lane.b32.xlu0 %v2603, 64
        %v2675 = vpop.permute.xlu0 %2674
        %2676 = vrot.lane.b32.xlu0 %v2604, 64
        %v2677 = vpop.permute.xlu0 %2676
        %2678 = vrot.lane.b32.xlu0 %v2605, 64
        %v2679 = vpop.permute.xlu0 %2678
        %2680 = vrot.lane.b32.xlu0 %v2606, 64
        %v2681 = vpop.permute.xlu0 %2680
        %2682 = vrot.lane.b32.xlu0 %v2607, 64
        %v2683 = vpop.permute.xlu0 %2682
        %2684 = vrot.lane.b32.xlu0 %v2608, 64
        %v2685 = vpop.permute.xlu0 %2684
        %2686 = vrot.lane.b32.xlu0 %v2609, 64
        %v2687 = vpop.permute.xlu0 %2686
        %2688 = vrot.lane.b32.xlu0 %v2610, 64
        %v2689 = vpop.permute.xlu0 %2688
        %2690 = vrot.lane.b32.xlu0 %v2611, 64
        %v2691 = vpop.permute.xlu0 %2690
        %2692 = vrot.lane.b32.xlu0 %v2596, 32
        %v2693 = vpop.permute.xlu0 %2692
        %2694 = vrot.lane.b32.xlu0 %v2597, 32
        %v2695 = vpop.permute.xlu0 %2694
        %2696 = vrot.lane.b32.xlu0 %v2598, 32
        %v2697 = vpop.permute.xlu0 %2696
        %2698 = vrot.lane.b32.xlu0 %v2599, 32
        %v2699 = vpop.permute.xlu0 %2698
        %2700 = vrot.lane.b32.xlu0 %v2600, 32
        %v2701 = vpop.permute.xlu0 %2700
        %2702 = vrot.lane.b32.xlu0 %v2601, 32
        %v2703 = vpop.permute.xlu0 %2702
        %2704 = vrot.lane.b32.xlu0 %v2602, 32
        %v2705 = vpop.permute.xlu0 %2704
        %2706 = vrot.lane.b32.xlu0 %v2603, 32
        %v2707 = vpop.permute.xlu0 %2706
        %2708 = vrot.lane.b32.xlu0 %v2604, 32
        %v2709 = vpop.permute.xlu0 %2708
        %2710 = vrot.lane.b32.xlu0 %v2605, 32
        %v2711 = vpop.permute.xlu0 %2710
        %2712 = vrot.lane.b32.xlu0 %v2606, 32
        %v2713 = vpop.permute.xlu0 %2712
        %2714 = vrot.lane.b32.xlu0 %v2607, 32
        %v2715 = vpop.permute.xlu0 %2714
        %2716 = vrot.lane.b32.xlu0 %v2608, 32
        %v2717 = vpop.permute.xlu0 %2716
        %2718 = vrot.lane.b32.xlu0 %v2609, 32
        %v2719 = vpop.permute.xlu0 %2718
        %2720 = vrot.lane.b32.xlu0 %v2610, 32
        %v2721 = vpop.permute.xlu0 %2720
        %2722 = vrot.lane.b32.xlu0 %v2611, 32
        %v2723 = vpop.permute.xlu0 %2722
        %v2724 = vlaneseq
        %v2725 = vshrl.u32 %v2724, 7
        %v2726 = vadd.s32 %v2725, 8
        %v2727 = vadd.s32 %v2725, 16
        %v2728 = vadd.s32 %v2725, 24
        %v2729 = vadd.s32 %v2725, 32
        %v2730 = vadd.s32 %v2725, 40
        %v2731 = vadd.s32 %v2725, 48
        %v2732 = vadd.s32 %v2725, 56
        %v2733 = vadd.s32 %v2725, 64
        %v2734 = vadd.s32 %v2725, 72
        %v2735 = vadd.s32 %v2725, 80
        %v2736 = vadd.s32 %v2725, 88
        %v2737 = vadd.s32 %v2725, 96
        %v2738 = vadd.s32 %v2725, 104
        %v2739 = vadd.s32 %v2725, 112
        %v2740 = vadd.s32 %v2725, 120
        %v2741 = vlaneseq
        %v2742 = vand.u32 %v2741, 127
        %s2743 = sadd.s32 %s44, 1
        // While loop
        $region125: #{tpu_custom_call.1} parent=83 // loop_pre_header
          _
        $region126: #{tpu_custom_call.1} parent=83 // loop_header
          %s2745 = sphi 0, %s2747
          %p2746 = scmp.ge.s32.totalorder %s2745, %s2743
          %v2750 = vphi -1e+30, %v3616
          %v2751 = vphi -1e+30, %v3617
          %v2752 = vphi -1e+30, %v3618
          %v2753 = vphi -1e+30, %v3619
          %v2754 = vphi -1e+30, %v3620
          %v2755 = vphi -1e+30, %v3621
          %v2756 = vphi -1e+30, %v3622
          %v2757 = vphi -1e+30, %v3623
          %v2758 = vphi -1e+30, %v3624
          %v2759 = vphi -1e+30, %v3625
          %v2760 = vphi -1e+30, %v3626
          %v2761 = vphi -1e+30, %v3627
          %v2762 = vphi -1e+30, %v3628
          %v2763 = vphi -1e+30, %v3629
          %v2764 = vphi -1e+30, %v3630
          %v2765 = vphi -1e+30, %v3631
          %v2766 = vphi -1e+30, %v3632
          %v2767 = vphi -1e+30, %v3633
          %v2768 = vphi -1e+30, %v3634
          %v2769 = vphi -1e+30, %v3635
          %v2770 = vphi -1e+30, %v3636
          %v2771 = vphi -1e+30, %v3637
          %v2772 = vphi -1e+30, %v3638
          %v2773 = vphi -1e+30, %v3639
          %v2774 = vphi -1e+30, %v3640
          %v2775 = vphi -1e+30, %v3641
          %v2776 = vphi -1e+30, %v3642
          %v2777 = vphi -1e+30, %v3643
          %v2778 = vphi -1e+30, %v3644
          %v2779 = vphi -1e+30, %v3645
          %v2780 = vphi -1e+30, %v3646
          %v2781 = vphi -1e+30, %v3647
          %v2782 = vphi -1e+30, %v3648
          %v2783 = vphi -1e+30, %v3649
          %v2784 = vphi -1e+30, %v3650
          %v2785 = vphi -1e+30, %v3651
          %v2786 = vphi -1e+30, %v3652
          %v2787 = vphi -1e+30, %v3653
          %v2788 = vphi -1e+30, %v3654
          %v2789 = vphi -1e+30, %v3655
          %v2790 = vphi -1e+30, %v3656
          %v2791 = vphi -1e+30, %v3657
          %v2792 = vphi -1e+30, %v3658
          %v2793 = vphi -1e+30, %v3659
          %v2794 = vphi -1e+30, %v3660
          %v2795 = vphi -1e+30, %v3661
          %v2796 = vphi -1e+30, %v3662
          %v2797 = vphi -1e+30, %v3663
          %v2798 = vphi -1e+30, %v3664
          %v2799 = vphi -1e+30, %v3665
          %v2800 = vphi -1e+30, %v3666
          %v2801 = vphi -1e+30, %v3667
          %v2802 = vphi -1e+30, %v3668
          %v2803 = vphi -1e+30, %v3669
          %v2804 = vphi -1e+30, %v3670
          %v2805 = vphi -1e+30, %v3671
          %v2806 = vphi -1e+30, %v3672
          %v2807 = vphi -1e+30, %v3673
          %v2808 = vphi -1e+30, %v3674
          %v2809 = vphi -1e+30, %v3675
          %v2810 = vphi -1e+30, %v3676
          %v2811 = vphi -1e+30, %v3677
          %v2812 = vphi -1e+30, %v3678
          %v2813 = vphi -1e+30, %v3679
          %v2814 = vphi 0.0, %v4256
          %v2815 = vphi 0.0, %v4257
          %v2816 = vphi 0.0, %v4258
          %v2817 = vphi 0.0, %v4259
          %v2818 = vphi 0.0, %v4260
          %v2819 = vphi 0.0, %v4261
          %v2820 = vphi 0.0, %v4262
          %v2821 = vphi 0.0, %v4263
          %v2822 = vphi 0.0, %v4264
          %v2823 = vphi 0.0, %v4265
          %v2824 = vphi 0.0, %v4266
          %v2825 = vphi 0.0, %v4267
          %v2826 = vphi 0.0, %v4268
          %v2827 = vphi 0.0, %v4269
          %v2828 = vphi 0.0, %v4270
          %v2829 = vphi 0.0, %v4271
          %v2830 = vphi 0.0, %v4272
          %v2831 = vphi 0.0, %v4273
          %v2832 = vphi 0.0, %v4274
          %v2833 = vphi 0.0, %v4275
          %v2834 = vphi 0.0, %v4276
          %v2835 = vphi 0.0, %v4277
          %v2836 = vphi 0.0, %v4278
          %v2837 = vphi 0.0, %v4279
          %v2838 = vphi 0.0, %v4280
          %v2839 = vphi 0.0, %v4281
          %v2840 = vphi 0.0, %v4282
          %v2841 = vphi 0.0, %v4283
          %v2842 = vphi 0.0, %v4284
          %v2843 = vphi 0.0, %v4285
          %v2844 = vphi 0.0, %v4286
          %v2845 = vphi 0.0, %v4287
          %v2846 = vphi 0.0, %v4288
          %v2847 = vphi 0.0, %v4289
          %v2848 = vphi 0.0, %v4290
          %v2849 = vphi 0.0, %v4291
          %v2850 = vphi 0.0, %v4292
          %v2851 = vphi 0.0, %v4293
          %v2852 = vphi 0.0, %v4294
          %v2853 = vphi 0.0, %v4295
          %v2854 = vphi 0.0, %v4296
          %v2855 = vphi 0.0, %v4297
          %v2856 = vphi 0.0, %v4298
          %v2857 = vphi 0.0, %v4299
          %v2858 = vphi 0.0, %v4300
          %v2859 = vphi 0.0, %v4301
          %v2860 = vphi 0.0, %v4302
          %v2861 = vphi 0.0, %v4303
          %v2862 = vphi 0.0, %v4304
          %v2863 = vphi 0.0, %v4305
          %v2864 = vphi 0.0, %v4306
          %v2865 = vphi 0.0, %v4307
          %v2866 = vphi 0.0, %v4308
          %v2867 = vphi 0.0, %v4309
          %v2868 = vphi 0.0, %v4310
          %v2869 = vphi 0.0, %v4311
          %v2870 = vphi 0.0, %v4312
          %v2871 = vphi 0.0, %v4313
          %v2872 = vphi 0.0, %v4314
          %v2873 = vphi 0.0, %v4315
          %v2874 = vphi 0.0, %v4316
          %v2875 = vphi 0.0, %v4317
          %v2876 = vphi 0.0, %v4318
          %v2877 = vphi 0.0, %v4319
          %v2878 = vphi 0.0, %v4884
          %v2879 = vphi 0.0, %v4885
          %v2880 = vphi 0.0, %v4886
          %v2881 = vphi 0.0, %v4887
          %v2882 = vphi 0.0, %v4888
          %v2883 = vphi 0.0, %v4889
          %v2884 = vphi 0.0, %v4890
          %v2885 = vphi 0.0, %v4891
          %v2886 = vphi 0.0, %v4892
          %v2887 = vphi 0.0, %v4893
          %v2888 = vphi 0.0, %v4894
          %v2889 = vphi 0.0, %v4895
          %v2890 = vphi 0.0, %v4896
          %v2891 = vphi 0.0, %v4897
          %v2892 = vphi 0.0, %v4898
          %v2893 = vphi 0.0, %v4899
          %v2894 = vphi 0.0, %v4900
          %v2895 = vphi 0.0, %v4901
          %v2896 = vphi 0.0, %v4902
          %v2897 = vphi 0.0, %v4903
          %v2898 = vphi 0.0, %v4904
          %v2899 = vphi 0.0, %v4905
          %v2900 = vphi 0.0, %v4906
          %v2901 = vphi 0.0, %v4907
          %v2902 = vphi 0.0, %v4908
          %v2903 = vphi 0.0, %v4909
          %v2904 = vphi 0.0, %v4910
          %v2905 = vphi 0.0, %v4911
          %v2906 = vphi 0.0, %v4912
          %v2907 = vphi 0.0, %v4913
          %v2908 = vphi 0.0, %v4914
          %v2909 = vphi 0.0, %v4915
          %v2910 = vphi 0.0, %v4916
          %v2911 = vphi 0.0, %v4917
          %v2912 = vphi 0.0, %v4918
          %v2913 = vphi 0.0, %v4919
          %v2914 = vphi 0.0, %v4920
          %v2915 = vphi 0.0, %v4921
          %v2916 = vphi 0.0, %v4922
          %v2917 = vphi 0.0, %v4923
          %v2918 = vphi 0.0, %v4924
          %v2919 = vphi 0.0, %v4925
          %v2920 = vphi 0.0, %v4926
          %v2921 = vphi 0.0, %v4927
          %v2922 = vphi 0.0, %v4928
          %v2923 = vphi 0.0, %v4929
          %v2924 = vphi 0.0, %v4930
          %v2925 = vphi 0.0, %v4931
          %v2926 = vphi 0.0, %v4932
          %v2927 = vphi 0.0, %v4933
          %v2928 = vphi 0.0, %v4934
          %v2929 = vphi 0.0, %v4935
          %v2930 = vphi 0.0, %v4936
          %v2931 = vphi 0.0, %v4937
          %v2932 = vphi 0.0, %v4938
          %v2933 = vphi 0.0, %v4939
          %v2934 = vphi 0.0, %v4940
          %v2935 = vphi 0.0, %v4941
          %v2936 = vphi 0.0, %v4942
          %v2937 = vphi 0.0, %v4943
          %v2938 = vphi 0.0, %v4944
          %v2939 = vphi 0.0, %v4945
          %v2940 = vphi 0.0, %v4946
          %v2941 = vphi 0.0, %v4947
        $region127: #{tpu_custom_call.1} parent=83 // loop_header_branch
          %2749 = sbr.rel (%p2746) target = $region131
        $region128: #{tpu_custom_call.1} parent=83 // loop_body
          %s2942 = smul.u32 %s2745, 16
          %s2943 = smul.addr %s2942, 4
          %s2944 = scalar_lea.vmem [#allocation2], %s2943
          %v2945 = vld [vmem:[%s2944] sm:$0xf]
          %v2946 = vld [vmem:[%s2944 + $0x4] sm:$0xf]
          %v2947 = vld [vmem:[%s2944 + $0x8] sm:$0xf]
          %v2948 = vld [vmem:[%s2944 + $0xc] sm:$0xf]
          %v2949 = vld [vmem:[%s2944 + $0x10] sm:$0xf]
          %v2950 = vld [vmem:[%s2944 + $0x14] sm:$0xf]
          %v2951 = vld [vmem:[%s2944 + $0x18] sm:$0xf]
          %v2952 = vld [vmem:[%s2944 + $0x1c] sm:$0xf]
          %v2953 = vld [vmem:[%s2944 + $0x20] sm:$0xf]
          %v2954 = vld [vmem:[%s2944 + $0x24] sm:$0xf]
          %v2955 = vld [vmem:[%s2944 + $0x28] sm:$0xf]
          %v2956 = vld [vmem:[%s2944 + $0x2c] sm:$0xf]
          %v2957 = vld [vmem:[%s2944 + $0x30] sm:$0xf]
          %v2958 = vld [vmem:[%s2944 + $0x34] sm:$0xf]
          %v2959 = vld [vmem:[%s2944 + $0x38] sm:$0xf]
          %v2960 = vld [vmem:[%s2944 + $0x3c] sm:$0xf]
          %s2961 = smul.addr %s2942, 4
          %s2962 = scalar_lea.vmem [#allocation3], %s2961
          %v2963 = vld [vmem:[%s2962] sm:$0xf]
          %v2964 = vld [vmem:[%s2962 + $0x4] sm:$0xf]
          %v2965 = vld [vmem:[%s2962 + $0x8] sm:$0xf]
          %v2966 = vld [vmem:[%s2962 + $0xc] sm:$0xf]
          %v2967 = vld [vmem:[%s2962 + $0x10] sm:$0xf]
          %v2968 = vld [vmem:[%s2962 + $0x14] sm:$0xf]
          %v2969 = vld [vmem:[%s2962 + $0x18] sm:$0xf]
          %v2970 = vld [vmem:[%s2962 + $0x1c] sm:$0xf]
          %v2971 = vld [vmem:[%s2962 + $0x20] sm:$0xf]
          %v2972 = vld [vmem:[%s2962 + $0x24] sm:$0xf]
          %v2973 = vld [vmem:[%s2962 + $0x28] sm:$0xf]
          %v2974 = vld [vmem:[%s2962 + $0x2c] sm:$0xf]
          %v2975 = vld [vmem:[%s2962 + $0x30] sm:$0xf]
          %v2976 = vld [vmem:[%s2962 + $0x34] sm:$0xf]
          %v2977 = vld [vmem:[%s2962 + $0x38] sm:$0xf]
          %v2978 = vld [vmem:[%s2962 + $0x3c] sm:$0xf]
          %s2979 = smul.u32 %s2745, 128
          %s2980 = ssub.s32 %s2051, %s2979
          %v2981 = vstv %s2980
          %v2982 = vadd.s32 %v2725, %v2981
          %v2983 = vadd.s32 %v2726, %v2981
          %v2984 = vadd.s32 %v2727, %v2981
          %v2985 = vadd.s32 %v2728, %v2981
          %v2986 = vadd.s32 %v2729, %v2981
          %v2987 = vadd.s32 %v2730, %v2981
          %v2988 = vadd.s32 %v2731, %v2981
          %v2989 = vadd.s32 %v2732, %v2981
          %v2990 = vadd.s32 %v2733, %v2981
          %v2991 = vadd.s32 %v2734, %v2981
          %v2992 = vadd.s32 %v2735, %v2981
          %v2993 = vadd.s32 %v2736, %v2981
          %v2994 = vadd.s32 %v2737, %v2981
          %v2995 = vadd.s32 %v2738, %v2981
          %v2996 = vadd.s32 %v2739, %v2981
          %v2997 = vadd.s32 %v2740, %v2981
          %vm2998 = vcmp.ge.s32.totalorder %v2982, %v2742
          %vm2999 = vcmp.ge.s32.totalorder %v2983, %v2742
          %vm3000 = vcmp.ge.s32.totalorder %v2984, %v2742
          %vm3001 = vcmp.ge.s32.totalorder %v2985, %v2742
          %vm3002 = vcmp.ge.s32.totalorder %v2986, %v2742
          %vm3003 = vcmp.ge.s32.totalorder %v2987, %v2742
          %vm3004 = vcmp.ge.s32.totalorder %v2988, %v2742
          %vm3005 = vcmp.ge.s32.totalorder %v2989, %v2742
          %vm3006 = vcmp.ge.s32.totalorder %v2990, %v2742
          %vm3007 = vcmp.ge.s32.totalorder %v2991, %v2742
          %vm3008 = vcmp.ge.s32.totalorder %v2992, %v2742
          %vm3009 = vcmp.ge.s32.totalorder %v2993, %v2742
          %vm3010 = vcmp.ge.s32.totalorder %v2994, %v2742
          %vm3011 = vcmp.ge.s32.totalorder %v2995, %v2742
          %vm3012 = vcmp.ge.s32.totalorder %v2996, %v2742
          %vm3013 = vcmp.ge.s32.totalorder %v2997, %v2742
          %v3014 = vsel %vm2998, 0.0, -1e+09
          %v3015 = vsel %vm2999, 0.0, -1e+09
          %v3016 = vsel %vm3000, 0.0, -1e+09
          %v3017 = vsel %vm3001, 0.0, -1e+09
          %v3018 = vsel %vm3002, 0.0, -1e+09
          %v3019 = vsel %vm3003, 0.0, -1e+09
          %v3020 = vsel %vm3004, 0.0, -1e+09
          %v3021 = vsel %vm3005, 0.0, -1e+09
          %v3022 = vsel %vm3006, 0.0, -1e+09
          %v3023 = vsel %vm3007, 0.0, -1e+09
          %v3024 = vsel %vm3008, 0.0, -1e+09
          %v3025 = vsel %vm3009, 0.0, -1e+09
          %v3026 = vsel %vm3010, 0.0, -1e+09
          %v3027 = vsel %vm3011, 0.0, -1e+09
          %v3028 = vsel %vm3012, 0.0, -1e+09
          %v3029 = vsel %vm3013, 0.0, -1e+09
          %s3030 = scalar_lea.vmem %s618, %s2745 [#allocation7]
          %v3031 = vld [vmem:[%s3030] sm:$0x1]
          %v3033 = vperm.slane %v3031, 0
          %v3035 = vadd.f32 %v3014, %v3033
          %v3036 = vadd.f32 %v3015, %v3033
          %v3037 = vadd.f32 %v3016, %v3033
          %v3038 = vadd.f32 %v3017, %v3033
          %v3039 = vadd.f32 %v3018, %v3033
          %v3040 = vadd.f32 %v3019, %v3033
          %v3041 = vadd.f32 %v3020, %v3033
          %v3042 = vadd.f32 %v3021, %v3033
          %v3043 = vadd.f32 %v3022, %v3033
          %v3044 = vadd.f32 %v3023, %v3033
          %v3045 = vadd.f32 %v3024, %v3033
          %v3046 = vadd.f32 %v3025, %v3033
          %v3047 = vadd.f32 %v3026, %v3033
          %v3048 = vadd.f32 %v3027, %v3033
          %v3049 = vadd.f32 %v3028, %v3033
          %v3050 = vadd.f32 %v3029, %v3033
          %v3051 = vunpack.c.l.b16 %v2596
          %v3052 = vunpack.c.l.b16 %v2597
          %v3053 = vunpack.c.l.b16 %v2598
          %v3054 = vunpack.c.l.b16 %v2599
          %v3055 = vunpack.c.l.b16 %v2600
          %v3056 = vunpack.c.l.b16 %v2601
          %v3057 = vunpack.c.l.b16 %v2602
          %v3058 = vunpack.c.l.b16 %v2603
          %v3059 = vunpack.c.l.b16 %v2604
          %v3060 = vunpack.c.l.b16 %v2605
          %v3061 = vunpack.c.l.b16 %v2606
          %v3062 = vunpack.c.l.b16 %v2607
          %v3063 = vunpack.c.l.b16 %v2608
          %v3064 = vunpack.c.l.b16 %v2609
          %v3065 = vunpack.c.l.b16 %v2610
          %v3066 = vunpack.c.l.b16 %v2611
          %v3067 = vpack.c.b16 %v3052, %v3051
          %v3068 = vpack.c.b16 %v3054, %v3053
          %v3069 = vpack.c.b16 %v3056, %v3055
          %v3070 = vpack.c.b16 %v3058, %v3057
          %v3071 = vpack.c.b16 %v3060, %v3059
          %v3072 = vpack.c.b16 %v3062, %v3061
          %v3073 = vpack.c.b16 %v3064, %v3063
          %v3074 = vpack.c.b16 %v3066, %v3065
          %v3079 = vunpack.c.l.b16 %v2945
          %v3080 = vunpack.c.l.b16 %v2946
          %v3081 = vunpack.c.l.b16 %v2947
          %v3082 = vunpack.c.l.b16 %v2948
          %v3083 = vpack.c.b16 %v3080, %v3079
          %v3084 = vpack.c.b16 %v3082, %v3081
          %vm3087 = vcmask 261120
          %v3089 = vsel %vm3087, %v3067, 0
          %v3092 = vsel %vm3087, %v3068, 0
          %v3095 = vsel %vm3087, %v3069, 0
          %v3098 = vsel %vm3087, %v3070, 0
          %v3101 = vsel %vm3087, %v3071, 0
          %v3104 = vsel %vm3087, %v3072, 0
          %v3107 = vsel %vm3087, %v3073, 0
          %v3110 = vsel %vm3087, %v3074, 0
          %3112 = vmatpush.bf16.msra.mxu0 0
          %3113 = vmatpush.bf16.msra.mxu0 0
          %3114 = vmatpush.bf16.msra.mxu0 0
          %3115 = vmatpush.bf16.msra.mxu0 0
          %3116 = vmatpush.bf16.msra.mxu0 0
          %3117 = vmatpush.bf16.msra.mxu0 0
          %3118 = vmatpush.bf16.msra.mxu0 %v3084
          %3119 = vmatpush.bf16.msra.mxu0 %v3083
          %3120 = vmatmul.bf16.gmra.mxu0 %v3089
          %v3121 = vpop.f32.mrf.mxu0
          %v3122 = vadd.f32 %v3035, %v3121
          %v3123 = vpop.f32.mrf.mxu0
          %v3124 = vadd.f32 %v3036, %v3123
          %3125 = vmatmul.bf16.gmra.mxu0 %v3092
          %v3126 = vpop.f32.mrf.mxu0
          %v3127 = vadd.f32 %v3037, %v3126
          %v3128 = vpop.f32.mrf.mxu0
          %v3129 = vadd.f32 %v3038, %v3128
          %3130 = vmatmul.bf16.gmra.mxu0 %v3095
          %v3131 = vpop.f32.mrf.mxu0
          %v3132 = vadd.f32 %v3039, %v3131
          %v3133 = vpop.f32.mrf.mxu0
          %v3134 = vadd.f32 %v3040, %v3133
          %3135 = vmatmul.bf16.gmra.mxu0 %v3098
          %v3136 = vpop.f32.mrf.mxu0
          %v3137 = vadd.f32 %v3041, %v3136
          %v3138 = vpop.f32.mrf.mxu0
          %v3139 = vadd.f32 %v3042, %v3138
          %3140 = vmatmul.bf16.gmra.mxu0 %v3101
          %v3141 = vpop.f32.mrf.mxu0
          %v3142 = vadd.f32 %v3043, %v3141
          %v3143 = vpop.f32.mrf.mxu0
          %v3144 = vadd.f32 %v3044, %v3143
          %3145 = vmatmul.bf16.gmra.mxu0 %v3104
          %v3146 = vpop.f32.mrf.mxu0
          %v3147 = vadd.f32 %v3045, %v3146
          %v3148 = vpop.f32.mrf.mxu0
          %v3149 = vadd.f32 %v3046, %v3148
          %3150 = vmatmul.bf16.gmra.mxu0 %v3107
          %v3151 = vpop.f32.mrf.mxu0
          %v3152 = vadd.f32 %v3047, %v3151
          %v3153 = vpop.f32.mrf.mxu0
          %v3154 = vadd.f32 %v3048, %v3153
          %3155 = vmatmul.bf16.gmra.mxu0 %v3110
          %v3156 = vpop.f32.mrf.mxu0
          %v3157 = vadd.f32 %v3049, %v3156
          %v3158 = vpop.f32.mrf.mxu0
          %v3159 = vadd.f32 %v3050, %v3158
          %3160 = vdwg.mxu0
          %v3161 = vunpack.c.l.b16 %v2629
          %v3162 = vunpack.c.l.b16 %v2631
          %v3163 = vunpack.c.l.b16 %v2633
          %v3164 = vunpack.c.l.b16 %v2635
          %v3165 = vunpack.c.l.b16 %v2637
          %v3166 = vunpack.c.l.b16 %v2639
          %v3167 = vunpack.c.l.b16 %v2641
          %v3168 = vunpack.c.l.b16 %v2643
          %v3169 = vunpack.c.l.b16 %v2645
          %v3170 = vunpack.c.l.b16 %v2647
          %v3171 = vunpack.c.l.b16 %v2649
          %v3172 = vunpack.c.l.b16 %v2651
          %v3173 = vunpack.c.l.b16 %v2653
          %v3174 = vunpack.c.l.b16 %v2655
          %v3175 = vunpack.c.l.b16 %v2657
          %v3176 = vunpack.c.l.b16 %v2659
          %v3177 = vpack.c.b16 %v3162, %v3161
          %v3178 = vpack.c.b16 %v3164, %v3163
          %v3179 = vpack.c.b16 %v3166, %v3165
          %v3180 = vpack.c.b16 %v3168, %v3167
          %v3181 = vpack.c.b16 %v3170, %v3169
          %v3182 = vpack.c.b16 %v3172, %v3171
          %v3183 = vpack.c.b16 %v3174, %v3173
          %v3184 = vpack.c.b16 %v3176, %v3175
          %v3189 = vunpack.c.l.b16 %v2949
          %v3190 = vunpack.c.l.b16 %v2950
          %v3191 = vunpack.c.l.b16 %v2951
          %v3192 = vunpack.c.l.b16 %v2952
          %v3193 = vpack.c.b16 %v3190, %v3189
          %v3194 = vpack.c.b16 %v3192, %v3191
          %v3198 = vsel %vm3087, %v3177, 0
          %v3201 = vsel %vm3087, %v3178, 0
          %v3204 = vsel %vm3087, %v3179, 0
          %v3207 = vsel %vm3087, %v3180, 0
          %v3210 = vsel %vm3087, %v3181, 0
          %v3213 = vsel %vm3087, %v3182, 0
          %v3216 = vsel %vm3087, %v3183, 0
          %v3219 = vsel %vm3087, %v3184, 0
          %3221 = vmatpush.bf16.msra.mxu0 0
          %3222 = vmatpush.bf16.msra.mxu0 0
          %3223 = vmatpush.bf16.msra.mxu0 0
          %3224 = vmatpush.bf16.msra.mxu0 0
          %3225 = vmatpush.bf16.msra.mxu0 0
          %3226 = vmatpush.bf16.msra.mxu0 0
          %3227 = vmatpush.bf16.msra.mxu0 %v3194
          %3228 = vmatpush.bf16.msra.mxu0 %v3193
          %3229 = vmatmul.bf16.gmra.mxu0 %v3198
          %v3230 = vpop.f32.mrf.mxu0
          %v3231 = vadd.f32 %v3035, %v3230
          %v3232 = vpop.f32.mrf.mxu0
          %v3233 = vadd.f32 %v3036, %v3232
          %3234 = vmatmul.bf16.gmra.mxu0 %v3201
          %v3235 = vpop.f32.mrf.mxu0
          %v3236 = vadd.f32 %v3037, %v3235
          %v3237 = vpop.f32.mrf.mxu0
          %v3238 = vadd.f32 %v3038, %v3237
          %3239 = vmatmul.bf16.gmra.mxu0 %v3204
          %v3240 = vpop.f32.mrf.mxu0
          %v3241 = vadd.f32 %v3039, %v3240
          %v3242 = vpop.f32.mrf.mxu0
          %v3243 = vadd.f32 %v3040, %v3242
          %3244 = vmatmul.bf16.gmra.mxu0 %v3207
          %v3245 = vpop.f32.mrf.mxu0
          %v3246 = vadd.f32 %v3041, %v3245
          %v3247 = vpop.f32.mrf.mxu0
          %v3248 = vadd.f32 %v3042, %v3247
          %3249 = vmatmul.bf16.gmra.mxu0 %v3210
          %v3250 = vpop.f32.mrf.mxu0
          %v3251 = vadd.f32 %v3043, %v3250
          %v3252 = vpop.f32.mrf.mxu0
          %v3253 = vadd.f32 %v3044, %v3252
          %3254 = vmatmul.bf16.gmra.mxu0 %v3213
          %v3255 = vpop.f32.mrf.mxu0
          %v3256 = vadd.f32 %v3045, %v3255
          %v3257 = vpop.f32.mrf.mxu0
          %v3258 = vadd.f32 %v3046, %v3257
          %3259 = vmatmul.bf16.gmra.mxu0 %v3216
          %v3260 = vpop.f32.mrf.mxu0
          %v3261 = vadd.f32 %v3047, %v3260
          %v3262 = vpop.f32.mrf.mxu0
          %v3263 = vadd.f32 %v3048, %v3262
          %3264 = vmatmul.bf16.gmra.mxu0 %v3219
          %v3265 = vpop.f32.mrf.mxu0
          %v3266 = vadd.f32 %v3049, %v3265
          %v3267 = vpop.f32.mrf.mxu0
          %v3268 = vadd.f32 %v3050, %v3267
          %3269 = vdwg.mxu0
          %v3270 = vunpack.c.l.b16 %v2661
          %v3271 = vunpack.c.l.b16 %v2663
          %v3272 = vunpack.c.l.b16 %v2665
          %v3273 = vunpack.c.l.b16 %v2667
          %v3274 = vunpack.c.l.b16 %v2669
          %v3275 = vunpack.c.l.b16 %v2671
          %v3276 = vunpack.c.l.b16 %v2673
          %v3277 = vunpack.c.l.b16 %v2675
          %v3278 = vunpack.c.l.b16 %v2677
          %v3279 = vunpack.c.l.b16 %v2679
          %v3280 = vunpack.c.l.b16 %v2681
          %v3281 = vunpack.c.l.b16 %v2683
          %v3282 = vunpack.c.l.b16 %v2685
          %v3283 = vunpack.c.l.b16 %v2687
          %v3284 = vunpack.c.l.b16 %v2689
          %v3285 = vunpack.c.l.b16 %v2691
          %v3286 = vpack.c.b16 %v3271, %v3270
          %v3287 = vpack.c.b16 %v3273, %v3272
          %v3288 = vpack.c.b16 %v3275, %v3274
          %v3289 = vpack.c.b16 %v3277, %v3276
          %v3290 = vpack.c.b16 %v3279, %v3278
          %v3291 = vpack.c.b16 %v3281, %v3280
          %v3292 = vpack.c.b16 %v3283, %v3282
          %v3293 = vpack.c.b16 %v3285, %v3284
          %v3298 = vunpack.c.l.b16 %v2953
          %v3299 = vunpack.c.l.b16 %v2954
          %v3300 = vunpack.c.l.b16 %v2955
          %v3301 = vunpack.c.l.b16 %v2956
          %v3302 = vpack.c.b16 %v3299, %v3298
          %v3303 = vpack.c.b16 %v3301, %v3300
          %v3307 = vsel %vm3087, %v3286, 0
          %v3310 = vsel %vm3087, %v3287, 0
          %v3313 = vsel %vm3087, %v3288, 0
          %v3316 = vsel %vm3087, %v3289, 0
          %v3319 = vsel %vm3087, %v3290, 0
          %v3322 = vsel %vm3087, %v3291, 0
          %v3325 = vsel %vm3087, %v3292, 0
          %v3328 = vsel %vm3087, %v3293, 0
          %3330 = vmatpush.bf16.msra.mxu0 0
          %3331 = vmatpush.bf16.msra.mxu0 0
          %3332 = vmatpush.bf16.msra.mxu0 0
          %3333 = vmatpush.bf16.msra.mxu0 0
          %3334 = vmatpush.bf16.msra.mxu0 0
          %3335 = vmatpush.bf16.msra.mxu0 0
          %3336 = vmatpush.bf16.msra.mxu0 %v3303
          %3337 = vmatpush.bf16.msra.mxu0 %v3302
          %3338 = vmatmul.bf16.gmra.mxu0 %v3307
          %v3339 = vpop.f32.mrf.mxu0
          %v3340 = vadd.f32 %v3035, %v3339
          %v3341 = vpop.f32.mrf.mxu0
          %v3342 = vadd.f32 %v3036, %v3341
          %3343 = vmatmul.bf16.gmra.mxu0 %v3310
          %v3344 = vpop.f32.mrf.mxu0
          %v3345 = vadd.f32 %v3037, %v3344
          %v3346 = vpop.f32.mrf.mxu0
          %v3347 = vadd.f32 %v3038, %v3346
          %3348 = vmatmul.bf16.gmra.mxu0 %v3313
          %v3349 = vpop.f32.mrf.mxu0
          %v3350 = vadd.f32 %v3039, %v3349
          %v3351 = vpop.f32.mrf.mxu0
          %v3352 = vadd.f32 %v3040, %v3351
          %3353 = vmatmul.bf16.gmra.mxu0 %v3316
          %v3354 = vpop.f32.mrf.mxu0
          %v3355 = vadd.f32 %v3041, %v3354
          %v3356 = vpop.f32.mrf.mxu0
          %v3357 = vadd.f32 %v3042, %v3356
          %3358 = vmatmul.bf16.gmra.mxu0 %v3319
          %v3359 = vpop.f32.mrf.mxu0
          %v3360 = vadd.f32 %v3043, %v3359
          %v3361 = vpop.f32.mrf.mxu0
          %v3362 = vadd.f32 %v3044, %v3361
          %3363 = vmatmul.bf16.gmra.mxu0 %v3322
          %v3364 = vpop.f32.mrf.mxu0
          %v3365 = vadd.f32 %v3045, %v3364
          %v3366 = vpop.f32.mrf.mxu0
          %v3367 = vadd.f32 %v3046, %v3366
          %3368 = vmatmul.bf16.gmra.mxu0 %v3325
          %v3369 = vpop.f32.mrf.mxu0
          %v3370 = vadd.f32 %v3047, %v3369
          %v3371 = vpop.f32.mrf.mxu0
          %v3372 = vadd.f32 %v3048, %v3371
          %3373 = vmatmul.bf16.gmra.mxu0 %v3328
          %v3374 = vpop.f32.mrf.mxu0
          %v3375 = vadd.f32 %v3049, %v3374
          %v3376 = vpop.f32.mrf.mxu0
          %v3377 = vadd.f32 %v3050, %v3376
          %3378 = vdwg.mxu0
          %v3379 = vunpack.c.l.b16 %v2693
          %v3380 = vunpack.c.l.b16 %v2695
          %v3381 = vunpack.c.l.b16 %v2697
          %v3382 = vunpack.c.l.b16 %v2699
          %v3383 = vunpack.c.l.b16 %v2701
          %v3384 = vunpack.c.l.b16 %v2703
          %v3385 = vunpack.c.l.b16 %v2705
          %v3386 = vunpack.c.l.b16 %v2707
          %v3387 = vunpack.c.l.b16 %v2709
          %v3388 = vunpack.c.l.b16 %v2711
          %v3389 = vunpack.c.l.b16 %v2713
          %v3390 = vunpack.c.l.b16 %v2715
          %v3391 = vunpack.c.l.b16 %v2717
          %v3392 = vunpack.c.l.b16 %v2719
          %v3393 = vunpack.c.l.b16 %v2721
          %v3394 = vunpack.c.l.b16 %v2723
          %v3395 = vpack.c.b16 %v3380, %v3379
          %v3396 = vpack.c.b16 %v3382, %v3381
          %v3397 = vpack.c.b16 %v3384, %v3383
          %v3398 = vpack.c.b16 %v3386, %v3385
          %v3399 = vpack.c.b16 %v3388, %v3387
          %v3400 = vpack.c.b16 %v3390, %v3389
          %v3401 = vpack.c.b16 %v3392, %v3391
          %v3402 = vpack.c.b16 %v3394, %v3393
          %v3407 = vunpack.c.l.b16 %v2957
          %v3408 = vunpack.c.l.b16 %v2958
          %v3409 = vunpack.c.l.b16 %v2959
          %v3410 = vunpack.c.l.b16 %v2960
          %v3411 = vpack.c.b16 %v3408, %v3407
          %v3412 = vpack.c.b16 %v3410, %v3409
          %v3416 = vsel %vm3087, %v3395, 0
          %v3419 = vsel %vm3087, %v3396, 0
          %v3422 = vsel %vm3087, %v3397, 0
          %v3425 = vsel %vm3087, %v3398, 0
          %v3428 = vsel %vm3087, %v3399, 0
          %v3431 = vsel %vm3087, %v3400, 0
          %v3434 = vsel %vm3087, %v3401, 0
          %v3437 = vsel %vm3087, %v3402, 0
          %3439 = vmatpush.bf16.msra.mxu0 0
          %3440 = vmatpush.bf16.msra.mxu0 0
          %3441 = vmatpush.bf16.msra.mxu0 0
          %3442 = vmatpush.bf16.msra.mxu0 0
          %3443 = vmatpush.bf16.msra.mxu0 0
          %3444 = vmatpush.bf16.msra.mxu0 0
          %3445 = vmatpush.bf16.msra.mxu0 %v3412
          %3446 = vmatpush.bf16.msra.mxu0 %v3411
          %3447 = vmatmul.bf16.gmra.mxu0 %v3416
          %v3448 = vpop.f32.mrf.mxu0
          %v3449 = vadd.f32 %v3035, %v3448
          %v3450 = vpop.f32.mrf.mxu0
          %v3451 = vadd.f32 %v3036, %v3450
          %3452 = vmatmul.bf16.gmra.mxu0 %v3419
          %v3453 = vpop.f32.mrf.mxu0
          %v3454 = vadd.f32 %v3037, %v3453
          %v3455 = vpop.f32.mrf.mxu0
          %v3456 = vadd.f32 %v3038, %v3455
          %3457 = vmatmul.bf16.gmra.mxu0 %v3422
          %v3458 = vpop.f32.mrf.mxu0
          %v3459 = vadd.f32 %v3039, %v3458
          %v3460 = vpop.f32.mrf.mxu0
          %v3461 = vadd.f32 %v3040, %v3460
          %3462 = vmatmul.bf16.gmra.mxu0 %v3425
          %v3463 = vpop.f32.mrf.mxu0
          %v3464 = vadd.f32 %v3041, %v3463
          %v3465 = vpop.f32.mrf.mxu0
          %v3466 = vadd.f32 %v3042, %v3465
          %3467 = vmatmul.bf16.gmra.mxu0 %v3428
          %v3468 = vpop.f32.mrf.mxu0
          %v3469 = vadd.f32 %v3043, %v3468
          %v3470 = vpop.f32.mrf.mxu0
          %v3471 = vadd.f32 %v3044, %v3470
          %3472 = vmatmul.bf16.gmra.mxu0 %v3431
          %v3473 = vpop.f32.mrf.mxu0
          %v3474 = vadd.f32 %v3045, %v3473
          %v3475 = vpop.f32.mrf.mxu0
          %v3476 = vadd.f32 %v3046, %v3475
          %3477 = vmatmul.bf16.gmra.mxu0 %v3434
          %v3478 = vpop.f32.mrf.mxu0
          %v3479 = vadd.f32 %v3047, %v3478
          %v3480 = vpop.f32.mrf.mxu0
          %v3481 = vadd.f32 %v3048, %v3480
          %3482 = vmatmul.bf16.gmra.mxu0 %v3437
          %v3483 = vpop.f32.mrf.mxu0
          %v3484 = vadd.f32 %v3049, %v3483
          %v3485 = vpop.f32.mrf.mxu0
          %v3486 = vadd.f32 %v3050, %v3485
          %3487 = vdwg.mxu0
          %3488 = vmax.xlane.f32.xlu0 %v3122
          %v3489 = vpop.xlane.xlu0 %3488
          %3490 = vmax.xlane.f32.xlu0 %v3124
          %v3491 = vpop.xlane.xlu0 %3490
          %3492 = vmax.xlane.f32.xlu0 %v3127
          %v3493 = vpop.xlane.xlu0 %3492
          %3494 = vmax.xlane.f32.xlu0 %v3129
          %v3495 = vpop.xlane.xlu0 %3494
          %3496 = vmax.xlane.f32.xlu0 %v3132
          %v3497 = vpop.xlane.xlu0 %3496
          %3498 = vmax.xlane.f32.xlu0 %v3134
          %v3499 = vpop.xlane.xlu0 %3498
          %3500 = vmax.xlane.f32.xlu0 %v3137
          %v3501 = vpop.xlane.xlu0 %3500
          %3502 = vmax.xlane.f32.xlu0 %v3139
          %v3503 = vpop.xlane.xlu0 %3502
          %3504 = vmax.xlane.f32.xlu0 %v3142
          %v3505 = vpop.xlane.xlu0 %3504
          %3506 = vmax.xlane.f32.xlu0 %v3144
          %v3507 = vpop.xlane.xlu0 %3506
          %3508 = vmax.xlane.f32.xlu0 %v3147
          %v3509 = vpop.xlane.xlu0 %3508
          %3510 = vmax.xlane.f32.xlu0 %v3149
          %v3511 = vpop.xlane.xlu0 %3510
          %3512 = vmax.xlane.f32.xlu0 %v3152
          %v3513 = vpop.xlane.xlu0 %3512
          %3514 = vmax.xlane.f32.xlu0 %v3154
          %v3515 = vpop.xlane.xlu0 %3514
          %3516 = vmax.xlane.f32.xlu0 %v3157
          %v3517 = vpop.xlane.xlu0 %3516
          %3518 = vmax.xlane.f32.xlu0 %v3159
          %v3519 = vpop.xlane.xlu0 %3518
          %3520 = vmax.xlane.f32.xlu0 %v3231
          %v3521 = vpop.xlane.xlu0 %3520
          %3522 = vmax.xlane.f32.xlu0 %v3233
          %v3523 = vpop.xlane.xlu0 %3522
          %3524 = vmax.xlane.f32.xlu0 %v3236
          %v3525 = vpop.xlane.xlu0 %3524
          %3526 = vmax.xlane.f32.xlu0 %v3238
          %v3527 = vpop.xlane.xlu0 %3526
          %3528 = vmax.xlane.f32.xlu0 %v3241
          %v3529 = vpop.xlane.xlu0 %3528
          %3530 = vmax.xlane.f32.xlu0 %v3243
          %v3531 = vpop.xlane.xlu0 %3530
          %3532 = vmax.xlane.f32.xlu0 %v3246
          %v3533 = vpop.xlane.xlu0 %3532
          %3534 = vmax.xlane.f32.xlu0 %v3248
          %v3535 = vpop.xlane.xlu0 %3534
          %3536 = vmax.xlane.f32.xlu0 %v3251
          %v3537 = vpop.xlane.xlu0 %3536
          %3538 = vmax.xlane.f32.xlu0 %v3253
          %v3539 = vpop.xlane.xlu0 %3538
          %3540 = vmax.xlane.f32.xlu0 %v3256
          %v3541 = vpop.xlane.xlu0 %3540
          %3542 = vmax.xlane.f32.xlu0 %v3258
          %v3543 = vpop.xlane.xlu0 %3542
          %3544 = vmax.xlane.f32.xlu0 %v3261
          %v3545 = vpop.xlane.xlu0 %3544
          %3546 = vmax.xlane.f32.xlu0 %v3263
          %v3547 = vpop.xlane.xlu0 %3546
          %3548 = vmax.xlane.f32.xlu0 %v3266
          %v3549 = vpop.xlane.xlu0 %3548
          %3550 = vmax.xlane.f32.xlu0 %v3268
          %v3551 = vpop.xlane.xlu0 %3550
          %3552 = vmax.xlane.f32.xlu0 %v3340
          %v3553 = vpop.xlane.xlu0 %3552
          %3554 = vmax.xlane.f32.xlu0 %v3342
          %v3555 = vpop.xlane.xlu0 %3554
          %3556 = vmax.xlane.f32.xlu0 %v3345
          %v3557 = vpop.xlane.xlu0 %3556
          %3558 = vmax.xlane.f32.xlu0 %v3347
          %v3559 = vpop.xlane.xlu0 %3558
          %3560 = vmax.xlane.f32.xlu0 %v3350
          %v3561 = vpop.xlane.xlu0 %3560
          %3562 = vmax.xlane.f32.xlu0 %v3352
          %v3563 = vpop.xlane.xlu0 %3562
          %3564 = vmax.xlane.f32.xlu0 %v3355
          %v3565 = vpop.xlane.xlu0 %3564
          %3566 = vmax.xlane.f32.xlu0 %v3357
          %v3567 = vpop.xlane.xlu0 %3566
          %3568 = vmax.xlane.f32.xlu0 %v3360
          %v3569 = vpop.xlane.xlu0 %3568
          %3570 = vmax.xlane.f32.xlu0 %v3362
          %v3571 = vpop.xlane.xlu0 %3570
          %3572 = vmax.xlane.f32.xlu0 %v3365
          %v3573 = vpop.xlane.xlu0 %3572
          %3574 = vmax.xlane.f32.xlu0 %v3367
          %v3575 = vpop.xlane.xlu0 %3574
          %3576 = vmax.xlane.f32.xlu0 %v3370
          %v3577 = vpop.xlane.xlu0 %3576
          %3578 = vmax.xlane.f32.xlu0 %v3372
          %v3579 = vpop.xlane.xlu0 %3578
          %3580 = vmax.xlane.f32.xlu0 %v3375
          %v3581 = vpop.xlane.xlu0 %3580
          %3582 = vmax.xlane.f32.xlu0 %v3377
          %v3583 = vpop.xlane.xlu0 %3582
          %3584 = vmax.xlane.f32.xlu0 %v3449
          %v3585 = vpop.xlane.xlu0 %3584
          %3586 = vmax.xlane.f32.xlu0 %v3451
          %v3587 = vpop.xlane.xlu0 %3586
          %3588 = vmax.xlane.f32.xlu0 %v3454
          %v3589 = vpop.xlane.xlu0 %3588
          %3590 = vmax.xlane.f32.xlu0 %v3456
          %v3591 = vpop.xlane.xlu0 %3590
          %3592 = vmax.xlane.f32.xlu0 %v3459
          %v3593 = vpop.xlane.xlu0 %3592
          %3594 = vmax.xlane.f32.xlu0 %v3461
          %v3595 = vpop.xlane.xlu0 %3594
          %3596 = vmax.xlane.f32.xlu0 %v3464
          %v3597 = vpop.xlane.xlu0 %3596
          %3598 = vmax.xlane.f32.xlu0 %v3466
          %v3599 = vpop.xlane.xlu0 %3598
          %3600 = vmax.xlane.f32.xlu0 %v3469
          %v3601 = vpop.xlane.xlu0 %3600
          %3602 = vmax.xlane.f32.xlu0 %v3471
          %v3603 = vpop.xlane.xlu0 %3602
          %3604 = vmax.xlane.f32.xlu0 %v3474
          %v3605 = vpop.xlane.xlu0 %3604
          %3606 = vmax.xlane.f32.xlu0 %v3476
          %v3607 = vpop.xlane.xlu0 %3606
          %3608 = vmax.xlane.f32.xlu0 %v3479
          %v3609 = vpop.xlane.xlu0 %3608
          %3610 = vmax.xlane.f32.xlu0 %v3481
          %v3611 = vpop.xlane.xlu0 %3610
          %3612 = vmax.xlane.f32.xlu0 %v3484
          %v3613 = vpop.xlane.xlu0 %3612
          %3614 = vmax.xlane.f32.xlu0 %v3486
          %v3615 = vpop.xlane.xlu0 %3614
          %v3616 = vmax.f32 %v2750, %v3489
          %v3617 = vmax.f32 %v2751, %v3491
          %v3618 = vmax.f32 %v2752, %v3493
          %v3619 = vmax.f32 %v2753, %v3495
          %v3620 = vmax.f32 %v2754, %v3497
          %v3621 = vmax.f32 %v2755, %v3499
          %v3622 = vmax.f32 %v2756, %v3501
          %v3623 = vmax.f32 %v2757, %v3503
          %v3624 = vmax.f32 %v2758, %v3505
          %v3625 = vmax.f32 %v2759, %v3507
          %v3626 = vmax.f32 %v2760, %v3509
          %v3627 = vmax.f32 %v2761, %v3511
          %v3628 = vmax.f32 %v2762, %v3513
          %v3629 = vmax.f32 %v2763, %v3515
          %v3630 = vmax.f32 %v2764, %v3517
          %v3631 = vmax.f32 %v2765, %v3519
          %v3632 = vmax.f32 %v2766, %v3521
          %v3633 = vmax.f32 %v2767, %v3523
          %v3634 = vmax.f32 %v2768, %v3525
          %v3635 = vmax.f32 %v2769, %v3527
          %v3636 = vmax.f32 %v2770, %v3529
          %v3637 = vmax.f32 %v2771, %v3531
          %v3638 = vmax.f32 %v2772, %v3533
          %v3639 = vmax.f32 %v2773, %v3535
          %v3640 = vmax.f32 %v2774, %v3537
          %v3641 = vmax.f32 %v2775, %v3539
          %v3642 = vmax.f32 %v2776, %v3541
          %v3643 = vmax.f32 %v2777, %v3543
          %v3644 = vmax.f32 %v2778, %v3545
          %v3645 = vmax.f32 %v2779, %v3547
          %v3646 = vmax.f32 %v2780, %v3549
          %v3647 = vmax.f32 %v2781, %v3551
          %v3648 = vmax.f32 %v2782, %v3553
          %v3649 = vmax.f32 %v2783, %v3555
          %v3650 = vmax.f32 %v2784, %v3557
          %v3651 = vmax.f32 %v2785, %v3559
          %v3652 = vmax.f32 %v2786, %v3561
          %v3653 = vmax.f32 %v2787, %v3563
          %v3654 = vmax.f32 %v2788, %v3565
          %v3655 = vmax.f32 %v2789, %v3567
          %v3656 = vmax.f32 %v2790, %v3569
          %v3657 = vmax.f32 %v2791, %v3571
          %v3658 = vmax.f32 %v2792, %v3573
          %v3659 = vmax.f32 %v2793, %v3575
          %v3660 = vmax.f32 %v2794, %v3577
          %v3661 = vmax.f32 %v2795, %v3579
          %v3662 = vmax.f32 %v2796, %v3581
          %v3663 = vmax.f32 %v2797, %v3583
          %v3664 = vmax.f32 %v2798, %v3585
          %v3665 = vmax.f32 %v2799, %v3587
          %v3666 = vmax.f32 %v2800, %v3589
          %v3667 = vmax.f32 %v2801, %v3591
          %v3668 = vmax.f32 %v2802, %v3593
          %v3669 = vmax.f32 %v2803, %v3595
          %v3670 = vmax.f32 %v2804, %v3597
          %v3671 = vmax.f32 %v2805, %v3599
          %v3672 = vmax.f32 %v2806, %v3601
          %v3673 = vmax.f32 %v2807, %v3603
          %v3674 = vmax.f32 %v2808, %v3605
          %v3675 = vmax.f32 %v2809, %v3607
          %v3676 = vmax.f32 %v2810, %v3609
          %v3677 = vmax.f32 %v2811, %v3611
          %v3678 = vmax.f32 %v2812, %v3613
          %v3679 = vmax.f32 %v2813, %v3615
          %v3680 = vsub.f32 %v2750, %v3616
          %v3681 = vsub.f32 %v2751, %v3617
          %v3682 = vsub.f32 %v2752, %v3618
          %v3683 = vsub.f32 %v2753, %v3619
          %v3684 = vsub.f32 %v2754, %v3620
          %v3685 = vsub.f32 %v2755, %v3621
          %v3686 = vsub.f32 %v2756, %v3622
          %v3687 = vsub.f32 %v2757, %v3623
          %v3688 = vsub.f32 %v2758, %v3624
          %v3689 = vsub.f32 %v2759, %v3625
          %v3690 = vsub.f32 %v2760, %v3626
          %v3691 = vsub.f32 %v2761, %v3627
          %v3692 = vsub.f32 %v2762, %v3628
          %v3693 = vsub.f32 %v2763, %v3629
          %v3694 = vsub.f32 %v2764, %v3630
          %v3695 = vsub.f32 %v2765, %v3631
          %v3696 = vsub.f32 %v2766, %v3632
          %v3697 = vsub.f32 %v2767, %v3633
          %v3698 = vsub.f32 %v2768, %v3634
          %v3699 = vsub.f32 %v2769, %v3635
          %v3700 = vsub.f32 %v2770, %v3636
          %v3701 = vsub.f32 %v2771, %v3637
          %v3702 = vsub.f32 %v2772, %v3638
          %v3703 = vsub.f32 %v2773, %v3639
          %v3704 = vsub.f32 %v2774, %v3640
          %v3705 = vsub.f32 %v2775, %v3641
          %v3706 = vsub.f32 %v2776, %v3642
          %v3707 = vsub.f32 %v2777, %v3643
          %v3708 = vsub.f32 %v2778, %v3644
          %v3709 = vsub.f32 %v2779, %v3645
          %v3710 = vsub.f32 %v2780, %v3646
          %v3711 = vsub.f32 %v2781, %v3647
          %v3712 = vsub.f32 %v2782, %v3648
          %v3713 = vsub.f32 %v2783, %v3649
          %v3714 = vsub.f32 %v2784, %v3650
          %v3715 = vsub.f32 %v2785, %v3651
          %v3716 = vsub.f32 %v2786, %v3652
          %v3717 = vsub.f32 %v2787, %v3653
          %v3718 = vsub.f32 %v2788, %v3654
          %v3719 = vsub.f32 %v2789, %v3655
          %v3720 = vsub.f32 %v2790, %v3656
          %v3721 = vsub.f32 %v2791, %v3657
          %v3722 = vsub.f32 %v2792, %v3658
          %v3723 = vsub.f32 %v2793, %v3659
          %v3724 = vsub.f32 %v2794, %v3660
          %v3725 = vsub.f32 %v2795, %v3661
          %v3726 = vsub.f32 %v2796, %v3662
          %v3727 = vsub.f32 %v2797, %v3663
          %v3728 = vsub.f32 %v2798, %v3664
          %v3729 = vsub.f32 %v2799, %v3665
          %v3730 = vsub.f32 %v2800, %v3666
          %v3731 = vsub.f32 %v2801, %v3667
          %v3732 = vsub.f32 %v2802, %v3668
          %v3733 = vsub.f32 %v2803, %v3669
          %v3734 = vsub.f32 %v2804, %v3670
          %v3735 = vsub.f32 %v2805, %v3671
          %v3736 = vsub.f32 %v2806, %v3672
          %v3737 = vsub.f32 %v2807, %v3673
          %v3738 = vsub.f32 %v2808, %v3674
          %v3739 = vsub.f32 %v2809, %v3675
          %v3740 = vsub.f32 %v2810, %v3676
          %v3741 = vsub.f32 %v2811, %v3677
          %v3742 = vsub.f32 %v2812, %v3678
          %v3743 = vsub.f32 %v2813, %v3679
          %v3744 = vmul.f32 %v3680, 1.442695
          %v3745 = vpow.pop %v3744
          %v3746 = vmul.f32 %v3681, 1.442695
          %v3747 = vpow.pop %v3746
          %v3748 = vmul.f32 %v3682, 1.442695
          %v3749 = vpow.pop %v3748
          %v3750 = vmul.f32 %v3683, 1.442695
          %v3751 = vpow.pop %v3750
          %v3752 = vmul.f32 %v3684, 1.442695
          %v3753 = vpow.pop %v3752
          %v3754 = vmul.f32 %v3685, 1.442695
          %v3755 = vpow.pop %v3754
          %v3756 = vmul.f32 %v3686, 1.442695
          %v3757 = vpow.pop %v3756
          %v3758 = vmul.f32 %v3687, 1.442695
          %v3759 = vpow.pop %v3758
          %v3760 = vmul.f32 %v3688, 1.442695
          %v3761 = vpow.pop %v3760
          %v3762 = vmul.f32 %v3689, 1.442695
          %v3763 = vpow.pop %v3762
          %v3764 = vmul.f32 %v3690, 1.442695
          %v3765 = vpow.pop %v3764
          %v3766 = vmul.f32 %v3691, 1.442695
          %v3767 = vpow.pop %v3766
          %v3768 = vmul.f32 %v3692, 1.442695
          %v3769 = vpow.pop %v3768
          %v3770 = vmul.f32 %v3693, 1.442695
          %v3771 = vpow.pop %v3770
          %v3772 = vmul.f32 %v3694, 1.442695
          %v3773 = vpow.pop %v3772
          %v3774 = vmul.f32 %v3695, 1.442695
          %v3775 = vpow.pop %v3774
          %v3776 = vmul.f32 %v3696, 1.442695
          %v3777 = vpow.pop %v3776
          %v3778 = vmul.f32 %v3697, 1.442695
          %v3779 = vpow.pop %v3778
          %v3780 = vmul.f32 %v3698, 1.442695
          %v3781 = vpow.pop %v3780
          %v3782 = vmul.f32 %v3699, 1.442695
          %v3783 = vpow.pop %v3782
          %v3784 = vmul.f32 %v3700, 1.442695
          %v3785 = vpow.pop %v3784
          %v3786 = vmul.f32 %v3701, 1.442695
          %v3787 = vpow.pop %v3786
          %v3788 = vmul.f32 %v3702, 1.442695
          %v3789 = vpow.pop %v3788
          %v3790 = vmul.f32 %v3703, 1.442695
          %v3791 = vpow.pop %v3790
          %v3792 = vmul.f32 %v3704, 1.442695
          %v3793 = vpow.pop %v3792
          %v3794 = vmul.f32 %v3705, 1.442695
          %v3795 = vpow.pop %v3794
          %v3796 = vmul.f32 %v3706, 1.442695
          %v3797 = vpow.pop %v3796
          %v3798 = vmul.f32 %v3707, 1.442695
          %v3799 = vpow.pop %v3798
          %v3800 = vmul.f32 %v3708, 1.442695
          %v3801 = vpow.pop %v3800
          %v3802 = vmul.f32 %v3709, 1.442695
          %v3803 = vpow.pop %v3802
          %v3804 = vmul.f32 %v3710, 1.442695
          %v3805 = vpow.pop %v3804
          %v3806 = vmul.f32 %v3711, 1.442695
          %v3807 = vpow.pop %v3806
          %v3808 = vmul.f32 %v3712, 1.442695
          %v3809 = vpow.pop %v3808
          %v3810 = vmul.f32 %v3713, 1.442695
          %v3811 = vpow.pop %v3810
          %v3812 = vmul.f32 %v3714, 1.442695
          %v3813 = vpow.pop %v3812
          %v3814 = vmul.f32 %v3715, 1.442695
          %v3815 = vpow.pop %v3814
          %v3816 = vmul.f32 %v3716, 1.442695
          %v3817 = vpow.pop %v3816
          %v3818 = vmul.f32 %v3717, 1.442695
          %v3819 = vpow.pop %v3818
          %v3820 = vmul.f32 %v3718, 1.442695
          %v3821 = vpow.pop %v3820
          %v3822 = vmul.f32 %v3719, 1.442695
          %v3823 = vpow.pop %v3822
          %v3824 = vmul.f32 %v3720, 1.442695
          %v3825 = vpow.pop %v3824
          %v3826 = vmul.f32 %v3721, 1.442695
          %v3827 = vpow.pop %v3826
          %v3828 = vmul.f32 %v3722, 1.442695
          %v3829 = vpow.pop %v3828
          %v3830 = vmul.f32 %v3723, 1.442695
          %v3831 = vpow.pop %v3830
          %v3832 = vmul.f32 %v3724, 1.442695
          %v3833 = vpow.pop %v3832
          %v3834 = vmul.f32 %v3725, 1.442695
          %v3835 = vpow.pop %v3834
          %v3836 = vmul.f32 %v3726, 1.442695
          %v3837 = vpow.pop %v3836
          %v3838 = vmul.f32 %v3727, 1.442695
          %v3839 = vpow.pop %v3838
          %v3840 = vmul.f32 %v3728, 1.442695
          %v3841 = vpow.pop %v3840
          %v3842 = vmul.f32 %v3729, 1.442695
          %v3843 = vpow.pop %v3842
          %v3844 = vmul.f32 %v3730, 1.442695
          %v3845 = vpow.pop %v3844
          %v3846 = vmul.f32 %v3731, 1.442695
          %v3847 = vpow.pop %v3846
          %v3848 = vmul.f32 %v3732, 1.442695
          %v3849 = vpow.pop %v3848
          %v3850 = vmul.f32 %v3733, 1.442695
          %v3851 = vpow.pop %v3850
          %v3852 = vmul.f32 %v3734, 1.442695
          %v3853 = vpow.pop %v3852
          %v3854 = vmul.f32 %v3735, 1.442695
          %v3855 = vpow.pop %v3854
          %v3856 = vmul.f32 %v3736, 1.442695
          %v3857 = vpow.pop %v3856
          %v3858 = vmul.f32 %v3737, 1.442695
          %v3859 = vpow.pop %v3858
          %v3860 = vmul.f32 %v3738, 1.442695
          %v3861 = vpow.pop %v3860
          %v3862 = vmul.f32 %v3739, 1.442695
          %v3863 = vpow.pop %v3862
          %v3864 = vmul.f32 %v3740, 1.442695
          %v3865 = vpow.pop %v3864
          %v3866 = vmul.f32 %v3741, 1.442695
          %v3867 = vpow.pop %v3866
          %v3868 = vmul.f32 %v3742, 1.442695
          %v3869 = vpow.pop %v3868
          %v3870 = vmul.f32 %v3743, 1.442695
          %v3871 = vpow.pop %v3870
          %v3872 = vsub.f32 %v3122, %v3616
          %v3873 = vsub.f32 %v3124, %v3617
          %v3874 = vsub.f32 %v3127, %v3618
          %v3875 = vsub.f32 %v3129, %v3619
          %v3876 = vsub.f32 %v3132, %v3620
          %v3877 = vsub.f32 %v3134, %v3621
          %v3878 = vsub.f32 %v3137, %v3622
          %v3879 = vsub.f32 %v3139, %v3623
          %v3880 = vsub.f32 %v3142, %v3624
          %v3881 = vsub.f32 %v3144, %v3625
          %v3882 = vsub.f32 %v3147, %v3626
          %v3883 = vsub.f32 %v3149, %v3627
          %v3884 = vsub.f32 %v3152, %v3628
          %v3885 = vsub.f32 %v3154, %v3629
          %v3886 = vsub.f32 %v3157, %v3630
          %v3887 = vsub.f32 %v3159, %v3631
          %v3888 = vsub.f32 %v3231, %v3632
          %v3889 = vsub.f32 %v3233, %v3633
          %v3890 = vsub.f32 %v3236, %v3634
          %v3891 = vsub.f32 %v3238, %v3635
          %v3892 = vsub.f32 %v3241, %v3636
          %v3893 = vsub.f32 %v3243, %v3637
          %v3894 = vsub.f32 %v3246, %v3638
          %v3895 = vsub.f32 %v3248, %v3639
          %v3896 = vsub.f32 %v3251, %v3640
          %v3897 = vsub.f32 %v3253, %v3641
          %v3898 = vsub.f32 %v3256, %v3642
          %v3899 = vsub.f32 %v3258, %v3643
          %v3900 = vsub.f32 %v3261, %v3644
          %v3901 = vsub.f32 %v3263, %v3645
          %v3902 = vsub.f32 %v3266, %v3646
          %v3903 = vsub.f32 %v3268, %v3647
          %v3904 = vsub.f32 %v3340, %v3648
          %v3905 = vsub.f32 %v3342, %v3649
          %v3906 = vsub.f32 %v3345, %v3650
          %v3907 = vsub.f32 %v3347, %v3651
          %v3908 = vsub.f32 %v3350, %v3652
          %v3909 = vsub.f32 %v3352, %v3653
          %v3910 = vsub.f32 %v3355, %v3654
          %v3911 = vsub.f32 %v3357, %v3655
          %v3912 = vsub.f32 %v3360, %v3656
          %v3913 = vsub.f32 %v3362, %v3657
          %v3914 = vsub.f32 %v3365, %v3658
          %v3915 = vsub.f32 %v3367, %v3659
          %v3916 = vsub.f32 %v3370, %v3660
          %v3917 = vsub.f32 %v3372, %v3661
          %v3918 = vsub.f32 %v3375, %v3662
          %v3919 = vsub.f32 %v3377, %v3663
          %v3920 = vsub.f32 %v3449, %v3664
          %v3921 = vsub.f32 %v3451, %v3665
          %v3922 = vsub.f32 %v3454, %v3666
          %v3923 = vsub.f32 %v3456, %v3667
          %v3924 = vsub.f32 %v3459, %v3668
          %v3925 = vsub.f32 %v3461, %v3669
          %v3926 = vsub.f32 %v3464, %v3670
          %v3927 = vsub.f32 %v3466, %v3671
          %v3928 = vsub.f32 %v3469, %v3672
          %v3929 = vsub.f32 %v3471, %v3673
          %v3930 = vsub.f32 %v3474, %v3674
          %v3931 = vsub.f32 %v3476, %v3675
          %v3932 = vsub.f32 %v3479, %v3676
          %v3933 = vsub.f32 %v3481, %v3677
          %v3934 = vsub.f32 %v3484, %v3678
          %v3935 = vsub.f32 %v3486, %v3679
          %v3936 = vmul.f32 %v3872, 1.442695
          %v3937 = vpow.pop %v3936
          %v3938 = vmul.f32 %v3873, 1.442695
          %v3939 = vpow.pop %v3938
          %v3940 = vmul.f32 %v3874, 1.442695
          %v3941 = vpow.pop %v3940
          %v3942 = vmul.f32 %v3875, 1.442695
          %v3943 = vpow.pop %v3942
          %v3944 = vmul.f32 %v3876, 1.442695
          %v3945 = vpow.pop %v3944
          %v3946 = vmul.f32 %v3877, 1.442695
          %v3947 = vpow.pop %v3946
          %v3948 = vmul.f32 %v3878, 1.442695
          %v3949 = vpow.pop %v3948
          %v3950 = vmul.f32 %v3879, 1.442695
          %v3951 = vpow.pop %v3950
          %v3952 = vmul.f32 %v3880, 1.442695
          %v3953 = vpow.pop %v3952
          %v3954 = vmul.f32 %v3881, 1.442695
          %v3955 = vpow.pop %v3954
          %v3956 = vmul.f32 %v3882, 1.442695
          %v3957 = vpow.pop %v3956
          %v3958 = vmul.f32 %v3883, 1.442695
          %v3959 = vpow.pop %v3958
          %v3960 = vmul.f32 %v3884, 1.442695
          %v3961 = vpow.pop %v3960
          %v3962 = vmul.f32 %v3885, 1.442695
          %v3963 = vpow.pop %v3962
          %v3964 = vmul.f32 %v3886, 1.442695
          %v3965 = vpow.pop %v3964
          %v3966 = vmul.f32 %v3887, 1.442695
          %v3967 = vpow.pop %v3966
          %v3968 = vmul.f32 %v3888, 1.442695
          %v3969 = vpow.pop %v3968
          %v3970 = vmul.f32 %v3889, 1.442695
          %v3971 = vpow.pop %v3970
          %v3972 = vmul.f32 %v3890, 1.442695
          %v3973 = vpow.pop %v3972
          %v3974 = vmul.f32 %v3891, 1.442695
          %v3975 = vpow.pop %v3974
          %v3976 = vmul.f32 %v3892, 1.442695
          %v3977 = vpow.pop %v3976
          %v3978 = vmul.f32 %v3893, 1.442695
          %v3979 = vpow.pop %v3978
          %v3980 = vmul.f32 %v3894, 1.442695
          %v3981 = vpow.pop %v3980
          %v3982 = vmul.f32 %v3895, 1.442695
          %v3983 = vpow.pop %v3982
          %v3984 = vmul.f32 %v3896, 1.442695
          %v3985 = vpow.pop %v3984
          %v3986 = vmul.f32 %v3897, 1.442695
          %v3987 = vpow.pop %v3986
          %v3988 = vmul.f32 %v3898, 1.442695
          %v3989 = vpow.pop %v3988
          %v3990 = vmul.f32 %v3899, 1.442695
          %v3991 = vpow.pop %v3990
          %v3992 = vmul.f32 %v3900, 1.442695
          %v3993 = vpow.pop %v3992
          %v3994 = vmul.f32 %v3901, 1.442695
          %v3995 = vpow.pop %v3994
          %v3996 = vmul.f32 %v3902, 1.442695
          %v3997 = vpow.pop %v3996
          %v3998 = vmul.f32 %v3903, 1.442695
          %v3999 = vpow.pop %v3998
          %v4000 = vmul.f32 %v3904, 1.442695
          %v4001 = vpow.pop %v4000
          %v4002 = vmul.f32 %v3905, 1.442695
          %v4003 = vpow.pop %v4002
          %v4004 = vmul.f32 %v3906, 1.442695
          %v4005 = vpow.pop %v4004
          %v4006 = vmul.f32 %v3907, 1.442695
          %v4007 = vpow.pop %v4006
          %v4008 = vmul.f32 %v3908, 1.442695
          %v4009 = vpow.pop %v4008
          %v4010 = vmul.f32 %v3909, 1.442695
          %v4011 = vpow.pop %v4010
          %v4012 = vmul.f32 %v3910, 1.442695
          %v4013 = vpow.pop %v4012
          %v4014 = vmul.f32 %v3911, 1.442695
          %v4015 = vpow.pop %v4014
          %v4016 = vmul.f32 %v3912, 1.442695
          %v4017 = vpow.pop %v4016
          %v4018 = vmul.f32 %v3913, 1.442695
          %v4019 = vpow.pop %v4018
          %v4020 = vmul.f32 %v3914, 1.442695
          %v4021 = vpow.pop %v4020
          %v4022 = vmul.f32 %v3915, 1.442695
          %v4023 = vpow.pop %v4022
          %v4024 = vmul.f32 %v3916, 1.442695
          %v4025 = vpow.pop %v4024
          %v4026 = vmul.f32 %v3917, 1.442695
          %v4027 = vpow.pop %v4026
          %v4028 = vmul.f32 %v3918, 1.442695
          %v4029 = vpow.pop %v4028
          %v4030 = vmul.f32 %v3919, 1.442695
          %v4031 = vpow.pop %v4030
          %v4032 = vmul.f32 %v3920, 1.442695
          %v4033 = vpow.pop %v4032
          %v4034 = vmul.f32 %v3921, 1.442695
          %v4035 = vpow.pop %v4034
          %v4036 = vmul.f32 %v3922, 1.442695
          %v4037 = vpow.pop %v4036
          %v4038 = vmul.f32 %v3923, 1.442695
          %v4039 = vpow.pop %v4038
          %v4040 = vmul.f32 %v3924, 1.442695
          %v4041 = vpow.pop %v4040
          %v4042 = vmul.f32 %v3925, 1.442695
          %v4043 = vpow.pop %v4042
          %v4044 = vmul.f32 %v3926, 1.442695
          %v4045 = vpow.pop %v4044
          %v4046 = vmul.f32 %v3927, 1.442695
          %v4047 = vpow.pop %v4046
          %v4048 = vmul.f32 %v3928, 1.442695
          %v4049 = vpow.pop %v4048
          %v4050 = vmul.f32 %v3929, 1.442695
          %v4051 = vpow.pop %v4050
          %v4052 = vmul.f32 %v3930, 1.442695
          %v4053 = vpow.pop %v4052
          %v4054 = vmul.f32 %v3931, 1.442695
          %v4055 = vpow.pop %v4054
          %v4056 = vmul.f32 %v3932, 1.442695
          %v4057 = vpow.pop %v4056
          %v4058 = vmul.f32 %v3933, 1.442695
          %v4059 = vpow.pop %v4058
          %v4060 = vmul.f32 %v3934, 1.442695
          %v4061 = vpow.pop %v4060
          %v4062 = vmul.f32 %v3935, 1.442695
          %v4063 = vpow.pop %v4062
          %v4064 = vmul.f32 %v3745, %v2814
          %v4065 = vmul.f32 %v3747, %v2815
          %v4066 = vmul.f32 %v3749, %v2816
          %v4067 = vmul.f32 %v3751, %v2817
          %v4068 = vmul.f32 %v3753, %v2818
          %v4069 = vmul.f32 %v3755, %v2819
          %v4070 = vmul.f32 %v3757, %v2820
          %v4071 = vmul.f32 %v3759, %v2821
          %v4072 = vmul.f32 %v3761, %v2822
          %v4073 = vmul.f32 %v3763, %v2823
          %v4074 = vmul.f32 %v3765, %v2824
          %v4075 = vmul.f32 %v3767, %v2825
          %v4076 = vmul.f32 %v3769, %v2826
          %v4077 = vmul.f32 %v3771, %v2827
          %v4078 = vmul.f32 %v3773, %v2828
          %v4079 = vmul.f32 %v3775, %v2829
          %v4080 = vmul.f32 %v3777, %v2830
          %v4081 = vmul.f32 %v3779, %v2831
          %v4082 = vmul.f32 %v3781, %v2832
          %v4083 = vmul.f32 %v3783, %v2833
          %v4084 = vmul.f32 %v3785, %v2834
          %v4085 = vmul.f32 %v3787, %v2835
          %v4086 = vmul.f32 %v3789, %v2836
          %v4087 = vmul.f32 %v3791, %v2837
          %v4088 = vmul.f32 %v3793, %v2838
          %v4089 = vmul.f32 %v3795, %v2839
          %v4090 = vmul.f32 %v3797, %v2840
          %v4091 = vmul.f32 %v3799, %v2841
          %v4092 = vmul.f32 %v3801, %v2842
          %v4093 = vmul.f32 %v3803, %v2843
          %v4094 = vmul.f32 %v3805, %v2844
          %v4095 = vmul.f32 %v3807, %v2845
          %v4096 = vmul.f32 %v3809, %v2846
          %v4097 = vmul.f32 %v3811, %v2847
          %v4098 = vmul.f32 %v3813, %v2848
          %v4099 = vmul.f32 %v3815, %v2849
          %v4100 = vmul.f32 %v3817, %v2850
          %v4101 = vmul.f32 %v3819, %v2851
          %v4102 = vmul.f32 %v3821, %v2852
          %v4103 = vmul.f32 %v3823, %v2853
          %v4104 = vmul.f32 %v3825, %v2854
          %v4105 = vmul.f32 %v3827, %v2855
          %v4106 = vmul.f32 %v3829, %v2856
          %v4107 = vmul.f32 %v3831, %v2857
          %v4108 = vmul.f32 %v3833, %v2858
          %v4109 = vmul.f32 %v3835, %v2859
          %v4110 = vmul.f32 %v3837, %v2860
          %v4111 = vmul.f32 %v3839, %v2861
          %v4112 = vmul.f32 %v3841, %v2862
          %v4113 = vmul.f32 %v3843, %v2863
          %v4114 = vmul.f32 %v3845, %v2864
          %v4115 = vmul.f32 %v3847, %v2865
          %v4116 = vmul.f32 %v3849, %v2866
          %v4117 = vmul.f32 %v3851, %v2867
          %v4118 = vmul.f32 %v3853, %v2868
          %v4119 = vmul.f32 %v3855, %v2869
          %v4120 = vmul.f32 %v3857, %v2870
          %v4121 = vmul.f32 %v3859, %v2871
          %v4122 = vmul.f32 %v3861, %v2872
          %v4123 = vmul.f32 %v3863, %v2873
          %v4124 = vmul.f32 %v3865, %v2874
          %v4125 = vmul.f32 %v3867, %v2875
          %v4126 = vmul.f32 %v3869, %v2876
          %v4127 = vmul.f32 %v3871, %v2877
          %4128 = vadd.xlane.f32.xlu0 %v3937
          %v4129 = vpop.xlane.xlu0 %4128
          %4130 = vadd.xlane.f32.xlu0 %v3939
          %v4131 = vpop.xlane.xlu0 %4130
          %4132 = vadd.xlane.f32.xlu0 %v3941
          %v4133 = vpop.xlane.xlu0 %4132
          %4134 = vadd.xlane.f32.xlu0 %v3943
          %v4135 = vpop.xlane.xlu0 %4134
          %4136 = vadd.xlane.f32.xlu0 %v3945
          %v4137 = vpop.xlane.xlu0 %4136
          %4138 = vadd.xlane.f32.xlu0 %v3947
          %v4139 = vpop.xlane.xlu0 %4138
          %4140 = vadd.xlane.f32.xlu0 %v3949
          %v4141 = vpop.xlane.xlu0 %4140
          %4142 = vadd.xlane.f32.xlu0 %v3951
          %v4143 = vpop.xlane.xlu0 %4142
          %4144 = vadd.xlane.f32.xlu0 %v3953
          %v4145 = vpop.xlane.xlu0 %4144
          %4146 = vadd.xlane.f32.xlu0 %v3955
          %v4147 = vpop.xlane.xlu0 %4146
          %4148 = vadd.xlane.f32.xlu0 %v3957
          %v4149 = vpop.xlane.xlu0 %4148
          %4150 = vadd.xlane.f32.xlu0 %v3959
          %v4151 = vpop.xlane.xlu0 %4150
          %4152 = vadd.xlane.f32.xlu0 %v3961
          %v4153 = vpop.xlane.xlu0 %4152
          %4154 = vadd.xlane.f32.xlu0 %v3963
          %v4155 = vpop.xlane.xlu0 %4154
          %4156 = vadd.xlane.f32.xlu0 %v3965
          %v4157 = vpop.xlane.xlu0 %4156
          %4158 = vadd.xlane.f32.xlu0 %v3967
          %v4159 = vpop.xlane.xlu0 %4158
          %4160 = vadd.xlane.f32.xlu0 %v3969
          %v4161 = vpop.xlane.xlu0 %4160
          %4162 = vadd.xlane.f32.xlu0 %v3971
          %v4163 = vpop.xlane.xlu0 %4162
          %4164 = vadd.xlane.f32.xlu0 %v3973
          %v4165 = vpop.xlane.xlu0 %4164
          %4166 = vadd.xlane.f32.xlu0 %v3975
          %v4167 = vpop.xlane.xlu0 %4166
          %4168 = vadd.xlane.f32.xlu0 %v3977
          %v4169 = vpop.xlane.xlu0 %4168
          %4170 = vadd.xlane.f32.xlu0 %v3979
          %v4171 = vpop.xlane.xlu0 %4170
          %4172 = vadd.xlane.f32.xlu0 %v3981
          %v4173 = vpop.xlane.xlu0 %4172
          %4174 = vadd.xlane.f32.xlu0 %v3983
          %v4175 = vpop.xlane.xlu0 %4174
          %4176 = vadd.xlane.f32.xlu0 %v3985
          %v4177 = vpop.xlane.xlu0 %4176
          %4178 = vadd.xlane.f32.xlu0 %v3987
          %v4179 = vpop.xlane.xlu0 %4178
          %4180 = vadd.xlane.f32.xlu0 %v3989
          %v4181 = vpop.xlane.xlu0 %4180
          %4182 = vadd.xlane.f32.xlu0 %v3991
          %v4183 = vpop.xlane.xlu0 %4182
          %4184 = vadd.xlane.f32.xlu0 %v3993
          %v4185 = vpop.xlane.xlu0 %4184
          %4186 = vadd.xlane.f32.xlu0 %v3995
          %v4187 = vpop.xlane.xlu0 %4186
          %4188 = vadd.xlane.f32.xlu0 %v3997
          %v4189 = vpop.xlane.xlu0 %4188
          %4190 = vadd.xlane.f32.xlu0 %v3999
          %v4191 = vpop.xlane.xlu0 %4190
          %4192 = vadd.xlane.f32.xlu0 %v4001
          %v4193 = vpop.xlane.xlu0 %4192
          %4194 = vadd.xlane.f32.xlu0 %v4003
          %v4195 = vpop.xlane.xlu0 %4194
          %4196 = vadd.xlane.f32.xlu0 %v4005
          %v4197 = vpop.xlane.xlu0 %4196
          %4198 = vadd.xlane.f32.xlu0 %v4007
          %v4199 = vpop.xlane.xlu0 %4198
          %4200 = vadd.xlane.f32.xlu0 %v4009
          %v4201 = vpop.xlane.xlu0 %4200
          %4202 = vadd.xlane.f32.xlu0 %v4011
          %v4203 = vpop.xlane.xlu0 %4202
          %4204 = vadd.xlane.f32.xlu0 %v4013
          %v4205 = vpop.xlane.xlu0 %4204
          %4206 = vadd.xlane.f32.xlu0 %v4015
          %v4207 = vpop.xlane.xlu0 %4206
          %4208 = vadd.xlane.f32.xlu0 %v4017
          %v4209 = vpop.xlane.xlu0 %4208
          %4210 = vadd.xlane.f32.xlu0 %v4019
          %v4211 = vpop.xlane.xlu0 %4210
          %4212 = vadd.xlane.f32.xlu0 %v4021
          %v4213 = vpop.xlane.xlu0 %4212
          %4214 = vadd.xlane.f32.xlu0 %v4023
          %v4215 = vpop.xlane.xlu0 %4214
          %4216 = vadd.xlane.f32.xlu0 %v4025
          %v4217 = vpop.xlane.xlu0 %4216
          %4218 = vadd.xlane.f32.xlu0 %v4027
          %v4219 = vpop.xlane.xlu0 %4218
          %4220 = vadd.xlane.f32.xlu0 %v4029
          %v4221 = vpop.xlane.xlu0 %4220
          %4222 = vadd.xlane.f32.xlu0 %v4031
          %v4223 = vpop.xlane.xlu0 %4222
          %4224 = vadd.xlane.f32.xlu0 %v4033
          %v4225 = vpop.xlane.xlu0 %4224
          %4226 = vadd.xlane.f32.xlu0 %v4035
          %v4227 = vpop.xlane.xlu0 %4226
          %4228 = vadd.xlane.f32.xlu0 %v4037
          %v4229 = vpop.xlane.xlu0 %4228
          %4230 = vadd.xlane.f32.xlu0 %v4039
          %v4231 = vpop.xlane.xlu0 %4230
          %4232 = vadd.xlane.f32.xlu0 %v4041
          %v4233 = vpop.xlane.xlu0 %4232
          %4234 = vadd.xlane.f32.xlu0 %v4043
          %v4235 = vpop.xlane.xlu0 %4234
          %4236 = vadd.xlane.f32.xlu0 %v4045
          %v4237 = vpop.xlane.xlu0 %4236
          %4238 = vadd.xlane.f32.xlu0 %v4047
          %v4239 = vpop.xlane.xlu0 %4238
          %4240 = vadd.xlane.f32.xlu0 %v4049
          %v4241 = vpop.xlane.xlu0 %4240
          %4242 = vadd.xlane.f32.xlu0 %v4051
          %v4243 = vpop.xlane.xlu0 %4242
          %4244 = vadd.xlane.f32.xlu0 %v4053
          %v4245 = vpop.xlane.xlu0 %4244
          %4246 = vadd.xlane.f32.xlu0 %v4055
          %v4247 = vpop.xlane.xlu0 %4246
          %4248 = vadd.xlane.f32.xlu0 %v4057
          %v4249 = vpop.xlane.xlu0 %4248
          %4250 = vadd.xlane.f32.xlu0 %v4059
          %v4251 = vpop.xlane.xlu0 %4250
          %4252 = vadd.xlane.f32.xlu0 %v4061
          %v4253 = vpop.xlane.xlu0 %4252
          %4254 = vadd.xlane.f32.xlu0 %v4063
          %v4255 = vpop.xlane.xlu0 %4254
          %v4256 = vadd.f32 %v4064, %v4129
          %v4257 = vadd.f32 %v4065, %v4131
          %v4258 = vadd.f32 %v4066, %v4133
          %v4259 = vadd.f32 %v4067, %v4135
          %v4260 = vadd.f32 %v4068, %v4137
          %v4261 = vadd.f32 %v4069, %v4139
          %v4262 = vadd.f32 %v4070, %v4141
          %v4263 = vadd.f32 %v4071, %v4143
          %v4264 = vadd.f32 %v4072, %v4145
          %v4265 = vadd.f32 %v4073, %v4147
          %v4266 = vadd.f32 %v4074, %v4149
          %v4267 = vadd.f32 %v4075, %v4151
          %v4268 = vadd.f32 %v4076, %v4153
          %v4269 = vadd.f32 %v4077, %v4155
          %v4270 = vadd.f32 %v4078, %v4157
          %v4271 = vadd.f32 %v4079, %v4159
          %v4272 = vadd.f32 %v4080, %v4161
          %v4273 = vadd.f32 %v4081, %v4163
          %v4274 = vadd.f32 %v4082, %v4165
          %v4275 = vadd.f32 %v4083, %v4167
          %v4276 = vadd.f32 %v4084, %v4169
          %v4277 = vadd.f32 %v4085, %v4171
          %v4278 = vadd.f32 %v4086, %v4173
          %v4279 = vadd.f32 %v4087, %v4175
          %v4280 = vadd.f32 %v4088, %v4177
          %v4281 = vadd.f32 %v4089, %v4179
          %v4282 = vadd.f32 %v4090, %v4181
          %v4283 = vadd.f32 %v4091, %v4183
          %v4284 = vadd.f32 %v4092, %v4185
          %v4285 = vadd.f32 %v4093, %v4187
          %v4286 = vadd.f32 %v4094, %v4189
          %v4287 = vadd.f32 %v4095, %v4191
          %v4288 = vadd.f32 %v4096, %v4193
          %v4289 = vadd.f32 %v4097, %v4195
          %v4290 = vadd.f32 %v4098, %v4197
          %v4291 = vadd.f32 %v4099, %v4199
          %v4292 = vadd.f32 %v4100, %v4201
          %v4293 = vadd.f32 %v4101, %v4203
          %v4294 = vadd.f32 %v4102, %v4205
          %v4295 = vadd.f32 %v4103, %v4207
          %v4296 = vadd.f32 %v4104, %v4209
          %v4297 = vadd.f32 %v4105, %v4211
          %v4298 = vadd.f32 %v4106, %v4213
          %v4299 = vadd.f32 %v4107, %v4215
          %v4300 = vadd.f32 %v4108, %v4217
          %v4301 = vadd.f32 %v4109, %v4219
          %v4302 = vadd.f32 %v4110, %v4221
          %v4303 = vadd.f32 %v4111, %v4223
          %v4304 = vadd.f32 %v4112, %v4225
          %v4305 = vadd.f32 %v4113, %v4227
          %v4306 = vadd.f32 %v4114, %v4229
          %v4307 = vadd.f32 %v4115, %v4231
          %v4308 = vadd.f32 %v4116, %v4233
          %v4309 = vadd.f32 %v4117, %v4235
          %v4310 = vadd.f32 %v4118, %v4237
          %v4311 = vadd.f32 %v4119, %v4239
          %v4312 = vadd.f32 %v4120, %v4241
          %v4313 = vadd.f32 %v4121, %v4243
          %v4314 = vadd.f32 %v4122, %v4245
          %v4315 = vadd.f32 %v4123, %v4247
          %v4316 = vadd.f32 %v4124, %v4249
          %v4317 = vadd.f32 %v4125, %v4251
          %v4318 = vadd.f32 %v4126, %v4253
          %v4319 = vadd.f32 %v4127, %v4255
          %v4320 = vpack.c.bf16 %v3937, %v3937
          %v4321 = vpack.c.bf16 %v3939, %v3939
          %v4322 = vpack.c.bf16 %v3941, %v3941
          %v4323 = vpack.c.bf16 %v3943, %v3943
          %v4324 = vpack.c.bf16 %v3945, %v3945
          %v4325 = vpack.c.bf16 %v3947, %v3947
          %v4326 = vpack.c.bf16 %v3949, %v3949
          %v4327 = vpack.c.bf16 %v3951, %v3951
          %v4328 = vpack.c.bf16 %v3953, %v3953
          %v4329 = vpack.c.bf16 %v3955, %v3955
          %v4330 = vpack.c.bf16 %v3957, %v3957
          %v4331 = vpack.c.bf16 %v3959, %v3959
          %v4332 = vpack.c.bf16 %v3961, %v3961
          %v4333 = vpack.c.bf16 %v3963, %v3963
          %v4334 = vpack.c.bf16 %v3965, %v3965
          %v4335 = vpack.c.bf16 %v3967, %v3967
          %v4336 = vpack.c.bf16 %v3969, %v3969
          %v4337 = vpack.c.bf16 %v3971, %v3971
          %v4338 = vpack.c.bf16 %v3973, %v3973
          %v4339 = vpack.c.bf16 %v3975, %v3975
          %v4340 = vpack.c.bf16 %v3977, %v3977
          %v4341 = vpack.c.bf16 %v3979, %v3979
          %v4342 = vpack.c.bf16 %v3981, %v3981
          %v4343 = vpack.c.bf16 %v3983, %v3983
          %v4344 = vpack.c.bf16 %v3985, %v3985
          %v4345 = vpack.c.bf16 %v3987, %v3987
          %v4346 = vpack.c.bf16 %v3989, %v3989
          %v4347 = vpack.c.bf16 %v3991, %v3991
          %v4348 = vpack.c.bf16 %v3993, %v3993
          %v4349 = vpack.c.bf16 %v3995, %v3995
          %v4350 = vpack.c.bf16 %v3997, %v3997
          %v4351 = vpack.c.bf16 %v3999, %v3999
          %v4352 = vpack.c.bf16 %v4001, %v4001
          %v4353 = vpack.c.bf16 %v4003, %v4003
          %v4354 = vpack.c.bf16 %v4005, %v4005
          %v4355 = vpack.c.bf16 %v4007, %v4007
          %v4356 = vpack.c.bf16 %v4009, %v4009
          %v4357 = vpack.c.bf16 %v4011, %v4011
          %v4358 = vpack.c.bf16 %v4013, %v4013
          %v4359 = vpack.c.bf16 %v4015, %v4015
          %v4360 = vpack.c.bf16 %v4017, %v4017
          %v4361 = vpack.c.bf16 %v4019, %v4019
          %v4362 = vpack.c.bf16 %v4021, %v4021
          %v4363 = vpack.c.bf16 %v4023, %v4023
          %v4364 = vpack.c.bf16 %v4025, %v4025
          %v4365 = vpack.c.bf16 %v4027, %v4027
          %v4366 = vpack.c.bf16 %v4029, %v4029
          %v4367 = vpack.c.bf16 %v4031, %v4031
          %v4368 = vpack.c.bf16 %v4033, %v4033
          %v4369 = vpack.c.bf16 %v4035, %v4035
          %v4370 = vpack.c.bf16 %v4037, %v4037
          %v4371 = vpack.c.bf16 %v4039, %v4039
          %v4372 = vpack.c.bf16 %v4041, %v4041
          %v4373 = vpack.c.bf16 %v4043, %v4043
          %v4374 = vpack.c.bf16 %v4045, %v4045
          %v4375 = vpack.c.bf16 %v4047, %v4047
          %v4376 = vpack.c.bf16 %v4049, %v4049
          %v4377 = vpack.c.bf16 %v4051, %v4051
          %v4378 = vpack.c.bf16 %v4053, %v4053
          %v4379 = vpack.c.bf16 %v4055, %v4055
          %v4380 = vpack.c.bf16 %v4057, %v4057
          %v4381 = vpack.c.bf16 %v4059, %v4059
          %v4382 = vpack.c.bf16 %v4061, %v4061
          %v4383 = vpack.c.bf16 %v4063, %v4063
          %v4400 = vunpack.c.l.b16 %v4320
          %v4401 = vunpack.c.l.b16 %v4321
          %v4402 = vunpack.c.l.b16 %v4322
          %v4403 = vunpack.c.l.b16 %v4323
          %v4404 = vunpack.c.l.b16 %v4324
          %v4405 = vunpack.c.l.b16 %v4325
          %v4406 = vunpack.c.l.b16 %v4326
          %v4407 = vunpack.c.l.b16 %v4327
          %v4408 = vunpack.c.l.b16 %v4328
          %v4409 = vunpack.c.l.b16 %v4329
          %v4410 = vunpack.c.l.b16 %v4330
          %v4411 = vunpack.c.l.b16 %v4331
          %v4412 = vunpack.c.l.b16 %v4332
          %v4413 = vunpack.c.l.b16 %v4333
          %v4414 = vunpack.c.l.b16 %v4334
          %v4415 = vunpack.c.l.b16 %v4335
          %v4416 = vpack.c.b16 %v4401, %v4400
          %v4417 = vpack.c.b16 %v4403, %v4402
          %v4418 = vpack.c.b16 %v4405, %v4404
          %v4419 = vpack.c.b16 %v4407, %v4406
          %v4420 = vpack.c.b16 %v4409, %v4408
          %v4421 = vpack.c.b16 %v4411, %v4410
          %v4422 = vpack.c.b16 %v4413, %v4412
          %v4423 = vpack.c.b16 %v4415, %v4414
          %v4436 = vunpack.c.l.b16 %v2963
          %v4437 = vunpack.c.l.b16 %v2964
          %v4438 = vunpack.c.l.b16 %v2965
          %v4439 = vunpack.c.l.b16 %v2966
          %v4440 = vpack.c.b16 %v4437, %v4436
          %v4441 = vpack.c.b16 %v4439, %v4438
          %4444 = vmatpush.bf16.xpose.msra.mxu0 0
          %4445 = vmatpush.bf16.xpose.msra.mxu0 0
          %4446 = vmatpush.bf16.xpose.msra.mxu0 0
          %4447 = vmatpush.bf16.xpose.msra.mxu0 0
          %4448 = vmatpush.bf16.xpose.msra.mxu0 0
          %4449 = vmatpush.bf16.xpose.msra.mxu0 0
          %4450 = vmatpush.bf16.xpose.msra.mxu0 %v4441
          %4451 = vmatpush.bf16.xpose.msra.mxu0 %v4440
          %4452 = vmatmul.bf16.gmra.mxu0 %v4416
          %v4453 = vpop.f32.mrf.mxu0
          %v4454 = vadd.f32 0.0, %v4453
          %v4455 = vpop.f32.mrf.mxu0
          %v4456 = vadd.f32 0.0, %v4455
          %4457 = vmatmul.bf16.gmra.mxu0 %v4417
          %v4458 = vpop.f32.mrf.mxu0
          %v4459 = vadd.f32 0.0, %v4458
          %v4460 = vpop.f32.mrf.mxu0
          %v4461 = vadd.f32 0.0, %v4460
          %4462 = vmatmul.bf16.gmra.mxu0 %v4418
          %v4463 = vpop.f32.mrf.mxu0
          %v4464 = vadd.f32 0.0, %v4463
          %v4465 = vpop.f32.mrf.mxu0
          %v4466 = vadd.f32 0.0, %v4465
          %4467 = vmatmul.bf16.gmra.mxu0 %v4419
          %v4468 = vpop.f32.mrf.mxu0
          %v4469 = vadd.f32 0.0, %v4468
          %v4470 = vpop.f32.mrf.mxu0
          %v4471 = vadd.f32 0.0, %v4470
          %4472 = vmatmul.bf16.gmra.mxu0 %v4420
          %v4473 = vpop.f32.mrf.mxu0
          %v4474 = vadd.f32 0.0, %v4473
          %v4475 = vpop.f32.mrf.mxu0
          %v4476 = vadd.f32 0.0, %v4475
          %4477 = vmatmul.bf16.gmra.mxu0 %v4421
          %v4478 = vpop.f32.mrf.mxu0
          %v4479 = vadd.f32 0.0, %v4478
          %v4480 = vpop.f32.mrf.mxu0
          %v4481 = vadd.f32 0.0, %v4480
          %4482 = vmatmul.bf16.gmra.mxu0 %v4422
          %v4483 = vpop.f32.mrf.mxu0
          %v4484 = vadd.f32 0.0, %v4483
          %v4485 = vpop.f32.mrf.mxu0
          %v4486 = vadd.f32 0.0, %v4485
          %4487 = vmatmul.bf16.gmra.mxu0 %v4423
          %v4488 = vpop.f32.mrf.mxu0
          %v4489 = vadd.f32 0.0, %v4488
          %v4490 = vpop.f32.mrf.mxu0
          %v4491 = vadd.f32 0.0, %v4490
          %4492 = vdwg.mxu0
          %v4509 = vunpack.c.l.b16 %v4336
          %v4510 = vunpack.c.l.b16 %v4337
          %v4511 = vunpack.c.l.b16 %v4338
          %v4512 = vunpack.c.l.b16 %v4339
          %v4513 = vunpack.c.l.b16 %v4340
          %v4514 = vunpack.c.l.b16 %v4341
          %v4515 = vunpack.c.l.b16 %v4342
          %v4516 = vunpack.c.l.b16 %v4343
          %v4517 = vunpack.c.l.b16 %v4344
          %v4518 = vunpack.c.l.b16 %v4345
          %v4519 = vunpack.c.l.b16 %v4346
          %v4520 = vunpack.c.l.b16 %v4347
          %v4521 = vunpack.c.l.b16 %v4348
          %v4522 = vunpack.c.l.b16 %v4349
          %v4523 = vunpack.c.l.b16 %v4350
          %v4524 = vunpack.c.l.b16 %v4351
          %v4525 = vpack.c.b16 %v4510, %v4509
          %v4526 = vpack.c.b16 %v4512, %v4511
          %v4527 = vpack.c.b16 %v4514, %v4513
          %v4528 = vpack.c.b16 %v4516, %v4515
          %v4529 = vpack.c.b16 %v4518, %v4517
          %v4530 = vpack.c.b16 %v4520, %v4519
          %v4531 = vpack.c.b16 %v4522, %v4521
          %v4532 = vpack.c.b16 %v4524, %v4523
          %v4545 = vunpack.c.l.b16 %v2967
          %v4546 = vunpack.c.l.b16 %v2968
          %v4547 = vunpack.c.l.b16 %v2969
          %v4548 = vunpack.c.l.b16 %v2970
          %v4549 = vpack.c.b16 %v4546, %v4545
          %v4550 = vpack.c.b16 %v4548, %v4547
          %4553 = vmatpush.bf16.xpose.msra.mxu0 0
          %4554 = vmatpush.bf16.xpose.msra.mxu0 0
          %4555 = vmatpush.bf16.xpose.msra.mxu0 0
          %4556 = vmatpush.bf16.xpose.msra.mxu0 0
          %4557 = vmatpush.bf16.xpose.msra.mxu0 0
          %4558 = vmatpush.bf16.xpose.msra.mxu0 0
          %4559 = vmatpush.bf16.xpose.msra.mxu0 %v4550
          %4560 = vmatpush.bf16.xpose.msra.mxu0 %v4549
          %4561 = vmatmul.bf16.gmra.mxu0 %v4525
          %v4562 = vpop.f32.mrf.mxu0
          %v4563 = vadd.f32 0.0, %v4562
          %v4564 = vpop.f32.mrf.mxu0
          %v4565 = vadd.f32 0.0, %v4564
          %4566 = vmatmul.bf16.gmra.mxu0 %v4526
          %v4567 = vpop.f32.mrf.mxu0
          %v4568 = vadd.f32 0.0, %v4567
          %v4569 = vpop.f32.mrf.mxu0
          %v4570 = vadd.f32 0.0, %v4569
          %4571 = vmatmul.bf16.gmra.mxu0 %v4527
          %v4572 = vpop.f32.mrf.mxu0
          %v4573 = vadd.f32 0.0, %v4572
          %v4574 = vpop.f32.mrf.mxu0
          %v4575 = vadd.f32 0.0, %v4574
          %4576 = vmatmul.bf16.gmra.mxu0 %v4528
          %v4577 = vpop.f32.mrf.mxu0
          %v4578 = vadd.f32 0.0, %v4577
          %v4579 = vpop.f32.mrf.mxu0
          %v4580 = vadd.f32 0.0, %v4579
          %4581 = vmatmul.bf16.gmra.mxu0 %v4529
          %v4582 = vpop.f32.mrf.mxu0
          %v4583 = vadd.f32 0.0, %v4582
          %v4584 = vpop.f32.mrf.mxu0
          %v4585 = vadd.f32 0.0, %v4584
          %4586 = vmatmul.bf16.gmra.mxu0 %v4530
          %v4587 = vpop.f32.mrf.mxu0
          %v4588 = vadd.f32 0.0, %v4587
          %v4589 = vpop.f32.mrf.mxu0
          %v4590 = vadd.f32 0.0, %v4589
          %4591 = vmatmul.bf16.gmra.mxu0 %v4531
          %v4592 = vpop.f32.mrf.mxu0
          %v4593 = vadd.f32 0.0, %v4592
          %v4594 = vpop.f32.mrf.mxu0
          %v4595 = vadd.f32 0.0, %v4594
          %4596 = vmatmul.bf16.gmra.mxu0 %v4532
          %v4597 = vpop.f32.mrf.mxu0
          %v4598 = vadd.f32 0.0, %v4597
          %v4599 = vpop.f32.mrf.mxu0
          %v4600 = vadd.f32 0.0, %v4599
          %4601 = vdwg.mxu0
          %v4618 = vunpack.c.l.b16 %v4352
          %v4619 = vunpack.c.l.b16 %v4353
          %v4620 = vunpack.c.l.b16 %v4354
          %v4621 = vunpack.c.l.b16 %v4355
          %v4622 = vunpack.c.l.b16 %v4356
          %v4623 = vunpack.c.l.b16 %v4357
          %v4624 = vunpack.c.l.b16 %v4358
          %v4625 = vunpack.c.l.b16 %v4359
          %v4626 = vunpack.c.l.b16 %v4360
          %v4627 = vunpack.c.l.b16 %v4361
          %v4628 = vunpack.c.l.b16 %v4362
          %v4629 = vunpack.c.l.b16 %v4363
          %v4630 = vunpack.c.l.b16 %v4364
          %v4631 = vunpack.c.l.b16 %v4365
          %v4632 = vunpack.c.l.b16 %v4366
          %v4633 = vunpack.c.l.b16 %v4367
          %v4634 = vpack.c.b16 %v4619, %v4618
          %v4635 = vpack.c.b16 %v4621, %v4620
          %v4636 = vpack.c.b16 %v4623, %v4622
          %v4637 = vpack.c.b16 %v4625, %v4624
          %v4638 = vpack.c.b16 %v4627, %v4626
          %v4639 = vpack.c.b16 %v4629, %v4628
          %v4640 = vpack.c.b16 %v4631, %v4630
          %v4641 = vpack.c.b16 %v4633, %v4632
          %v4654 = vunpack.c.l.b16 %v2971
          %v4655 = vunpack.c.l.b16 %v2972
          %v4656 = vunpack.c.l.b16 %v2973
          %v4657 = vunpack.c.l.b16 %v2974
          %v4658 = vpack.c.b16 %v4655, %v4654
          %v4659 = vpack.c.b16 %v4657, %v4656
          %4662 = vmatpush.bf16.xpose.msra.mxu0 0
          %4663 = vmatpush.bf16.xpose.msra.mxu0 0
          %4664 = vmatpush.bf16.xpose.msra.mxu0 0
          %4665 = vmatpush.bf16.xpose.msra.mxu0 0
          %4666 = vmatpush.bf16.xpose.msra.mxu0 0
          %4667 = vmatpush.bf16.xpose.msra.mxu0 0
          %4668 = vmatpush.bf16.xpose.msra.mxu0 %v4659
          %4669 = vmatpush.bf16.xpose.msra.mxu0 %v4658
          %4670 = vmatmul.bf16.gmra.mxu0 %v4634
          %v4671 = vpop.f32.mrf.mxu0
          %v4672 = vadd.f32 0.0, %v4671
          %v4673 = vpop.f32.mrf.mxu0
          %v4674 = vadd.f32 0.0, %v4673
          %4675 = vmatmul.bf16.gmra.mxu0 %v4635
          %v4676 = vpop.f32.mrf.mxu0
          %v4677 = vadd.f32 0.0, %v4676
          %v4678 = vpop.f32.mrf.mxu0
          %v4679 = vadd.f32 0.0, %v4678
          %4680 = vmatmul.bf16.gmra.mxu0 %v4636
          %v4681 = vpop.f32.mrf.mxu0
          %v4682 = vadd.f32 0.0, %v4681
          %v4683 = vpop.f32.mrf.mxu0
          %v4684 = vadd.f32 0.0, %v4683
          %4685 = vmatmul.bf16.gmra.mxu0 %v4637
          %v4686 = vpop.f32.mrf.mxu0
          %v4687 = vadd.f32 0.0, %v4686
          %v4688 = vpop.f32.mrf.mxu0
          %v4689 = vadd.f32 0.0, %v4688
          %4690 = vmatmul.bf16.gmra.mxu0 %v4638
          %v4691 = vpop.f32.mrf.mxu0
          %v4692 = vadd.f32 0.0, %v4691
          %v4693 = vpop.f32.mrf.mxu0
          %v4694 = vadd.f32 0.0, %v4693
          %4695 = vmatmul.bf16.gmra.mxu0 %v4639
          %v4696 = vpop.f32.mrf.mxu0
          %v4697 = vadd.f32 0.0, %v4696
          %v4698 = vpop.f32.mrf.mxu0
          %v4699 = vadd.f32 0.0, %v4698
          %4700 = vmatmul.bf16.gmra.mxu0 %v4640
          %v4701 = vpop.f32.mrf.mxu0
          %v4702 = vadd.f32 0.0, %v4701
          %v4703 = vpop.f32.mrf.mxu0
          %v4704 = vadd.f32 0.0, %v4703
          %4705 = vmatmul.bf16.gmra.mxu0 %v4641
          %v4706 = vpop.f32.mrf.mxu0
          %v4707 = vadd.f32 0.0, %v4706
          %v4708 = vpop.f32.mrf.mxu0
          %v4709 = vadd.f32 0.0, %v4708
          %4710 = vdwg.mxu0
          %v4727 = vunpack.c.l.b16 %v4368
          %v4728 = vunpack.c.l.b16 %v4369
          %v4729 = vunpack.c.l.b16 %v4370
          %v4730 = vunpack.c.l.b16 %v4371
          %v4731 = vunpack.c.l.b16 %v4372
          %v4732 = vunpack.c.l.b16 %v4373
          %v4733 = vunpack.c.l.b16 %v4374
          %v4734 = vunpack.c.l.b16 %v4375
          %v4735 = vunpack.c.l.b16 %v4376
          %v4736 = vunpack.c.l.b16 %v4377
          %v4737 = vunpack.c.l.b16 %v4378
          %v4738 = vunpack.c.l.b16 %v4379
          %v4739 = vunpack.c.l.b16 %v4380
          %v4740 = vunpack.c.l.b16 %v4381
          %v4741 = vunpack.c.l.b16 %v4382
          %v4742 = vunpack.c.l.b16 %v4383
          %v4743 = vpack.c.b16 %v4728, %v4727
          %v4744 = vpack.c.b16 %v4730, %v4729
          %v4745 = vpack.c.b16 %v4732, %v4731
          %v4746 = vpack.c.b16 %v4734, %v4733
          %v4747 = vpack.c.b16 %v4736, %v4735
          %v4748 = vpack.c.b16 %v4738, %v4737
          %v4749 = vpack.c.b16 %v4740, %v4739
          %v4750 = vpack.c.b16 %v4742, %v4741
          %v4763 = vunpack.c.l.b16 %v2975
          %v4764 = vunpack.c.l.b16 %v2976
          %v4765 = vunpack.c.l.b16 %v2977
          %v4766 = vunpack.c.l.b16 %v2978
          %v4767 = vpack.c.b16 %v4764, %v4763
          %v4768 = vpack.c.b16 %v4766, %v4765
          %4771 = vmatpush.bf16.xpose.msra.mxu0 0
          %4772 = vmatpush.bf16.xpose.msra.mxu0 0
          %4773 = vmatpush.bf16.xpose.msra.mxu0 0
          %4774 = vmatpush.bf16.xpose.msra.mxu0 0
          %4775 = vmatpush.bf16.xpose.msra.mxu0 0
          %4776 = vmatpush.bf16.xpose.msra.mxu0 0
          %4777 = vmatpush.bf16.xpose.msra.mxu0 %v4768
          %4778 = vmatpush.bf16.xpose.msra.mxu0 %v4767
          %4779 = vmatmul.bf16.gmra.mxu0 %v4743
          %v4780 = vpop.f32.mrf.mxu0
          %v4781 = vadd.f32 0.0, %v4780
          %v4782 = vpop.f32.mrf.mxu0
          %v4783 = vadd.f32 0.0, %v4782
          %4784 = vmatmul.bf16.gmra.mxu0 %v4744
          %v4785 = vpop.f32.mrf.mxu0
          %v4786 = vadd.f32 0.0, %v4785
          %v4787 = vpop.f32.mrf.mxu0
          %v4788 = vadd.f32 0.0, %v4787
          %4789 = vmatmul.bf16.gmra.mxu0 %v4745
          %v4790 = vpop.f32.mrf.mxu0
          %v4791 = vadd.f32 0.0, %v4790
          %v4792 = vpop.f32.mrf.mxu0
          %v4793 = vadd.f32 0.0, %v4792
          %4794 = vmatmul.bf16.gmra.mxu0 %v4746
          %v4795 = vpop.f32.mrf.mxu0
          %v4796 = vadd.f32 0.0, %v4795
          %v4797 = vpop.f32.mrf.mxu0
          %v4798 = vadd.f32 0.0, %v4797
          %4799 = vmatmul.bf16.gmra.mxu0 %v4747
          %v4800 = vpop.f32.mrf.mxu0
          %v4801 = vadd.f32 0.0, %v4800
          %v4802 = vpop.f32.mrf.mxu0
          %v4803 = vadd.f32 0.0, %v4802
          %4804 = vmatmul.bf16.gmra.mxu0 %v4748
          %v4805 = vpop.f32.mrf.mxu0
          %v4806 = vadd.f32 0.0, %v4805
          %v4807 = vpop.f32.mrf.mxu0
          %v4808 = vadd.f32 0.0, %v4807
          %4809 = vmatmul.bf16.gmra.mxu0 %v4749
          %v4810 = vpop.f32.mrf.mxu0
          %v4811 = vadd.f32 0.0, %v4810
          %v4812 = vpop.f32.mrf.mxu0
          %v4813 = vadd.f32 0.0, %v4812
          %4814 = vmatmul.bf16.gmra.mxu0 %v4750
          %v4815 = vpop.f32.mrf.mxu0
          %v4816 = vadd.f32 0.0, %v4815
          %v4817 = vpop.f32.mrf.mxu0
          %v4818 = vadd.f32 0.0, %v4817
          %4819 = vdwg.mxu0
          %v4820 = vmul.f32 %v3745, %v2878
          %v4821 = vmul.f32 %v3747, %v2879
          %v4822 = vmul.f32 %v3749, %v2880
          %v4823 = vmul.f32 %v3751, %v2881
          %v4824 = vmul.f32 %v3753, %v2882
          %v4825 = vmul.f32 %v3755, %v2883
          %v4826 = vmul.f32 %v3757, %v2884
          %v4827 = vmul.f32 %v3759, %v2885
          %v4828 = vmul.f32 %v3761, %v2886
          %v4829 = vmul.f32 %v3763, %v2887
          %v4830 = vmul.f32 %v3765, %v2888
          %v4831 = vmul.f32 %v3767, %v2889
          %v4832 = vmul.f32 %v3769, %v2890
          %v4833 = vmul.f32 %v3771, %v2891
          %v4834 = vmul.f32 %v3773, %v2892
          %v4835 = vmul.f32 %v3775, %v2893
          %v4836 = vmul.f32 %v3777, %v2894
          %v4837 = vmul.f32 %v3779, %v2895
          %v4838 = vmul.f32 %v3781, %v2896
          %v4839 = vmul.f32 %v3783, %v2897
          %v4840 = vmul.f32 %v3785, %v2898
          %v4841 = vmul.f32 %v3787, %v2899
          %v4842 = vmul.f32 %v3789, %v2900
          %v4843 = vmul.f32 %v3791, %v2901
          %v4844 = vmul.f32 %v3793, %v2902
          %v4845 = vmul.f32 %v3795, %v2903
          %v4846 = vmul.f32 %v3797, %v2904
          %v4847 = vmul.f32 %v3799, %v2905
          %v4848 = vmul.f32 %v3801, %v2906
          %v4849 = vmul.f32 %v3803, %v2907
          %v4850 = vmul.f32 %v3805, %v2908
          %v4851 = vmul.f32 %v3807, %v2909
          %v4852 = vmul.f32 %v3809, %v2910
          %v4853 = vmul.f32 %v3811, %v2911
          %v4854 = vmul.f32 %v3813, %v2912
          %v4855 = vmul.f32 %v3815, %v2913
          %v4856 = vmul.f32 %v3817, %v2914
          %v4857 = vmul.f32 %v3819, %v2915
          %v4858 = vmul.f32 %v3821, %v2916
          %v4859 = vmul.f32 %v3823, %v2917
          %v4860 = vmul.f32 %v3825, %v2918
          %v4861 = vmul.f32 %v3827, %v2919
          %v4862 = vmul.f32 %v3829, %v2920
          %v4863 = vmul.f32 %v3831, %v2921
          %v4864 = vmul.f32 %v3833, %v2922
          %v4865 = vmul.f32 %v3835, %v2923
          %v4866 = vmul.f32 %v3837, %v2924
          %v4867 = vmul.f32 %v3839, %v2925
          %v4868 = vmul.f32 %v3841, %v2926
          %v4869 = vmul.f32 %v3843, %v2927
          %v4870 = vmul.f32 %v3845, %v2928
          %v4871 = vmul.f32 %v3847, %v2929
          %v4872 = vmul.f32 %v3849, %v2930
          %v4873 = vmul.f32 %v3851, %v2931
          %v4874 = vmul.f32 %v3853, %v2932
          %v4875 = vmul.f32 %v3855, %v2933
          %v4876 = vmul.f32 %v3857, %v2934
          %v4877 = vmul.f32 %v3859, %v2935
          %v4878 = vmul.f32 %v3861, %v2936
          %v4879 = vmul.f32 %v3863, %v2937
          %v4880 = vmul.f32 %v3865, %v2938
          %v4881 = vmul.f32 %v3867, %v2939
          %v4882 = vmul.f32 %v3869, %v2940
          %v4883 = vmul.f32 %v3871, %v2941
          %v4884 = vadd.f32 %v4820, %v4454
          %v4885 = vadd.f32 %v4821, %v4456
          %v4886 = vadd.f32 %v4822, %v4459
          %v4887 = vadd.f32 %v4823, %v4461
          %v4888 = vadd.f32 %v4824, %v4464
          %v4889 = vadd.f32 %v4825, %v4466
          %v4890 = vadd.f32 %v4826, %v4469
          %v4891 = vadd.f32 %v4827, %v4471
          %v4892 = vadd.f32 %v4828, %v4474
          %v4893 = vadd.f32 %v4829, %v4476
          %v4894 = vadd.f32 %v4830, %v4479
          %v4895 = vadd.f32 %v4831, %v4481
          %v4896 = vadd.f32 %v4832, %v4484
          %v4897 = vadd.f32 %v4833, %v4486
          %v4898 = vadd.f32 %v4834, %v4489
          %v4899 = vadd.f32 %v4835, %v4491
          %v4900 = vadd.f32 %v4836, %v4563
          %v4901 = vadd.f32 %v4837, %v4565
          %v4902 = vadd.f32 %v4838, %v4568
          %v4903 = vadd.f32 %v4839, %v4570
          %v4904 = vadd.f32 %v4840, %v4573
          %v4905 = vadd.f32 %v4841, %v4575
          %v4906 = vadd.f32 %v4842, %v4578
          %v4907 = vadd.f32 %v4843, %v4580
          %v4908 = vadd.f32 %v4844, %v4583
          %v4909 = vadd.f32 %v4845, %v4585
          %v4910 = vadd.f32 %v4846, %v4588
          %v4911 = vadd.f32 %v4847, %v4590
          %v4912 = vadd.f32 %v4848, %v4593
          %v4913 = vadd.f32 %v4849, %v4595
          %v4914 = vadd.f32 %v4850, %v4598
          %v4915 = vadd.f32 %v4851, %v4600
          %v4916 = vadd.f32 %v4852, %v4672
          %v4917 = vadd.f32 %v4853, %v4674
          %v4918 = vadd.f32 %v4854, %v4677
          %v4919 = vadd.f32 %v4855, %v4679
          %v4920 = vadd.f32 %v4856, %v4682
          %v4921 = vadd.f32 %v4857, %v4684
          %v4922 = vadd.f32 %v4858, %v4687
          %v4923 = vadd.f32 %v4859, %v4689
          %v4924 = vadd.f32 %v4860, %v4692
          %v4925 = vadd.f32 %v4861, %v4694
          %v4926 = vadd.f32 %v4862, %v4697
          %v4927 = vadd.f32 %v4863, %v4699
          %v4928 = vadd.f32 %v4864, %v4702
          %v4929 = vadd.f32 %v4865, %v4704
          %v4930 = vadd.f32 %v4866, %v4707
          %v4931 = vadd.f32 %v4867, %v4709
          %v4932 = vadd.f32 %v4868, %v4781
          %v4933 = vadd.f32 %v4869, %v4783
          %v4934 = vadd.f32 %v4870, %v4786
          %v4935 = vadd.f32 %v4871, %v4788
          %v4936 = vadd.f32 %v4872, %v4791
          %v4937 = vadd.f32 %v4873, %v4793
          %v4938 = vadd.f32 %v4874, %v4796
          %v4939 = vadd.f32 %v4875, %v4798
          %v4940 = vadd.f32 %v4876, %v4801
          %v4941 = vadd.f32 %v4877, %v4803
          %v4942 = vadd.f32 %v4878, %v4806
          %v4943 = vadd.f32 %v4879, %v4808
          %v4944 = vadd.f32 %v4880, %v4811
          %v4945 = vadd.f32 %v4881, %v4813
          %v4946 = vadd.f32 %v4882, %v4816
          %v4947 = vadd.f32 %v4883, %v4818
        $region129: #{tpu_custom_call.1} parent=83 // loop_footer
          %s2747 = sadd.s32 %s2745, 1
        $region130: #{tpu_custom_call.1} parent=83 // loop_footer_branch
          %2744 = sbr.rel target = $region126
        $region131: #{tpu_custom_call.1} parent=83 // loop_exit
          _
        %v4948 = vrcp.pop %v2814
        %v4949 = vrcp.pop %v2815
        %v4950 = vrcp.pop %v2816
        %v4951 = vrcp.pop %v2817
        %v4952 = vrcp.pop %v2818
        %v4953 = vrcp.pop %v2819
        %v4954 = vrcp.pop %v2820
        %v4955 = vrcp.pop %v2821
        %v4956 = vrcp.pop %v2822
        %v4957 = vrcp.pop %v2823
        %v4958 = vrcp.pop %v2824
        %v4959 = vrcp.pop %v2825
        %v4960 = vrcp.pop %v2826
        %v4961 = vrcp.pop %v2827
        %v4962 = vrcp.pop %v2828
        %v4963 = vrcp.pop %v2829
        %v4964 = vrcp.pop %v2830
        %v4965 = vrcp.pop %v2831
        %v4966 = vrcp.pop %v2832
        %v4967 = vrcp.pop %v2833
        %v4968 = vrcp.pop %v2834
        %v4969 = vrcp.pop %v2835
        %v4970 = vrcp.pop %v2836
        %v4971 = vrcp.pop %v2837
        %v4972 = vrcp.pop %v2838
        %v4973 = vrcp.pop %v2839
        %v4974 = vrcp.pop %v2840
        %v4975 = vrcp.pop %v2841
        %v4976 = vrcp.pop %v2842
        %v4977 = vrcp.pop %v2843
        %v4978 = vrcp.pop %v2844
        %v4979 = vrcp.pop %v2845
        %v4980 = vrcp.pop %v2846
        %v4981 = vrcp.pop %v2847
        %v4982 = vrcp.pop %v2848
        %v4983 = vrcp.pop %v2849
        %v4984 = vrcp.pop %v2850
        %v4985 = vrcp.pop %v2851
        %v4986 = vrcp.pop %v2852
        %v4987 = vrcp.pop %v2853
        %v4988 = vrcp.pop %v2854
        %v4989 = vrcp.pop %v2855
        %v4990 = vrcp.pop %v2856
        %v4991 = vrcp.pop %v2857
        %v4992 = vrcp.pop %v2858
        %v4993 = vrcp.pop %v2859
        %v4994 = vrcp.pop %v2860
        %v4995 = vrcp.pop %v2861
        %v4996 = vrcp.pop %v2862
        %v4997 = vrcp.pop %v2863
        %v4998 = vrcp.pop %v2864
        %v4999 = vrcp.pop %v2865
        %v5000 = vrcp.pop %v2866
        %v5001 = vrcp.pop %v2867
        %v5002 = vrcp.pop %v2868
        %v5003 = vrcp.pop %v2869
        %v5004 = vrcp.pop %v2870
        %v5005 = vrcp.pop %v2871
        %v5006 = vrcp.pop %v2872
        %v5007 = vrcp.pop %v2873
        %v5008 = vrcp.pop %v2874
        %v5009 = vrcp.pop %v2875
        %v5010 = vrcp.pop %v2876
        %v5011 = vrcp.pop %v2877
        %v5012 = vmul.f32 %v2878, %v4948
        %v5013 = vmul.f32 %v2879, %v4949
        %v5014 = vmul.f32 %v2880, %v4950
        %v5015 = vmul.f32 %v2881, %v4951
        %v5016 = vmul.f32 %v2882, %v4952
        %v5017 = vmul.f32 %v2883, %v4953
        %v5018 = vmul.f32 %v2884, %v4954
        %v5019 = vmul.f32 %v2885, %v4955
        %v5020 = vmul.f32 %v2886, %v4956
        %v5021 = vmul.f32 %v2887, %v4957
        %v5022 = vmul.f32 %v2888, %v4958
        %v5023 = vmul.f32 %v2889, %v4959
        %v5024 = vmul.f32 %v2890, %v4960
        %v5025 = vmul.f32 %v2891, %v4961
        %v5026 = vmul.f32 %v2892, %v4962
        %v5027 = vmul.f32 %v2893, %v4963
        %v5028 = vmul.f32 %v2894, %v4964
        %v5029 = vmul.f32 %v2895, %v4965
        %v5030 = vmul.f32 %v2896, %v4966
        %v5031 = vmul.f32 %v2897, %v4967
        %v5032 = vmul.f32 %v2898, %v4968
        %v5033 = vmul.f32 %v2899, %v4969
        %v5034 = vmul.f32 %v2900, %v4970
        %v5035 = vmul.f32 %v2901, %v4971
        %v5036 = vmul.f32 %v2902, %v4972
        %v5037 = vmul.f32 %v2903, %v4973
        %v5038 = vmul.f32 %v2904, %v4974
        %v5039 = vmul.f32 %v2905, %v4975
        %v5040 = vmul.f32 %v2906, %v4976
        %v5041 = vmul.f32 %v2907, %v4977
        %v5042 = vmul.f32 %v2908, %v4978
        %v5043 = vmul.f32 %v2909, %v4979
        %v5044 = vmul.f32 %v2910, %v4980
        %v5045 = vmul.f32 %v2911, %v4981
        %v5046 = vmul.f32 %v2912, %v4982
        %v5047 = vmul.f32 %v2913, %v4983
        %v5048 = vmul.f32 %v2914, %v4984
        %v5049 = vmul.f32 %v2915, %v4985
        %v5050 = vmul.f32 %v2916, %v4986
        %v5051 = vmul.f32 %v2917, %v4987
        %v5052 = vmul.f32 %v2918, %v4988
        %v5053 = vmul.f32 %v2919, %v4989
        %v5054 = vmul.f32 %v2920, %v4990
        %v5055 = vmul.f32 %v2921, %v4991
        %v5056 = vmul.f32 %v2922, %v4992
        %v5057 = vmul.f32 %v2923, %v4993
        %v5058 = vmul.f32 %v2924, %v4994
        %v5059 = vmul.f32 %v2925, %v4995
        %v5060 = vmul.f32 %v2926, %v4996
        %v5061 = vmul.f32 %v2927, %v4997
        %v5062 = vmul.f32 %v2928, %v4998
        %v5063 = vmul.f32 %v2929, %v4999
        %v5064 = vmul.f32 %v2930, %v5000
        %v5065 = vmul.f32 %v2931, %v5001
        %v5066 = vmul.f32 %v2932, %v5002
        %v5067 = vmul.f32 %v2933, %v5003
        %v5068 = vmul.f32 %v2934, %v5004
        %v5069 = vmul.f32 %v2935, %v5005
        %v5070 = vmul.f32 %v2936, %v5006
        %v5071 = vmul.f32 %v2937, %v5007
        %v5072 = vmul.f32 %v2938, %v5008
        %v5073 = vmul.f32 %v2939, %v5009
        %v5074 = vmul.f32 %v2940, %v5010
        %v5075 = vmul.f32 %v2941, %v5011
        %5092 = vrot.lane.b32.xlu0 %v5028, 32
        %v5093 = vpop.permute.xlu0 %5092
        %5094 = vrot.lane.b32.xlu0 %v5029, 32
        %v5095 = vpop.permute.xlu0 %5094
        %5096 = vrot.lane.b32.xlu0 %v5030, 32
        %v5097 = vpop.permute.xlu0 %5096
        %5098 = vrot.lane.b32.xlu0 %v5031, 32
        %v5099 = vpop.permute.xlu0 %5098
        %5100 = vrot.lane.b32.xlu0 %v5032, 32
        %v5101 = vpop.permute.xlu0 %5100
        %5102 = vrot.lane.b32.xlu0 %v5033, 32
        %v5103 = vpop.permute.xlu0 %5102
        %5104 = vrot.lane.b32.xlu0 %v5034, 32
        %v5105 = vpop.permute.xlu0 %5104
        %5106 = vrot.lane.b32.xlu0 %v5035, 32
        %v5107 = vpop.permute.xlu0 %5106
        %5108 = vrot.lane.b32.xlu0 %v5036, 32
        %v5109 = vpop.permute.xlu0 %5108
        %5110 = vrot.lane.b32.xlu0 %v5037, 32
        %v5111 = vpop.permute.xlu0 %5110
        %5112 = vrot.lane.b32.xlu0 %v5038, 32
        %v5113 = vpop.permute.xlu0 %5112
        %5114 = vrot.lane.b32.xlu0 %v5039, 32
        %v5115 = vpop.permute.xlu0 %5114
        %5116 = vrot.lane.b32.xlu0 %v5040, 32
        %v5117 = vpop.permute.xlu0 %5116
        %5118 = vrot.lane.b32.xlu0 %v5041, 32
        %v5119 = vpop.permute.xlu0 %5118
        %5120 = vrot.lane.b32.xlu0 %v5042, 32
        %v5121 = vpop.permute.xlu0 %5120
        %5122 = vrot.lane.b32.xlu0 %v5043, 32
        %v5123 = vpop.permute.xlu0 %5122
        %5156 = vrot.lane.b32.xlu0 %v5044, 64
        %v5157 = vpop.permute.xlu0 %5156
        %5158 = vrot.lane.b32.xlu0 %v5045, 64
        %v5159 = vpop.permute.xlu0 %5158
        %5160 = vrot.lane.b32.xlu0 %v5046, 64
        %v5161 = vpop.permute.xlu0 %5160
        %5162 = vrot.lane.b32.xlu0 %v5047, 64
        %v5163 = vpop.permute.xlu0 %5162
        %5164 = vrot.lane.b32.xlu0 %v5048, 64
        %v5165 = vpop.permute.xlu0 %5164
        %5166 = vrot.lane.b32.xlu0 %v5049, 64
        %v5167 = vpop.permute.xlu0 %5166
        %5168 = vrot.lane.b32.xlu0 %v5050, 64
        %v5169 = vpop.permute.xlu0 %5168
        %5170 = vrot.lane.b32.xlu0 %v5051, 64
        %v5171 = vpop.permute.xlu0 %5170
        %5172 = vrot.lane.b32.xlu0 %v5052, 64
        %v5173 = vpop.permute.xlu0 %5172
        %5174 = vrot.lane.b32.xlu0 %v5053, 64
        %v5175 = vpop.permute.xlu0 %5174
        %5176 = vrot.lane.b32.xlu0 %v5054, 64
        %v5177 = vpop.permute.xlu0 %5176
        %5178 = vrot.lane.b32.xlu0 %v5055, 64
        %v5179 = vpop.permute.xlu0 %5178
        %5180 = vrot.lane.b32.xlu0 %v5056, 64
        %v5181 = vpop.permute.xlu0 %5180
        %5182 = vrot.lane.b32.xlu0 %v5057, 64
        %v5183 = vpop.permute.xlu0 %5182
        %5184 = vrot.lane.b32.xlu0 %v5058, 64
        %v5185 = vpop.permute.xlu0 %5184
        %5186 = vrot.lane.b32.xlu0 %v5059, 64
        %v5187 = vpop.permute.xlu0 %5186
        %5220 = vrot.lane.b32.xlu0 %v5060, 96
        %v5221 = vpop.permute.xlu0 %5220
        %5222 = vrot.lane.b32.xlu0 %v5061, 96
        %v5223 = vpop.permute.xlu0 %5222
        %5224 = vrot.lane.b32.xlu0 %v5062, 96
        %v5225 = vpop.permute.xlu0 %5224
        %5226 = vrot.lane.b32.xlu0 %v5063, 96
        %v5227 = vpop.permute.xlu0 %5226
        %5228 = vrot.lane.b32.xlu0 %v5064, 96
        %v5229 = vpop.permute.xlu0 %5228
        %5230 = vrot.lane.b32.xlu0 %v5065, 96
        %v5231 = vpop.permute.xlu0 %5230
        %5232 = vrot.lane.b32.xlu0 %v5066, 96
        %v5233 = vpop.permute.xlu0 %5232
        %5234 = vrot.lane.b32.xlu0 %v5067, 96
        %v5235 = vpop.permute.xlu0 %5234
        %5236 = vrot.lane.b32.xlu0 %v5068, 96
        %v5237 = vpop.permute.xlu0 %5236
        %5238 = vrot.lane.b32.xlu0 %v5069, 96
        %v5239 = vpop.permute.xlu0 %5238
        %5240 = vrot.lane.b32.xlu0 %v5070, 96
        %v5241 = vpop.permute.xlu0 %5240
        %5242 = vrot.lane.b32.xlu0 %v5071, 96
        %v5243 = vpop.permute.xlu0 %5242
        %5244 = vrot.lane.b32.xlu0 %v5072, 96
        %v5245 = vpop.permute.xlu0 %5244
        %5246 = vrot.lane.b32.xlu0 %v5073, 96
        %v5247 = vpop.permute.xlu0 %5246
        %5248 = vrot.lane.b32.xlu0 %v5074, 96
        %v5249 = vpop.permute.xlu0 %5248
        %5250 = vrot.lane.b32.xlu0 %v5075, 96
        %v5251 = vpop.permute.xlu0 %5250
        %vm5268 = vcmask 261120
        %v5269 = vsel %vm5268, %v5012, %v5093
        %v5270 = vsel %vm5268, %v5013, %v5095
        %v5271 = vsel %vm5268, %v5014, %v5097
        %v5272 = vsel %vm5268, %v5015, %v5099
        %v5273 = vsel %vm5268, %v5016, %v5101
        %v5274 = vsel %vm5268, %v5017, %v5103
        %v5275 = vsel %vm5268, %v5018, %v5105
        %v5276 = vsel %vm5268, %v5019, %v5107
        %v5277 = vsel %vm5268, %v5020, %v5109
        %v5278 = vsel %vm5268, %v5021, %v5111
        %v5279 = vsel %vm5268, %v5022, %v5113
        %v5280 = vsel %vm5268, %v5023, %v5115
        %v5281 = vsel %vm5268, %v5024, %v5117
        %v5282 = vsel %vm5268, %v5025, %v5119
        %v5283 = vsel %vm5268, %v5026, %v5121
        %v5284 = vsel %vm5268, %v5027, %v5123
        %vm5285 = vcmask 523264
        %v5286 = vsel %vm5285, %v5269, %v5157
        %v5287 = vsel %vm5285, %v5270, %v5159
        %v5288 = vsel %vm5285, %v5271, %v5161
        %v5289 = vsel %vm5285, %v5272, %v5163
        %v5290 = vsel %vm5285, %v5273, %v5165
        %v5291 = vsel %vm5285, %v5274, %v5167
        %v5292 = vsel %vm5285, %v5275, %v5169
        %v5293 = vsel %vm5285, %v5276, %v5171
        %v5294 = vsel %vm5285, %v5277, %v5173
        %v5295 = vsel %vm5285, %v5278, %v5175
        %v5296 = vsel %vm5285, %v5279, %v5177
        %v5297 = vsel %vm5285, %v5280, %v5179
        %v5298 = vsel %vm5285, %v5281, %v5181
        %v5299 = vsel %vm5285, %v5282, %v5183
        %v5300 = vsel %vm5285, %v5283, %v5185
        %v5301 = vsel %vm5285, %v5284, %v5187
        %vm5302 = vcmask 785408
        %v5303 = vsel %vm5302, %v5286, %v5221
        %v5304 = vsel %vm5302, %v5287, %v5223
        %v5305 = vsel %vm5302, %v5288, %v5225
        %v5306 = vsel %vm5302, %v5289, %v5227
        %v5307 = vsel %vm5302, %v5290, %v5229
        %v5308 = vsel %vm5302, %v5291, %v5231
        %v5309 = vsel %vm5302, %v5292, %v5233
        %v5310 = vsel %vm5302, %v5293, %v5235
        %v5311 = vsel %vm5302, %v5294, %v5237
        %v5312 = vsel %vm5302, %v5295, %v5239
        %v5313 = vsel %vm5302, %v5296, %v5241
        %v5314 = vsel %vm5302, %v5297, %v5243
        %v5315 = vsel %vm5302, %v5298, %v5245
        %v5316 = vsel %vm5302, %v5299, %v5247
        %v5317 = vsel %vm5302, %v5300, %v5249
        %v5318 = vsel %vm5302, %v5301, %v5251
        %v5319 = vpack.c.bf16 %v5304, %v5303
        %v5320 = vpack.c.bf16 %v5306, %v5305
        %v5321 = vpack.c.bf16 %v5308, %v5307
        %v5322 = vpack.c.bf16 %v5310, %v5309
        %v5323 = vpack.c.bf16 %v5312, %v5311
        %v5324 = vpack.c.bf16 %v5314, %v5313
        %v5325 = vpack.c.bf16 %v5316, %v5315
        %v5326 = vpack.c.bf16 %v5318, %v5317
        %v5327 = vld [vmem:[#allocation15] sm:$0xf]
        %v5328 = vld [vmem:[#allocation15 + $0x4] sm:$0xf]
        %v5329 = vld [vmem:[#allocation15 + $0x8] sm:$0xf]
        %v5330 = vld [vmem:[#allocation15 + $0xc] sm:$0xf]
        %v5331 = vld [vmem:[#allocation15 + $0x10] sm:$0xf]
        %v5332 = vld [vmem:[#allocation15 + $0x14] sm:$0xf]
        %v5333 = vld [vmem:[#allocation15 + $0x18] sm:$0xf]
        %v5334 = vld [vmem:[#allocation15 + $0x1c] sm:$0xf]
        %v5335 = vld [vmem:[#allocation15 + $0x20] sm:$0xf]
        %v5336 = vld [vmem:[#allocation15 + $0x24] sm:$0xf]
        %v5337 = vld [vmem:[#allocation15 + $0x28] sm:$0xf]
        %v5338 = vld [vmem:[#allocation15 + $0x2c] sm:$0xf]
        %v5339 = vld [vmem:[#allocation15 + $0x30] sm:$0xf]
        %v5340 = vld [vmem:[#allocation15 + $0x34] sm:$0xf]
        %v5341 = vld [vmem:[#allocation15 + $0x38] sm:$0xf]
        %v5342 = vld [vmem:[#allocation15 + $0x3c] sm:$0xf]
        %v5343 = vld [vmem:[%s9] sm:$0x1]
        %v5345 = vperm.slane %v5343, 0
        %v5363 = vunpack.c.l.b16 %v5327
        %v5364 = vunpack.c.l.b16 %v5328
        %v5365 = vunpack.c.l.b16 %v5329
        %v5366 = vunpack.c.l.b16 %v5330
        %v5367 = vunpack.c.l.b16 %v5331
        %v5368 = vunpack.c.l.b16 %v5332
        %v5369 = vunpack.c.l.b16 %v5333
        %v5370 = vunpack.c.l.b16 %v5334
        %v5371 = vunpack.c.l.b16 %v5335
        %v5372 = vunpack.c.l.b16 %v5336
        %v5373 = vunpack.c.l.b16 %v5337
        %v5374 = vunpack.c.l.b16 %v5338
        %v5375 = vunpack.c.l.b16 %v5339
        %v5376 = vunpack.c.l.b16 %v5340
        %v5377 = vunpack.c.l.b16 %v5341
        %v5378 = vunpack.c.l.b16 %v5342
        %v5379 = vpack.c.b16 %v5364, %v5363
        %v5380 = vpack.c.b16 %v5366, %v5365
        %v5381 = vpack.c.b16 %v5368, %v5367
        %v5382 = vpack.c.b16 %v5370, %v5369
        %v5383 = vpack.c.b16 %v5372, %v5371
        %v5384 = vpack.c.b16 %v5374, %v5373
        %v5385 = vpack.c.b16 %v5376, %v5375
        %v5386 = vpack.c.b16 %v5378, %v5377
        %5395 = vmatpush.bf16.msra.mxu0 %v5386
        %5396 = vmatpush.bf16.msra.mxu0 %v5385
        %5397 = vmatpush.bf16.msra.mxu0 %v5384
        %5398 = vmatpush.bf16.msra.mxu0 %v5383
        %5399 = vmatpush.bf16.msra.mxu0 %v5382
        %5400 = vmatpush.bf16.msra.mxu0 %v5381
        %5401 = vmatpush.bf16.msra.mxu0 %v5380
        %5402 = vmatpush.bf16.msra.mxu0 %v5379
        %5403 = vmatmul.bf16.gmra.mxu0 %v5319
        %v5404 = vpop.f32.mrf.mxu0
        %v5405 = vadd.f32 %v5345, %v5404
        %v5406 = vpop.f32.mrf.mxu0
        %v5407 = vadd.f32 %v5345, %v5406
        %5408 = vmatmul.bf16.gmra.mxu0 %v5320
        %v5409 = vpop.f32.mrf.mxu0
        %v5410 = vadd.f32 %v5345, %v5409
        %v5411 = vpop.f32.mrf.mxu0
        %v5412 = vadd.f32 %v5345, %v5411
        %5413 = vmatmul.bf16.gmra.mxu0 %v5321
        %v5414 = vpop.f32.mrf.mxu0
        %v5415 = vadd.f32 %v5345, %v5414
        %v5416 = vpop.f32.mrf.mxu0
        %v5417 = vadd.f32 %v5345, %v5416
        %5418 = vmatmul.bf16.gmra.mxu0 %v5322
        %v5419 = vpop.f32.mrf.mxu0
        %v5420 = vadd.f32 %v5345, %v5419
        %v5421 = vpop.f32.mrf.mxu0
        %v5422 = vadd.f32 %v5345, %v5421
        %5423 = vmatmul.bf16.gmra.mxu0 %v5323
        %v5424 = vpop.f32.mrf.mxu0
        %v5425 = vadd.f32 %v5345, %v5424
        %v5426 = vpop.f32.mrf.mxu0
        %v5427 = vadd.f32 %v5345, %v5426
        %5428 = vmatmul.bf16.gmra.mxu0 %v5324
        %v5429 = vpop.f32.mrf.mxu0
        %v5430 = vadd.f32 %v5345, %v5429
        %v5431 = vpop.f32.mrf.mxu0
        %v5432 = vadd.f32 %v5345, %v5431
        %5433 = vmatmul.bf16.gmra.mxu0 %v5325
        %v5434 = vpop.f32.mrf.mxu0
        %v5435 = vadd.f32 %v5345, %v5434
        %v5436 = vpop.f32.mrf.mxu0
        %v5437 = vadd.f32 %v5345, %v5436
        %5438 = vmatmul.bf16.gmra.mxu0 %v5326
        %v5439 = vpop.f32.mrf.mxu0
        %v5440 = vadd.f32 %v5345, %v5439
        %v5441 = vpop.f32.mrf.mxu0
        %v5442 = vadd.f32 %v5345, %v5441
        %5443 = vdwg.mxu0
        %v5444 = vadd.f32 %v2072, %v5405
        %v5445 = vadd.f32 %v2073, %v5407
        %v5446 = vadd.f32 %v2074, %v5410
        %v5447 = vadd.f32 %v2075, %v5412
        %v5448 = vadd.f32 %v2076, %v5415
        %v5449 = vadd.f32 %v2077, %v5417
        %v5450 = vadd.f32 %v2078, %v5420
        %v5451 = vadd.f32 %v2079, %v5422
        %v5452 = vadd.f32 %v2080, %v5425
        %v5453 = vadd.f32 %v2081, %v5427
        %v5454 = vadd.f32 %v2082, %v5430
        %v5455 = vadd.f32 %v2083, %v5432
        %v5456 = vadd.f32 %v2084, %v5435
        %v5457 = vadd.f32 %v2085, %v5437
        %v5458 = vadd.f32 %v2086, %v5440
        %v5459 = vadd.f32 %v2087, %v5442
        %v5460 = vld [vmem:[%s10] sm:$0x1]
        %v5461 = vld [vmem:[%s11] sm:$0x1]
        %5462 = vadd.xlane.f32.xlu0 %v5444
        %v5463 = vpop.xlane.xlu0 %5462
        %5464 = vadd.xlane.f32.xlu0 %v5445
        %v5465 = vpop.xlane.xlu0 %5464
        %5466 = vadd.xlane.f32.xlu0 %v5446
        %v5467 = vpop.xlane.xlu0 %5466
        %5468 = vadd.xlane.f32.xlu0 %v5447
        %v5469 = vpop.xlane.xlu0 %5468
        %5470 = vadd.xlane.f32.xlu0 %v5448
        %v5471 = vpop.xlane.xlu0 %5470
        %5472 = vadd.xlane.f32.xlu0 %v5449
        %v5473 = vpop.xlane.xlu0 %5472
        %5474 = vadd.xlane.f32.xlu0 %v5450
        %v5475 = vpop.xlane.xlu0 %5474
        %5476 = vadd.xlane.f32.xlu0 %v5451
        %v5477 = vpop.xlane.xlu0 %5476
        %5478 = vadd.xlane.f32.xlu0 %v5452
        %v5479 = vpop.xlane.xlu0 %5478
        %5480 = vadd.xlane.f32.xlu0 %v5453
        %v5481 = vpop.xlane.xlu0 %5480
        %5482 = vadd.xlane.f32.xlu0 %v5454
        %v5483 = vpop.xlane.xlu0 %5482
        %5484 = vadd.xlane.f32.xlu0 %v5455
        %v5485 = vpop.xlane.xlu0 %5484
        %5486 = vadd.xlane.f32.xlu0 %v5456
        %v5487 = vpop.xlane.xlu0 %5486
        %5488 = vadd.xlane.f32.xlu0 %v5457
        %v5489 = vpop.xlane.xlu0 %5488
        %5490 = vadd.xlane.f32.xlu0 %v5458
        %v5491 = vpop.xlane.xlu0 %5490
        %5492 = vadd.xlane.f32.xlu0 %v5459
        %v5493 = vpop.xlane.xlu0 %5492
        %v5494 = vmul.f32 %v5463, %v2128
        %v5495 = vmul.f32 %v5465, %v2128
        %v5496 = vmul.f32 %v5467, %v2128
        %v5497 = vmul.f32 %v5469, %v2128
        %v5498 = vmul.f32 %v5471, %v2128
        %v5499 = vmul.f32 %v5473, %v2128
        %v5500 = vmul.f32 %v5475, %v2128
        %v5501 = vmul.f32 %v5477, %v2128
        %v5502 = vmul.f32 %v5479, %v2128
        %v5503 = vmul.f32 %v5481, %v2128
        %v5504 = vmul.f32 %v5483, %v2128
        %v5505 = vmul.f32 %v5485, %v2128
        %v5506 = vmul.f32 %v5487, %v2128
        %v5507 = vmul.f32 %v5489, %v2128
        %v5508 = vmul.f32 %v5491, %v2128
        %v5509 = vmul.f32 %v5493, %v2128
        %v5510 = vsub.f32 %v5444, %v5494
        %v5511 = vsub.f32 %v5445, %v5495
        %v5512 = vsub.f32 %v5446, %v5496
        %v5513 = vsub.f32 %v5447, %v5497
        %v5514 = vsub.f32 %v5448, %v5498
        %v5515 = vsub.f32 %v5449, %v5499
        %v5516 = vsub.f32 %v5450, %v5500
        %v5517 = vsub.f32 %v5451, %v5501
        %v5518 = vsub.f32 %v5452, %v5502
        %v5519 = vsub.f32 %v5453, %v5503
        %v5520 = vsub.f32 %v5454, %v5504
        %v5521 = vsub.f32 %v5455, %v5505
        %v5522 = vsub.f32 %v5456, %v5506
        %v5523 = vsub.f32 %v5457, %v5507
        %v5524 = vsub.f32 %v5458, %v5508
        %v5525 = vsub.f32 %v5459, %v5509
        %v5526 = vmul.f32 %v5510, %v5510
        %v5527 = vmul.f32 %v5511, %v5511
        %v5528 = vmul.f32 %v5512, %v5512
        %v5529 = vmul.f32 %v5513, %v5513
        %v5530 = vmul.f32 %v5514, %v5514
        %v5531 = vmul.f32 %v5515, %v5515
        %v5532 = vmul.f32 %v5516, %v5516
        %v5533 = vmul.f32 %v5517, %v5517
        %v5534 = vmul.f32 %v5518, %v5518
        %v5535 = vmul.f32 %v5519, %v5519
        %v5536 = vmul.f32 %v5520, %v5520
        %v5537 = vmul.f32 %v5521, %v5521
        %v5538 = vmul.f32 %v5522, %v5522
        %v5539 = vmul.f32 %v5523, %v5523
        %v5540 = vmul.f32 %v5524, %v5524
        %v5541 = vmul.f32 %v5525, %v5525
        %5542 = vadd.xlane.f32.xlu0 %v5526
        %v5543 = vpop.xlane.xlu0 %5542
        %5544 = vadd.xlane.f32.xlu0 %v5527
        %v5545 = vpop.xlane.xlu0 %5544
        %5546 = vadd.xlane.f32.xlu0 %v5528
        %v5547 = vpop.xlane.xlu0 %5546
        %5548 = vadd.xlane.f32.xlu0 %v5529
        %v5549 = vpop.xlane.xlu0 %5548
        %5550 = vadd.xlane.f32.xlu0 %v5530
        %v5551 = vpop.xlane.xlu0 %5550
        %5552 = vadd.xlane.f32.xlu0 %v5531
        %v5553 = vpop.xlane.xlu0 %5552
        %5554 = vadd.xlane.f32.xlu0 %v5532
        %v5555 = vpop.xlane.xlu0 %5554
        %5556 = vadd.xlane.f32.xlu0 %v5533
        %v5557 = vpop.xlane.xlu0 %5556
        %5558 = vadd.xlane.f32.xlu0 %v5534
        %v5559 = vpop.xlane.xlu0 %5558
        %5560 = vadd.xlane.f32.xlu0 %v5535
        %v5561 = vpop.xlane.xlu0 %5560
        %5562 = vadd.xlane.f32.xlu0 %v5536
        %v5563 = vpop.xlane.xlu0 %5562
        %5564 = vadd.xlane.f32.xlu0 %v5537
        %v5565 = vpop.xlane.xlu0 %5564
        %5566 = vadd.xlane.f32.xlu0 %v5538
        %v5567 = vpop.xlane.xlu0 %5566
        %5568 = vadd.xlane.f32.xlu0 %v5539
        %v5569 = vpop.xlane.xlu0 %5568
        %5570 = vadd.xlane.f32.xlu0 %v5540
        %v5571 = vpop.xlane.xlu0 %5570
        %5572 = vadd.xlane.f32.xlu0 %v5541
        %v5573 = vpop.xlane.xlu0 %5572
        %v5574 = vmul.f32 %v5543, %v2128
        %v5575 = vmul.f32 %v5545, %v2128
        %v5576 = vmul.f32 %v5547, %v2128
        %v5577 = vmul.f32 %v5549, %v2128
        %v5578 = vmul.f32 %v5551, %v2128
        %v5579 = vmul.f32 %v5553, %v2128
        %v5580 = vmul.f32 %v5555, %v2128
        %v5581 = vmul.f32 %v5557, %v2128
        %v5582 = vmul.f32 %v5559, %v2128
        %v5583 = vmul.f32 %v5561, %v2128
        %v5584 = vmul.f32 %v5563, %v2128
        %v5585 = vmul.f32 %v5565, %v2128
        %v5586 = vmul.f32 %v5567, %v2128
        %v5587 = vmul.f32 %v5569, %v2128
        %v5588 = vmul.f32 %v5571, %v2128
        %v5589 = vmul.f32 %v5573, %v2128
        %v5590 = vadd.f32 %v5574, 1e-05
        %v5591 = vadd.f32 %v5575, 1e-05
        %v5592 = vadd.f32 %v5576, 1e-05
        %v5593 = vadd.f32 %v5577, 1e-05
        %v5594 = vadd.f32 %v5578, 1e-05
        %v5595 = vadd.f32 %v5579, 1e-05
        %v5596 = vadd.f32 %v5580, 1e-05
        %v5597 = vadd.f32 %v5581, 1e-05
        %v5598 = vadd.f32 %v5582, 1e-05
        %v5599 = vadd.f32 %v5583, 1e-05
        %v5600 = vadd.f32 %v5584, 1e-05
        %v5601 = vadd.f32 %v5585, 1e-05
        %v5602 = vadd.f32 %v5586, 1e-05
        %v5603 = vadd.f32 %v5587, 1e-05
        %v5604 = vadd.f32 %v5588, 1e-05
        %v5605 = vadd.f32 %v5589, 1e-05
        %v5606 = vrsqrt.pop %v5590
        %v5607 = vmul.f32 %v5606, %v5590
        %v5608 = vmul.f32 %v5607, %v5606
        %v5609 = vmul.f32 0.5, %v5608
        %v5610 = vsub.f32 1.5, %v5609
        %v5611 = vmul.f32 %v5606, %v5610
        %vm5612 = vweird.f32 %v5590
        %vm5613 = vweird.f32 %v5606
        %vm5614 = vmor %vm5612, %vm5613
        %v5615 = vsel %vm5614, %v5606, %v5611
        %v5616 = vrsqrt.pop %v5591
        %v5617 = vmul.f32 %v5616, %v5591
        %v5618 = vmul.f32 %v5617, %v5616
        %v5619 = vmul.f32 0.5, %v5618
        %v5620 = vsub.f32 1.5, %v5619
        %v5621 = vmul.f32 %v5616, %v5620
        %vm5622 = vweird.f32 %v5591
        %vm5623 = vweird.f32 %v5616
        %vm5624 = vmor %vm5622, %vm5623
        %v5625 = vsel %vm5624, %v5616, %v5621
        %v5626 = vrsqrt.pop %v5592
        %v5627 = vmul.f32 %v5626, %v5592
        %v5628 = vmul.f32 %v5627, %v5626
        %v5629 = vmul.f32 0.5, %v5628
        %v5630 = vsub.f32 1.5, %v5629
        %v5631 = vmul.f32 %v5626, %v5630
        %vm5632 = vweird.f32 %v5592
        %vm5633 = vweird.f32 %v5626
        %vm5634 = vmor %vm5632, %vm5633
        %v5635 = vsel %vm5634, %v5626, %v5631
        %v5636 = vrsqrt.pop %v5593
        %v5637 = vmul.f32 %v5636, %v5593
        %v5638 = vmul.f32 %v5637, %v5636
        %v5639 = vmul.f32 0.5, %v5638
        %v5640 = vsub.f32 1.5, %v5639
        %v5641 = vmul.f32 %v5636, %v5640
        %vm5642 = vweird.f32 %v5593
        %vm5643 = vweird.f32 %v5636
        %vm5644 = vmor %vm5642, %vm5643
        %v5645 = vsel %vm5644, %v5636, %v5641
        %v5646 = vrsqrt.pop %v5594
        %v5647 = vmul.f32 %v5646, %v5594
        %v5648 = vmul.f32 %v5647, %v5646
        %v5649 = vmul.f32 0.5, %v5648
        %v5650 = vsub.f32 1.5, %v5649
        %v5651 = vmul.f32 %v5646, %v5650
        %vm5652 = vweird.f32 %v5594
        %vm5653 = vweird.f32 %v5646
        %vm5654 = vmor %vm5652, %vm5653
        %v5655 = vsel %vm5654, %v5646, %v5651
        %v5656 = vrsqrt.pop %v5595
        %v5657 = vmul.f32 %v5656, %v5595
        %v5658 = vmul.f32 %v5657, %v5656
        %v5659 = vmul.f32 0.5, %v5658
        %v5660 = vsub.f32 1.5, %v5659
        %v5661 = vmul.f32 %v5656, %v5660
        %vm5662 = vweird.f32 %v5595
        %vm5663 = vweird.f32 %v5656
        %vm5664 = vmor %vm5662, %vm5663
        %v5665 = vsel %vm5664, %v5656, %v5661
        %v5666 = vrsqrt.pop %v5596
        %v5667 = vmul.f32 %v5666, %v5596
        %v5668 = vmul.f32 %v5667, %v5666
        %v5669 = vmul.f32 0.5, %v5668
        %v5670 = vsub.f32 1.5, %v5669
        %v5671 = vmul.f32 %v5666, %v5670
        %vm5672 = vweird.f32 %v5596
        %vm5673 = vweird.f32 %v5666
        %vm5674 = vmor %vm5672, %vm5673
        %v5675 = vsel %vm5674, %v5666, %v5671
        %v5676 = vrsqrt.pop %v5597
        %v5677 = vmul.f32 %v5676, %v5597
        %v5678 = vmul.f32 %v5677, %v5676
        %v5679 = vmul.f32 0.5, %v5678
        %v5680 = vsub.f32 1.5, %v5679
        %v5681 = vmul.f32 %v5676, %v5680
        %vm5682 = vweird.f32 %v5597
        %vm5683 = vweird.f32 %v5676
        %vm5684 = vmor %vm5682, %vm5683
        %v5685 = vsel %vm5684, %v5676, %v5681
        %v5686 = vrsqrt.pop %v5598
        %v5687 = vmul.f32 %v5686, %v5598
        %v5688 = vmul.f32 %v5687, %v5686
        %v5689 = vmul.f32 0.5, %v5688
        %v5690 = vsub.f32 1.5, %v5689
        %v5691 = vmul.f32 %v5686, %v5690
        %vm5692 = vweird.f32 %v5598
        %vm5693 = vweird.f32 %v5686
        %vm5694 = vmor %vm5692, %vm5693
        %v5695 = vsel %vm5694, %v5686, %v5691
        %v5696 = vrsqrt.pop %v5599
        %v5697 = vmul.f32 %v5696, %v5599
        %v5698 = vmul.f32 %v5697, %v5696
        %v5699 = vmul.f32 0.5, %v5698
        %v5700 = vsub.f32 1.5, %v5699
        %v5701 = vmul.f32 %v5696, %v5700
        %vm5702 = vweird.f32 %v5599
        %vm5703 = vweird.f32 %v5696
        %vm5704 = vmor %vm5702, %vm5703
        %v5705 = vsel %vm5704, %v5696, %v5701
        %v5706 = vrsqrt.pop %v5600
        %v5707 = vmul.f32 %v5706, %v5600
        %v5708 = vmul.f32 %v5707, %v5706
        %v5709 = vmul.f32 0.5, %v5708
        %v5710 = vsub.f32 1.5, %v5709
        %v5711 = vmul.f32 %v5706, %v5710
        %vm5712 = vweird.f32 %v5600
        %vm5713 = vweird.f32 %v5706
        %vm5714 = vmor %vm5712, %vm5713
        %v5715 = vsel %vm5714, %v5706, %v5711
        %v5716 = vrsqrt.pop %v5601
        %v5717 = vmul.f32 %v5716, %v5601
        %v5718 = vmul.f32 %v5717, %v5716
        %v5719 = vmul.f32 0.5, %v5718
        %v5720 = vsub.f32 1.5, %v5719
        %v5721 = vmul.f32 %v5716, %v5720
        %vm5722 = vweird.f32 %v5601
        %vm5723 = vweird.f32 %v5716
        %vm5724 = vmor %vm5722, %vm5723
        %v5725 = vsel %vm5724, %v5716, %v5721
        %v5726 = vrsqrt.pop %v5602
        %v5727 = vmul.f32 %v5726, %v5602
        %v5728 = vmul.f32 %v5727, %v5726
        %v5729 = vmul.f32 0.5, %v5728
        %v5730 = vsub.f32 1.5, %v5729
        %v5731 = vmul.f32 %v5726, %v5730
        %vm5732 = vweird.f32 %v5602
        %vm5733 = vweird.f32 %v5726
        %vm5734 = vmor %vm5732, %vm5733
        %v5735 = vsel %vm5734, %v5726, %v5731
        %v5736 = vrsqrt.pop %v5603
        %v5737 = vmul.f32 %v5736, %v5603
        %v5738 = vmul.f32 %v5737, %v5736
        %v5739 = vmul.f32 0.5, %v5738
        %v5740 = vsub.f32 1.5, %v5739
        %v5741 = vmul.f32 %v5736, %v5740
        %vm5742 = vweird.f32 %v5603
        %vm5743 = vweird.f32 %v5736
        %vm5744 = vmor %vm5742, %vm5743
        %v5745 = vsel %vm5744, %v5736, %v5741
        %v5746 = vrsqrt.pop %v5604
        %v5747 = vmul.f32 %v5746, %v5604
        %v5748 = vmul.f32 %v5747, %v5746
        %v5749 = vmul.f32 0.5, %v5748
        %v5750 = vsub.f32 1.5, %v5749
        %v5751 = vmul.f32 %v5746, %v5750
        %vm5752 = vweird.f32 %v5604
        %vm5753 = vweird.f32 %v5746
        %vm5754 = vmor %vm5752, %vm5753
        %v5755 = vsel %vm5754, %v5746, %v5751
        %v5756 = vrsqrt.pop %v5605
        %v5757 = vmul.f32 %v5756, %v5605
        %v5758 = vmul.f32 %v5757, %v5756
        %v5759 = vmul.f32 0.5, %v5758
        %v5760 = vsub.f32 1.5, %v5759
        %v5761 = vmul.f32 %v5756, %v5760
        %vm5762 = vweird.f32 %v5605
        %vm5763 = vweird.f32 %v5756
        %vm5764 = vmor %vm5762, %vm5763
        %v5765 = vsel %vm5764, %v5756, %v5761
        %v5766 = vmul.f32 %v5510, %v5615
        %v5767 = vmul.f32 %v5511, %v5625
        %v5768 = vmul.f32 %v5512, %v5635
        %v5769 = vmul.f32 %v5513, %v5645
        %v5770 = vmul.f32 %v5514, %v5655
        %v5771 = vmul.f32 %v5515, %v5665
        %v5772 = vmul.f32 %v5516, %v5675
        %v5773 = vmul.f32 %v5517, %v5685
        %v5774 = vmul.f32 %v5518, %v5695
        %v5775 = vmul.f32 %v5519, %v5705
        %v5776 = vmul.f32 %v5520, %v5715
        %v5777 = vmul.f32 %v5521, %v5725
        %v5778 = vmul.f32 %v5522, %v5735
        %v5779 = vmul.f32 %v5523, %v5745
        %v5780 = vmul.f32 %v5524, %v5755
        %v5781 = vmul.f32 %v5525, %v5765
        %v5783 = vperm.slane %v5460, 0
        %v5785 = vmul.f32 %v5766, %v5783
        %v5786 = vmul.f32 %v5767, %v5783
        %v5787 = vmul.f32 %v5768, %v5783
        %v5788 = vmul.f32 %v5769, %v5783
        %v5789 = vmul.f32 %v5770, %v5783
        %v5790 = vmul.f32 %v5771, %v5783
        %v5791 = vmul.f32 %v5772, %v5783
        %v5792 = vmul.f32 %v5773, %v5783
        %v5793 = vmul.f32 %v5774, %v5783
        %v5794 = vmul.f32 %v5775, %v5783
        %v5795 = vmul.f32 %v5776, %v5783
        %v5796 = vmul.f32 %v5777, %v5783
        %v5797 = vmul.f32 %v5778, %v5783
        %v5798 = vmul.f32 %v5779, %v5783
        %v5799 = vmul.f32 %v5780, %v5783
        %v5800 = vmul.f32 %v5781, %v5783
        %v5802 = vperm.slane %v5461, 0
        %v5804 = vadd.f32 %v5785, %v5802
        %v5805 = vadd.f32 %v5786, %v5802
        %v5806 = vadd.f32 %v5787, %v5802
        %v5807 = vadd.f32 %v5788, %v5802
        %v5808 = vadd.f32 %v5789, %v5802
        %v5809 = vadd.f32 %v5790, %v5802
        %v5810 = vadd.f32 %v5791, %v5802
        %v5811 = vadd.f32 %v5792, %v5802
        %v5812 = vadd.f32 %v5793, %v5802
        %v5813 = vadd.f32 %v5794, %v5802
        %v5814 = vadd.f32 %v5795, %v5802
        %v5815 = vadd.f32 %v5796, %v5802
        %v5816 = vadd.f32 %v5797, %v5802
        %v5817 = vadd.f32 %v5798, %v5802
        %v5818 = vadd.f32 %v5799, %v5802
        %v5819 = vadd.f32 %v5800, %v5802
        %v5820 = vpack.c.bf16 %v5805, %v5804
        %v5821 = vpack.c.bf16 %v5807, %v5806
        %v5822 = vpack.c.bf16 %v5809, %v5808
        %v5823 = vpack.c.bf16 %v5811, %v5810
        %v5824 = vpack.c.bf16 %v5813, %v5812
        %v5825 = vpack.c.bf16 %v5815, %v5814
        %v5826 = vpack.c.bf16 %v5817, %v5816
        %v5827 = vpack.c.bf16 %v5819, %v5818
        %v5828 = vld [vmem:[#allocation16] sm:$0xff]
        %v5829 = vld [vmem:[#allocation16 + $0x8] sm:$0xff]
        %v5830 = vld [vmem:[#allocation16 + $0x10] sm:$0xff]
        %v5831 = vld [vmem:[#allocation16 + $0x18] sm:$0xff]
        %v5832 = vld [vmem:[#allocation16 + $0x20] sm:$0xff]
        %v5833 = vld [vmem:[#allocation16 + $0x28] sm:$0xff]
        %v5834 = vld [vmem:[#allocation16 + $0x30] sm:$0xff]
        %v5835 = vld [vmem:[#allocation16 + $0x38] sm:$0xff]
        %v5836 = vld [vmem:[#allocation16 + $0x40] sm:$0xff]
        %v5837 = vld [vmem:[#allocation16 + $0x48] sm:$0xff]
        %v5838 = vld [vmem:[#allocation16 + $0x50] sm:$0xff]
        %v5839 = vld [vmem:[#allocation16 + $0x58] sm:$0xff]
        %v5840 = vld [vmem:[#allocation16 + $0x60] sm:$0xff]
        %v5841 = vld [vmem:[#allocation16 + $0x68] sm:$0xff]
        %v5842 = vld [vmem:[#allocation16 + $0x70] sm:$0xff]
        %v5843 = vld [vmem:[#allocation16 + $0x78] sm:$0xff]
        %v5844 = vld [vmem:[#allocation16 + $0x80] sm:$0xff]
        %v5845 = vld [vmem:[#allocation16 + $0x88] sm:$0xff]
        %v5846 = vld [vmem:[#allocation16 + $0x90] sm:$0xff]
        %v5847 = vld [vmem:[#allocation16 + $0x98] sm:$0xff]
        %v5848 = vld [vmem:[#allocation16 + $0xa0] sm:$0xff]
        %v5849 = vld [vmem:[#allocation16 + $0xa8] sm:$0xff]
        %v5850 = vld [vmem:[#allocation16 + $0xb0] sm:$0xff]
        %v5851 = vld [vmem:[#allocation16 + $0xb8] sm:$0xff]
        %v5852 = vld [vmem:[#allocation16 + $0xc0] sm:$0xff]
        %v5853 = vld [vmem:[#allocation16 + $0xc8] sm:$0xff]
        %v5854 = vld [vmem:[#allocation16 + $0xd0] sm:$0xff]
        %v5855 = vld [vmem:[#allocation16 + $0xd8] sm:$0xff]
        %v5856 = vld [vmem:[#allocation16 + $0xe0] sm:$0xff]
        %v5857 = vld [vmem:[#allocation16 + $0xe8] sm:$0xff]
        %v5858 = vld [vmem:[#allocation16 + $0xf0] sm:$0xff]
        %v5859 = vld [vmem:[#allocation16 + $0xf8] sm:$0xff]
        %v5860 = vld [vmem:[%s13] sm:$0xf]
        %v5862 = vperm.slane %v5860, 0
        %v5863 = vperm.slane %v5860, 1
        %v5864 = vperm.slane %v5860, 2
        %v5865 = vperm.slane %v5860, 3
        %v5902 = vunpack.c.l.b16 %v5828
        %v5903 = vunpack.c.h.b16 %v5828
        %v5904 = vunpack.c.l.b16 %v5829
        %v5905 = vunpack.c.h.b16 %v5829
        %v5906 = vunpack.c.l.b16 %v5830
        %v5907 = vunpack.c.h.b16 %v5830
        %v5908 = vunpack.c.l.b16 %v5831
        %v5909 = vunpack.c.h.b16 %v5831
        %v5910 = vunpack.c.l.b16 %v5832
        %v5911 = vunpack.c.h.b16 %v5832
        %v5912 = vunpack.c.l.b16 %v5833
        %v5913 = vunpack.c.h.b16 %v5833
        %v5914 = vunpack.c.l.b16 %v5834
        %v5915 = vunpack.c.h.b16 %v5834
        %v5916 = vunpack.c.l.b16 %v5835
        %v5917 = vunpack.c.h.b16 %v5835
        %v5918 = vunpack.c.l.b16 %v5836
        %v5919 = vunpack.c.h.b16 %v5836
        %v5920 = vunpack.c.l.b16 %v5837
        %v5921 = vunpack.c.h.b16 %v5837
        %v5922 = vunpack.c.l.b16 %v5838
        %v5923 = vunpack.c.h.b16 %v5838
        %v5924 = vunpack.c.l.b16 %v5839
        %v5925 = vunpack.c.h.b16 %v5839
        %v5926 = vunpack.c.l.b16 %v5840
        %v5927 = vunpack.c.h.b16 %v5840
        %v5928 = vunpack.c.l.b16 %v5841
        %v5929 = vunpack.c.h.b16 %v5841
        %v5930 = vunpack.c.l.b16 %v5842
        %v5931 = vunpack.c.h.b16 %v5842
        %v5932 = vunpack.c.l.b16 %v5843
        %v5933 = vunpack.c.h.b16 %v5843
        %v5934 = vunpack.c.l.b16 %v5844
        %v5935 = vunpack.c.h.b16 %v5844
        %v5936 = vunpack.c.l.b16 %v5845
        %v5937 = vunpack.c.h.b16 %v5845
        %v5938 = vunpack.c.l.b16 %v5846
        %v5939 = vunpack.c.h.b16 %v5846
        %v5940 = vunpack.c.l.b16 %v5847
        %v5941 = vunpack.c.h.b16 %v5847
        %v5942 = vunpack.c.l.b16 %v5848
        %v5943 = vunpack.c.h.b16 %v5848
        %v5944 = vunpack.c.l.b16 %v5849
        %v5945 = vunpack.c.h.b16 %v5849
        %v5946 = vunpack.c.l.b16 %v5850
        %v5947 = vunpack.c.h.b16 %v5850
        %v5948 = vunpack.c.l.b16 %v5851
        %v5949 = vunpack.c.h.b16 %v5851
        %v5950 = vunpack.c.l.b16 %v5852
        %v5951 = vunpack.c.h.b16 %v5852
        %v5952 = vunpack.c.l.b16 %v5853
        %v5953 = vunpack.c.h.b16 %v5853
        %v5954 = vunpack.c.l.b16 %v5854
        %v5955 = vunpack.c.h.b16 %v5854
        %v5956 = vunpack.c.l.b16 %v5855
        %v5957 = vunpack.c.h.b16 %v5855
        %v5958 = vunpack.c.l.b16 %v5856
        %v5959 = vunpack.c.h.b16 %v5856
        %v5960 = vunpack.c.l.b16 %v5857
        %v5961 = vunpack.c.h.b16 %v5857
        %v5962 = vunpack.c.l.b16 %v5858
        %v5963 = vunpack.c.h.b16 %v5858
        %v5964 = vunpack.c.l.b16 %v5859
        %v5965 = vunpack.c.h.b16 %v5859
        %v5966 = vpack.c.b16 %v5906, %v5902
        %v5967 = vpack.c.b16 %v5907, %v5903
        %v5968 = vpack.c.b16 %v5908, %v5904
        %v5969 = vpack.c.b16 %v5909, %v5905
        %v5970 = vpack.c.b16 %v5914, %v5910
        %v5971 = vpack.c.b16 %v5915, %v5911
        %v5972 = vpack.c.b16 %v5916, %v5912
        %v5973 = vpack.c.b16 %v5917, %v5913
        %v5974 = vpack.c.b16 %v5922, %v5918
        %v5975 = vpack.c.b16 %v5923, %v5919
        %v5976 = vpack.c.b16 %v5924, %v5920
        %v5977 = vpack.c.b16 %v5925, %v5921
        %v5978 = vpack.c.b16 %v5930, %v5926
        %v5979 = vpack.c.b16 %v5931, %v5927
        %v5980 = vpack.c.b16 %v5932, %v5928
        %v5981 = vpack.c.b16 %v5933, %v5929
        %v5982 = vpack.c.b16 %v5938, %v5934
        %v5983 = vpack.c.b16 %v5939, %v5935
        %v5984 = vpack.c.b16 %v5940, %v5936
        %v5985 = vpack.c.b16 %v5941, %v5937
        %v5986 = vpack.c.b16 %v5946, %v5942
        %v5987 = vpack.c.b16 %v5947, %v5943
        %v5988 = vpack.c.b16 %v5948, %v5944
        %v5989 = vpack.c.b16 %v5949, %v5945
        %v5990 = vpack.c.b16 %v5954, %v5950
        %v5991 = vpack.c.b16 %v5955, %v5951
        %v5992 = vpack.c.b16 %v5956, %v5952
        %v5993 = vpack.c.b16 %v5957, %v5953
        %v5994 = vpack.c.b16 %v5962, %v5958
        %v5995 = vpack.c.b16 %v5963, %v5959
        %v5996 = vpack.c.b16 %v5964, %v5960
        %v5997 = vpack.c.b16 %v5965, %v5961
        %6030 = vmatpush.bf16.msra.mxu0 %v5994
        %6031 = vmatpush.bf16.msra.mxu0 %v5990
        %6032 = vmatpush.bf16.msra.mxu0 %v5986
        %6033 = vmatpush.bf16.msra.mxu0 %v5982
        %6034 = vmatpush.bf16.msra.mxu0 %v5978
        %6035 = vmatpush.bf16.msra.mxu0 %v5974
        %6036 = vmatpush.bf16.msra.mxu0 %v5970
        %6037 = vmatpush.bf16.msra.mxu0 %v5966
        %6038 = vmatmul.bf16.gmra.mxu0 %v5820
        %v6039 = vpop.f32.mrf.mxu0
        %v6040 = vadd.f32 %v5862, %v6039
        %v6041 = vpop.f32.mrf.mxu0
        %v6042 = vadd.f32 %v5862, %v6041
        %6043 = vmatmul.bf16.gmra.mxu0 %v5821
        %v6044 = vpop.f32.mrf.mxu0
        %v6045 = vadd.f32 %v5862, %v6044
        %v6046 = vpop.f32.mrf.mxu0
        %v6047 = vadd.f32 %v5862, %v6046
        %6048 = vmatmul.bf16.gmra.mxu0 %v5822
        %v6049 = vpop.f32.mrf.mxu0
        %v6050 = vadd.f32 %v5862, %v6049
        %v6051 = vpop.f32.mrf.mxu0
        %v6052 = vadd.f32 %v5862, %v6051
        %6053 = vmatmul.bf16.gmra.mxu0 %v5823
        %v6054 = vpop.f32.mrf.mxu0
        %v6055 = vadd.f32 %v5862, %v6054
        %v6056 = vpop.f32.mrf.mxu0
        %v6057 = vadd.f32 %v5862, %v6056
        %6058 = vmatmul.bf16.gmra.mxu0 %v5824
        %v6059 = vpop.f32.mrf.mxu0
        %v6060 = vadd.f32 %v5862, %v6059
        %v6061 = vpop.f32.mrf.mxu0
        %v6062 = vadd.f32 %v5862, %v6061
        %6063 = vmatmul.bf16.gmra.mxu0 %v5825
        %v6064 = vpop.f32.mrf.mxu0
        %v6065 = vadd.f32 %v5862, %v6064
        %v6066 = vpop.f32.mrf.mxu0
        %v6067 = vadd.f32 %v5862, %v6066
        %6068 = vmatmul.bf16.gmra.mxu0 %v5826
        %v6069 = vpop.f32.mrf.mxu0
        %v6070 = vadd.f32 %v5862, %v6069
        %v6071 = vpop.f32.mrf.mxu0
        %v6072 = vadd.f32 %v5862, %v6071
        %6073 = vmatmul.bf16.gmra.mxu0 %v5827
        %v6074 = vpop.f32.mrf.mxu0
        %v6075 = vadd.f32 %v5862, %v6074
        %v6076 = vpop.f32.mrf.mxu0
        %v6077 = vadd.f32 %v5862, %v6076
        %6078 = vdwg.mxu0
        %6079 = vmatpush.bf16.msra.mxu0 %v5995
        %6080 = vmatpush.bf16.msra.mxu0 %v5991
        %6081 = vmatpush.bf16.msra.mxu0 %v5987
        %6082 = vmatpush.bf16.msra.mxu0 %v5983
        %6083 = vmatpush.bf16.msra.mxu0 %v5979
        %6084 = vmatpush.bf16.msra.mxu0 %v5975
        %6085 = vmatpush.bf16.msra.mxu0 %v5971
        %6086 = vmatpush.bf16.msra.mxu0 %v5967
        %6087 = vmatmul.bf16.gmra.mxu0 %v5820
        %v6088 = vpop.f32.mrf.mxu0
        %v6089 = vadd.f32 %v5863, %v6088
        %v6090 = vpop.f32.mrf.mxu0
        %v6091 = vadd.f32 %v5863, %v6090
        %6092 = vmatmul.bf16.gmra.mxu0 %v5821
        %v6093 = vpop.f32.mrf.mxu0
        %v6094 = vadd.f32 %v5863, %v6093
        %v6095 = vpop.f32.mrf.mxu0
        %v6096 = vadd.f32 %v5863, %v6095
        %6097 = vmatmul.bf16.gmra.mxu0 %v5822
        %v6098 = vpop.f32.mrf.mxu0
        %v6099 = vadd.f32 %v5863, %v6098
        %v6100 = vpop.f32.mrf.mxu0
        %v6101 = vadd.f32 %v5863, %v6100
        %6102 = vmatmul.bf16.gmra.mxu0 %v5823
        %v6103 = vpop.f32.mrf.mxu0
        %v6104 = vadd.f32 %v5863, %v6103
        %v6105 = vpop.f32.mrf.mxu0
        %v6106 = vadd.f32 %v5863, %v6105
        %6107 = vmatmul.bf16.gmra.mxu0 %v5824
        %v6108 = vpop.f32.mrf.mxu0
        %v6109 = vadd.f32 %v5863, %v6108
        %v6110 = vpop.f32.mrf.mxu0
        %v6111 = vadd.f32 %v5863, %v6110
        %6112 = vmatmul.bf16.gmra.mxu0 %v5825
        %v6113 = vpop.f32.mrf.mxu0
        %v6114 = vadd.f32 %v5863, %v6113
        %v6115 = vpop.f32.mrf.mxu0
        %v6116 = vadd.f32 %v5863, %v6115
        %6117 = vmatmul.bf16.gmra.mxu0 %v5826
        %v6118 = vpop.f32.mrf.mxu0
        %v6119 = vadd.f32 %v5863, %v6118
        %v6120 = vpop.f32.mrf.mxu0
        %v6121 = vadd.f32 %v5863, %v6120
        %6122 = vmatmul.bf16.gmra.mxu0 %v5827
        %v6123 = vpop.f32.mrf.mxu0
        %v6124 = vadd.f32 %v5863, %v6123
        %v6125 = vpop.f32.mrf.mxu0
        %v6126 = vadd.f32 %v5863, %v6125
        %6127 = vdwg.mxu0
        %6128 = vmatpush.bf16.msra.mxu0 %v5996
        %6129 = vmatpush.bf16.msra.mxu0 %v5992
        %6130 = vmatpush.bf16.msra.mxu0 %v5988
        %6131 = vmatpush.bf16.msra.mxu0 %v5984
        %6132 = vmatpush.bf16.msra.mxu0 %v5980
        %6133 = vmatpush.bf16.msra.mxu0 %v5976
        %6134 = vmatpush.bf16.msra.mxu0 %v5972
        %6135 = vmatpush.bf16.msra.mxu0 %v5968
        %6136 = vmatmul.bf16.gmra.mxu0 %v5820
        %v6137 = vpop.f32.mrf.mxu0
        %v6138 = vadd.f32 %v5864, %v6137
        %v6139 = vpop.f32.mrf.mxu0
        %v6140 = vadd.f32 %v5864, %v6139
        %6141 = vmatmul.bf16.gmra.mxu0 %v5821
        %v6142 = vpop.f32.mrf.mxu0
        %v6143 = vadd.f32 %v5864, %v6142
        %v6144 = vpop.f32.mrf.mxu0
        %v6145 = vadd.f32 %v5864, %v6144
        %6146 = vmatmul.bf16.gmra.mxu0 %v5822
        %v6147 = vpop.f32.mrf.mxu0
        %v6148 = vadd.f32 %v5864, %v6147
        %v6149 = vpop.f32.mrf.mxu0
        %v6150 = vadd.f32 %v5864, %v6149
        %6151 = vmatmul.bf16.gmra.mxu0 %v5823
        %v6152 = vpop.f32.mrf.mxu0
        %v6153 = vadd.f32 %v5864, %v6152
        %v6154 = vpop.f32.mrf.mxu0
        %v6155 = vadd.f32 %v5864, %v6154
        %6156 = vmatmul.bf16.gmra.mxu0 %v5824
        %v6157 = vpop.f32.mrf.mxu0
        %v6158 = vadd.f32 %v5864, %v6157
        %v6159 = vpop.f32.mrf.mxu0
        %v6160 = vadd.f32 %v5864, %v6159
        %6161 = vmatmul.bf16.gmra.mxu0 %v5825
        %v6162 = vpop.f32.mrf.mxu0
        %v6163 = vadd.f32 %v5864, %v6162
        %v6164 = vpop.f32.mrf.mxu0
        %v6165 = vadd.f32 %v5864, %v6164
        %6166 = vmatmul.bf16.gmra.mxu0 %v5826
        %v6167 = vpop.f32.mrf.mxu0
        %v6168 = vadd.f32 %v5864, %v6167
        %v6169 = vpop.f32.mrf.mxu0
        %v6170 = vadd.f32 %v5864, %v6169
        %6171 = vmatmul.bf16.gmra.mxu0 %v5827
        %v6172 = vpop.f32.mrf.mxu0
        %v6173 = vadd.f32 %v5864, %v6172
        %v6174 = vpop.f32.mrf.mxu0
        %v6175 = vadd.f32 %v5864, %v6174
        %6176 = vdwg.mxu0
        %6177 = vmatpush.bf16.msra.mxu0 %v5997
        %6178 = vmatpush.bf16.msra.mxu0 %v5993
        %6179 = vmatpush.bf16.msra.mxu0 %v5989
        %6180 = vmatpush.bf16.msra.mxu0 %v5985
        %6181 = vmatpush.bf16.msra.mxu0 %v5981
        %6182 = vmatpush.bf16.msra.mxu0 %v5977
        %6183 = vmatpush.bf16.msra.mxu0 %v5973
        %6184 = vmatpush.bf16.msra.mxu0 %v5969
        %6185 = vmatmul.bf16.gmra.mxu0 %v5820
        %v6186 = vpop.f32.mrf.mxu0
        %v6187 = vadd.f32 %v5865, %v6186
        %v6188 = vpop.f32.mrf.mxu0
        %v6189 = vadd.f32 %v5865, %v6188
        %6190 = vmatmul.bf16.gmra.mxu0 %v5821
        %v6191 = vpop.f32.mrf.mxu0
        %v6192 = vadd.f32 %v5865, %v6191
        %v6193 = vpop.f32.mrf.mxu0
        %v6194 = vadd.f32 %v5865, %v6193
        %6195 = vmatmul.bf16.gmra.mxu0 %v5822
        %v6196 = vpop.f32.mrf.mxu0
        %v6197 = vadd.f32 %v5865, %v6196
        %v6198 = vpop.f32.mrf.mxu0
        %v6199 = vadd.f32 %v5865, %v6198
        %6200 = vmatmul.bf16.gmra.mxu0 %v5823
        %v6201 = vpop.f32.mrf.mxu0
        %v6202 = vadd.f32 %v5865, %v6201
        %v6203 = vpop.f32.mrf.mxu0
        %v6204 = vadd.f32 %v5865, %v6203
        %6205 = vmatmul.bf16.gmra.mxu0 %v5824
        %v6206 = vpop.f32.mrf.mxu0
        %v6207 = vadd.f32 %v5865, %v6206
        %v6208 = vpop.f32.mrf.mxu0
        %v6209 = vadd.f32 %v5865, %v6208
        %6210 = vmatmul.bf16.gmra.mxu0 %v5825
        %v6211 = vpop.f32.mrf.mxu0
        %v6212 = vadd.f32 %v5865, %v6211
        %v6213 = vpop.f32.mrf.mxu0
        %v6214 = vadd.f32 %v5865, %v6213
        %6215 = vmatmul.bf16.gmra.mxu0 %v5826
        %v6216 = vpop.f32.mrf.mxu0
        %v6217 = vadd.f32 %v5865, %v6216
        %v6218 = vpop.f32.mrf.mxu0
        %v6219 = vadd.f32 %v5865, %v6218
        %6220 = vmatmul.bf16.gmra.mxu0 %v5827
        %v6221 = vpop.f32.mrf.mxu0
        %v6222 = vadd.f32 %v5865, %v6221
        %v6223 = vpop.f32.mrf.mxu0
        %v6224 = vadd.f32 %v5865, %v6223
        %6225 = vdwg.mxu0
        %v6226 = vmul.f32 %v6040, 0.5
        %v6227 = vmul.f32 %v6089, 0.5
        %v6228 = vmul.f32 %v6138, 0.5
        %v6229 = vmul.f32 %v6187, 0.5
        %v6230 = vmul.f32 %v6042, 0.5
        %v6231 = vmul.f32 %v6091, 0.5
        %v6232 = vmul.f32 %v6140, 0.5
        %v6233 = vmul.f32 %v6189, 0.5
        %v6234 = vmul.f32 %v6045, 0.5
        %v6235 = vmul.f32 %v6094, 0.5
        %v6236 = vmul.f32 %v6143, 0.5
        %v6237 = vmul.f32 %v6192, 0.5
        %v6238 = vmul.f32 %v6047, 0.5
        %v6239 = vmul.f32 %v6096, 0.5
        %v6240 = vmul.f32 %v6145, 0.5
        %v6241 = vmul.f32 %v6194, 0.5
        %v6242 = vmul.f32 %v6050, 0.5
        %v6243 = vmul.f32 %v6099, 0.5
        %v6244 = vmul.f32 %v6148, 0.5
        %v6245 = vmul.f32 %v6197, 0.5
        %v6246 = vmul.f32 %v6052, 0.5
        %v6247 = vmul.f32 %v6101, 0.5
        %v6248 = vmul.f32 %v6150, 0.5
        %v6249 = vmul.f32 %v6199, 0.5
        %v6250 = vmul.f32 %v6055, 0.5
        %v6251 = vmul.f32 %v6104, 0.5
        %v6252 = vmul.f32 %v6153, 0.5
        %v6253 = vmul.f32 %v6202, 0.5
        %v6254 = vmul.f32 %v6057, 0.5
        %v6255 = vmul.f32 %v6106, 0.5
        %v6256 = vmul.f32 %v6155, 0.5
        %v6257 = vmul.f32 %v6204, 0.5
        %v6258 = vmul.f32 %v6060, 0.5
        %v6259 = vmul.f32 %v6109, 0.5
        %v6260 = vmul.f32 %v6158, 0.5
        %v6261 = vmul.f32 %v6207, 0.5
        %v6262 = vmul.f32 %v6062, 0.5
        %v6263 = vmul.f32 %v6111, 0.5
        %v6264 = vmul.f32 %v6160, 0.5
        %v6265 = vmul.f32 %v6209, 0.5
        %v6266 = vmul.f32 %v6065, 0.5
        %v6267 = vmul.f32 %v6114, 0.5
        %v6268 = vmul.f32 %v6163, 0.5
        %v6269 = vmul.f32 %v6212, 0.5
        %v6270 = vmul.f32 %v6067, 0.5
        %v6271 = vmul.f32 %v6116, 0.5
        %v6272 = vmul.f32 %v6165, 0.5
        %v6273 = vmul.f32 %v6214, 0.5
        %v6274 = vmul.f32 %v6070, 0.5
        %v6275 = vmul.f32 %v6119, 0.5
        %v6276 = vmul.f32 %v6168, 0.5
        %v6277 = vmul.f32 %v6217, 0.5
        %v6278 = vmul.f32 %v6072, 0.5
        %v6279 = vmul.f32 %v6121, 0.5
        %v6280 = vmul.f32 %v6170, 0.5
        %v6281 = vmul.f32 %v6219, 0.5
        %v6282 = vmul.f32 %v6075, 0.5
        %v6283 = vmul.f32 %v6124, 0.5
        %v6284 = vmul.f32 %v6173, 0.5
        %v6285 = vmul.f32 %v6222, 0.5
        %v6286 = vmul.f32 %v6077, 0.5
        %v6287 = vmul.f32 %v6126, 0.5
        %v6288 = vmul.f32 %v6175, 0.5
        %v6289 = vmul.f32 %v6224, 0.5
        %v6290 = vmul.f32 %v6040, 0.044715
        %v6291 = vmul.f32 %v6089, 0.044715
        %v6292 = vmul.f32 %v6138, 0.044715
        %v6293 = vmul.f32 %v6187, 0.044715
        %v6294 = vmul.f32 %v6042, 0.044715
        %v6295 = vmul.f32 %v6091, 0.044715
        %v6296 = vmul.f32 %v6140, 0.044715
        %v6297 = vmul.f32 %v6189, 0.044715
        %v6298 = vmul.f32 %v6045, 0.044715
        %v6299 = vmul.f32 %v6094, 0.044715
        %v6300 = vmul.f32 %v6143, 0.044715
        %v6301 = vmul.f32 %v6192, 0.044715
        %v6302 = vmul.f32 %v6047, 0.044715
        %v6303 = vmul.f32 %v6096, 0.044715
        %v6304 = vmul.f32 %v6145, 0.044715
        %v6305 = vmul.f32 %v6194, 0.044715
        %v6306 = vmul.f32 %v6050, 0.044715
        %v6307 = vmul.f32 %v6099, 0.044715
        %v6308 = vmul.f32 %v6148, 0.044715
        %v6309 = vmul.f32 %v6197, 0.044715
        %v6310 = vmul.f32 %v6052, 0.044715
        %v6311 = vmul.f32 %v6101, 0.044715
        %v6312 = vmul.f32 %v6150, 0.044715
        %v6313 = vmul.f32 %v6199, 0.044715
        %v6314 = vmul.f32 %v6055, 0.044715
        %v6315 = vmul.f32 %v6104, 0.044715
        %v6316 = vmul.f32 %v6153, 0.044715
        %v6317 = vmul.f32 %v6202, 0.044715
        %v6318 = vmul.f32 %v6057, 0.044715
        %v6319 = vmul.f32 %v6106, 0.044715
        %v6320 = vmul.f32 %v6155, 0.044715
        %v6321 = vmul.f32 %v6204, 0.044715
        %v6322 = vmul.f32 %v6060, 0.044715
        %v6323 = vmul.f32 %v6109, 0.044715
        %v6324 = vmul.f32 %v6158, 0.044715
        %v6325 = vmul.f32 %v6207, 0.044715
        %v6326 = vmul.f32 %v6062, 0.044715
        %v6327 = vmul.f32 %v6111, 0.044715
        %v6328 = vmul.f32 %v6160, 0.044715
        %v6329 = vmul.f32 %v6209, 0.044715
        %v6330 = vmul.f32 %v6065, 0.044715
        %v6331 = vmul.f32 %v6114, 0.044715
        %v6332 = vmul.f32 %v6163, 0.044715
        %v6333 = vmul.f32 %v6212, 0.044715
        %v6334 = vmul.f32 %v6067, 0.044715
        %v6335 = vmul.f32 %v6116, 0.044715
        %v6336 = vmul.f32 %v6165, 0.044715
        %v6337 = vmul.f32 %v6214, 0.044715
        %v6338 = vmul.f32 %v6070, 0.044715
        %v6339 = vmul.f32 %v6119, 0.044715
        %v6340 = vmul.f32 %v6168, 0.044715
        %v6341 = vmul.f32 %v6217, 0.044715
        %v6342 = vmul.f32 %v6072, 0.044715
        %v6343 = vmul.f32 %v6121, 0.044715
        %v6344 = vmul.f32 %v6170, 0.044715
        %v6345 = vmul.f32 %v6219, 0.044715
        %v6346 = vmul.f32 %v6075, 0.044715
        %v6347 = vmul.f32 %v6124, 0.044715
        %v6348 = vmul.f32 %v6173, 0.044715
        %v6349 = vmul.f32 %v6222, 0.044715
        %v6350 = vmul.f32 %v6077, 0.044715
        %v6351 = vmul.f32 %v6126, 0.044715
        %v6352 = vmul.f32 %v6175, 0.044715
        %v6353 = vmul.f32 %v6224, 0.044715
        %v6354 = vmul.f32 %v6290, %v6040
        %v6355 = vmul.f32 %v6291, %v6089
        %v6356 = vmul.f32 %v6292, %v6138
        %v6357 = vmul.f32 %v6293, %v6187
        %v6358 = vmul.f32 %v6294, %v6042
        %v6359 = vmul.f32 %v6295, %v6091
        %v6360 = vmul.f32 %v6296, %v6140
        %v6361 = vmul.f32 %v6297, %v6189
        %v6362 = vmul.f32 %v6298, %v6045
        %v6363 = vmul.f32 %v6299, %v6094
        %v6364 = vmul.f32 %v6300, %v6143
        %v6365 = vmul.f32 %v6301, %v6192
        %v6366 = vmul.f32 %v6302, %v6047
        %v6367 = vmul.f32 %v6303, %v6096
        %v6368 = vmul.f32 %v6304, %v6145
        %v6369 = vmul.f32 %v6305, %v6194
        %v6370 = vmul.f32 %v6306, %v6050
        %v6371 = vmul.f32 %v6307, %v6099
        %v6372 = vmul.f32 %v6308, %v6148
        %v6373 = vmul.f32 %v6309, %v6197
        %v6374 = vmul.f32 %v6310, %v6052
        %v6375 = vmul.f32 %v6311, %v6101
        %v6376 = vmul.f32 %v6312, %v6150
        %v6377 = vmul.f32 %v6313, %v6199
        %v6378 = vmul.f32 %v6314, %v6055
        %v6379 = vmul.f32 %v6315, %v6104
        %v6380 = vmul.f32 %v6316, %v6153
        %v6381 = vmul.f32 %v6317, %v6202
        %v6382 = vmul.f32 %v6318, %v6057
        %v6383 = vmul.f32 %v6319, %v6106
        %v6384 = vmul.f32 %v6320, %v6155
        %v6385 = vmul.f32 %v6321, %v6204
        %v6386 = vmul.f32 %v6322, %v6060
        %v6387 = vmul.f32 %v6323, %v6109
        %v6388 = vmul.f32 %v6324, %v6158
        %v6389 = vmul.f32 %v6325, %v6207
        %v6390 = vmul.f32 %v6326, %v6062
        %v6391 = vmul.f32 %v6327, %v6111
        %v6392 = vmul.f32 %v6328, %v6160
        %v6393 = vmul.f32 %v6329, %v6209
        %v6394 = vmul.f32 %v6330, %v6065
        %v6395 = vmul.f32 %v6331, %v6114
        %v6396 = vmul.f32 %v6332, %v6163
        %v6397 = vmul.f32 %v6333, %v6212
        %v6398 = vmul.f32 %v6334, %v6067
        %v6399 = vmul.f32 %v6335, %v6116
        %v6400 = vmul.f32 %v6336, %v6165
        %v6401 = vmul.f32 %v6337, %v6214
        %v6402 = vmul.f32 %v6338, %v6070
        %v6403 = vmul.f32 %v6339, %v6119
        %v6404 = vmul.f32 %v6340, %v6168
        %v6405 = vmul.f32 %v6341, %v6217
        %v6406 = vmul.f32 %v6342, %v6072
        %v6407 = vmul.f32 %v6343, %v6121
        %v6408 = vmul.f32 %v6344, %v6170
        %v6409 = vmul.f32 %v6345, %v6219
        %v6410 = vmul.f32 %v6346, %v6075
        %v6411 = vmul.f32 %v6347, %v6124
        %v6412 = vmul.f32 %v6348, %v6173
        %v6413 = vmul.f32 %v6349, %v6222
        %v6414 = vmul.f32 %v6350, %v6077
        %v6415 = vmul.f32 %v6351, %v6126
        %v6416 = vmul.f32 %v6352, %v6175
        %v6417 = vmul.f32 %v6353, %v6224
        %v6418 = vmul.f32 %v6354, %v6040
        %v6419 = vmul.f32 %v6355, %v6089
        %v6420 = vmul.f32 %v6356, %v6138
        %v6421 = vmul.f32 %v6357, %v6187
        %v6422 = vmul.f32 %v6358, %v6042
        %v6423 = vmul.f32 %v6359, %v6091
        %v6424 = vmul.f32 %v6360, %v6140
        %v6425 = vmul.f32 %v6361, %v6189
        %v6426 = vmul.f32 %v6362, %v6045
        %v6427 = vmul.f32 %v6363, %v6094
        %v6428 = vmul.f32 %v6364, %v6143
        %v6429 = vmul.f32 %v6365, %v6192
        %v6430 = vmul.f32 %v6366, %v6047
        %v6431 = vmul.f32 %v6367, %v6096
        %v6432 = vmul.f32 %v6368, %v6145
        %v6433 = vmul.f32 %v6369, %v6194
        %v6434 = vmul.f32 %v6370, %v6050
        %v6435 = vmul.f32 %v6371, %v6099
        %v6436 = vmul.f32 %v6372, %v6148
        %v6437 = vmul.f32 %v6373, %v6197
        %v6438 = vmul.f32 %v6374, %v6052
        %v6439 = vmul.f32 %v6375, %v6101
        %v6440 = vmul.f32 %v6376, %v6150
        %v6441 = vmul.f32 %v6377, %v6199
        %v6442 = vmul.f32 %v6378, %v6055
        %v6443 = vmul.f32 %v6379, %v6104
        %v6444 = vmul.f32 %v6380, %v6153
        %v6445 = vmul.f32 %v6381, %v6202
        %v6446 = vmul.f32 %v6382, %v6057
        %v6447 = vmul.f32 %v6383, %v6106
        %v6448 = vmul.f32 %v6384, %v6155
        %v6449 = vmul.f32 %v6385, %v6204
        %v6450 = vmul.f32 %v6386, %v6060
        %v6451 = vmul.f32 %v6387, %v6109
        %v6452 = vmul.f32 %v6388, %v6158
        %v6453 = vmul.f32 %v6389, %v6207
        %v6454 = vmul.f32 %v6390, %v6062
        %v6455 = vmul.f32 %v6391, %v6111
        %v6456 = vmul.f32 %v6392, %v6160
        %v6457 = vmul.f32 %v6393, %v6209
        %v6458 = vmul.f32 %v6394, %v6065
        %v6459 = vmul.f32 %v6395, %v6114
        %v6460 = vmul.f32 %v6396, %v6163
        %v6461 = vmul.f32 %v6397, %v6212
        %v6462 = vmul.f32 %v6398, %v6067
        %v6463 = vmul.f32 %v6399, %v6116
        %v6464 = vmul.f32 %v6400, %v6165
        %v6465 = vmul.f32 %v6401, %v6214
        %v6466 = vmul.f32 %v6402, %v6070
        %v6467 = vmul.f32 %v6403, %v6119
        %v6468 = vmul.f32 %v6404, %v6168
        %v6469 = vmul.f32 %v6405, %v6217
        %v6470 = vmul.f32 %v6406, %v6072
        %v6471 = vmul.f32 %v6407, %v6121
        %v6472 = vmul.f32 %v6408, %v6170
        %v6473 = vmul.f32 %v6409, %v6219
        %v6474 = vmul.f32 %v6410, %v6075
        %v6475 = vmul.f32 %v6411, %v6124
        %v6476 = vmul.f32 %v6412, %v6173
        %v6477 = vmul.f32 %v6413, %v6222
        %v6478 = vmul.f32 %v6414, %v6077
        %v6479 = vmul.f32 %v6415, %v6126
        %v6480 = vmul.f32 %v6416, %v6175
        %v6481 = vmul.f32 %v6417, %v6224
        %v6482 = vadd.f32 %v6040, %v6418
        %v6483 = vadd.f32 %v6089, %v6419
        %v6484 = vadd.f32 %v6138, %v6420
        %v6485 = vadd.f32 %v6187, %v6421
        %v6486 = vadd.f32 %v6042, %v6422
        %v6487 = vadd.f32 %v6091, %v6423
        %v6488 = vadd.f32 %v6140, %v6424
        %v6489 = vadd.f32 %v6189, %v6425
        %v6490 = vadd.f32 %v6045, %v6426
        %v6491 = vadd.f32 %v6094, %v6427
        %v6492 = vadd.f32 %v6143, %v6428
        %v6493 = vadd.f32 %v6192, %v6429
        %v6494 = vadd.f32 %v6047, %v6430
        %v6495 = vadd.f32 %v6096, %v6431
        %v6496 = vadd.f32 %v6145, %v6432
        %v6497 = vadd.f32 %v6194, %v6433
        %v6498 = vadd.f32 %v6050, %v6434
        %v6499 = vadd.f32 %v6099, %v6435
        %v6500 = vadd.f32 %v6148, %v6436
        %v6501 = vadd.f32 %v6197, %v6437
        %v6502 = vadd.f32 %v6052, %v6438
        %v6503 = vadd.f32 %v6101, %v6439
        %v6504 = vadd.f32 %v6150, %v6440
        %v6505 = vadd.f32 %v6199, %v6441
        %v6506 = vadd.f32 %v6055, %v6442
        %v6507 = vadd.f32 %v6104, %v6443
        %v6508 = vadd.f32 %v6153, %v6444
        %v6509 = vadd.f32 %v6202, %v6445
        %v6510 = vadd.f32 %v6057, %v6446
        %v6511 = vadd.f32 %v6106, %v6447
        %v6512 = vadd.f32 %v6155, %v6448
        %v6513 = vadd.f32 %v6204, %v6449
        %v6514 = vadd.f32 %v6060, %v6450
        %v6515 = vadd.f32 %v6109, %v6451
        %v6516 = vadd.f32 %v6158, %v6452
        %v6517 = vadd.f32 %v6207, %v6453
        %v6518 = vadd.f32 %v6062, %v6454
        %v6519 = vadd.f32 %v6111, %v6455
        %v6520 = vadd.f32 %v6160, %v6456
        %v6521 = vadd.f32 %v6209, %v6457
        %v6522 = vadd.f32 %v6065, %v6458
        %v6523 = vadd.f32 %v6114, %v6459
        %v6524 = vadd.f32 %v6163, %v6460
        %v6525 = vadd.f32 %v6212, %v6461
        %v6526 = vadd.f32 %v6067, %v6462
        %v6527 = vadd.f32 %v6116, %v6463
        %v6528 = vadd.f32 %v6165, %v6464
        %v6529 = vadd.f32 %v6214, %v6465
        %v6530 = vadd.f32 %v6070, %v6466
        %v6531 = vadd.f32 %v6119, %v6467
        %v6532 = vadd.f32 %v6168, %v6468
        %v6533 = vadd.f32 %v6217, %v6469
        %v6534 = vadd.f32 %v6072, %v6470
        %v6535 = vadd.f32 %v6121, %v6471
        %v6536 = vadd.f32 %v6170, %v6472
        %v6537 = vadd.f32 %v6219, %v6473
        %v6538 = vadd.f32 %v6075, %v6474
        %v6539 = vadd.f32 %v6124, %v6475
        %v6540 = vadd.f32 %v6173, %v6476
        %v6541 = vadd.f32 %v6222, %v6477
        %v6542 = vadd.f32 %v6077, %v6478
        %v6543 = vadd.f32 %v6126, %v6479
        %v6544 = vadd.f32 %v6175, %v6480
        %v6545 = vadd.f32 %v6224, %v6481
        %v6546 = vmul.f32 %v6482, 0.7978846
        %v6547 = vmul.f32 %v6483, 0.7978846
        %v6548 = vmul.f32 %v6484, 0.7978846
        %v6549 = vmul.f32 %v6485, 0.7978846
        %v6550 = vmul.f32 %v6486, 0.7978846
        %v6551 = vmul.f32 %v6487, 0.7978846
        %v6552 = vmul.f32 %v6488, 0.7978846
        %v6553 = vmul.f32 %v6489, 0.7978846
        %v6554 = vmul.f32 %v6490, 0.7978846
        %v6555 = vmul.f32 %v6491, 0.7978846
        %v6556 = vmul.f32 %v6492, 0.7978846
        %v6557 = vmul.f32 %v6493, 0.7978846
        %v6558 = vmul.f32 %v6494, 0.7978846
        %v6559 = vmul.f32 %v6495, 0.7978846
        %v6560 = vmul.f32 %v6496, 0.7978846
        %v6561 = vmul.f32 %v6497, 0.7978846
        %v6562 = vmul.f32 %v6498, 0.7978846
        %v6563 = vmul.f32 %v6499, 0.7978846
        %v6564 = vmul.f32 %v6500, 0.7978846
        %v6565 = vmul.f32 %v6501, 0.7978846
        %v6566 = vmul.f32 %v6502, 0.7978846
        %v6567 = vmul.f32 %v6503, 0.7978846
        %v6568 = vmul.f32 %v6504, 0.7978846
        %v6569 = vmul.f32 %v6505, 0.7978846
        %v6570 = vmul.f32 %v6506, 0.7978846
        %v6571 = vmul.f32 %v6507, 0.7978846
        %v6572 = vmul.f32 %v6508, 0.7978846
        %v6573 = vmul.f32 %v6509, 0.7978846
        %v6574 = vmul.f32 %v6510, 0.7978846
        %v6575 = vmul.f32 %v6511, 0.7978846
        %v6576 = vmul.f32 %v6512, 0.7978846
        %v6577 = vmul.f32 %v6513, 0.7978846
        %v6578 = vmul.f32 %v6514, 0.7978846
        %v6579 = vmul.f32 %v6515, 0.7978846
        %v6580 = vmul.f32 %v6516, 0.7978846
        %v6581 = vmul.f32 %v6517, 0.7978846
        %v6582 = vmul.f32 %v6518, 0.7978846
        %v6583 = vmul.f32 %v6519, 0.7978846
        %v6584 = vmul.f32 %v6520, 0.7978846
        %v6585 = vmul.f32 %v6521, 0.7978846
        %v6586 = vmul.f32 %v6522, 0.7978846
        %v6587 = vmul.f32 %v6523, 0.7978846
        %v6588 = vmul.f32 %v6524, 0.7978846
        %v6589 = vmul.f32 %v6525, 0.7978846
        %v6590 = vmul.f32 %v6526, 0.7978846
        %v6591 = vmul.f32 %v6527, 0.7978846
        %v6592 = vmul.f32 %v6528, 0.7978846
        %v6593 = vmul.f32 %v6529, 0.7978846
        %v6594 = vmul.f32 %v6530, 0.7978846
        %v6595 = vmul.f32 %v6531, 0.7978846
        %v6596 = vmul.f32 %v6532, 0.7978846
        %v6597 = vmul.f32 %v6533, 0.7978846
        %v6598 = vmul.f32 %v6534, 0.7978846
        %v6599 = vmul.f32 %v6535, 0.7978846
        %v6600 = vmul.f32 %v6536, 0.7978846
        %v6601 = vmul.f32 %v6537, 0.7978846
        %v6602 = vmul.f32 %v6538, 0.7978846
        %v6603 = vmul.f32 %v6539, 0.7978846
        %v6604 = vmul.f32 %v6540, 0.7978846
        %v6605 = vmul.f32 %v6541, 0.7978846
        %v6606 = vmul.f32 %v6542, 0.7978846
        %v6607 = vmul.f32 %v6543, 0.7978846
        %v6608 = vmul.f32 %v6544, 0.7978846
        %v6609 = vmul.f32 %v6545, 0.7978846
        %v6610 = vtanh.pop %v6546
        %v6611 = vtanh.pop %v6547
        %v6612 = vtanh.pop %v6548
        %v6613 = vtanh.pop %v6549
        %v6614 = vtanh.pop %v6550
        %v6615 = vtanh.pop %v6551
        %v6616 = vtanh.pop %v6552
        %v6617 = vtanh.pop %v6553
        %v6618 = vtanh.pop %v6554
        %v6619 = vtanh.pop %v6555
        %v6620 = vtanh.pop %v6556
        %v6621 = vtanh.pop %v6557
        %v6622 = vtanh.pop %v6558
        %v6623 = vtanh.pop %v6559
        %v6624 = vtanh.pop %v6560
        %v6625 = vtanh.pop %v6561
        %v6626 = vtanh.pop %v6562
        %v6627 = vtanh.pop %v6563
        %v6628 = vtanh.pop %v6564
        %v6629 = vtanh.pop %v6565
        %v6630 = vtanh.pop %v6566
        %v6631 = vtanh.pop %v6567
        %v6632 = vtanh.pop %v6568
        %v6633 = vtanh.pop %v6569
        %v6634 = vtanh.pop %v6570
        %v6635 = vtanh.pop %v6571
        %v6636 = vtanh.pop %v6572
        %v6637 = vtanh.pop %v6573
        %v6638 = vtanh.pop %v6574
        %v6639 = vtanh.pop %v6575
        %v6640 = vtanh.pop %v6576
        %v6641 = vtanh.pop %v6577
        %v6642 = vtanh.pop %v6578
        %v6643 = vtanh.pop %v6579
        %v6644 = vtanh.pop %v6580
        %v6645 = vtanh.pop %v6581
        %v6646 = vtanh.pop %v6582
        %v6647 = vtanh.pop %v6583
        %v6648 = vtanh.pop %v6584
        %v6649 = vtanh.pop %v6585
        %v6650 = vtanh.pop %v6586
        %v6651 = vtanh.pop %v6587
        %v6652 = vtanh.pop %v6588
        %v6653 = vtanh.pop %v6589
        %v6654 = vtanh.pop %v6590
        %v6655 = vtanh.pop %v6591
        %v6656 = vtanh.pop %v6592
        %v6657 = vtanh.pop %v6593
        %v6658 = vtanh.pop %v6594
        %v6659 = vtanh.pop %v6595
        %v6660 = vtanh.pop %v6596
        %v6661 = vtanh.pop %v6597
        %v6662 = vtanh.pop %v6598
        %v6663 = vtanh.pop %v6599
        %v6664 = vtanh.pop %v6600
        %v6665 = vtanh.pop %v6601
        %v6666 = vtanh.pop %v6602
        %v6667 = vtanh.pop %v6603
        %v6668 = vtanh.pop %v6604
        %v6669 = vtanh.pop %v6605
        %v6670 = vtanh.pop %v6606
        %v6671 = vtanh.pop %v6607
        %v6672 = vtanh.pop %v6608
        %v6673 = vtanh.pop %v6609
        %v6674 = vadd.f32 %v6610, 1.0
        %v6675 = vadd.f32 %v6611, 1.0
        %v6676 = vadd.f32 %v6612, 1.0
        %v6677 = vadd.f32 %v6613, 1.0
        %v6678 = vadd.f32 %v6614, 1.0
        %v6679 = vadd.f32 %v6615, 1.0
        %v6680 = vadd.f32 %v6616, 1.0
        %v6681 = vadd.f32 %v6617, 1.0
        %v6682 = vadd.f32 %v6618, 1.0
        %v6683 = vadd.f32 %v6619, 1.0
        %v6684 = vadd.f32 %v6620, 1.0
        %v6685 = vadd.f32 %v6621, 1.0
        %v6686 = vadd.f32 %v6622, 1.0
        %v6687 = vadd.f32 %v6623, 1.0
        %v6688 = vadd.f32 %v6624, 1.0
        %v6689 = vadd.f32 %v6625, 1.0
        %v6690 = vadd.f32 %v6626, 1.0
        %v6691 = vadd.f32 %v6627, 1.0
        %v6692 = vadd.f32 %v6628, 1.0
        %v6693 = vadd.f32 %v6629, 1.0
        %v6694 = vadd.f32 %v6630, 1.0
        %v6695 = vadd.f32 %v6631, 1.0
        %v6696 = vadd.f32 %v6632, 1.0
        %v6697 = vadd.f32 %v6633, 1.0
        %v6698 = vadd.f32 %v6634, 1.0
        %v6699 = vadd.f32 %v6635, 1.0
        %v6700 = vadd.f32 %v6636, 1.0
        %v6701 = vadd.f32 %v6637, 1.0
        %v6702 = vadd.f32 %v6638, 1.0
        %v6703 = vadd.f32 %v6639, 1.0
        %v6704 = vadd.f32 %v6640, 1.0
        %v6705 = vadd.f32 %v6641, 1.0
        %v6706 = vadd.f32 %v6642, 1.0
        %v6707 = vadd.f32 %v6643, 1.0
        %v6708 = vadd.f32 %v6644, 1.0
        %v6709 = vadd.f32 %v6645, 1.0
        %v6710 = vadd.f32 %v6646, 1.0
        %v6711 = vadd.f32 %v6647, 1.0
        %v6712 = vadd.f32 %v6648, 1.0
        %v6713 = vadd.f32 %v6649, 1.0
        %v6714 = vadd.f32 %v6650, 1.0
        %v6715 = vadd.f32 %v6651, 1.0
        %v6716 = vadd.f32 %v6652, 1.0
        %v6717 = vadd.f32 %v6653, 1.0
        %v6718 = vadd.f32 %v6654, 1.0
        %v6719 = vadd.f32 %v6655, 1.0
        %v6720 = vadd.f32 %v6656, 1.0
        %v6721 = vadd.f32 %v6657, 1.0
        %v6722 = vadd.f32 %v6658, 1.0
        %v6723 = vadd.f32 %v6659, 1.0
        %v6724 = vadd.f32 %v6660, 1.0
        %v6725 = vadd.f32 %v6661, 1.0
        %v6726 = vadd.f32 %v6662, 1.0
        %v6727 = vadd.f32 %v6663, 1.0
        %v6728 = vadd.f32 %v6664, 1.0
        %v6729 = vadd.f32 %v6665, 1.0
        %v6730 = vadd.f32 %v6666, 1.0
        %v6731 = vadd.f32 %v6667, 1.0
        %v6732 = vadd.f32 %v6668, 1.0
        %v6733 = vadd.f32 %v6669, 1.0
        %v6734 = vadd.f32 %v6670, 1.0
        %v6735 = vadd.f32 %v6671, 1.0
        %v6736 = vadd.f32 %v6672, 1.0
        %v6737 = vadd.f32 %v6673, 1.0
        %v6738 = vmul.f32 %v6226, %v6674
        %v6739 = vmul.f32 %v6227, %v6675
        %v6740 = vmul.f32 %v6228, %v6676
        %v6741 = vmul.f32 %v6229, %v6677
        %v6742 = vmul.f32 %v6230, %v6678
        %v6743 = vmul.f32 %v6231, %v6679
        %v6744 = vmul.f32 %v6232, %v6680
        %v6745 = vmul.f32 %v6233, %v6681
        %v6746 = vmul.f32 %v6234, %v6682
        %v6747 = vmul.f32 %v6235, %v6683
        %v6748 = vmul.f32 %v6236, %v6684
        %v6749 = vmul.f32 %v6237, %v6685
        %v6750 = vmul.f32 %v6238, %v6686
        %v6751 = vmul.f32 %v6239, %v6687
        %v6752 = vmul.f32 %v6240, %v6688
        %v6753 = vmul.f32 %v6241, %v6689
        %v6754 = vmul.f32 %v6242, %v6690
        %v6755 = vmul.f32 %v6243, %v6691
        %v6756 = vmul.f32 %v6244, %v6692
        %v6757 = vmul.f32 %v6245, %v6693
        %v6758 = vmul.f32 %v6246, %v6694
        %v6759 = vmul.f32 %v6247, %v6695
        %v6760 = vmul.f32 %v6248, %v6696
        %v6761 = vmul.f32 %v6249, %v6697
        %v6762 = vmul.f32 %v6250, %v6698
        %v6763 = vmul.f32 %v6251, %v6699
        %v6764 = vmul.f32 %v6252, %v6700
        %v6765 = vmul.f32 %v6253, %v6701
        %v6766 = vmul.f32 %v6254, %v6702
        %v6767 = vmul.f32 %v6255, %v6703
        %v6768 = vmul.f32 %v6256, %v6704
        %v6769 = vmul.f32 %v6257, %v6705
        %v6770 = vmul.f32 %v6258, %v6706
        %v6771 = vmul.f32 %v6259, %v6707
        %v6772 = vmul.f32 %v6260, %v6708
        %v6773 = vmul.f32 %v6261, %v6709
        %v6774 = vmul.f32 %v6262, %v6710
        %v6775 = vmul.f32 %v6263, %v6711
        %v6776 = vmul.f32 %v6264, %v6712
        %v6777 = vmul.f32 %v6265, %v6713
        %v6778 = vmul.f32 %v6266, %v6714
        %v6779 = vmul.f32 %v6267, %v6715
        %v6780 = vmul.f32 %v6268, %v6716
        %v6781 = vmul.f32 %v6269, %v6717
        %v6782 = vmul.f32 %v6270, %v6718
        %v6783 = vmul.f32 %v6271, %v6719
        %v6784 = vmul.f32 %v6272, %v6720
        %v6785 = vmul.f32 %v6273, %v6721
        %v6786 = vmul.f32 %v6274, %v6722
        %v6787 = vmul.f32 %v6275, %v6723
        %v6788 = vmul.f32 %v6276, %v6724
        %v6789 = vmul.f32 %v6277, %v6725
        %v6790 = vmul.f32 %v6278, %v6726
        %v6791 = vmul.f32 %v6279, %v6727
        %v6792 = vmul.f32 %v6280, %v6728
        %v6793 = vmul.f32 %v6281, %v6729
        %v6794 = vmul.f32 %v6282, %v6730
        %v6795 = vmul.f32 %v6283, %v6731
        %v6796 = vmul.f32 %v6284, %v6732
        %v6797 = vmul.f32 %v6285, %v6733
        %v6798 = vmul.f32 %v6286, %v6734
        %v6799 = vmul.f32 %v6287, %v6735
        %v6800 = vmul.f32 %v6288, %v6736
        %v6801 = vmul.f32 %v6289, %v6737
        %v6802 = vpack.c.bf16 %v6742, %v6738
        %v6803 = vpack.c.bf16 %v6743, %v6739
        %v6804 = vpack.c.bf16 %v6744, %v6740
        %v6805 = vpack.c.bf16 %v6745, %v6741
        %v6806 = vpack.c.bf16 %v6750, %v6746
        %v6807 = vpack.c.bf16 %v6751, %v6747
        %v6808 = vpack.c.bf16 %v6752, %v6748
        %v6809 = vpack.c.bf16 %v6753, %v6749
        %v6810 = vpack.c.bf16 %v6758, %v6754
        %v6811 = vpack.c.bf16 %v6759, %v6755
        %v6812 = vpack.c.bf16 %v6760, %v6756
        %v6813 = vpack.c.bf16 %v6761, %v6757
        %v6814 = vpack.c.bf16 %v6766, %v6762
        %v6815 = vpack.c.bf16 %v6767, %v6763
        %v6816 = vpack.c.bf16 %v6768, %v6764
        %v6817 = vpack.c.bf16 %v6769, %v6765
        %v6818 = vpack.c.bf16 %v6774, %v6770
        %v6819 = vpack.c.bf16 %v6775, %v6771
        %v6820 = vpack.c.bf16 %v6776, %v6772
        %v6821 = vpack.c.bf16 %v6777, %v6773
        %v6822 = vpack.c.bf16 %v6782, %v6778
        %v6823 = vpack.c.bf16 %v6783, %v6779
        %v6824 = vpack.c.bf16 %v6784, %v6780
        %v6825 = vpack.c.bf16 %v6785, %v6781
        %v6826 = vpack.c.bf16 %v6790, %v6786
        %v6827 = vpack.c.bf16 %v6791, %v6787
        %v6828 = vpack.c.bf16 %v6792, %v6788
        %v6829 = vpack.c.bf16 %v6793, %v6789
        %v6830 = vpack.c.bf16 %v6798, %v6794
        %v6831 = vpack.c.bf16 %v6799, %v6795
        %v6832 = vpack.c.bf16 %v6800, %v6796
        %v6833 = vpack.c.bf16 %v6801, %v6797
        %v6834 = vld [vmem:[#allocation18] sm:$0xf]
        %v6835 = vld [vmem:[#allocation18 + $0x4] sm:$0xf]
        %v6836 = vld [vmem:[#allocation18 + $0x8] sm:$0xf]
        %v6837 = vld [vmem:[#allocation18 + $0xc] sm:$0xf]
        %v6838 = vld [vmem:[#allocation18 + $0x10] sm:$0xf]
        %v6839 = vld [vmem:[#allocation18 + $0x14] sm:$0xf]
        %v6840 = vld [vmem:[#allocation18 + $0x18] sm:$0xf]
        %v6841 = vld [vmem:[#allocation18 + $0x1c] sm:$0xf]
        %v6842 = vld [vmem:[#allocation18 + $0x20] sm:$0xf]
        %v6843 = vld [vmem:[#allocation18 + $0x24] sm:$0xf]
        %v6844 = vld [vmem:[#allocation18 + $0x28] sm:$0xf]
        %v6845 = vld [vmem:[#allocation18 + $0x2c] sm:$0xf]
        %v6846 = vld [vmem:[#allocation18 + $0x30] sm:$0xf]
        %v6847 = vld [vmem:[#allocation18 + $0x34] sm:$0xf]
        %v6848 = vld [vmem:[#allocation18 + $0x38] sm:$0xf]
        %v6849 = vld [vmem:[#allocation18 + $0x3c] sm:$0xf]
        %v6850 = vld [vmem:[#allocation18 + $0x40] sm:$0xf]
        %v6851 = vld [vmem:[#allocation18 + $0x44] sm:$0xf]
        %v6852 = vld [vmem:[#allocation18 + $0x48] sm:$0xf]
        %v6853 = vld [vmem:[#allocation18 + $0x4c] sm:$0xf]
        %v6854 = vld [vmem:[#allocation18 + $0x50] sm:$0xf]
        %v6855 = vld [vmem:[#allocation18 + $0x54] sm:$0xf]
        %v6856 = vld [vmem:[#allocation18 + $0x58] sm:$0xf]
        %v6857 = vld [vmem:[#allocation18 + $0x5c] sm:$0xf]
        %v6858 = vld [vmem:[#allocation18 + $0x60] sm:$0xf]
        %v6859 = vld [vmem:[#allocation18 + $0x64] sm:$0xf]
        %v6860 = vld [vmem:[#allocation18 + $0x68] sm:$0xf]
        %v6861 = vld [vmem:[#allocation18 + $0x6c] sm:$0xf]
        %v6862 = vld [vmem:[#allocation18 + $0x70] sm:$0xf]
        %v6863 = vld [vmem:[#allocation18 + $0x74] sm:$0xf]
        %v6864 = vld [vmem:[#allocation18 + $0x78] sm:$0xf]
        %v6865 = vld [vmem:[#allocation18 + $0x7c] sm:$0xf]
        %v6866 = vld [vmem:[#allocation18 + $0x80] sm:$0xf]
        %v6867 = vld [vmem:[#allocation18 + $0x84] sm:$0xf]
        %v6868 = vld [vmem:[#allocation18 + $0x88] sm:$0xf]
        %v6869 = vld [vmem:[#allocation18 + $0x8c] sm:$0xf]
        %v6870 = vld [vmem:[#allocation18 + $0x90] sm:$0xf]
        %v6871 = vld [vmem:[#allocation18 + $0x94] sm:$0xf]
        %v6872 = vld [vmem:[#allocation18 + $0x98] sm:$0xf]
        %v6873 = vld [vmem:[#allocation18 + $0x9c] sm:$0xf]
        %v6874 = vld [vmem:[#allocation18 + $0xa0] sm:$0xf]
        %v6875 = vld [vmem:[#allocation18 + $0xa4] sm:$0xf]
        %v6876 = vld [vmem:[#allocation18 + $0xa8] sm:$0xf]
        %v6877 = vld [vmem:[#allocation18 + $0xac] sm:$0xf]
        %v6878 = vld [vmem:[#allocation18 + $0xb0] sm:$0xf]
        %v6879 = vld [vmem:[#allocation18 + $0xb4] sm:$0xf]
        %v6880 = vld [vmem:[#allocation18 + $0xb8] sm:$0xf]
        %v6881 = vld [vmem:[#allocation18 + $0xbc] sm:$0xf]
        %v6882 = vld [vmem:[#allocation18 + $0xc0] sm:$0xf]
        %v6883 = vld [vmem:[#allocation18 + $0xc4] sm:$0xf]
        %v6884 = vld [vmem:[#allocation18 + $0xc8] sm:$0xf]
        %v6885 = vld [vmem:[#allocation18 + $0xcc] sm:$0xf]
        %v6886 = vld [vmem:[#allocation18 + $0xd0] sm:$0xf]
        %v6887 = vld [vmem:[#allocation18 + $0xd4] sm:$0xf]
        %v6888 = vld [vmem:[#allocation18 + $0xd8] sm:$0xf]
        %v6889 = vld [vmem:[#allocation18 + $0xdc] sm:$0xf]
        %v6890 = vld [vmem:[#allocation18 + $0xe0] sm:$0xf]
        %v6891 = vld [vmem:[#allocation18 + $0xe4] sm:$0xf]
        %v6892 = vld [vmem:[#allocation18 + $0xe8] sm:$0xf]
        %v6893 = vld [vmem:[#allocation18 + $0xec] sm:$0xf]
        %v6894 = vld [vmem:[#allocation18 + $0xf0] sm:$0xf]
        %v6895 = vld [vmem:[#allocation18 + $0xf4] sm:$0xf]
        %v6896 = vld [vmem:[#allocation18 + $0xf8] sm:$0xf]
        %v6897 = vld [vmem:[#allocation18 + $0xfc] sm:$0xf]
        %v6898 = vld [vmem:[%s15] sm:$0x1]
        %v6900 = vperm.slane %v6898, 0
        %v6966 = vunpack.c.l.b16 %v6834
        %v6967 = vunpack.c.l.b16 %v6835
        %v6968 = vunpack.c.l.b16 %v6836
        %v6969 = vunpack.c.l.b16 %v6837
        %v6970 = vunpack.c.l.b16 %v6838
        %v6971 = vunpack.c.l.b16 %v6839
        %v6972 = vunpack.c.l.b16 %v6840
        %v6973 = vunpack.c.l.b16 %v6841
        %v6974 = vunpack.c.l.b16 %v6842
        %v6975 = vunpack.c.l.b16 %v6843
        %v6976 = vunpack.c.l.b16 %v6844
        %v6977 = vunpack.c.l.b16 %v6845
        %v6978 = vunpack.c.l.b16 %v6846
        %v6979 = vunpack.c.l.b16 %v6847
        %v6980 = vunpack.c.l.b16 %v6848
        %v6981 = vunpack.c.l.b16 %v6849
        %v6982 = vunpack.c.l.b16 %v6850
        %v6983 = vunpack.c.l.b16 %v6851
        %v6984 = vunpack.c.l.b16 %v6852
        %v6985 = vunpack.c.l.b16 %v6853
        %v6986 = vunpack.c.l.b16 %v6854
        %v6987 = vunpack.c.l.b16 %v6855
        %v6988 = vunpack.c.l.b16 %v6856
        %v6989 = vunpack.c.l.b16 %v6857
        %v6990 = vunpack.c.l.b16 %v6858
        %v6991 = vunpack.c.l.b16 %v6859
        %v6992 = vunpack.c.l.b16 %v6860
        %v6993 = vunpack.c.l.b16 %v6861
        %v6994 = vunpack.c.l.b16 %v6862
        %v6995 = vunpack.c.l.b16 %v6863
        %v6996 = vunpack.c.l.b16 %v6864
        %v6997 = vunpack.c.l.b16 %v6865
        %v6998 = vunpack.c.l.b16 %v6866
        %v6999 = vunpack.c.l.b16 %v6867
        %v7000 = vunpack.c.l.b16 %v6868
        %v7001 = vunpack.c.l.b16 %v6869
        %v7002 = vunpack.c.l.b16 %v6870
        %v7003 = vunpack.c.l.b16 %v6871
        %v7004 = vunpack.c.l.b16 %v6872
        %v7005 = vunpack.c.l.b16 %v6873
        %v7006 = vunpack.c.l.b16 %v6874
        %v7007 = vunpack.c.l.b16 %v6875
        %v7008 = vunpack.c.l.b16 %v6876
        %v7009 = vunpack.c.l.b16 %v6877
        %v7010 = vunpack.c.l.b16 %v6878
        %v7011 = vunpack.c.l.b16 %v6879
        %v7012 = vunpack.c.l.b16 %v6880
        %v7013 = vunpack.c.l.b16 %v6881
        %v7014 = vunpack.c.l.b16 %v6882
        %v7015 = vunpack.c.l.b16 %v6883
        %v7016 = vunpack.c.l.b16 %v6884
        %v7017 = vunpack.c.l.b16 %v6885
        %v7018 = vunpack.c.l.b16 %v6886
        %v7019 = vunpack.c.l.b16 %v6887
        %v7020 = vunpack.c.l.b16 %v6888
        %v7021 = vunpack.c.l.b16 %v6889
        %v7022 = vunpack.c.l.b16 %v6890
        %v7023 = vunpack.c.l.b16 %v6891
        %v7024 = vunpack.c.l.b16 %v6892
        %v7025 = vunpack.c.l.b16 %v6893
        %v7026 = vunpack.c.l.b16 %v6894
        %v7027 = vunpack.c.l.b16 %v6895
        %v7028 = vunpack.c.l.b16 %v6896
        %v7029 = vunpack.c.l.b16 %v6897
        %v7030 = vpack.c.b16 %v6967, %v6966
        %v7031 = vpack.c.b16 %v6969, %v6968
        %v7032 = vpack.c.b16 %v6971, %v6970
        %v7033 = vpack.c.b16 %v6973, %v6972
        %v7034 = vpack.c.b16 %v6975, %v6974
        %v7035 = vpack.c.b16 %v6977, %v6976
        %v7036 = vpack.c.b16 %v6979, %v6978
        %v7037 = vpack.c.b16 %v6981, %v6980
        %v7038 = vpack.c.b16 %v6983, %v6982
        %v7039 = vpack.c.b16 %v6985, %v6984
        %v7040 = vpack.c.b16 %v6987, %v6986
        %v7041 = vpack.c.b16 %v6989, %v6988
        %v7042 = vpack.c.b16 %v6991, %v6990
        %v7043 = vpack.c.b16 %v6993, %v6992
        %v7044 = vpack.c.b16 %v6995, %v6994
        %v7045 = vpack.c.b16 %v6997, %v6996
        %v7046 = vpack.c.b16 %v6999, %v6998
        %v7047 = vpack.c.b16 %v7001, %v7000
        %v7048 = vpack.c.b16 %v7003, %v7002
        %v7049 = vpack.c.b16 %v7005, %v7004
        %v7050 = vpack.c.b16 %v7007, %v7006
        %v7051 = vpack.c.b16 %v7009, %v7008
        %v7052 = vpack.c.b16 %v7011, %v7010
        %v7053 = vpack.c.b16 %v7013, %v7012
        %v7054 = vpack.c.b16 %v7015, %v7014
        %v7055 = vpack.c.b16 %v7017, %v7016
        %v7056 = vpack.c.b16 %v7019, %v7018
        %v7057 = vpack.c.b16 %v7021, %v7020
        %v7058 = vpack.c.b16 %v7023, %v7022
        %v7059 = vpack.c.b16 %v7025, %v7024
        %v7060 = vpack.c.b16 %v7027, %v7026
        %v7061 = vpack.c.b16 %v7029, %v7028
        %7094 = vmatpush.bf16.msra.mxu0 %v7037
        %7095 = vmatpush.bf16.msra.mxu0 %v7036
        %7096 = vmatpush.bf16.msra.mxu0 %v7035
        %7097 = vmatpush.bf16.msra.mxu0 %v7034
        %7098 = vmatpush.bf16.msra.mxu0 %v7033
        %7099 = vmatpush.bf16.msra.mxu0 %v7032
        %7100 = vmatpush.bf16.msra.mxu0 %v7031
        %7101 = vmatpush.bf16.msra.mxu0 %v7030
        %7102 = vmatmul.bf16.gmra.mxu0 %v6802
        %v7103 = vpop.f32.mrf.mxu0
        %v7104 = vadd.f32 %v6900, %v7103
        %v7105 = vpop.f32.mrf.mxu0
        %v7106 = vadd.f32 %v6900, %v7105
        %7107 = vmatmul.bf16.gmra.mxu0 %v6806
        %v7108 = vpop.f32.mrf.mxu0
        %v7109 = vadd.f32 %v6900, %v7108
        %v7110 = vpop.f32.mrf.mxu0
        %v7111 = vadd.f32 %v6900, %v7110
        %7112 = vmatmul.bf16.gmra.mxu0 %v6810
        %v7113 = vpop.f32.mrf.mxu0
        %v7114 = vadd.f32 %v6900, %v7113
        %v7115 = vpop.f32.mrf.mxu0
        %v7116 = vadd.f32 %v6900, %v7115
        %7117 = vmatmul.bf16.gmra.mxu0 %v6814
        %v7118 = vpop.f32.mrf.mxu0
        %v7119 = vadd.f32 %v6900, %v7118
        %v7120 = vpop.f32.mrf.mxu0
        %v7121 = vadd.f32 %v6900, %v7120
        %7122 = vmatmul.bf16.gmra.mxu0 %v6818
        %v7123 = vpop.f32.mrf.mxu0
        %v7124 = vadd.f32 %v6900, %v7123
        %v7125 = vpop.f32.mrf.mxu0
        %v7126 = vadd.f32 %v6900, %v7125
        %7127 = vmatmul.bf16.gmra.mxu0 %v6822
        %v7128 = vpop.f32.mrf.mxu0
        %v7129 = vadd.f32 %v6900, %v7128
        %v7130 = vpop.f32.mrf.mxu0
        %v7131 = vadd.f32 %v6900, %v7130
        %7132 = vmatmul.bf16.gmra.mxu0 %v6826
        %v7133 = vpop.f32.mrf.mxu0
        %v7134 = vadd.f32 %v6900, %v7133
        %v7135 = vpop.f32.mrf.mxu0
        %v7136 = vadd.f32 %v6900, %v7135
        %7137 = vmatmul.bf16.gmra.mxu0 %v6830
        %v7138 = vpop.f32.mrf.mxu0
        %v7139 = vadd.f32 %v6900, %v7138
        %v7140 = vpop.f32.mrf.mxu0
        %v7141 = vadd.f32 %v6900, %v7140
        %7142 = vdwg.mxu0
        %7143 = vmatpush.bf16.msra.mxu0 %v7045
        %7144 = vmatpush.bf16.msra.mxu0 %v7044
        %7145 = vmatpush.bf16.msra.mxu0 %v7043
        %7146 = vmatpush.bf16.msra.mxu0 %v7042
        %7147 = vmatpush.bf16.msra.mxu0 %v7041
        %7148 = vmatpush.bf16.msra.mxu0 %v7040
        %7149 = vmatpush.bf16.msra.mxu0 %v7039
        %7150 = vmatpush.bf16.msra.mxu0 %v7038
        %7151 = vmatmul.bf16.gmra.mxu0 %v6803
        %v7152 = vpop.f32.mrf.mxu0
        %v7153 = vadd.f32 %v7104, %v7152
        %v7154 = vpop.f32.mrf.mxu0
        %v7155 = vadd.f32 %v7106, %v7154
        %7156 = vmatmul.bf16.gmra.mxu0 %v6807
        %v7157 = vpop.f32.mrf.mxu0
        %v7158 = vadd.f32 %v7109, %v7157
        %v7159 = vpop.f32.mrf.mxu0
        %v7160 = vadd.f32 %v7111, %v7159
        %7161 = vmatmul.bf16.gmra.mxu0 %v6811
        %v7162 = vpop.f32.mrf.mxu0
        %v7163 = vadd.f32 %v7114, %v7162
        %v7164 = vpop.f32.mrf.mxu0
        %v7165 = vadd.f32 %v7116, %v7164
        %7166 = vmatmul.bf16.gmra.mxu0 %v6815
        %v7167 = vpop.f32.mrf.mxu0
        %v7168 = vadd.f32 %v7119, %v7167
        %v7169 = vpop.f32.mrf.mxu0
        %v7170 = vadd.f32 %v7121, %v7169
        %7171 = vmatmul.bf16.gmra.mxu0 %v6819
        %v7172 = vpop.f32.mrf.mxu0
        %v7173 = vadd.f32 %v7124, %v7172
        %v7174 = vpop.f32.mrf.mxu0
        %v7175 = vadd.f32 %v7126, %v7174
        %7176 = vmatmul.bf16.gmra.mxu0 %v6823
        %v7177 = vpop.f32.mrf.mxu0
        %v7178 = vadd.f32 %v7129, %v7177
        %v7179 = vpop.f32.mrf.mxu0
        %v7180 = vadd.f32 %v7131, %v7179
        %7181 = vmatmul.bf16.gmra.mxu0 %v6827
        %v7182 = vpop.f32.mrf.mxu0
        %v7183 = vadd.f32 %v7134, %v7182
        %v7184 = vpop.f32.mrf.mxu0
        %v7185 = vadd.f32 %v7136, %v7184
        %7186 = vmatmul.bf16.gmra.mxu0 %v6831
        %v7187 = vpop.f32.mrf.mxu0
        %v7188 = vadd.f32 %v7139, %v7187
        %v7189 = vpop.f32.mrf.mxu0
        %v7190 = vadd.f32 %v7141, %v7189
        %7191 = vdwg.mxu0
        %7192 = vmatpush.bf16.msra.mxu0 %v7053
        %7193 = vmatpush.bf16.msra.mxu0 %v7052
        %7194 = vmatpush.bf16.msra.mxu0 %v7051
        %7195 = vmatpush.bf16.msra.mxu0 %v7050
        %7196 = vmatpush.bf16.msra.mxu0 %v7049
        %7197 = vmatpush.bf16.msra.mxu0 %v7048
        %7198 = vmatpush.bf16.msra.mxu0 %v7047
        %7199 = vmatpush.bf16.msra.mxu0 %v7046
        %7200 = vmatmul.bf16.gmra.mxu0 %v6804
        %v7201 = vpop.f32.mrf.mxu0
        %v7202 = vadd.f32 %v7153, %v7201
        %v7203 = vpop.f32.mrf.mxu0
        %v7204 = vadd.f32 %v7155, %v7203
        %7205 = vmatmul.bf16.gmra.mxu0 %v6808
        %v7206 = vpop.f32.mrf.mxu0
        %v7207 = vadd.f32 %v7158, %v7206
        %v7208 = vpop.f32.mrf.mxu0
        %v7209 = vadd.f32 %v7160, %v7208
        %7210 = vmatmul.bf16.gmra.mxu0 %v6812
        %v7211 = vpop.f32.mrf.mxu0
        %v7212 = vadd.f32 %v7163, %v7211
        %v7213 = vpop.f32.mrf.mxu0
        %v7214 = vadd.f32 %v7165, %v7213
        %7215 = vmatmul.bf16.gmra.mxu0 %v6816
        %v7216 = vpop.f32.mrf.mxu0
        %v7217 = vadd.f32 %v7168, %v7216
        %v7218 = vpop.f32.mrf.mxu0
        %v7219 = vadd.f32 %v7170, %v7218
        %7220 = vmatmul.bf16.gmra.mxu0 %v6820
        %v7221 = vpop.f32.mrf.mxu0
        %v7222 = vadd.f32 %v7173, %v7221
        %v7223 = vpop.f32.mrf.mxu0
        %v7224 = vadd.f32 %v7175, %v7223
        %7225 = vmatmul.bf16.gmra.mxu0 %v6824
        %v7226 = vpop.f32.mrf.mxu0
        %v7227 = vadd.f32 %v7178, %v7226
        %v7228 = vpop.f32.mrf.mxu0
        %v7229 = vadd.f32 %v7180, %v7228
        %7230 = vmatmul.bf16.gmra.mxu0 %v6828
        %v7231 = vpop.f32.mrf.mxu0
        %v7232 = vadd.f32 %v7183, %v7231
        %v7233 = vpop.f32.mrf.mxu0
        %v7234 = vadd.f32 %v7185, %v7233
        %7235 = vmatmul.bf16.gmra.mxu0 %v6832
        %v7236 = vpop.f32.mrf.mxu0
        %v7237 = vadd.f32 %v7188, %v7236
        %v7238 = vpop.f32.mrf.mxu0
        %v7239 = vadd.f32 %v7190, %v7238
        %7240 = vdwg.mxu0
        %7241 = vmatpush.bf16.msra.mxu0 %v7061
        %7242 = vmatpush.bf16.msra.mxu0 %v7060
        %7243 = vmatpush.bf16.msra.mxu0 %v7059
        %7244 = vmatpush.bf16.msra.mxu0 %v7058
        %7245 = vmatpush.bf16.msra.mxu0 %v7057
        %7246 = vmatpush.bf16.msra.mxu0 %v7056
        %7247 = vmatpush.bf16.msra.mxu0 %v7055
        %7248 = vmatpush.bf16.msra.mxu0 %v7054
        %7249 = vmatmul.bf16.gmra.mxu0 %v6805
        %v7250 = vpop.f32.mrf.mxu0
        %v7251 = vadd.f32 %v7202, %v7250
        %v7252 = vpop.f32.mrf.mxu0
        %v7253 = vadd.f32 %v7204, %v7252
        %7254 = vmatmul.bf16.gmra.mxu0 %v6809
        %v7255 = vpop.f32.mrf.mxu0
        %v7256 = vadd.f32 %v7207, %v7255
        %v7257 = vpop.f32.mrf.mxu0
        %v7258 = vadd.f32 %v7209, %v7257
        %7259 = vmatmul.bf16.gmra.mxu0 %v6813
        %v7260 = vpop.f32.mrf.mxu0
        %v7261 = vadd.f32 %v7212, %v7260
        %v7262 = vpop.f32.mrf.mxu0
        %v7263 = vadd.f32 %v7214, %v7262
        %7264 = vmatmul.bf16.gmra.mxu0 %v6817
        %v7265 = vpop.f32.mrf.mxu0
        %v7266 = vadd.f32 %v7217, %v7265
        %v7267 = vpop.f32.mrf.mxu0
        %v7268 = vadd.f32 %v7219, %v7267
        %7269 = vmatmul.bf16.gmra.mxu0 %v6821
        %v7270 = vpop.f32.mrf.mxu0
        %v7271 = vadd.f32 %v7222, %v7270
        %v7272 = vpop.f32.mrf.mxu0
        %v7273 = vadd.f32 %v7224, %v7272
        %7274 = vmatmul.bf16.gmra.mxu0 %v6825
        %v7275 = vpop.f32.mrf.mxu0
        %v7276 = vadd.f32 %v7227, %v7275
        %v7277 = vpop.f32.mrf.mxu0
        %v7278 = vadd.f32 %v7229, %v7277
        %7279 = vmatmul.bf16.gmra.mxu0 %v6829
        %v7280 = vpop.f32.mrf.mxu0
        %v7281 = vadd.f32 %v7232, %v7280
        %v7282 = vpop.f32.mrf.mxu0
        %v7283 = vadd.f32 %v7234, %v7282
        %7284 = vmatmul.bf16.gmra.mxu0 %v6833
        %v7285 = vpop.f32.mrf.mxu0
        %v7286 = vadd.f32 %v7237, %v7285
        %v7287 = vpop.f32.mrf.mxu0
        %v7288 = vadd.f32 %v7239, %v7287
        %7289 = vdwg.mxu0
        %v7290 = vadd.f32 %v5444, %v7251
        %v7291 = vadd.f32 %v5445, %v7253
        %v7292 = vadd.f32 %v5446, %v7256
        %v7293 = vadd.f32 %v5447, %v7258
        %v7294 = vadd.f32 %v5448, %v7261
        %v7295 = vadd.f32 %v5449, %v7263
        %v7296 = vadd.f32 %v5450, %v7266
        %v7297 = vadd.f32 %v5451, %v7268
        %v7298 = vadd.f32 %v5452, %v7271
        %v7299 = vadd.f32 %v5453, %v7273
        %v7300 = vadd.f32 %v5454, %v7276
        %v7301 = vadd.f32 %v5455, %v7278
        %v7302 = vadd.f32 %v5456, %v7281
        %v7303 = vadd.f32 %v5457, %v7283
        %v7304 = vadd.f32 %v5458, %v7286
        %v7305 = vadd.f32 %v5459, %v7288
        %v7306 = vpack.c.bf16 %v7290, %v7290
        %v7307 = vpack.c.bf16 %v7291, %v7291
        %v7308 = vpack.c.bf16 %v7292, %v7292
        %v7309 = vpack.c.bf16 %v7293, %v7293
        %v7310 = vpack.c.bf16 %v7294, %v7294
        %v7311 = vpack.c.bf16 %v7295, %v7295
        %v7312 = vpack.c.bf16 %v7296, %v7296
        %v7313 = vpack.c.bf16 %v7297, %v7297
        %v7314 = vpack.c.bf16 %v7298, %v7298
        %v7315 = vpack.c.bf16 %v7299, %v7299
        %v7316 = vpack.c.bf16 %v7300, %v7300
        %v7317 = vpack.c.bf16 %v7301, %v7301
        %v7318 = vpack.c.bf16 %v7302, %v7302
        %v7319 = vpack.c.bf16 %v7303, %v7303
        %v7320 = vpack.c.bf16 %v7304, %v7304
        %v7321 = vpack.c.bf16 %v7305, %v7305
        %7322 = vst [vmem:[%s707] sm:$0xf] %v7306
        %7323 = vst [vmem:[%s707 + $0x4] sm:$0xf] %v7307
        %7324 = vst [vmem:[%s707 + $0x8] sm:$0xf] %v7308
        %7325 = vst [vmem:[%s707 + $0xc] sm:$0xf] %v7309
        %7326 = vst [vmem:[%s707 + $0x10] sm:$0xf] %v7310
        %7327 = vst [vmem:[%s707 + $0x14] sm:$0xf] %v7311
        %7328 = vst [vmem:[%s707 + $0x18] sm:$0xf] %v7312
        %7329 = vst [vmem:[%s707 + $0x1c] sm:$0xf] %v7313
        %7330 = vst [vmem:[%s707 + $0x20] sm:$0xf] %v7314
        %7331 = vst [vmem:[%s707 + $0x24] sm:$0xf] %v7315
        %7332 = vst [vmem:[%s707 + $0x28] sm:$0xf] %v7316
        %7333 = vst [vmem:[%s707 + $0x2c] sm:$0xf] %v7317
        %7334 = vst [vmem:[%s707 + $0x30] sm:$0xf] %v7318
        %7335 = vst [vmem:[%s707 + $0x34] sm:$0xf] %v7319
        %7336 = vst [vmem:[%s707 + $0x38] sm:$0xf] %v7320
        %7337 = vst [vmem:[%s707 + $0x3c] sm:$0xf] %v7321
        %s7338 = sand.u32 %s407, 1
        %s7339 = scalar_lea.sflag [#allocation6], %s7338
        %s7340 = sand.u32 %s407, 1
        %s7341 = smul.addr %s7340, 64
        %s7342 = scalar_lea.vmem [#allocation19], %s7341
        // Predicated region
        $region132: #{tpu_custom_call.1} parent=83 // pred_check
          %p7343 = pneg %p417
        $region133: #{tpu_custom_call.1} parent=83 // pred_check_branch
          %7345 = sbr.rel (%p7343) target = $region135
        $region134: #{tpu_custom_call.1} parent=83 // pred_region
          %s7346 = smul.u32 16, %s44
          %7348 = vsyncadd %s7339, 0
          %s7349 = smul.addr %s43, 32
          %s7350 = sadd.s32 %s7346, %s7349
          %s7351 = smul.addr %s7350, 4
          %s7352 = scalar_lea.hbm %s16, %s7351
          %s7353 = sshll.u32 %s7342, 4
          %s7354 = int_to_ptr.vmem [resolvable:$true] %s7353
          %s7355 = sshll.u32 %s7352, 4
          %s7356 = int_to_ptr.hbm [resolvable:$true] %s7355
          %7361 = dma.vmem_to_hbm [thread:$0]  %s7354, 1024, %s7356, %s7339, 64, 64, 4
        $region135: #{tpu_custom_call.1} parent=83 // pred_fallthru
          _
      $region84: #{tpu_custom_call.1} parent=5 // pred_fallthru
        _
      %p7362 = scmp.le.s32.totalorder 2, %s34
      // Predicated region
      $region136: #{tpu_custom_call.1} parent=5 // pred_check
        %p7363 = pneg %p7362
      $region137: #{tpu_custom_call.1} parent=5 // pred_check_branch
        %7365 = sbr.rel (%p7363) target = $region139
      $region138: #{tpu_custom_call.1} parent=5 // pred_region
        %s7366 = ssub.s32 %s34, 2
        // Predicated region
        $region140: #{tpu_custom_call.1} parent=138 // pred_check
          %p7367 = pneg %p423
        $region141: #{tpu_custom_call.1} parent=138 // pred_check_branch
          %7369 = sbr.rel (%p7367) target = $region143
        $region142: #{tpu_custom_call.1} parent=138 // pred_region
          %s7370 = sand.u32 %s408, 1
          %s7371 = scalar_lea.sflag [#allocation6], %s7370
          %s7372 = sand.u32 %s408, 1
          %s7373 = smul.addr %s7372, 64
          %s7374 = scalar_lea.vmem [#allocation19], %s7373
          %7376 = dma.done %s7371, 1024
        $region143: #{tpu_custom_call.1} parent=138 // pred_fallthru
          _
      $region139: #{tpu_custom_call.1} parent=5 // pred_fallthru
        _
    $region6: #{tpu_custom_call.1} parent=1 // loop_footer
      %s38 = sadd.s32 1, %s34
    $region7: #{tpu_custom_call.1} parent=1 // loop_footer_branch
      %33 = sbr.rel target = $region3
    $region8: #{tpu_custom_call.1} parent=1 // loop_exit
      _
    %7377 = vsyncpa [#allocation5], 1
    %s7378 = scalar_lea.sflag [#allocation5], 1
    %7379 = vsyncpa %s7378, 1
    %7380 = vsyncpa [#allocation8], 1
    %s7381 = scalar_lea.sflag [#allocation8], 1
    %7382 = vsyncpa %s7381, 1
    %7383 = vsyncpa [#allocation11], 1
    %7384 = vsyncpa [#allocation14], 1
    %7385 = vsyncpa [#allocation17], 1
    %7386 = vsyncpa [#allocation6], 1
    %s7387 = scalar_lea.sflag [#allocation6], 1
    %7388 = vsyncpa %s7387, 1

</llo_original>
